<compile_context>
chip_gen: v7x
topology: tpu7x:2x2x1
jax: 0.10.0
libtpu: 0.0.40
codegen_flags: <defaults>
</compile_context>

<pallas_src>
import numpy as np

import jax
import jax.numpy as jnp
from jax.experimental import pallas as pl
from jax.experimental.pallas import tpu as pltpu

NEG_SLOPE = 0.2   # LeakyReLU slope used by the Critic
IN_EPS = 1e-5     # nn.InstanceNorm2d default eps (affine=False, no running stats)


# ---------------------------------------------------------------------------
# Fused Pallas kernel: whole Critic forward, one batch element per grid step
# ---------------------------------------------------------------------------
def _critic_kernel(x_ref,
                   a1, c1,
                   a2, c2, p2,
                   a3, c3, p3,
                   a4, c4, p4,
                   a5, c5,
                   b_ref, o_ref):
    def leaky(y):
        return jnp.where(y >= 0, y, NEG_SLOPE * y)

    def conv(x2, a_ref, c_ref):
        # x2: (Cin*H, W) bf16; c_ref: (KW, W, OW) bf16 0/1 selection matrices;
        # a_ref: (KW, Cout*OH, Cin*H) bf16 folded conv weights.
        acc = None
        for kj in range(c_ref.shape[0]):
            # Column selection (stride + padding); exact in bf16.
            xc = jnp.dot(x2, c_ref[kj],
                         preferred_element_type=jnp.float32).astype(jnp.bfloat16)
            # Folded (weight x row-selection) matmul -> (Cout*OH, OW), f32 acc.
            t = jnp.dot(a_ref[kj], xc, preferred_element_type=jnp.float32)
            acc = t if acc is None else acc + t
        return acc

    def inst_norm_leaky(y, p_ref):
        # y: (Cout*OH, OW) f32.  p_ref: (Cout*OH, Cout*OH) pooling matrix that
        # averages each channel's block of OH rows (and /(OH*OW)) and
        # broadcasts the per-channel statistic back to every row.
        p = p_ref[...]
        mean = jnp.dot(p, jnp.sum(y, axis=1, keepdims=True),
                       preferred_element_type=jnp.float32)
        d = y - mean
        var = jnp.dot(p, jnp.sum(d * d, axis=1, keepdims=True),
                      preferred_element_type=jnp.float32)
        return leaky(d * jax.lax.rsqrt(var + IN_EPS))

    x = x_ref[0]                                           # (Cin0*H0, W0) bf16
    y = leaky(conv(x, a1, c1))                             # conv1 + LeakyReLU
    y = inst_norm_leaky(conv(y.astype(jnp.bfloat16), a2, c2), p2)
    y = inst_norm_leaky(conv(y.astype(jnp.bfloat16), a3, c3), p3)
    y = inst_norm_leaky(conv(y.astype(jnp.bfloat16), a4, c4), p4)
    y = conv(y.astype(jnp.bfloat16), a5, c5)               # (1, 1) f32
    o_ref[0] = (y + b_ref[0, 0]).astype(o_ref.dtype)


# ---------------------------------------------------------------------------
# Weight folding (host-side, done once): conv -> per-kj matmul operands
# ---------------------------------------------------------------------------
def _fold_layer(w_oihw, h_in, stride, pad):
    """Fold a (Cout, Cin, KH, KW) conv weight into per-kj matmul operands.

    Returns
      A: (KW, Cout*OH, Cin*H) bf16 — weight x row-selection (handles ki, stride, pad)
      C: (KW, W, OW)          bf16 — 0/1 column-selection (handles kj, stride, pad)
    assuming square spatial input (W == H, OW == OH).
    """
    w = np.asarray(w_oihw, np.float32)
    cout, cin, kh, kw = w.shape
    oh = (h_in + 2 * pad - kh) // stride + 1

    a = np.zeros((kw, cout * oh, cin * h_in), np.float32)
    for kj in range(kw):
        for oy in range(oh):
            for ki in range(kh):
                h = stride * oy + ki - pad
                if 0 <= h < h_in:
                    # rows co*OH+oy for all co; cols ci*H+h for all ci
                    a[kj, oy::oh, h::h_in] = w[:, :, ki, kj]

    c = np.zeros((kw, h_in, oh), np.float32)
    for kj in range(kw):
        for ox in range(oh):
            col = stride * ox + kj - pad
            if 0 <= col < h_in:
                c[kj, col, ox] = 1.0

    return jnp.asarray(a, jnp.bfloat16), jnp.asarray(c, jnp.bfloat16), oh


def _pool_matrix(cout, oh):
    """(Cout*OH, Cout*OH) matrix: per-channel average over OH*OW + broadcast."""
    ch = np.arange(cout * oh) // oh
    p = (ch[:, None] == ch[None, :]).astype(np.float32) / float(oh * oh)
    return jnp.asarray(p, jnp.float32)


def init_critic_params(key, n_channels, features_d):
    """Deterministic synthetic parameters matching the PyTorch module's shapes."""
    fd = features_d
    shapes = [
        (fd,     n_channels, 4, 4),   # conv1 (no bias)
        (fd * 2, fd,         4, 4),   # conv2 (no bias)
        (fd * 4, fd * 2,     4, 4),   # conv3 (no bias)
        (fd * 8, fd * 4,     4, 4),   # conv4 (no bias)
        (1,      fd * 8,     4, 4),   # conv5 (bias=True)
    ]
    keys = jax.random.split(key, len(shapes) + 1)
    raw = {f"w{i}": 0.05 * jax.random.normal(k, s, dtype=jnp.float32)
           for i, (s, k) in enumerate(zip(shapes, keys[:-1]), start=1)}
    raw["b5"] = 0.05 * jax.random.normal(keys[-1], (1,), dtype=jnp.float32)
    return raw


def prepare_constants(raw, spatial):
    """Fold raw PyTorch-layout weights into the kernel's matmul constants."""
    consts = {}
    h = spatial
    layer_cfg = [("w1", 2, 1, False), ("w2", 2, 1, True), ("w3", 2, 1, True),
                 ("w4", 2, 1, True), ("w5", 1, 0, False)]
    for idx, (name, stride, pad, has_inorm) in enumerate(layer_cfg, start=1):
        a, c, oh = _fold_layer(raw[name], h, stride, pad)
        consts[f"A{idx}"] = a
        consts[f"C{idx}"] = c
        if has_inorm:
            consts[f"P{idx}"] = _pool_matrix(raw[name].shape[0], oh)
        h = oh
    consts["b5"] = jnp.asarray(raw["b5"], jnp.float32).reshape(1, 1)
    return consts


# ---------------------------------------------------------------------------
# Forward pass (single pallas_call)
# ---------------------------------------------------------------------------
@jax.jit
def critic_forward(x_nchw, consts):
    n, cin, h, w = x_nchw.shape
    # (N, C, H, W) -> (N, C*H, W): channel-major rows, spatial width on lanes.
    x2 = x_nchw.reshape(n, cin * h, w).astype(jnp.bfloat16)

    inputs = [x2,
              consts["A1"], consts["C1"],
              consts["A2"], consts["C2"], consts["P2"],
              consts["A3"], consts["C3"], consts["P3"],
              consts["A4"], consts["C4"], consts["P4"],
              consts["A5"], consts["C5"],
              consts["b5"]]

    in_specs = [pl.BlockSpec((1, cin * h, w), lambda i: (i, 0, 0))]
    for arr in inputs[1:-1]:   # layer constants: same full block every grid step
        in_specs.append(pl.BlockSpec(arr.shape, lambda i, nd=arr.ndim: (0,) * nd))
    # conv5 bias: a single scalar kept in SMEM (no padded VMEM tile).
    in_specs.append(pl.BlockSpec(memory_space=pltpu.MemorySpace.SMEM))

    out = pl.pallas_call(
        _critic_kernel,
        grid=(n,),
        in_specs=in_specs,
        out_specs=pl.BlockSpec((1, 1, 1), lambda i: (i, 0, 0)),
        out_shape=jax.ShapeDtypeStruct((n, 1, 1), jnp.float32),
        compiler_params=pltpu.CompilerParams(
            dimension_semantics=("parallel",)),   # shards batch across TCs on v7x
    )(*inputs)
    return out.reshape(n, 1, 1, 1)


# ---------------------------------------------------------------------------
# Pure-JAX reference (matches the PyTorch module) for a numeric sanity check
# ---------------------------------------------------------------------------
def _reference_forward(x_nchw, raw):
    def conv(x, wt, stride, pad):
        return jax.lax.conv_general_dilated(
            x, wt, window_strides=(stride, stride),
            padding=[(pad, pad), (pad, pad)],
            dimension_numbers=("NCHW", "OIHW", "NCHW"))

    def leaky(y):
        return jnp.where(y >= 0, y, NEG_SLOPE * y)

    y = leaky(conv(x_nchw, raw["w1"], 2, 1))
    for name in ("w2", "w3", "w4"):
        y = conv(y, raw[name], 2, 1)
        mean = jnp.mean(y, axis=(2, 3), keepdims=True)
        var = jnp.mean((y - mean) ** 2, axis=(2, 3), keepdims=True)
        y = leaky((y - mean) * jax.lax.rsqrt(var + IN_EPS))
    return conv(y, raw["w5"], 1, 0) + raw["b5"].reshape(1, 1, 1, 1)


if __name__ == "__main__":
    # Spatial size must be 64 so the final 4x4 valid conv yields 1x1
    # (64 -> 32 -> 16 -> 8 -> 4 -> 1), exactly like the PyTorch Critic.
    batch, n_channels, features_d, spatial = 2, 3, 4, 64

    key = jax.random.PRNGKey(0)
    k_x, k_p = jax.random.split(key)
    x = jax.random.normal(k_x, (batch, n_channels, spatial, spatial),
                          dtype=jnp.float32)
    raw = init_critic_params(k_p, n_channels, features_d)
    consts = prepare_constants(raw, spatial)

    out = jax.block_until_ready(critic_forward(x, consts))

    assert out.shape == (batch, 1, 1, 1), out.shape
    assert bool(jnp.all(jnp.isfinite(out)))

    # Numeric check against a plain-JAX implementation of the PyTorch module
    # (loose tolerance: kernel uses bf16 MXU operands with f32 accumulation).
    ref = _reference_forward(x, raw)
    assert bool(jnp.allclose(out, ref, rtol=0.1, atol=0.1)), (out, ref)

    print("KERNEL_OK")
</pallas_src>

<mosaic_0001>
module attributes {stable_mosaic.version = 11 : i64} {
  func.func @_critic_kernel(%arg0: i32, %arg1: memref<1x192x64xbf16, #tpu.memory_space<vmem>>, %arg2: memref<4x128x192xbf16, #tpu.memory_space<vmem>>, %arg3: memref<4x64x32xbf16, #tpu.memory_space<vmem>>, %arg4: memref<4x128x128xbf16, #tpu.memory_space<vmem>>, %arg5: memref<4x32x16xbf16, #tpu.memory_space<vmem>>, %arg6: memref<128x128xf32, #tpu.memory_space<vmem>>, %arg7: memref<4x128x128xbf16, #tpu.memory_space<vmem>>, %arg8: memref<4x16x8xbf16, #tpu.memory_space<vmem>>, %arg9: memref<128x128xf32, #tpu.memory_space<vmem>>, %arg10: memref<4x128x128xbf16, #tpu.memory_space<vmem>>, %arg11: memref<4x8x4xbf16, #tpu.memory_space<vmem>>, %arg12: memref<128x128xf32, #tpu.memory_space<vmem>>, %arg13: memref<4x1x128xbf16, #tpu.memory_space<vmem>>, %arg14: memref<4x4x1xbf16, #tpu.memory_space<vmem>>, %arg15: memref<1x1xf32, #tpu.memory_space<smem>>, %arg16: memref<1x1x1xf32, #tpu.memory_space<vmem>>) attributes {dimension_semantics = [#tpu.dimension_semantics<parallel>], iteration_bounds = array<i64: 2>, scalar_prefetch = 0 : i64, scratch_operands = 0 : i64, tpu.core_type = #tpu.core_type<tc>, window_params = [{transform_indices = @transform_0, window_bounds = array<i64: 1, 192, 64>}, {pipeline_mode = #tpu.pipeline_mode<synchronous>, transform_indices = @transform_1, window_bounds = array<i64: 4, 128, 192>}, {pipeline_mode = #tpu.pipeline_mode<synchronous>, transform_indices = @transform_2, window_bounds = array<i64: 4, 64, 32>}, {pipeline_mode = #tpu.pipeline_mode<synchronous>, transform_indices = @transform_3, window_bounds = array<i64: 4, 128, 128>}, {pipeline_mode = #tpu.pipeline_mode<synchronous>, transform_indices = @transform_4, window_bounds = array<i64: 4, 32, 16>}, {pipeline_mode = #tpu.pipeline_mode<synchronous>, transform_indices = @transform_5, window_bounds = array<i64: 128, 128>}, {pipeline_mode = #tpu.pipeline_mode<synchronous>, transform_indices = @transform_6, window_bounds = array<i64: 4, 128, 128>}, {pipeline_mode = #tpu.pipeline_mode<synchronous>, transform_indices = @transform_7, window_bounds = array<i64: 4, 16, 8>}, {pipeline_mode = #tpu.pipeline_mode<synchronous>, transform_indices = @transform_8, window_bounds = array<i64: 128, 128>}, {pipeline_mode = #tpu.pipeline_mode<synchronous>, transform_indices = @transform_9, window_bounds = array<i64: 4, 128, 128>}, {pipeline_mode = #tpu.pipeline_mode<synchronous>, transform_indices = @transform_10, window_bounds = array<i64: 4, 8, 4>}, {pipeline_mode = #tpu.pipeline_mode<synchronous>, transform_indices = @transform_11, window_bounds = array<i64: 128, 128>}, {pipeline_mode = #tpu.pipeline_mode<synchronous>, transform_indices = @transform_12, window_bounds = array<i64: 4, 1, 128>}, {pipeline_mode = #tpu.pipeline_mode<synchronous>, transform_indices = @transform_13, window_bounds = array<i64: 4, 4, 1>}, {transform_indices = @transform_14, window_bounds = array<i64: 1, 1>}, {transform_indices = @transform_15, window_bounds = array<i64: 1, 1, 1>}]} {
    %c0 = arith.constant 0 : index
    %c0_0 = arith.constant 0 : index
    %c0_1 = arith.constant 0 : index
    %0 = vector.load %arg1[%c0, %c0_0, %c0_1] : memref<1x192x64xbf16, #tpu.memory_space<vmem>>, vector<1x192x64xbf16>
    %1 = vector.shape_cast %0 : vector<1x192x64xbf16> to vector<192x64xbf16>
    %c0_2 = arith.constant 0 : index
    %c0_3 = arith.constant 0 : index
    %c0_4 = arith.constant 0 : index
    %2 = vector.load %arg3[%c0_2, %c0_3, %c0_4] : memref<4x64x32xbf16, #tpu.memory_space<vmem>>, vector<1x64x32xbf16>
    %3 = vector.shape_cast %2 : vector<1x64x32xbf16> to vector<64x32xbf16>
    %cst = arith.constant dense<0.000000e+00> : vector<192x32xf32>
    %4 = tpu.matmul %1, %3, %cst {dimension_numbers = #tpu.dot_dimension_numbers<[1], [0], [0], [1], [0, 0, 1, 1], [], []>} : vector<192x64xbf16>, vector<64x32xbf16>, vector<192x32xf32> -> vector<192x32xf32>
    %5 = arith.truncf %4 : vector<192x32xf32> to vector<192x32xbf16>
    %c0_5 = arith.constant 0 : index
    %c0_6 = arith.constant 0 : index
    %c0_7 = arith.constant 0 : index
    %6 = vector.load %arg2[%c0_5, %c0_6, %c0_7] : memref<4x128x192xbf16, #tpu.memory_space<vmem>>, vector<1x128x192xbf16>
    %7 = vector.shape_cast %6 : vector<1x128x192xbf16> to vector<128x192xbf16>
    %cst_8 = arith.constant dense<0.000000e+00> : vector<128x32xf32>
    %8 = tpu.matmul %7, %5, %cst_8 {dimension_numbers = #tpu.dot_dimension_numbers<[1], [0], [0], [1], [0, 0, 1, 1], [], []>} : vector<128x192xbf16>, vector<192x32xbf16>, vector<128x32xf32> -> vector<128x32xf32>
    %c1 = arith.constant 1 : index
    %c0_9 = arith.constant 0 : index
    %c0_10 = arith.constant 0 : index
    %9 = vector.load %arg3[%c1, %c0_9, %c0_10] : memref<4x64x32xbf16, #tpu.memory_space<vmem>>, vector<1x64x32xbf16>
    %10 = vector.shape_cast %9 : vector<1x64x32xbf16> to vector<64x32xbf16>
    %cst_11 = arith.constant dense<0.000000e+00> : vector<192x32xf32>
    %11 = tpu.matmul %1, %10, %cst_11 {dimension_numbers = #tpu.dot_dimension_numbers<[1], [0], [0], [1], [0, 0, 1, 1], [], []>} : vector<192x64xbf16>, vector<64x32xbf16>, vector<192x32xf32> -> vector<192x32xf32>
    %12 = arith.truncf %11 : vector<192x32xf32> to vector<192x32xbf16>
    %c1_12 = arith.constant 1 : index
    %c0_13 = arith.constant 0 : index
    %c0_14 = arith.constant 0 : index
    %13 = vector.load %arg2[%c1_12, %c0_13, %c0_14] : memref<4x128x192xbf16, #tpu.memory_space<vmem>>, vector<1x128x192xbf16>
    %14 = vector.shape_cast %13 : vector<1x128x192xbf16> to vector<128x192xbf16>
    %cst_15 = arith.constant dense<0.000000e+00> : vector<128x32xf32>
    %15 = tpu.matmul %14, %12, %cst_15 {dimension_numbers = #tpu.dot_dimension_numbers<[1], [0], [0], [1], [0, 0, 1, 1], [], []>} : vector<128x192xbf16>, vector<192x32xbf16>, vector<128x32xf32> -> vector<128x32xf32>
    %16 = arith.addf %8, %15 : vector<128x32xf32>
    %c2 = arith.constant 2 : index
    %c0_16 = arith.constant 0 : index
    %c0_17 = arith.constant 0 : index
    %17 = vector.load %arg3[%c2, %c0_16, %c0_17] : memref<4x64x32xbf16, #tpu.memory_space<vmem>>, vector<1x64x32xbf16>
    %18 = vector.shape_cast %17 : vector<1x64x32xbf16> to vector<64x32xbf16>
    %cst_18 = arith.constant dense<0.000000e+00> : vector<192x32xf32>
    %19 = tpu.matmul %1, %18, %cst_18 {dimension_numbers = #tpu.dot_dimension_numbers<[1], [0], [0], [1], [0, 0, 1, 1], [], []>} : vector<192x64xbf16>, vector<64x32xbf16>, vector<192x32xf32> -> vector<192x32xf32>
    %20 = arith.truncf %19 : vector<192x32xf32> to vector<192x32xbf16>
    %c2_19 = arith.constant 2 : index
    %c0_20 = arith.constant 0 : index
    %c0_21 = arith.constant 0 : index
    %21 = vector.load %arg2[%c2_19, %c0_20, %c0_21] : memref<4x128x192xbf16, #tpu.memory_space<vmem>>, vector<1x128x192xbf16>
    %22 = vector.shape_cast %21 : vector<1x128x192xbf16> to vector<128x192xbf16>
    %cst_22 = arith.constant dense<0.000000e+00> : vector<128x32xf32>
    %23 = tpu.matmul %22, %20, %cst_22 {dimension_numbers = #tpu.dot_dimension_numbers<[1], [0], [0], [1], [0, 0, 1, 1], [], []>} : vector<128x192xbf16>, vector<192x32xbf16>, vector<128x32xf32> -> vector<128x32xf32>
    %24 = arith.addf %16, %23 : vector<128x32xf32>
    %c3 = arith.constant 3 : index
    %c0_23 = arith.constant 0 : index
    %c0_24 = arith.constant 0 : index
    %25 = vector.load %arg3[%c3, %c0_23, %c0_24] : memref<4x64x32xbf16, #tpu.memory_space<vmem>>, vector<1x64x32xbf16>
    %26 = vector.shape_cast %25 : vector<1x64x32xbf16> to vector<64x32xbf16>
    %cst_25 = arith.constant dense<0.000000e+00> : vector<192x32xf32>
    %27 = tpu.matmul %1, %26, %cst_25 {dimension_numbers = #tpu.dot_dimension_numbers<[1], [0], [0], [1], [0, 0, 1, 1], [], []>} : vector<192x64xbf16>, vector<64x32xbf16>, vector<192x32xf32> -> vector<192x32xf32>
    %28 = arith.truncf %27 : vector<192x32xf32> to vector<192x32xbf16>
    %c3_26 = arith.constant 3 : index
    %c0_27 = arith.constant 0 : index
    %c0_28 = arith.constant 0 : index
    %29 = vector.load %arg2[%c3_26, %c0_27, %c0_28] : memref<4x128x192xbf16, #tpu.memory_space<vmem>>, vector<1x128x192xbf16>
    %30 = vector.shape_cast %29 : vector<1x128x192xbf16> to vector<128x192xbf16>
    %cst_29 = arith.constant dense<0.000000e+00> : vector<128x32xf32>
    %31 = tpu.matmul %30, %28, %cst_29 {dimension_numbers = #tpu.dot_dimension_numbers<[1], [0], [0], [1], [0, 0, 1, 1], [], []>} : vector<128x192xbf16>, vector<192x32xbf16>, vector<128x32xf32> -> vector<128x32xf32>
    %32 = arith.addf %24, %31 : vector<128x32xf32>
    %cst_30 = arith.constant 0.000000e+00 : f32
    %33 = vector.broadcast %cst_30 : f32 to vector<128x32xf32>
    %34 = arith.cmpf oge, %32, %33 : vector<128x32xf32>
    %cst_31 = arith.constant 2.000000e-01 : f32
    %35 = vector.broadcast %cst_31 : f32 to vector<128x32xf32>
    %36 = arith.mulf %35, %32 : vector<128x32xf32>
    %37 = arith.select %34, %32, %36 : vector<128x32xi1>, vector<128x32xf32>
    %38 = arith.truncf %37 : vector<128x32xf32> to vector<128x32xbf16>
    %c0_32 = arith.constant 0 : index
    %c0_33 = arith.constant 0 : index
    %c0_34 = arith.constant 0 : index
    %39 = vector.load %arg5[%c0_32, %c0_33, %c0_34] : memref<4x32x16xbf16, #tpu.memory_space<vmem>>, vector<1x32x16xbf16>
    %40 = vector.shape_cast %39 : vector<1x32x16xbf16> to vector<32x16xbf16>
    %cst_35 = arith.constant dense<0.000000e+00> : vector<128x16xf32>
    %41 = tpu.matmul %38, %40, %cst_35 {dimension_numbers = #tpu.dot_dimension_numbers<[1], [0], [0], [1], [0, 0, 1, 1], [], []>} : vector<128x32xbf16>, vector<32x16xbf16>, vector<128x16xf32> -> vector<128x16xf32>
    %42 = arith.truncf %41 : vector<128x16xf32> to vector<128x16xbf16>
    %c0_36 = arith.constant 0 : index
    %c0_37 = arith.constant 0 : index
    %c0_38 = arith.constant 0 : index
    %43 = vector.load %arg4[%c0_36, %c0_37, %c0_38] : memref<4x128x128xbf16, #tpu.memory_space<vmem>>, vector<1x128x128xbf16>
    %44 = vector.shape_cast %43 : vector<1x128x128xbf16> to vector<128x128xbf16>
    %cst_39 = arith.constant dense<0.000000e+00> : vector<128x16xf32>
    %45 = tpu.matmul %44, %42, %cst_39 {dimension_numbers = #tpu.dot_dimension_numbers<[1], [0], [0], [1], [0, 0, 1, 1], [], []>} : vector<128x128xbf16>, vector<128x16xbf16>, vector<128x16xf32> -> vector<128x16xf32>
    %c1_40 = arith.constant 1 : index
    %c0_41 = arith.constant 0 : index
    %c0_42 = arith.constant 0 : index
    %46 = vector.load %arg5[%c1_40, %c0_41, %c0_42] : memref<4x32x16xbf16, #tpu.memory_space<vmem>>, vector<1x32x16xbf16>
    %47 = vector.shape_cast %46 : vector<1x32x16xbf16> to vector<32x16xbf16>
    %cst_43 = arith.constant dense<0.000000e+00> : vector<128x16xf32>
    %48 = tpu.matmul %38, %47, %cst_43 {dimension_numbers = #tpu.dot_dimension_numbers<[1], [0], [0], [1], [0, 0, 1, 1], [], []>} : vector<128x32xbf16>, vector<32x16xbf16>, vector<128x16xf32> -> vector<128x16xf32>
    %49 = arith.truncf %48 : vector<128x16xf32> to vector<128x16xbf16>
    %c1_44 = arith.constant 1 : index
    %c0_45 = arith.constant 0 : index
    %c0_46 = arith.constant 0 : index
    %50 = vector.load %arg4[%c1_44, %c0_45, %c0_46] : memref<4x128x128xbf16, #tpu.memory_space<vmem>>, vector<1x128x128xbf16>
    %51 = vector.shape_cast %50 : vector<1x128x128xbf16> to vector<128x128xbf16>
    %cst_47 = arith.constant dense<0.000000e+00> : vector<128x16xf32>
    %52 = tpu.matmul %51, %49, %cst_47 {dimension_numbers = #tpu.dot_dimension_numbers<[1], [0], [0], [1], [0, 0, 1, 1], [], []>} : vector<128x128xbf16>, vector<128x16xbf16>, vector<128x16xf32> -> vector<128x16xf32>
    %53 = arith.addf %45, %52 : vector<128x16xf32>
    %c2_48 = arith.constant 2 : index
    %c0_49 = arith.constant 0 : index
    %c0_50 = arith.constant 0 : index
    %54 = vector.load %arg5[%c2_48, %c0_49, %c0_50] : memref<4x32x16xbf16, #tpu.memory_space<vmem>>, vector<1x32x16xbf16>
    %55 = vector.shape_cast %54 : vector<1x32x16xbf16> to vector<32x16xbf16>
    %cst_51 = arith.constant dense<0.000000e+00> : vector<128x16xf32>
    %56 = tpu.matmul %38, %55, %cst_51 {dimension_numbers = #tpu.dot_dimension_numbers<[1], [0], [0], [1], [0, 0, 1, 1], [], []>} : vector<128x32xbf16>, vector<32x16xbf16>, vector<128x16xf32> -> vector<128x16xf32>
    %57 = arith.truncf %56 : vector<128x16xf32> to vector<128x16xbf16>
    %c2_52 = arith.constant 2 : index
    %c0_53 = arith.constant 0 : index
    %c0_54 = arith.constant 0 : index
    %58 = vector.load %arg4[%c2_52, %c0_53, %c0_54] : memref<4x128x128xbf16, #tpu.memory_space<vmem>>, vector<1x128x128xbf16>
    %59 = vector.shape_cast %58 : vector<1x128x128xbf16> to vector<128x128xbf16>
    %cst_55 = arith.constant dense<0.000000e+00> : vector<128x16xf32>
    %60 = tpu.matmul %59, %57, %cst_55 {dimension_numbers = #tpu.dot_dimension_numbers<[1], [0], [0], [1], [0, 0, 1, 1], [], []>} : vector<128x128xbf16>, vector<128x16xbf16>, vector<128x16xf32> -> vector<128x16xf32>
    %61 = arith.addf %53, %60 : vector<128x16xf32>
    %c3_56 = arith.constant 3 : index
    %c0_57 = arith.constant 0 : index
    %c0_58 = arith.constant 0 : index
    %62 = vector.load %arg5[%c3_56, %c0_57, %c0_58] : memref<4x32x16xbf16, #tpu.memory_space<vmem>>, vector<1x32x16xbf16>
    %63 = vector.shape_cast %62 : vector<1x32x16xbf16> to vector<32x16xbf16>
    %cst_59 = arith.constant dense<0.000000e+00> : vector<128x16xf32>
    %64 = tpu.matmul %38, %63, %cst_59 {dimension_numbers = #tpu.dot_dimension_numbers<[1], [0], [0], [1], [0, 0, 1, 1], [], []>} : vector<128x32xbf16>, vector<32x16xbf16>, vector<128x16xf32> -> vector<128x16xf32>
    %65 = arith.truncf %64 : vector<128x16xf32> to vector<128x16xbf16>
    %c3_60 = arith.constant 3 : index
    %c0_61 = arith.constant 0 : index
    %c0_62 = arith.constant 0 : index
    %66 = vector.load %arg4[%c3_60, %c0_61, %c0_62] : memref<4x128x128xbf16, #tpu.memory_space<vmem>>, vector<1x128x128xbf16>
    %67 = vector.shape_cast %66 : vector<1x128x128xbf16> to vector<128x128xbf16>
    %cst_63 = arith.constant dense<0.000000e+00> : vector<128x16xf32>
    %68 = tpu.matmul %67, %65, %cst_63 {dimension_numbers = #tpu.dot_dimension_numbers<[1], [0], [0], [1], [0, 0, 1, 1], [], []>} : vector<128x128xbf16>, vector<128x16xbf16>, vector<128x16xf32> -> vector<128x16xf32>
    %69 = arith.addf %61, %68 : vector<128x16xf32>
    %c0_64 = arith.constant 0 : index
    %c0_65 = arith.constant 0 : index
    %70 = vector.load %arg6[%c0_64, %c0_65] : memref<128x128xf32, #tpu.memory_space<vmem>>, vector<128x128xf32>
    %cst_66 = arith.constant dense<0.000000e+00> : vector<128xf32>
    %71 = vector.multi_reduction <add>, %69, %cst_66 [1] : vector<128x16xf32> to vector<128xf32>
    %72 = vector.shape_cast %71 : vector<128xf32> to vector<128x1xf32>
    %cst_67 = arith.constant dense<0.000000e+00> : vector<128x1xf32>
    %73 = tpu.matmul %70, %72, %cst_67 {dimension_numbers = #tpu.dot_dimension_numbers<[1], [0], [0], [1], [0, 0, 1, 1], [], []>} : vector<128x128xf32>, vector<128x1xf32>, vector<128x1xf32> -> vector<128x1xf32>
    %74 = vector.broadcast %73 : vector<128x1xf32> to vector<128x16xf32>
    %75 = arith.subf %69, %74 : vector<128x16xf32>
    %76 = arith.mulf %75, %75 : vector<128x16xf32>
    %cst_68 = arith.constant dense<0.000000e+00> : vector<128xf32>
    %77 = vector.multi_reduction <add>, %76, %cst_68 [1] : vector<128x16xf32> to vector<128xf32>
    %78 = vector.shape_cast %77 : vector<128xf32> to vector<128x1xf32>
    %cst_69 = arith.constant dense<0.000000e+00> : vector<128x1xf32>
    %79 = tpu.matmul %70, %78, %cst_69 {dimension_numbers = #tpu.dot_dimension_numbers<[1], [0], [0], [1], [0, 0, 1, 1], [], []>} : vector<128x128xf32>, vector<128x1xf32>, vector<128x1xf32> -> vector<128x1xf32>
    %cst_70 = arith.constant 9.99999974E-6 : f32
    %80 = vector.broadcast %cst_70 : f32 to vector<128x1xf32>
    %81 = arith.addf %79, %80 : vector<128x1xf32>
    %82 = math.rsqrt %81 : vector<128x1xf32>
    %83 = vector.broadcast %82 : vector<128x1xf32> to vector<128x16xf32>
    %84 = arith.mulf %75, %83 : vector<128x16xf32>
    %cst_71 = arith.constant 0.000000e+00 : f32
    %85 = vector.broadcast %cst_71 : f32 to vector<128x16xf32>
    %86 = arith.cmpf oge, %84, %85 : vector<128x16xf32>
    %cst_72 = arith.constant 2.000000e-01 : f32
    %87 = vector.broadcast %cst_72 : f32 to vector<128x16xf32>
    %88 = arith.mulf %87, %84 : vector<128x16xf32>
    %89 = arith.select %86, %84, %88 : vector<128x16xi1>, vector<128x16xf32>
    %90 = arith.truncf %89 : vector<128x16xf32> to vector<128x16xbf16>
    %c0_73 = arith.constant 0 : index
    %c0_74 = arith.constant 0 : index
    %c0_75 = arith.constant 0 : index
    %91 = vector.load %arg8[%c0_73, %c0_74, %c0_75] : memref<4x16x8xbf16, #tpu.memory_space<vmem>>, vector<1x16x8xbf16>
    %92 = vector.shape_cast %91 : vector<1x16x8xbf16> to vector<16x8xbf16>
    %cst_76 = arith.constant dense<0.000000e+00> : vector<128x8xf32>
    %93 = tpu.matmul %90, %92, %cst_76 {dimension_numbers = #tpu.dot_dimension_numbers<[1], [0], [0], [1], [0, 0, 1, 1], [], []>} : vector<128x16xbf16>, vector<16x8xbf16>, vector<128x8xf32> -> vector<128x8xf32>
    %94 = arith.truncf %93 : vector<128x8xf32> to vector<128x8xbf16>
    %c0_77 = arith.constant 0 : index
    %c0_78 = arith.constant 0 : index
    %c0_79 = arith.constant 0 : index
    %95 = vector.load %arg7[%c0_77, %c0_78, %c0_79] : memref<4x128x128xbf16, #tpu.memory_space<vmem>>, vector<1x128x128xbf16>
    %96 = vector.shape_cast %95 : vector<1x128x128xbf16> to vector<128x128xbf16>
    %cst_80 = arith.constant dense<0.000000e+00> : vector<128x8xf32>
    %97 = tpu.matmul %96, %94, %cst_80 {dimension_numbers = #tpu.dot_dimension_numbers<[1], [0], [0], [1], [0, 0, 1, 1], [], []>} : vector<128x128xbf16>, vector<128x8xbf16>, vector<128x8xf32> -> vector<128x8xf32>
    %c1_81 = arith.constant 1 : index
    %c0_82 = arith.constant 0 : index
    %c0_83 = arith.constant 0 : index
    %98 = vector.load %arg8[%c1_81, %c0_82, %c0_83] : memref<4x16x8xbf16, #tpu.memory_space<vmem>>, vector<1x16x8xbf16>
    %99 = vector.shape_cast %98 : vector<1x16x8xbf16> to vector<16x8xbf16>
    %cst_84 = arith.constant dense<0.000000e+00> : vector<128x8xf32>
    %100 = tpu.matmul %90, %99, %cst_84 {dimension_numbers = #tpu.dot_dimension_numbers<[1], [0], [0], [1], [0, 0, 1, 1], [], []>} : vector<128x16xbf16>, vector<16x8xbf16>, vector<128x8xf32> -> vector<128x8xf32>
    %101 = arith.truncf %100 : vector<128x8xf32> to vector<128x8xbf16>
    %c1_85 = arith.constant 1 : index
    %c0_86 = arith.constant 0 : index
    %c0_87 = arith.constant 0 : index
    %102 = vector.load %arg7[%c1_85, %c0_86, %c0_87] : memref<4x128x128xbf16, #tpu.memory_space<vmem>>, vector<1x128x128xbf16>
    %103 = vector.shape_cast %102 : vector<1x128x128xbf16> to vector<128x128xbf16>
    %cst_88 = arith.constant dense<0.000000e+00> : vector<128x8xf32>
    %104 = tpu.matmul %103, %101, %cst_88 {dimension_numbers = #tpu.dot_dimension_numbers<[1], [0], [0], [1], [0, 0, 1, 1], [], []>} : vector<128x128xbf16>, vector<128x8xbf16>, vector<128x8xf32> -> vector<128x8xf32>
    %105 = arith.addf %97, %104 : vector<128x8xf32>
    %c2_89 = arith.constant 2 : index
    %c0_90 = arith.constant 0 : index
    %c0_91 = arith.constant 0 : index
    %106 = vector.load %arg8[%c2_89, %c0_90, %c0_91] : memref<4x16x8xbf16, #tpu.memory_space<vmem>>, vector<1x16x8xbf16>
    %107 = vector.shape_cast %106 : vector<1x16x8xbf16> to vector<16x8xbf16>
    %cst_92 = arith.constant dense<0.000000e+00> : vector<128x8xf32>
    %108 = tpu.matmul %90, %107, %cst_92 {dimension_numbers = #tpu.dot_dimension_numbers<[1], [0], [0], [1], [0, 0, 1, 1], [], []>} : vector<128x16xbf16>, vector<16x8xbf16>, vector<128x8xf32> -> vector<128x8xf32>
    %109 = arith.truncf %108 : vector<128x8xf32> to vector<128x8xbf16>
    %c2_93 = arith.constant 2 : index
    %c0_94 = arith.constant 0 : index
    %c0_95 = arith.constant 0 : index
    %110 = vector.load %arg7[%c2_93, %c0_94, %c0_95] : memref<4x128x128xbf16, #tpu.memory_space<vmem>>, vector<1x128x128xbf16>
    %111 = vector.shape_cast %110 : vector<1x128x128xbf16> to vector<128x128xbf16>
    %cst_96 = arith.constant dense<0.000000e+00> : vector<128x8xf32>
    %112 = tpu.matmul %111, %109, %cst_96 {dimension_numbers = #tpu.dot_dimension_numbers<[1], [0], [0], [1], [0, 0, 1, 1], [], []>} : vector<128x128xbf16>, vector<128x8xbf16>, vector<128x8xf32> -> vector<128x8xf32>
    %113 = arith.addf %105, %112 : vector<128x8xf32>
    %c3_97 = arith.constant 3 : index
    %c0_98 = arith.constant 0 : index
    %c0_99 = arith.constant 0 : index
    %114 = vector.load %arg8[%c3_97, %c0_98, %c0_99] : memref<4x16x8xbf16, #tpu.memory_space<vmem>>, vector<1x16x8xbf16>
    %115 = vector.shape_cast %114 : vector<1x16x8xbf16> to vector<16x8xbf16>
    %cst_100 = arith.constant dense<0.000000e+00> : vector<128x8xf32>
    %116 = tpu.matmul %90, %115, %cst_100 {dimension_numbers = #tpu.dot_dimension_numbers<[1], [0], [0], [1], [0, 0, 1, 1], [], []>} : vector<128x16xbf16>, vector<16x8xbf16>, vector<128x8xf32> -> vector<128x8xf32>
    %117 = arith.truncf %116 : vector<128x8xf32> to vector<128x8xbf16>
    %c3_101 = arith.constant 3 : index
    %c0_102 = arith.constant 0 : index
    %c0_103 = arith.constant 0 : index
    %118 = vector.load %arg7[%c3_101, %c0_102, %c0_103] : memref<4x128x128xbf16, #tpu.memory_space<vmem>>, vector<1x128x128xbf16>
    %119 = vector.shape_cast %118 : vector<1x128x128xbf16> to vector<128x128xbf16>
    %cst_104 = arith.constant dense<0.000000e+00> : vector<128x8xf32>
    %120 = tpu.matmul %119, %117, %cst_104 {dimension_numbers = #tpu.dot_dimension_numbers<[1], [0], [0], [1], [0, 0, 1, 1], [], []>} : vector<128x128xbf16>, vector<128x8xbf16>, vector<128x8xf32> -> vector<128x8xf32>
    %121 = arith.addf %113, %120 : vector<128x8xf32>
    %c0_105 = arith.constant 0 : index
    %c0_106 = arith.constant 0 : index
    %122 = vector.load %arg9[%c0_105, %c0_106] : memref<128x128xf32, #tpu.memory_space<vmem>>, vector<128x128xf32>
    %cst_107 = arith.constant dense<0.000000e+00> : vector<128xf32>
    %123 = vector.multi_reduction <add>, %121, %cst_107 [1] : vector<128x8xf32> to vector<128xf32>
    %124 = vector.shape_cast %123 : vector<128xf32> to vector<128x1xf32>
    %cst_108 = arith.constant dense<0.000000e+00> : vector<128x1xf32>
    %125 = tpu.matmul %122, %124, %cst_108 {dimension_numbers = #tpu.dot_dimension_numbers<[1], [0], [0], [1], [0, 0, 1, 1], [], []>} : vector<128x128xf32>, vector<128x1xf32>, vector<128x1xf32> -> vector<128x1xf32>
    %126 = vector.broadcast %125 : vector<128x1xf32> to vector<128x8xf32>
    %127 = arith.subf %121, %126 : vector<128x8xf32>
    %128 = arith.mulf %127, %127 : vector<128x8xf32>
    %cst_109 = arith.constant dense<0.000000e+00> : vector<128xf32>
    %129 = vector.multi_reduction <add>, %128, %cst_109 [1] : vector<128x8xf32> to vector<128xf32>
    %130 = vector.shape_cast %129 : vector<128xf32> to vector<128x1xf32>
    %cst_110 = arith.constant dense<0.000000e+00> : vector<128x1xf32>
    %131 = tpu.matmul %122, %130, %cst_110 {dimension_numbers = #tpu.dot_dimension_numbers<[1], [0], [0], [1], [0, 0, 1, 1], [], []>} : vector<128x128xf32>, vector<128x1xf32>, vector<128x1xf32> -> vector<128x1xf32>
    %cst_111 = arith.constant 9.99999974E-6 : f32
    %132 = vector.broadcast %cst_111 : f32 to vector<128x1xf32>
    %133 = arith.addf %131, %132 : vector<128x1xf32>
    %134 = math.rsqrt %133 : vector<128x1xf32>
    %135 = vector.broadcast %134 : vector<128x1xf32> to vector<128x8xf32>
    %136 = arith.mulf %127, %135 : vector<128x8xf32>
    %cst_112 = arith.constant 0.000000e+00 : f32
    %137 = vector.broadcast %cst_112 : f32 to vector<128x8xf32>
    %138 = arith.cmpf oge, %136, %137 : vector<128x8xf32>
    %cst_113 = arith.constant 2.000000e-01 : f32
    %139 = vector.broadcast %cst_113 : f32 to vector<128x8xf32>
    %140 = arith.mulf %139, %136 : vector<128x8xf32>
    %141 = arith.select %138, %136, %140 : vector<128x8xi1>, vector<128x8xf32>
    %142 = arith.truncf %141 : vector<128x8xf32> to vector<128x8xbf16>
    %c0_114 = arith.constant 0 : index
    %c0_115 = arith.constant 0 : index
    %c0_116 = arith.constant 0 : index
    %143 = vector.load %arg11[%c0_114, %c0_115, %c0_116] : memref<4x8x4xbf16, #tpu.memory_space<vmem>>, vector<1x8x4xbf16>
    %144 = vector.shape_cast %143 : vector<1x8x4xbf16> to vector<8x4xbf16>
    %cst_117 = arith.constant dense<0.000000e+00> : vector<128x4xf32>
    %145 = tpu.matmul %142, %144, %cst_117 {dimension_numbers = #tpu.dot_dimension_numbers<[1], [0], [0], [1], [0, 0, 1, 1], [], []>} : vector<128x8xbf16>, vector<8x4xbf16>, vector<128x4xf32> -> vector<128x4xf32>
    %146 = arith.truncf %145 : vector<128x4xf32> to vector<128x4xbf16>
    %c0_118 = arith.constant 0 : index
    %c0_119 = arith.constant 0 : index
    %c0_120 = arith.constant 0 : index
    %147 = vector.load %arg10[%c0_118, %c0_119, %c0_120] : memref<4x128x128xbf16, #tpu.memory_space<vmem>>, vector<1x128x128xbf16>
    %148 = vector.shape_cast %147 : vector<1x128x128xbf16> to vector<128x128xbf16>
    %cst_121 = arith.constant dense<0.000000e+00> : vector<128x4xf32>
    %149 = tpu.matmul %148, %146, %cst_121 {dimension_numbers = #tpu.dot_dimension_numbers<[1], [0], [0], [1], [0, 0, 1, 1], [], []>} : vector<128x128xbf16>, vector<128x4xbf16>, vector<128x4xf32> -> vector<128x4xf32>
    %c1_122 = arith.constant 1 : index
    %c0_123 = arith.constant 0 : index
    %c0_124 = arith.constant 0 : index
    %150 = vector.load %arg11[%c1_122, %c0_123, %c0_124] : memref<4x8x4xbf16, #tpu.memory_space<vmem>>, vector<1x8x4xbf16>
    %151 = vector.shape_cast %150 : vector<1x8x4xbf16> to vector<8x4xbf16>
    %cst_125 = arith.constant dense<0.000000e+00> : vector<128x4xf32>
    %152 = tpu.matmul %142, %151, %cst_125 {dimension_numbers = #tpu.dot_dimension_numbers<[1], [0], [0], [1], [0, 0, 1, 1], [], []>} : vector<128x8xbf16>, vector<8x4xbf16>, vector<128x4xf32> -> vector<128x4xf32>
    %153 = arith.truncf %152 : vector<128x4xf32> to vector<128x4xbf16>
    %c1_126 = arith.constant 1 : index
    %c0_127 = arith.constant 0 : index
    %c0_128 = arith.constant 0 : index
    %154 = vector.load %arg10[%c1_126, %c0_127, %c0_128] : memref<4x128x128xbf16, #tpu.memory_space<vmem>>, vector<1x128x128xbf16>
    %155 = vector.shape_cast %154 : vector<1x128x128xbf16> to vector<128x128xbf16>
    %cst_129 = arith.constant dense<0.000000e+00> : vector<128x4xf32>
    %156 = tpu.matmul %155, %153, %cst_129 {dimension_numbers = #tpu.dot_dimension_numbers<[1], [0], [0], [1], [0, 0, 1, 1], [], []>} : vector<128x128xbf16>, vector<128x4xbf16>, vector<128x4xf32> -> vector<128x4xf32>
    %157 = arith.addf %149, %156 : vector<128x4xf32>
    %c2_130 = arith.constant 2 : index
    %c0_131 = arith.constant 0 : index
    %c0_132 = arith.constant 0 : index
    %158 = vector.load %arg11[%c2_130, %c0_131, %c0_132] : memref<4x8x4xbf16, #tpu.memory_space<vmem>>, vector<1x8x4xbf16>
    %159 = vector.shape_cast %158 : vector<1x8x4xbf16> to vector<8x4xbf16>
    %cst_133 = arith.constant dense<0.000000e+00> : vector<128x4xf32>
    %160 = tpu.matmul %142, %159, %cst_133 {dimension_numbers = #tpu.dot_dimension_numbers<[1], [0], [0], [1], [0, 0, 1, 1], [], []>} : vector<128x8xbf16>, vector<8x4xbf16>, vector<128x4xf32> -> vector<128x4xf32>
    %161 = arith.truncf %160 : vector<128x4xf32> to vector<128x4xbf16>
    %c2_134 = arith.constant 2 : index
    %c0_135 = arith.constant 0 : index
    %c0_136 = arith.constant 0 : index
    %162 = vector.load %arg10[%c2_134, %c0_135, %c0_136] : memref<4x128x128xbf16, #tpu.memory_space<vmem>>, vector<1x128x128xbf16>
    %163 = vector.shape_cast %162 : vector<1x128x128xbf16> to vector<128x128xbf16>
    %cst_137 = arith.constant dense<0.000000e+00> : vector<128x4xf32>
    %164 = tpu.matmul %163, %161, %cst_137 {dimension_numbers = #tpu.dot_dimension_numbers<[1], [0], [0], [1], [0, 0, 1, 1], [], []>} : vector<128x128xbf16>, vector<128x4xbf16>, vector<128x4xf32> -> vector<128x4xf32>
    %165 = arith.addf %157, %164 : vector<128x4xf32>
    %c3_138 = arith.constant 3 : index
    %c0_139 = arith.constant 0 : index
    %c0_140 = arith.constant 0 : index
    %166 = vector.load %arg11[%c3_138, %c0_139, %c0_140] : memref<4x8x4xbf16, #tpu.memory_space<vmem>>, vector<1x8x4xbf16>
    %167 = vector.shape_cast %166 : vector<1x8x4xbf16> to vector<8x4xbf16>
    %cst_141 = arith.constant dense<0.000000e+00> : vector<128x4xf32>
    %168 = tpu.matmul %142, %167, %cst_141 {dimension_numbers = #tpu.dot_dimension_numbers<[1], [0], [0], [1], [0, 0, 1, 1], [], []>} : vector<128x8xbf16>, vector<8x4xbf16>, vector<128x4xf32> -> vector<128x4xf32>
    %169 = arith.truncf %168 : vector<128x4xf32> to vector<128x4xbf16>
    %c3_142 = arith.constant 3 : index
    %c0_143 = arith.constant 0 : index
    %c0_144 = arith.constant 0 : index
    %170 = vector.load %arg10[%c3_142, %c0_143, %c0_144] : memref<4x128x128xbf16, #tpu.memory_space<vmem>>, vector<1x128x128xbf16>
    %171 = vector.shape_cast %170 : vector<1x128x128xbf16> to vector<128x128xbf16>
    %cst_145 = arith.constant dense<0.000000e+00> : vector<128x4xf32>
    %172 = tpu.matmul %171, %169, %cst_145 {dimension_numbers = #tpu.dot_dimension_numbers<[1], [0], [0], [1], [0, 0, 1, 1], [], []>} : vector<128x128xbf16>, vector<128x4xbf16>, vector<128x4xf32> -> vector<128x4xf32>
    %173 = arith.addf %165, %172 : vector<128x4xf32>
    %c0_146 = arith.constant 0 : index
    %c0_147 = arith.constant 0 : index
    %174 = vector.load %arg12[%c0_146, %c0_147] : memref<128x128xf32, #tpu.memory_space<vmem>>, vector<128x128xf32>
    %cst_148 = arith.constant dense<0.000000e+00> : vector<128xf32>
    %175 = vector.multi_reduction <add>, %173, %cst_148 [1] : vector<128x4xf32> to vector<128xf32>
    %176 = vector.shape_cast %175 : vector<128xf32> to vector<128x1xf32>
    %cst_149 = arith.constant dense<0.000000e+00> : vector<128x1xf32>
    %177 = tpu.matmul %174, %176, %cst_149 {dimension_numbers = #tpu.dot_dimension_numbers<[1], [0], [0], [1], [0, 0, 1, 1], [], []>} : vector<128x128xf32>, vector<128x1xf32>, vector<128x1xf32> -> vector<128x1xf32>
    %178 = vector.broadcast %177 : vector<128x1xf32> to vector<128x4xf32>
    %179 = arith.subf %173, %178 : vector<128x4xf32>
    %180 = arith.mulf %179, %179 : vector<128x4xf32>
    %cst_150 = arith.constant dense<0.000000e+00> : vector<128xf32>
    %181 = vector.multi_reduction <add>, %180, %cst_150 [1] : vector<128x4xf32> to vector<128xf32>
    %182 = vector.shape_cast %181 : vector<128xf32> to vector<128x1xf32>
    %cst_151 = arith.constant dense<0.000000e+00> : vector<128x1xf32>
    %183 = tpu.matmul %174, %182, %cst_151 {dimension_numbers = #tpu.dot_dimension_numbers<[1], [0], [0], [1], [0, 0, 1, 1], [], []>} : vector<128x128xf32>, vector<128x1xf32>, vector<128x1xf32> -> vector<128x1xf32>
    %cst_152 = arith.constant 9.99999974E-6 : f32
    %184 = vector.broadcast %cst_152 : f32 to vector<128x1xf32>
    %185 = arith.addf %183, %184 : vector<128x1xf32>
    %186 = math.rsqrt %185 : vector<128x1xf32>
    %187 = vector.broadcast %186 : vector<128x1xf32> to vector<128x4xf32>
    %188 = arith.mulf %179, %187 : vector<128x4xf32>
    %cst_153 = arith.constant 0.000000e+00 : f32
    %189 = vector.broadcast %cst_153 : f32 to vector<128x4xf32>
    %190 = arith.cmpf oge, %188, %189 : vector<128x4xf32>
    %cst_154 = arith.constant 2.000000e-01 : f32
    %191 = vector.broadcast %cst_154 : f32 to vector<128x4xf32>
    %192 = arith.mulf %191, %188 : vector<128x4xf32>
    %193 = arith.select %190, %188, %192 : vector<128x4xi1>, vector<128x4xf32>
    %194 = arith.truncf %193 : vector<128x4xf32> to vector<128x4xbf16>
    %c0_155 = arith.constant 0 : index
    %c0_156 = arith.constant 0 : index
    %c0_157 = arith.constant 0 : index
    %195 = vector.load %arg14[%c0_155, %c0_156, %c0_157] : memref<4x4x1xbf16, #tpu.memory_space<vmem>>, vector<1x4x1xbf16>
    %196 = vector.shape_cast %195 : vector<1x4x1xbf16> to vector<4x1xbf16>
    %cst_158 = arith.constant dense<0.000000e+00> : vector<128x1xf32>
    %197 = tpu.matmul %194, %196, %cst_158 {dimension_numbers = #tpu.dot_dimension_numbers<[1], [0], [0], [1], [0, 0, 1, 1], [], []>} : vector<128x4xbf16>, vector<4x1xbf16>, vector<128x1xf32> -> vector<128x1xf32>
    %198 = arith.truncf %197 : vector<128x1xf32> to vector<128x1xbf16>
    %c0_159 = arith.constant 0 : index
    %c0_160 = arith.constant 0 : index
    %c0_161 = arith.constant 0 : index
    %199 = vector.load %arg13[%c0_159, %c0_160, %c0_161] : memref<4x1x128xbf16, #tpu.memory_space<vmem>>, vector<1x1x128xbf16>
    %200 = vector.shape_cast %199 : vector<1x1x128xbf16> to vector<1x128xbf16>
    %cst_162 = arith.constant dense<0.000000e+00> : vector<1x1xf32>
    %201 = tpu.matmul %200, %198, %cst_162 {dimension_numbers = #tpu.dot_dimension_numbers<[1], [0], [0], [1], [0, 0, 1, 1], [], []>} : vector<1x128xbf16>, vector<128x1xbf16>, vector<1x1xf32> -> vector<1x1xf32>
    %c1_163 = arith.constant 1 : index
    %c0_164 = arith.constant 0 : index
    %c0_165 = arith.constant 0 : index
    %202 = vector.load %arg14[%c1_163, %c0_164, %c0_165] : memref<4x4x1xbf16, #tpu.memory_space<vmem>>, vector<1x4x1xbf16>
    %203 = vector.shape_cast %202 : vector<1x4x1xbf16> to vector<4x1xbf16>
    %cst_166 = arith.constant dense<0.000000e+00> : vector<128x1xf32>
    %204 = tpu.matmul %194, %203, %cst_166 {dimension_numbers = #tpu.dot_dimension_numbers<[1], [0], [0], [1], [0, 0, 1, 1], [], []>} : vector<128x4xbf16>, vector<4x1xbf16>, vector<128x1xf32> -> vector<128x1xf32>
    %205 = arith.truncf %204 : vector<128x1xf32> to vector<128x1xbf16>
    %c1_167 = arith.constant 1 : index
    %c0_168 = arith.constant 0 : index
    %c0_169 = arith.constant 0 : index
    %206 = vector.load %arg13[%c1_167, %c0_168, %c0_169] : memref<4x1x128xbf16, #tpu.memory_space<vmem>>, vector<1x1x128xbf16>
    %207 = vector.shape_cast %206 : vector<1x1x128xbf16> to vector<1x128xbf16>
    %cst_170 = arith.constant dense<0.000000e+00> : vector<1x1xf32>
    %208 = tpu.matmul %207, %205, %cst_170 {dimension_numbers = #tpu.dot_dimension_numbers<[1], [0], [0], [1], [0, 0, 1, 1], [], []>} : vector<1x128xbf16>, vector<128x1xbf16>, vector<1x1xf32> -> vector<1x1xf32>
    %209 = arith.addf %201, %208 : vector<1x1xf32>
    %c2_171 = arith.constant 2 : index
    %c0_172 = arith.constant 0 : index
    %c0_173 = arith.constant 0 : index
    %210 = vector.load %arg14[%c2_171, %c0_172, %c0_173] : memref<4x4x1xbf16, #tpu.memory_space<vmem>>, vector<1x4x1xbf16>
    %211 = vector.shape_cast %210 : vector<1x4x1xbf16> to vector<4x1xbf16>
    %cst_174 = arith.constant dense<0.000000e+00> : vector<128x1xf32>
    %212 = tpu.matmul %194, %211, %cst_174 {dimension_numbers = #tpu.dot_dimension_numbers<[1], [0], [0], [1], [0, 0, 1, 1], [], []>} : vector<128x4xbf16>, vector<4x1xbf16>, vector<128x1xf32> -> vector<128x1xf32>
    %213 = arith.truncf %212 : vector<128x1xf32> to vector<128x1xbf16>
    %c2_175 = arith.constant 2 : index
    %c0_176 = arith.constant 0 : index
    %c0_177 = arith.constant 0 : index
    %214 = vector.load %arg13[%c2_175, %c0_176, %c0_177] : memref<4x1x128xbf16, #tpu.memory_space<vmem>>, vector<1x1x128xbf16>
    %215 = vector.shape_cast %214 : vector<1x1x128xbf16> to vector<1x128xbf16>
    %cst_178 = arith.constant dense<0.000000e+00> : vector<1x1xf32>
    %216 = tpu.matmul %215, %213, %cst_178 {dimension_numbers = #tpu.dot_dimension_numbers<[1], [0], [0], [1], [0, 0, 1, 1], [], []>} : vector<1x128xbf16>, vector<128x1xbf16>, vector<1x1xf32> -> vector<1x1xf32>
    %217 = arith.addf %209, %216 : vector<1x1xf32>
    %c3_179 = arith.constant 3 : index
    %c0_180 = arith.constant 0 : index
    %c0_181 = arith.constant 0 : index
    %218 = vector.load %arg14[%c3_179, %c0_180, %c0_181] : memref<4x4x1xbf16, #tpu.memory_space<vmem>>, vector<1x4x1xbf16>
    %219 = vector.shape_cast %218 : vector<1x4x1xbf16> to vector<4x1xbf16>
    %cst_182 = arith.constant dense<0.000000e+00> : vector<128x1xf32>
    %220 = tpu.matmul %194, %219, %cst_182 {dimension_numbers = #tpu.dot_dimension_numbers<[1], [0], [0], [1], [0, 0, 1, 1], [], []>} : vector<128x4xbf16>, vector<4x1xbf16>, vector<128x1xf32> -> vector<128x1xf32>
    %221 = arith.truncf %220 : vector<128x1xf32> to vector<128x1xbf16>
    %c3_183 = arith.constant 3 : index
    %c0_184 = arith.constant 0 : index
    %c0_185 = arith.constant 0 : index
    %222 = vector.load %arg13[%c3_183, %c0_184, %c0_185] : memref<4x1x128xbf16, #tpu.memory_space<vmem>>, vector<1x1x128xbf16>
    %223 = vector.shape_cast %222 : vector<1x1x128xbf16> to vector<1x128xbf16>
    %cst_186 = arith.constant dense<0.000000e+00> : vector<1x1xf32>
    %224 = tpu.matmul %223, %221, %cst_186 {dimension_numbers = #tpu.dot_dimension_numbers<[1], [0], [0], [1], [0, 0, 1, 1], [], []>} : vector<1x128xbf16>, vector<128x1xbf16>, vector<1x1xf32> -> vector<1x1xf32>
    %225 = arith.addf %217, %224 : vector<1x1xf32>
    %c0_187 = arith.constant 0 : index
    %c0_188 = arith.constant 0 : index
    %226 = memref.load %arg15[%c0_187, %c0_188] : memref<1x1xf32, #tpu.memory_space<smem>>
    %227 = vector.broadcast %226 : f32 to vector<1x1xf32>
    %228 = arith.addf %225, %227 : vector<1x1xf32>
    %c0_189 = arith.constant 0 : index
    %c0_190 = arith.constant 0 : index
    %c0_191 = arith.constant 0 : index
    %229 = vector.load %arg16[%c0_189, %c0_190, %c0_191] : memref<1x1x1xf32, #tpu.memory_space<vmem>>, vector<1x1x1xf32>
    %230 = vector.shape_cast %229 : vector<1x1x1xf32> to vector<1x1xf32>
    %231 = vector.shape_cast %228 : vector<1x1xf32> to vector<1x1x1xf32>
    tpu.vector_store %arg16[%c0_189, %c0_190, %c0_191], %231 {strides = array<i32>} : memref<1x1x1xf32, #tpu.memory_space<vmem>>, vector<1x1x1xf32>,
    return
  }
  func.func @transform_0(%arg0: i32) -> (i32, i32, i32) {
    %c0_i32 = arith.constant 0 : i32
    %c0_i32_0 = arith.constant 0 : i32
    %c0_i32_1 = arith.constant 0 : i32
    return %arg0, %c0_i32, %c0_i32_0 : i32, i32, i32
  }
  func.func @transform_1(%arg0: i32) -> (i32, i32, i32) {
    %c0_i32 = arith.constant 0 : i32
    %c0_i32_0 = arith.constant 0 : i32
    %c0_i32_1 = arith.constant 0 : i32
    %c0_i32_2 = arith.constant 0 : i32
    return %c0_i32, %c0_i32_0, %c0_i32_1 : i32, i32, i32
  }
  func.func @transform_2(%arg0: i32) -> (i32, i32, i32) {
    %c0_i32 = arith.constant 0 : i32
    %c0_i32_0 = arith.constant 0 : i32
    %c0_i32_1 = arith.constant 0 : i32
    %c0_i32_2 = arith.constant 0 : i32
    return %c0_i32, %c0_i32_0, %c0_i32_1 : i32, i32, i32
  }
  func.func @transform_3(%arg0: i32) -> (i32, i32, i32) {
    %c0_i32 = arith.constant 0 : i32
    %c0_i32_0 = arith.constant 0 : i32
    %c0_i32_1 = arith.constant 0 : i32
    %c0_i32_2 = arith.constant 0 : i32
    return %c0_i32, %c0_i32_0, %c0_i32_1 : i32, i32, i32
  }
  func.func @transform_4(%arg0: i32) -> (i32, i32, i32) {
    %c0_i32 = arith.constant 0 : i32
    %c0_i32_0 = arith.constant 0 : i32
    %c0_i32_1 = arith.constant 0 : i32
    %c0_i32_2 = arith.constant 0 : i32
    return %c0_i32, %c0_i32_0, %c0_i32_1 : i32, i32, i32
  }
  func.func @transform_5(%arg0: i32) -> (i32, i32) {
    %c0_i32 = arith.constant 0 : i32
    %c0_i32_0 = arith.constant 0 : i32
    %c0_i32_1 = arith.constant 0 : i32
    return %c0_i32, %c0_i32_0 : i32, i32
  }
  func.func @transform_6(%arg0: i32) -> (i32, i32, i32) {
    %c0_i32 = arith.constant 0 : i32
    %c0_i32_0 = arith.constant 0 : i32
    %c0_i32_1 = arith.constant 0 : i32
    %c0_i32_2 = arith.constant 0 : i32
    return %c0_i32, %c0_i32_0, %c0_i32_1 : i32, i32, i32
  }
  func.func @transform_7(%arg0: i32) -> (i32, i32, i32) {
    %c0_i32 = arith.constant 0 : i32
    %c0_i32_0 = arith.constant 0 : i32
    %c0_i32_1 = arith.constant 0 : i32
    %c0_i32_2 = arith.constant 0 : i32
    return %c0_i32, %c0_i32_0, %c0_i32_1 : i32, i32, i32
  }
  func.func @transform_8(%arg0: i32) -> (i32, i32) {
    %c0_i32 = arith.constant 0 : i32
    %c0_i32_0 = arith.constant 0 : i32
    %c0_i32_1 = arith.constant 0 : i32
    return %c0_i32, %c0_i32_0 : i32, i32
  }
  func.func @transform_9(%arg0: i32) -> (i32, i32, i32) {
    %c0_i32 = arith.constant 0 : i32
    %c0_i32_0 = arith.constant 0 : i32
    %c0_i32_1 = arith.constant 0 : i32
    %c0_i32_2 = arith.constant 0 : i32
    return %c0_i32, %c0_i32_0, %c0_i32_1 : i32, i32, i32
  }
  func.func @transform_10(%arg0: i32) -> (i32, i32, i32) {
    %c0_i32 = arith.constant 0 : i32
    %c0_i32_0 = arith.constant 0 : i32
    %c0_i32_1 = arith.constant 0 : i32
    %c0_i32_2 = arith.constant 0 : i32
    return %c0_i32, %c0_i32_0, %c0_i32_1 : i32, i32, i32
  }
  func.func @transform_11(%arg0: i32) -> (i32, i32) {
    %c0_i32 = arith.constant 0 : i32
    %c0_i32_0 = arith.constant 0 : i32
    %c0_i32_1 = arith.constant 0 : i32
    return %c0_i32, %c0_i32_0 : i32, i32
  }
  func.func @transform_12(%arg0: i32) -> (i32, i32, i32) {
    %c0_i32 = arith.constant 0 : i32
    %c0_i32_0 = arith.constant 0 : i32
    %c0_i32_1 = arith.constant 0 : i32
    %c0_i32_2 = arith.constant 0 : i32
    return %c0_i32, %c0_i32_0, %c0_i32_1 : i32, i32, i32
  }
  func.func @transform_13(%arg0: i32) -> (i32, i32, i32) {
    %c0_i32 = arith.constant 0 : i32
    %c0_i32_0 = arith.constant 0 : i32
    %c0_i32_1 = arith.constant 0 : i32
    %c0_i32_2 = arith.constant 0 : i32
    return %c0_i32, %c0_i32_0, %c0_i32_1 : i32, i32, i32
  }
  func.func @transform_14(%arg0: i32) -> (i32, i32) {
    %c0_i32 = arith.constant 0 : i32
    %c0_i32_0 = arith.constant 0 : i32
    %c0_i32_1 = arith.constant 0 : i32
    return %c0_i32, %c0_i32_0 : i32, i32
  }
  func.func @transform_15(%arg0: i32) -> (i32, i32, i32) {
    %c0_i32 = arith.constant 0 : i32
    %c0_i32_0 = arith.constant 0 : i32
    %c0_i32_1 = arith.constant 0 : i32
    return %arg0, %c0_i32, %c0_i32_0 : i32, i32, i32
  }
}

</mosaic_0001>

<llo_original>
// kernel: critic_forward.1
$region0: #{critic_forward.1}
  #allocation0 [shape = 'u32[]', space=smem, size = 0x4, offset = 0x4, fixed_abs, tag = 'smem constant byte address 0x4 - core index']
  #allocation1 [shape = 'u32[144,128]{1,0:T(1,128)}', space=vmem, size = 0x12000, scoped, tag = 'internal scratch']
  #allocation2 [shape = 'f32[1,1]{1,0:T(1,128)S(6)}', space=smem, size = 0x200, scoped, tag = 'scoped memory for critic_forward.1']
  %s0 = inlined_call_operand.vmem [shape: bf16[2,192,64], index: 0, kind: input, shape index: {}]
  %s1 = inlined_call_operand.vmem [shape: bf16[4,128,192], index: 1, kind: input, shape index: {}]
  %s2 = inlined_call_operand.vmem [shape: bf16[4,64,32], index: 2, kind: input, shape index: {}]
  %s3 = inlined_call_operand.vmem [shape: bf16[4,128,128], index: 3, kind: input, shape index: {}]
  %s4 = inlined_call_operand.vmem [shape: bf16[4,32,16], index: 4, kind: input, shape index: {}]
  %s5 = inlined_call_operand.vmem [shape: f32[128,128], index: 5, kind: input, shape index: {}]
  %s6 = inlined_call_operand.vmem [shape: bf16[4,128,128], index: 6, kind: input, shape index: {}]
  %s7 = inlined_call_operand.vmem [shape: bf16[4,16,8], index: 7, kind: input, shape index: {}]
  %s8 = inlined_call_operand.vmem [shape: f32[128,128], index: 8, kind: input, shape index: {}]
  %s9 = inlined_call_operand.vmem [shape: bf16[4,128,128], index: 9, kind: input, shape index: {}]
  %s10 = inlined_call_operand.vmem [shape: bf16[4,8,4], index: 10, kind: input, shape index: {}]
  %s11 = inlined_call_operand.vmem [shape: f32[128,128], index: 11, kind: input, shape index: {}]
  %s12 = inlined_call_operand.vmem [shape: bf16[4,1,128], index: 12, kind: input, shape index: {}]
  %s13 = inlined_call_operand.vmem [shape: bf16[4,4,1], index: 13, kind: input, shape index: {}]
  %s14 = inlined_call_operand.<no memory space> [shape: f32[1,1], index: 14, kind: input, shape index: {}]
  %s15 = inlined_call_operand.vmem [shape: f32[2,1,1], index: 15, kind: output, shape index: {}]
  %s16 = sld [smem:[#allocation0]]
  $region93: #{critic_forward.1} parent=0
    _
  %s18 = ssub.s32 1, %s16
  %s19 = scalar_select 0, %s18, %s16
  %20 = sst [smem:[#allocation2]] %s14
  loop: start=0, step=1, limit=4
  $region2: #{critic_forward.1} parent=0 // loop_pre_header
    _
  $region3: #{critic_forward.1} parent=0 // loop_header
    %s22 = sphi 0, %s26
    %p23 = scmp.ge.s32.totalorder %s22, 4
    %s32 = sphi 0, %s34
    %s35 = sphi 0, %s32
    %s36 = sphi 0, %s35
    %s52 = sphi 0, %s36
    %s56 = sphi 0, %s56
    %s58 = sphi 0, %s56
    %s59 = sphi 0, %s58
    %s73 = sphi 0, %s59
    %s77 = sphi 0, %s77
    %s79 = sphi 0, %s77
    %s80 = sphi 0, %s79
    %s94 = sphi 0, %s80
    %s98 = sphi 0, %s98
    %s100 = sphi 0, %s98
    %s101 = sphi 0, %s100
    %s115 = sphi 0, %s101
    %s119 = sphi 0, %s119
    %s121 = sphi 0, %s119
    %s122 = sphi 0, %s121
    %s136 = sphi 0, %s122
    %s140 = sphi 0, %s140
    %s142 = sphi 0, %s140
    %s143 = sphi 0, %s142
    %s157 = sphi 0, %s143
    %s161 = sphi 0, %s161
    %s163 = sphi 0, %s161
    %s164 = sphi 0, %s163
    %s178 = sphi 0, %s164
    %s182 = sphi 0, %s182
    %s184 = sphi 0, %s182
    %s185 = sphi 0, %s184
    %s199 = sphi 0, %s185
    %s203 = sphi 0, %s203
    %s205 = sphi 0, %s203
    %s206 = sphi 0, %s205
    %s220 = sphi 0, %s206
    %s224 = sphi 0, %s224
    %s226 = sphi 0, %s224
    %s227 = sphi 0, %s226
    %s241 = sphi 0, %s227
    %s245 = sphi 0, %s245
    %s247 = sphi 0, %s245
    %s248 = sphi 0, %s247
    %s262 = sphi 0, %s248
    %s266 = sphi 0, %s266
    %s268 = sphi 0, %s266
    %s269 = sphi 0, %s268
    %s283 = sphi 0, %s269
    %s287 = sphi 0, %s287
    %s289 = sphi 0, %s287
    %s290 = sphi 0, %s289
    %s304 = sphi 0, %s290
    %s308 = sphi 0, %s308
    %s310 = sphi 0, %s308
    %s311 = sphi 0, %s310
    %s325 = sphi 0, %s311
    %s329 = sphi 0, %s329
    %s331 = sphi 0, %s329
    %s332 = sphi 0, %s331
    %s346 = sphi 0, %s332
    %s352 = sphi 0, %s354
    %s355 = sphi 0, %s352
    %s356 = sphi 0, %s355
    %s372 = sphi 0, %s356
  $region4: #{critic_forward.1} parent=0 // loop_header_branch
    %25 = sbr.rel (%p23) target = $region8
  $region5: #{critic_forward.1} parent=0 // loop_body
    %s27 = ssub.s32 %s22, 1
    %s28 = ssub.s32 %s22, 2
    %s29 = sadd.s32 %s22, 1
    %s30 = ssub.s32 %s22, %s29
    %p31 = scmp.eq.s32.totalorder %s30, 0
    %s33 = sadd.s32 %s32, 1
    %s34 = scalar_select %p31, %s32, %s33
    %p37 = pneg %p31
    %p38 = scmp.eq.s32.totalorder %s22, 1
    %p39 = por %p37, %p38
    %p40 = scmp.ne.s32.totalorder %s32, %s35
    %p41 = scmp.eq.s32.totalorder %s22, 0
    %p42 = por %p40, %p41
    %p43 = scmp.ne.s32.totalorder %s32, %s35
    %p44 = scmp.eq.s32.totalorder %s27, 1
    %p45 = por %p43, %p44
    %p46 = scmp.ne.s32.totalorder %s35, %s36
    %p47 = scmp.eq.s32.totalorder %s27, 0
    %p48 = por %p46, %p47
    %p49 = scmp.ne.s32.totalorder %s35, %s36
    %p50 = scmp.eq.s32.totalorder %s28, 1
    %p51 = por %p49, %p50
    %p53 = scmp.ne.s32.totalorder %s36, %s52
    %p54 = scmp.eq.s32.totalorder %s28, 0
    %p55 = por %p53, %p54
    %s57 = sadd.s32 %s56, 1
    %p60 = scmp.eq.s32.totalorder %s22, 1
    %p61 = scmp.ne.s32.totalorder %s56, %s58
    %p62 = scmp.eq.s32.totalorder %s22, 0
    %p63 = por %p61, %p62
    %p64 = scmp.ne.s32.totalorder %s56, %s58
    %p65 = scmp.eq.s32.totalorder %s27, 1
    %p66 = por %p64, %p65
    %p67 = scmp.ne.s32.totalorder %s58, %s59
    %p68 = scmp.eq.s32.totalorder %s27, 0
    %p69 = por %p67, %p68
    %p70 = scmp.ne.s32.totalorder %s58, %s59
    %p71 = scmp.eq.s32.totalorder %s28, 1
    %p72 = por %p70, %p71
    %p74 = scmp.ne.s32.totalorder %s59, %s73
    %p75 = scmp.eq.s32.totalorder %s28, 0
    %p76 = por %p74, %p75
    %s78 = sadd.s32 %s77, 1
    %p81 = scmp.eq.s32.totalorder %s22, 1
    %p82 = scmp.ne.s32.totalorder %s77, %s79
    %p83 = scmp.eq.s32.totalorder %s22, 0
    %p84 = por %p82, %p83
    %p85 = scmp.ne.s32.totalorder %s77, %s79
    %p86 = scmp.eq.s32.totalorder %s27, 1
    %p87 = por %p85, %p86
    %p88 = scmp.ne.s32.totalorder %s79, %s80
    %p89 = scmp.eq.s32.totalorder %s27, 0
    %p90 = por %p88, %p89
    %p91 = scmp.ne.s32.totalorder %s79, %s80
    %p92 = scmp.eq.s32.totalorder %s28, 1
    %p93 = por %p91, %p92
    %p95 = scmp.ne.s32.totalorder %s80, %s94
    %p96 = scmp.eq.s32.totalorder %s28, 0
    %p97 = por %p95, %p96
    %s99 = sadd.s32 %s98, 1
    %p102 = scmp.eq.s32.totalorder %s22, 1
    %p103 = scmp.ne.s32.totalorder %s98, %s100
    %p104 = scmp.eq.s32.totalorder %s22, 0
    %p105 = por %p103, %p104
    %p106 = scmp.ne.s32.totalorder %s98, %s100
    %p107 = scmp.eq.s32.totalorder %s27, 1
    %p108 = por %p106, %p107
    %p109 = scmp.ne.s32.totalorder %s100, %s101
    %p110 = scmp.eq.s32.totalorder %s27, 0
    %p111 = por %p109, %p110
    %p112 = scmp.ne.s32.totalorder %s100, %s101
    %p113 = scmp.eq.s32.totalorder %s28, 1
    %p114 = por %p112, %p113
    %p116 = scmp.ne.s32.totalorder %s101, %s115
    %p117 = scmp.eq.s32.totalorder %s28, 0
    %p118 = por %p116, %p117
    %s120 = sadd.s32 %s119, 1
    %p123 = scmp.eq.s32.totalorder %s22, 1
    %p124 = scmp.ne.s32.totalorder %s119, %s121
    %p125 = scmp.eq.s32.totalorder %s22, 0
    %p126 = por %p124, %p125
    %p127 = scmp.ne.s32.totalorder %s119, %s121
    %p128 = scmp.eq.s32.totalorder %s27, 1
    %p129 = por %p127, %p128
    %p130 = scmp.ne.s32.totalorder %s121, %s122
    %p131 = scmp.eq.s32.totalorder %s27, 0
    %p132 = por %p130, %p131
    %p133 = scmp.ne.s32.totalorder %s121, %s122
    %p134 = scmp.eq.s32.totalorder %s28, 1
    %p135 = por %p133, %p134
    %p137 = scmp.ne.s32.totalorder %s122, %s136
    %p138 = scmp.eq.s32.totalorder %s28, 0
    %p139 = por %p137, %p138
    %s141 = sadd.s32 %s140, 1
    %p144 = scmp.eq.s32.totalorder %s22, 1
    %p145 = scmp.ne.s32.totalorder %s140, %s142
    %p146 = scmp.eq.s32.totalorder %s22, 0
    %p147 = por %p145, %p146
    %p148 = scmp.ne.s32.totalorder %s140, %s142
    %p149 = scmp.eq.s32.totalorder %s27, 1
    %p150 = por %p148, %p149
    %p151 = scmp.ne.s32.totalorder %s142, %s143
    %p152 = scmp.eq.s32.totalorder %s27, 0
    %p153 = por %p151, %p152
    %p154 = scmp.ne.s32.totalorder %s142, %s143
    %p155 = scmp.eq.s32.totalorder %s28, 1
    %p156 = por %p154, %p155
    %p158 = scmp.ne.s32.totalorder %s143, %s157
    %p159 = scmp.eq.s32.totalorder %s28, 0
    %p160 = por %p158, %p159
    %s162 = sadd.s32 %s161, 1
    %p165 = scmp.eq.s32.totalorder %s22, 1
    %p166 = scmp.ne.s32.totalorder %s161, %s163
    %p167 = scmp.eq.s32.totalorder %s22, 0
    %p168 = por %p166, %p167
    %p169 = scmp.ne.s32.totalorder %s161, %s163
    %p170 = scmp.eq.s32.totalorder %s27, 1
    %p171 = por %p169, %p170
    %p172 = scmp.ne.s32.totalorder %s163, %s164
    %p173 = scmp.eq.s32.totalorder %s27, 0
    %p174 = por %p172, %p173
    %p175 = scmp.ne.s32.totalorder %s163, %s164
    %p176 = scmp.eq.s32.totalorder %s28, 1
    %p177 = por %p175, %p176
    %p179 = scmp.ne.s32.totalorder %s164, %s178
    %p180 = scmp.eq.s32.totalorder %s28, 0
    %p181 = por %p179, %p180
    %s183 = sadd.s32 %s182, 1
    %p186 = scmp.eq.s32.totalorder %s22, 1
    %p187 = scmp.ne.s32.totalorder %s182, %s184
    %p188 = scmp.eq.s32.totalorder %s22, 0
    %p189 = por %p187, %p188
    %p190 = scmp.ne.s32.totalorder %s182, %s184
    %p191 = scmp.eq.s32.totalorder %s27, 1
    %p192 = por %p190, %p191
    %p193 = scmp.ne.s32.totalorder %s184, %s185
    %p194 = scmp.eq.s32.totalorder %s27, 0
    %p195 = por %p193, %p194
    %p196 = scmp.ne.s32.totalorder %s184, %s185
    %p197 = scmp.eq.s32.totalorder %s28, 1
    %p198 = por %p196, %p197
    %p200 = scmp.ne.s32.totalorder %s185, %s199
    %p201 = scmp.eq.s32.totalorder %s28, 0
    %p202 = por %p200, %p201
    %s204 = sadd.s32 %s203, 1
    %p207 = scmp.eq.s32.totalorder %s22, 1
    %p208 = scmp.ne.s32.totalorder %s203, %s205
    %p209 = scmp.eq.s32.totalorder %s22, 0
    %p210 = por %p208, %p209
    %p211 = scmp.ne.s32.totalorder %s203, %s205
    %p212 = scmp.eq.s32.totalorder %s27, 1
    %p213 = por %p211, %p212
    %p214 = scmp.ne.s32.totalorder %s205, %s206
    %p215 = scmp.eq.s32.totalorder %s27, 0
    %p216 = por %p214, %p215
    %p217 = scmp.ne.s32.totalorder %s205, %s206
    %p218 = scmp.eq.s32.totalorder %s28, 1
    %p219 = por %p217, %p218
    %p221 = scmp.ne.s32.totalorder %s206, %s220
    %p222 = scmp.eq.s32.totalorder %s28, 0
    %p223 = por %p221, %p222
    %s225 = sadd.s32 %s224, 1
    %p228 = scmp.eq.s32.totalorder %s22, 1
    %p229 = scmp.ne.s32.totalorder %s224, %s226
    %p230 = scmp.eq.s32.totalorder %s22, 0
    %p231 = por %p229, %p230
    %p232 = scmp.ne.s32.totalorder %s224, %s226
    %p233 = scmp.eq.s32.totalorder %s27, 1
    %p234 = por %p232, %p233
    %p235 = scmp.ne.s32.totalorder %s226, %s227
    %p236 = scmp.eq.s32.totalorder %s27, 0
    %p237 = por %p235, %p236
    %p238 = scmp.ne.s32.totalorder %s226, %s227
    %p239 = scmp.eq.s32.totalorder %s28, 1
    %p240 = por %p238, %p239
    %p242 = scmp.ne.s32.totalorder %s227, %s241
    %p243 = scmp.eq.s32.totalorder %s28, 0
    %p244 = por %p242, %p243
    %s246 = sadd.s32 %s245, 1
    %p249 = scmp.eq.s32.totalorder %s22, 1
    %p250 = scmp.ne.s32.totalorder %s245, %s247
    %p251 = scmp.eq.s32.totalorder %s22, 0
    %p252 = por %p250, %p251
    %p253 = scmp.ne.s32.totalorder %s245, %s247
    %p254 = scmp.eq.s32.totalorder %s27, 1
    %p255 = por %p253, %p254
    %p256 = scmp.ne.s32.totalorder %s247, %s248
    %p257 = scmp.eq.s32.totalorder %s27, 0
    %p258 = por %p256, %p257
    %p259 = scmp.ne.s32.totalorder %s247, %s248
    %p260 = scmp.eq.s32.totalorder %s28, 1
    %p261 = por %p259, %p260
    %p263 = scmp.ne.s32.totalorder %s248, %s262
    %p264 = scmp.eq.s32.totalorder %s28, 0
    %p265 = por %p263, %p264
    %s267 = sadd.s32 %s266, 1
    %p270 = scmp.eq.s32.totalorder %s22, 1
    %p271 = scmp.ne.s32.totalorder %s266, %s268
    %p272 = scmp.eq.s32.totalorder %s22, 0
    %p273 = por %p271, %p272
    %p274 = scmp.ne.s32.totalorder %s266, %s268
    %p275 = scmp.eq.s32.totalorder %s27, 1
    %p276 = por %p274, %p275
    %p277 = scmp.ne.s32.totalorder %s268, %s269
    %p278 = scmp.eq.s32.totalorder %s27, 0
    %p279 = por %p277, %p278
    %p280 = scmp.ne.s32.totalorder %s268, %s269
    %p281 = scmp.eq.s32.totalorder %s28, 1
    %p282 = por %p280, %p281
    %p284 = scmp.ne.s32.totalorder %s269, %s283
    %p285 = scmp.eq.s32.totalorder %s28, 0
    %p286 = por %p284, %p285
    %s288 = sadd.s32 %s287, 1
    %p291 = scmp.eq.s32.totalorder %s22, 1
    %p292 = scmp.ne.s32.totalorder %s287, %s289
    %p293 = scmp.eq.s32.totalorder %s22, 0
    %p294 = por %p292, %p293
    %p295 = scmp.ne.s32.totalorder %s287, %s289
    %p296 = scmp.eq.s32.totalorder %s27, 1
    %p297 = por %p295, %p296
    %p298 = scmp.ne.s32.totalorder %s289, %s290
    %p299 = scmp.eq.s32.totalorder %s27, 0
    %p300 = por %p298, %p299
    %p301 = scmp.ne.s32.totalorder %s289, %s290
    %p302 = scmp.eq.s32.totalorder %s28, 1
    %p303 = por %p301, %p302
    %p305 = scmp.ne.s32.totalorder %s290, %s304
    %p306 = scmp.eq.s32.totalorder %s28, 0
    %p307 = por %p305, %p306
    %s309 = sadd.s32 %s308, 1
    %p312 = scmp.eq.s32.totalorder %s22, 1
    %p313 = scmp.ne.s32.totalorder %s308, %s310
    %p314 = scmp.eq.s32.totalorder %s22, 0
    %p315 = por %p313, %p314
    %p316 = scmp.ne.s32.totalorder %s308, %s310
    %p317 = scmp.eq.s32.totalorder %s27, 1
    %p318 = por %p316, %p317
    %p319 = scmp.ne.s32.totalorder %s310, %s311
    %p320 = scmp.eq.s32.totalorder %s27, 0
    %p321 = por %p319, %p320
    %p322 = scmp.ne.s32.totalorder %s310, %s311
    %p323 = scmp.eq.s32.totalorder %s28, 1
    %p324 = por %p322, %p323
    %p326 = scmp.ne.s32.totalorder %s311, %s325
    %p327 = scmp.eq.s32.totalorder %s28, 0
    %p328 = por %p326, %p327
    %s330 = sadd.s32 %s329, 1
    %p333 = scmp.eq.s32.totalorder %s22, 1
    %p334 = scmp.ne.s32.totalorder %s329, %s331
    %p335 = scmp.eq.s32.totalorder %s22, 0
    %p336 = por %p334, %p335
    %p337 = scmp.ne.s32.totalorder %s329, %s331
    %p338 = scmp.eq.s32.totalorder %s27, 1
    %p339 = por %p337, %p338
    %p340 = scmp.ne.s32.totalorder %s331, %s332
    %p341 = scmp.eq.s32.totalorder %s27, 0
    %p342 = por %p340, %p341
    %p343 = scmp.ne.s32.totalorder %s331, %s332
    %p344 = scmp.eq.s32.totalorder %s28, 1
    %p345 = por %p343, %p344
    %p347 = scmp.ne.s32.totalorder %s332, %s346
    %p348 = scmp.eq.s32.totalorder %s28, 0
    %p349 = por %p347, %p348
    %s350 = ssub.s32 %s22, %s29
    %p351 = scmp.eq.s32.totalorder %s350, 0
    %s353 = sadd.s32 %s352, 1
    %s354 = scalar_select %p351, %s352, %s353
    %p357 = pneg %p351
    %p358 = scmp.eq.s32.totalorder %s22, 1
    %p359 = por %p357, %p358
    %p360 = scmp.ne.s32.totalorder %s352, %s355
    %p361 = scmp.eq.s32.totalorder %s22, 0
    %p362 = por %p360, %p361
    %p363 = scmp.ne.s32.totalorder %s352, %s355
    %p364 = scmp.eq.s32.totalorder %s27, 1
    %p365 = por %p363, %p364
    %p366 = scmp.ne.s32.totalorder %s355, %s356
    %p367 = scmp.eq.s32.totalorder %s27, 0
    %p368 = por %p366, %p367
    %p369 = scmp.ne.s32.totalorder %s355, %s356
    %p370 = scmp.eq.s32.totalorder %s28, 1
    %p371 = por %p369, %p370
    %p373 = scmp.ne.s32.totalorder %s356, %s372
    %p374 = scmp.eq.s32.totalorder %s28, 0
    %p375 = por %p373, %p374
    %p376 = scmp.le.s32.totalorder 1, %s22
    %p377 = scmp.lt.s32.totalorder %s22, 3
    %p378 = pnand %p376, %p377
    %p379 = pneg %p378
    // Predicated region
    $region9: #{critic_forward.1} parent=5 // pred_check
      _
    $region10: #{critic_forward.1} parent=5 // pred_check_branch
      %381 = sbr.rel (%p378) target = $region12
    $region11: #{critic_forward.1} parent=5 // pred_region
      %s382 = ssub.s32 %s22, 1
      // Predicated region
      $region13: #{critic_forward.1} parent=11 // pred_check
        %p383 = pneg %p69
      $region14: #{critic_forward.1} parent=11 // pred_check_branch
        %385 = sbr.rel (%p383) target = $region16
      $region15: #{critic_forward.1} parent=11 // pred_region
        _
      $region16: #{critic_forward.1} parent=11 // pred_fallthru
        _
      // Predicated region
      $region17: #{critic_forward.1} parent=11 // pred_check
        %p386 = pneg %p90
      $region18: #{critic_forward.1} parent=11 // pred_check_branch
        %388 = sbr.rel (%p386) target = $region20
      $region19: #{critic_forward.1} parent=11 // pred_region
        _
      $region20: #{critic_forward.1} parent=11 // pred_fallthru
        _
      // Predicated region
      $region21: #{critic_forward.1} parent=11 // pred_check
        %p389 = pneg %p111
      $region22: #{critic_forward.1} parent=11 // pred_check_branch
        %391 = sbr.rel (%p389) target = $region24
      $region23: #{critic_forward.1} parent=11 // pred_region
        _
      $region24: #{critic_forward.1} parent=11 // pred_fallthru
        _
      // Predicated region
      $region25: #{critic_forward.1} parent=11 // pred_check
        %p392 = pneg %p132
      $region26: #{critic_forward.1} parent=11 // pred_check_branch
        %394 = sbr.rel (%p392) target = $region28
      $region27: #{critic_forward.1} parent=11 // pred_region
        _
      $region28: #{critic_forward.1} parent=11 // pred_fallthru
        _
      // Predicated region
      $region29: #{critic_forward.1} parent=11 // pred_check
        %p395 = pneg %p153
      $region30: #{critic_forward.1} parent=11 // pred_check_branch
        %397 = sbr.rel (%p395) target = $region32
      $region31: #{critic_forward.1} parent=11 // pred_region
        _
      $region32: #{critic_forward.1} parent=11 // pred_fallthru
        _
      // Predicated region
      $region33: #{critic_forward.1} parent=11 // pred_check
        %p398 = pneg %p174
      $region34: #{critic_forward.1} parent=11 // pred_check_branch
        %400 = sbr.rel (%p398) target = $region36
      $region35: #{critic_forward.1} parent=11 // pred_region
        _
      $region36: #{critic_forward.1} parent=11 // pred_fallthru
        _
      // Predicated region
      $region37: #{critic_forward.1} parent=11 // pred_check
        %p401 = pneg %p195
      $region38: #{critic_forward.1} parent=11 // pred_check_branch
        %403 = sbr.rel (%p401) target = $region40
      $region39: #{critic_forward.1} parent=11 // pred_region
        _
      $region40: #{critic_forward.1} parent=11 // pred_fallthru
        _
      // Predicated region
      $region41: #{critic_forward.1} parent=11 // pred_check
        %p404 = pneg %p216
      $region42: #{critic_forward.1} parent=11 // pred_check_branch
        %406 = sbr.rel (%p404) target = $region44
      $region43: #{critic_forward.1} parent=11 // pred_region
        _
      $region44: #{critic_forward.1} parent=11 // pred_fallthru
        _
      // Predicated region
      $region45: #{critic_forward.1} parent=11 // pred_check
        %p407 = pneg %p237
      $region46: #{critic_forward.1} parent=11 // pred_check_branch
        %409 = sbr.rel (%p407) target = $region48
      $region47: #{critic_forward.1} parent=11 // pred_region
        _
      $region48: #{critic_forward.1} parent=11 // pred_fallthru
        _
      // Predicated region
      $region49: #{critic_forward.1} parent=11 // pred_check
        %p410 = pneg %p258
      $region50: #{critic_forward.1} parent=11 // pred_check_branch
        %412 = sbr.rel (%p410) target = $region52
      $region51: #{critic_forward.1} parent=11 // pred_region
        _
      $region52: #{critic_forward.1} parent=11 // pred_fallthru
        _
      // Predicated region
      $region53: #{critic_forward.1} parent=11 // pred_check
        %p413 = pneg %p279
      $region54: #{critic_forward.1} parent=11 // pred_check_branch
        %415 = sbr.rel (%p413) target = $region56
      $region55: #{critic_forward.1} parent=11 // pred_region
        _
      $region56: #{critic_forward.1} parent=11 // pred_fallthru
        _
      // Predicated region
      $region57: #{critic_forward.1} parent=11 // pred_check
        %p416 = pneg %p300
      $region58: #{critic_forward.1} parent=11 // pred_check_branch
        %418 = sbr.rel (%p416) target = $region60
      $region59: #{critic_forward.1} parent=11 // pred_region
        _
      $region60: #{critic_forward.1} parent=11 // pred_fallthru
        _
      // Predicated region
      $region61: #{critic_forward.1} parent=11 // pred_check
        %p419 = pneg %p321
      $region62: #{critic_forward.1} parent=11 // pred_check_branch
        %421 = sbr.rel (%p419) target = $region64
      $region63: #{critic_forward.1} parent=11 // pred_region
        _
      $region64: #{critic_forward.1} parent=11 // pred_fallthru
        _
      // Predicated region
      $region65: #{critic_forward.1} parent=11 // pred_check
        %p422 = pneg %p342
      $region66: #{critic_forward.1} parent=11 // pred_check_branch
        %424 = sbr.rel (%p422) target = $region68
      $region67: #{critic_forward.1} parent=11 // pred_region
        _
      $region68: #{critic_forward.1} parent=11 // pred_fallthru
        _
    $region12: #{critic_forward.1} parent=5 // pred_fallthru
      _
    %p425 = scmp.lt.s32.totalorder %s22, 2
    // Predicated region
    $region69: #{critic_forward.1} parent=5 // pred_check
      %p426 = pneg %p425
    $region70: #{critic_forward.1} parent=5 // pred_check_branch
      %428 = sbr.rel (%p426) target = $region72
    $region71: #{critic_forward.1} parent=5 // pred_region
      // Predicated region
      $region73: #{critic_forward.1} parent=71 // pred_check
        %p429 = pneg %p42
      $region74: #{critic_forward.1} parent=71 // pred_check_branch
        %431 = sbr.rel (%p429) target = $region76
      $region75: #{critic_forward.1} parent=71 // pred_region
        %p432 = scmp.lt.s32.totalorder %s22, 1
        %s433 = scalar_select %p432, %s22, 1
        %s434 = smul.addr %s433, 24
        %s435 = smul.addr %s434, 4
        %s436 = scalar_lea.vmem %s0, %s435
      $region76: #{critic_forward.1} parent=71 // pred_fallthru
        _
    $region72: #{critic_forward.1} parent=5 // pred_fallthru
      _
    %p437 = scmp.le.s32.totalorder 1, %s22
    %p438 = scmp.lt.s32.totalorder %s22, 3
    %p439 = pnand %p437, %p438
    %p440 = pneg %p439
    // Predicated region
    $region77: #{critic_forward.1} parent=5 // pred_check
      _
    $region78: #{critic_forward.1} parent=5 // pred_check_branch
      %442 = sbr.rel (%p439) target = $region80
    $region79: #{critic_forward.1} parent=5 // pred_region
      %s443 = ssub.s32 %s22, 1
      %p444 = scmp.lt.s32.totalorder %s27, 1
      %s445 = scalar_select %p444, %s27, 1
      %s446 = smul.addr %s445, 24
      %s447 = smul.addr %s446, 4
      %s448 = scalar_lea.vmem %s0, %s447
      %p449 = pneg %p48
      %p450 = pneg %p45
      %p451 = pneg %p69
      %p452 = pneg %p66
      %p453 = pneg %p90
      %p454 = pneg %p87
      %p455 = pneg %p111
      %p456 = pneg %p108
      %p457 = pneg %p132
      %p458 = pneg %p129
      %p459 = pneg %p153
      %p460 = pneg %p150
      %p461 = pneg %p174
      %p462 = pneg %p171
      %p463 = pneg %p195
      %p464 = pneg %p192
      %p465 = pneg %p216
      %p466 = pneg %p213
      %p467 = pneg %p237
      %p468 = pneg %p234
      %p469 = pneg %p258
      %p470 = pneg %p255
      %p471 = pneg %p279
      %p472 = pneg %p276
      %p473 = pneg %p300
      %p474 = pneg %p297
      %p475 = pneg %p321
      %p476 = pneg %p318
      %p477 = pneg %p342
      %p478 = pneg %p339
      %p479 = pneg %p368
      %p480 = pneg %p365
      %p481 = scmp.lt.s32.totalorder %s27, 1
      %s482 = scalar_select %p481, %s27, 1
      %s483 = scalar_lea.vmem %s15, %s482
      %p484 = scmp.lt.s32.totalorder %s27, 1
      %s485 = scalar_select %p484, %s27, 1
      %s486 = smul.addr %s485, 24
      %s487 = smul.addr %s486, 4
      %s488 = scalar_lea.vmem %s0, %s487
      %p489 = scmp.lt.s32.totalorder %s27, 1
      %s490 = scalar_select %p489, %s27, 1
      %s491 = scalar_lea.vmem %s15, %s490
      %v493 = vld [vmem:[%s488] sm:$0xf]
      %v494 = vld [vmem:[%s488 + $0x4] sm:$0xf]
      %v495 = vld [vmem:[%s488 + $0x8] sm:$0xf]
      %v496 = vld [vmem:[%s488 + $0xc] sm:$0xf]
      %v497 = vld [vmem:[%s488 + $0x10] sm:$0xf]
      %v498 = vld [vmem:[%s488 + $0x14] sm:$0xf]
      %v499 = vld [vmem:[%s488 + $0x18] sm:$0xf]
      %v500 = vld [vmem:[%s488 + $0x1c] sm:$0xf]
      %v501 = vld [vmem:[%s488 + $0x20] sm:$0xf]
      %v502 = vld [vmem:[%s488 + $0x24] sm:$0xf]
      %v503 = vld [vmem:[%s488 + $0x28] sm:$0xf]
      %v504 = vld [vmem:[%s488 + $0x2c] sm:$0xf]
      %v505 = vld [vmem:[%s488 + $0x30] sm:$0xf]
      %v506 = vld [vmem:[%s488 + $0x34] sm:$0xf]
      %v507 = vld [vmem:[%s488 + $0x38] sm:$0xf]
      %v508 = vld [vmem:[%s488 + $0x3c] sm:$0xf]
      %v509 = vld [vmem:[%s488 + $0x40] sm:$0xf]
      %v510 = vld [vmem:[%s488 + $0x44] sm:$0xf]
      %v511 = vld [vmem:[%s488 + $0x48] sm:$0xf]
      %v512 = vld [vmem:[%s488 + $0x4c] sm:$0xf]
      %v513 = vld [vmem:[%s488 + $0x50] sm:$0xf]
      %v514 = vld [vmem:[%s488 + $0x54] sm:$0xf]
      %v515 = vld [vmem:[%s488 + $0x58] sm:$0xf]
      %v516 = vld [vmem:[%s488 + $0x5c] sm:$0xf]
      %v517 = vld [vmem:[%s2] sm:$0xf]
      %v518 = vld [vmem:[%s2 + $0x4] sm:$0xf]
      %v519 = vld [vmem:[%s2 + $0x8] sm:$0xf]
      %v520 = vld [vmem:[%s2 + $0xc] sm:$0xf]
      %v521 = vld [vmem:[%s2 + $0x10] sm:$0xf]
      %v522 = vld [vmem:[%s2 + $0x14] sm:$0xf]
      %v523 = vld [vmem:[%s2 + $0x18] sm:$0xf]
      %v524 = vld [vmem:[%s2 + $0x1c] sm:$0xf]
      %v549 = vunpack.c.l.b16 %v493
      %v550 = vunpack.c.l.b16 %v494
      %v551 = vunpack.c.l.b16 %v495
      %v552 = vunpack.c.l.b16 %v496
      %v553 = vunpack.c.l.b16 %v497
      %v554 = vunpack.c.l.b16 %v498
      %v555 = vunpack.c.l.b16 %v499
      %v556 = vunpack.c.l.b16 %v500
      %v557 = vunpack.c.l.b16 %v501
      %v558 = vunpack.c.l.b16 %v502
      %v559 = vunpack.c.l.b16 %v503
      %v560 = vunpack.c.l.b16 %v504
      %v561 = vunpack.c.l.b16 %v505
      %v562 = vunpack.c.l.b16 %v506
      %v563 = vunpack.c.l.b16 %v507
      %v564 = vunpack.c.l.b16 %v508
      %v565 = vunpack.c.l.b16 %v509
      %v566 = vunpack.c.l.b16 %v510
      %v567 = vunpack.c.l.b16 %v511
      %v568 = vunpack.c.l.b16 %v512
      %v569 = vunpack.c.l.b16 %v513
      %v570 = vunpack.c.l.b16 %v514
      %v571 = vunpack.c.l.b16 %v515
      %v572 = vunpack.c.l.b16 %v516
      %v573 = vpack.c.b16 %v550, %v549
      %v574 = vpack.c.b16 %v552, %v551
      %v575 = vpack.c.b16 %v554, %v553
      %v576 = vpack.c.b16 %v556, %v555
      %v577 = vpack.c.b16 %v558, %v557
      %v578 = vpack.c.b16 %v560, %v559
      %v579 = vpack.c.b16 %v562, %v561
      %v580 = vpack.c.b16 %v564, %v563
      %v581 = vpack.c.b16 %v566, %v565
      %v582 = vpack.c.b16 %v568, %v567
      %v583 = vpack.c.b16 %v570, %v569
      %v584 = vpack.c.b16 %v572, %v571
      %v593 = vunpack.c.l.b16 %v517
      %v594 = vunpack.c.l.b16 %v518
      %v595 = vunpack.c.l.b16 %v519
      %v596 = vunpack.c.l.b16 %v520
      %v597 = vunpack.c.l.b16 %v521
      %v598 = vunpack.c.l.b16 %v522
      %v599 = vunpack.c.l.b16 %v523
      %v600 = vunpack.c.l.b16 %v524
      %v601 = vpack.c.b16 %v594, %v593
      %v602 = vpack.c.b16 %v596, %v595
      %v603 = vpack.c.b16 %v598, %v597
      %v604 = vpack.c.b16 %v600, %v599
      %vm609 = vcmask 523264
      %v611 = vsel %vm609, %v573, 0
      %v614 = vsel %vm609, %v574, 0
      %v617 = vsel %vm609, %v575, 0
      %v620 = vsel %vm609, %v576, 0
      %v623 = vsel %vm609, %v577, 0
      %v626 = vsel %vm609, %v578, 0
      %v629 = vsel %vm609, %v579, 0
      %v632 = vsel %vm609, %v580, 0
      %v635 = vsel %vm609, %v581, 0
      %v638 = vsel %vm609, %v582, 0
      %v641 = vsel %vm609, %v583, 0
      %v644 = vsel %vm609, %v584, 0
      %646 = vmatprep.subr.bf16.mxu0 0
      %647 = vmatpush1.bf16.msra.mxu0 %v601
      %648 = vmatprep.subr.bf16.mxu0 0
      %649 = vmatpush1.bf16.msra.mxu0 %v602
      %650 = vmatprep.subr.bf16.mxu0 0
      %651 = vmatpush1.bf16.msra.mxu0 %v603
      %652 = vmatprep.subr.bf16.mxu0 0
      %653 = vmatpush1.bf16.msra.mxu0 %v604
      %654 = vmatprep.subr.bf16.mxu0 0
      %655 = vmatpush1.bf16.msra.mxu0 0
      %656 = vmatprep.subr.bf16.mxu0 0
      %657 = vmatpush1.bf16.msra.mxu0 0
      %658 = vmatprep.subr.bf16.mxu0 0
      %659 = vmatpush1.bf16.msra.mxu0 0
      %660 = vmatprep.subr.bf16.mxu0 0
      %661 = vmatpush1.bf16.msra.mxu0 0
      %662 = vmatprep.subr.bf16.mxu0 0
      %663 = vmatpush1.bf16.msra.mxu0 0
      %664 = vmatprep.subr.bf16.mxu0 0
      %665 = vmatpush1.bf16.msra.mxu0 0
      %666 = vmatprep.subr.bf16.mxu0 0
      %667 = vmatpush1.bf16.msra.mxu0 0
      %668 = vmatprep.subr.bf16.mxu0 0
      %669 = vmatpush1.bf16.msra.mxu0 0
      %670 = vmatprep.subr.bf16.mxu0 0
      %671 = vmatpush1.bf16.msra.mxu0 0
      %672 = vmatprep.subr.bf16.mxu0 0
      %673 = vmatpush1.bf16.msra.mxu0 0
      %674 = vmatprep.subr.bf16.mxu0 0
      %675 = vmatpush1.bf16.msra.mxu0 0
      %676 = vmatprep.subr.bf16.mxu0 0
      %677 = vmatpush1.bf16.msra.mxu0 0
      %678 = vmatprep.mubr.bf16.mxu0 0
      %679 = vmatmul.mubr.bf16.gmra.mrb[0].mxu0 %v611
      %v680 = vpop.f32.mrb[0].mxu0
      %v681 = vadd.f32 0.0, %v680
      %v682 = vpop.f32.mrb[0].mxu0
      %v683 = vpop.f32.mrb[0].mxu0
      %v684 = vadd.f32 0.0, %v683
      %v685 = vpop.f32.mrb[0].mxu0
      %686 = vmatprep.mubr.bf16.mxu0 0
      %687 = vmatmul.mubr.bf16.gmra.mrb[0].mxu0 %v614
      %v688 = vpop.f32.mrb[0].mxu0
      %v689 = vadd.f32 0.0, %v688
      %v690 = vpop.f32.mrb[0].mxu0
      %v691 = vpop.f32.mrb[0].mxu0
      %v692 = vadd.f32 0.0, %v691
      %v693 = vpop.f32.mrb[0].mxu0
      %694 = vmatprep.mubr.bf16.mxu0 0
      %695 = vmatmul.mubr.bf16.gmra.mrb[0].mxu0 %v617
      %v696 = vpop.f32.mrb[0].mxu0
      %v697 = vadd.f32 0.0, %v696
      %v698 = vpop.f32.mrb[0].mxu0
      %v699 = vpop.f32.mrb[0].mxu0
      %v700 = vadd.f32 0.0, %v699
      %v701 = vpop.f32.mrb[0].mxu0
      %702 = vmatprep.mubr.bf16.mxu0 0
      %703 = vmatmul.mubr.bf16.gmra.mrb[0].mxu0 %v620
      %v704 = vpop.f32.mrb[0].mxu0
      %v705 = vadd.f32 0.0, %v704
      %v706 = vpop.f32.mrb[0].mxu0
      %v707 = vpop.f32.mrb[0].mxu0
      %v708 = vadd.f32 0.0, %v707
      %v709 = vpop.f32.mrb[0].mxu0
      %710 = vmatprep.mubr.bf16.mxu0 0
      %711 = vmatmul.mubr.bf16.gmra.mrb[0].mxu0 %v623
      %v712 = vpop.f32.mrb[0].mxu0
      %v713 = vadd.f32 0.0, %v712
      %v714 = vpop.f32.mrb[0].mxu0
      %v715 = vpop.f32.mrb[0].mxu0
      %v716 = vadd.f32 0.0, %v715
      %v717 = vpop.f32.mrb[0].mxu0
      %718 = vmatprep.mubr.bf16.mxu0 0
      %719 = vmatmul.mubr.bf16.gmra.mrb[0].mxu0 %v626
      %v720 = vpop.f32.mrb[0].mxu0
      %v721 = vadd.f32 0.0, %v720
      %v722 = vpop.f32.mrb[0].mxu0
      %v723 = vpop.f32.mrb[0].mxu0
      %v724 = vadd.f32 0.0, %v723
      %v725 = vpop.f32.mrb[0].mxu0
      %726 = vmatprep.mubr.bf16.mxu0 0
      %727 = vmatmul.mubr.bf16.gmra.mrb[0].mxu0 %v629
      %v728 = vpop.f32.mrb[0].mxu0
      %v729 = vadd.f32 0.0, %v728
      %v730 = vpop.f32.mrb[0].mxu0
      %v731 = vpop.f32.mrb[0].mxu0
      %v732 = vadd.f32 0.0, %v731
      %v733 = vpop.f32.mrb[0].mxu0
      %734 = vmatprep.mubr.bf16.mxu0 0
      %735 = vmatmul.mubr.bf16.gmra.mrb[0].mxu0 %v632
      %v736 = vpop.f32.mrb[0].mxu0
      %v737 = vadd.f32 0.0, %v736
      %v738 = vpop.f32.mrb[0].mxu0
      %v739 = vpop.f32.mrb[0].mxu0
      %v740 = vadd.f32 0.0, %v739
      %v741 = vpop.f32.mrb[0].mxu0
      %742 = vmatprep.mubr.bf16.mxu0 0
      %743 = vmatmul.mubr.bf16.gmra.mrb[0].mxu0 %v635
      %v744 = vpop.f32.mrb[0].mxu0
      %v745 = vadd.f32 0.0, %v744
      %v746 = vpop.f32.mrb[0].mxu0
      %v747 = vpop.f32.mrb[0].mxu0
      %v748 = vadd.f32 0.0, %v747
      %v749 = vpop.f32.mrb[0].mxu0
      %750 = vmatprep.mubr.bf16.mxu0 0
      %751 = vmatmul.mubr.bf16.gmra.mrb[0].mxu0 %v638
      %v752 = vpop.f32.mrb[0].mxu0
      %v753 = vadd.f32 0.0, %v752
      %v754 = vpop.f32.mrb[0].mxu0
      %v755 = vpop.f32.mrb[0].mxu0
      %v756 = vadd.f32 0.0, %v755
      %v757 = vpop.f32.mrb[0].mxu0
      %758 = vmatprep.mubr.bf16.mxu0 0
      %759 = vmatmul.mubr.bf16.gmra.mrb[0].mxu0 %v641
      %v760 = vpop.f32.mrb[0].mxu0
      %v761 = vadd.f32 0.0, %v760
      %v762 = vpop.f32.mrb[0].mxu0
      %v763 = vpop.f32.mrb[0].mxu0
      %v764 = vadd.f32 0.0, %v763
      %v765 = vpop.f32.mrb[0].mxu0
      %766 = vmatprep.mubr.bf16.mxu0 0
      %767 = vmatmul.mubr.bf16.gmra.mrb[0].mxu0 %v644
      %v768 = vpop.f32.mrb[0].mxu0
      %v769 = vadd.f32 0.0, %v768
      %v770 = vpop.f32.mrb[0].mxu0
      %v771 = vpop.f32.mrb[0].mxu0
      %v772 = vadd.f32 0.0, %v771
      %v773 = vpop.f32.mrb[0].mxu0
      %774 = vdwg.mxu0
      %v775 = vpack.c.bf16 %v684, %v681
      %v776 = vpack.c.bf16 %v692, %v689
      %v777 = vpack.c.bf16 %v700, %v697
      %v778 = vpack.c.bf16 %v708, %v705
      %v779 = vpack.c.bf16 %v716, %v713
      %v780 = vpack.c.bf16 %v724, %v721
      %v781 = vpack.c.bf16 %v732, %v729
      %v782 = vpack.c.bf16 %v740, %v737
      %v783 = vpack.c.bf16 %v748, %v745
      %v784 = vpack.c.bf16 %v756, %v753
      %v785 = vpack.c.bf16 %v764, %v761
      %v786 = vpack.c.bf16 %v772, %v769
      %v787 = vld [vmem:[%s1] sm:$0xff]
      %v788 = vld [vmem:[%s1 + $0x8] sm:$0xff]
      %v789 = vld [vmem:[%s1 + $0x10] sm:$0xff]
      %v790 = vld [vmem:[%s1 + $0x18] sm:$0xff]
      %v791 = vld [vmem:[%s1 + $0x20] sm:$0xff]
      %v792 = vld [vmem:[%s1 + $0x28] sm:$0xff]
      %v793 = vld [vmem:[%s1 + $0x30] sm:$0xff]
      %v794 = vld [vmem:[%s1 + $0x38] sm:$0xff]
      %v795 = vld [vmem:[%s1 + $0x40] sm:$0xff]
      %v796 = vld [vmem:[%s1 + $0x48] sm:$0xff]
      %v797 = vld [vmem:[%s1 + $0x50] sm:$0xff]
      %v798 = vld [vmem:[%s1 + $0x58] sm:$0xff]
      %v799 = vld [vmem:[%s1 + $0x60] sm:$0xff]
      %v800 = vld [vmem:[%s1 + $0x68] sm:$0xff]
      %v801 = vld [vmem:[%s1 + $0x70] sm:$0xff]
      %v802 = vld [vmem:[%s1 + $0x78] sm:$0xff]
      %s803 = scalar_lea.vmem %s2, 32
      %v804 = vld [vmem:[%s803] sm:$0xf]
      %v805 = vld [vmem:[%s803 + $0x4] sm:$0xf]
      %v806 = vld [vmem:[%s803 + $0x8] sm:$0xf]
      %v807 = vld [vmem:[%s803 + $0xc] sm:$0xf]
      %v808 = vld [vmem:[%s803 + $0x10] sm:$0xf]
      %v809 = vld [vmem:[%s803 + $0x14] sm:$0xf]
      %v810 = vld [vmem:[%s803 + $0x18] sm:$0xf]
      %v811 = vld [vmem:[%s803 + $0x1c] sm:$0xf]
      %v820 = vunpack.c.l.b16 %v804
      %v821 = vunpack.c.l.b16 %v805
      %v822 = vunpack.c.l.b16 %v806
      %v823 = vunpack.c.l.b16 %v807
      %v824 = vunpack.c.l.b16 %v808
      %v825 = vunpack.c.l.b16 %v809
      %v826 = vunpack.c.l.b16 %v810
      %v827 = vunpack.c.l.b16 %v811
      %v828 = vpack.c.b16 %v821, %v820
      %v829 = vpack.c.b16 %v823, %v822
      %v830 = vpack.c.b16 %v825, %v824
      %v831 = vpack.c.b16 %v827, %v826
      %836 = vmatprep.subr.bf16.mxu0 0
      %837 = vmatpush1.bf16.msra.mxu0 %v828
      %838 = vmatprep.subr.bf16.mxu0 0
      %839 = vmatpush1.bf16.msra.mxu0 %v829
      %840 = vmatprep.subr.bf16.mxu0 0
      %841 = vmatpush1.bf16.msra.mxu0 %v830
      %842 = vmatprep.subr.bf16.mxu0 0
      %843 = vmatpush1.bf16.msra.mxu0 %v831
      %844 = vmatprep.subr.bf16.mxu0 0
      %845 = vmatpush1.bf16.msra.mxu0 0
      %846 = vmatprep.subr.bf16.mxu0 0
      %847 = vmatpush1.bf16.msra.mxu0 0
      %848 = vmatprep.subr.bf16.mxu0 0
      %849 = vmatpush1.bf16.msra.mxu0 0
      %850 = vmatprep.subr.bf16.mxu0 0
      %851 = vmatpush1.bf16.msra.mxu0 0
      %852 = vmatprep.subr.bf16.mxu0 0
      %853 = vmatpush1.bf16.msra.mxu0 0
      %854 = vmatprep.subr.bf16.mxu0 0
      %855 = vmatpush1.bf16.msra.mxu0 0
      %856 = vmatprep.subr.bf16.mxu0 0
      %857 = vmatpush1.bf16.msra.mxu0 0
      %858 = vmatprep.subr.bf16.mxu0 0
      %859 = vmatpush1.bf16.msra.mxu0 0
      %860 = vmatprep.subr.bf16.mxu0 0
      %861 = vmatpush1.bf16.msra.mxu0 0
      %862 = vmatprep.subr.bf16.mxu0 0
      %863 = vmatpush1.bf16.msra.mxu0 0
      %864 = vmatprep.subr.bf16.mxu0 0
      %865 = vmatpush1.bf16.msra.mxu0 0
      %866 = vmatprep.subr.bf16.mxu0 0
      %867 = vmatpush1.bf16.msra.mxu0 0
      %868 = vmatprep.mubr.bf16.mxu0 0
      %869 = vmatmul.mubr.bf16.gmra.mrb[0].mxu0 %v611
      %v870 = vpop.f32.mrb[0].mxu0
      %v871 = vadd.f32 0.0, %v870
      %v872 = vpop.f32.mrb[0].mxu0
      %v873 = vpop.f32.mrb[0].mxu0
      %v874 = vadd.f32 0.0, %v873
      %v875 = vpop.f32.mrb[0].mxu0
      %876 = vmatprep.mubr.bf16.mxu0 0
      %877 = vmatmul.mubr.bf16.gmra.mrb[0].mxu0 %v614
      %v878 = vpop.f32.mrb[0].mxu0
      %v879 = vadd.f32 0.0, %v878
      %v880 = vpop.f32.mrb[0].mxu0
      %v881 = vpop.f32.mrb[0].mxu0
      %v882 = vadd.f32 0.0, %v881
      %v883 = vpop.f32.mrb[0].mxu0
      %884 = vmatprep.mubr.bf16.mxu0 0
      %885 = vmatmul.mubr.bf16.gmra.mrb[0].mxu0 %v617
      %v886 = vpop.f32.mrb[0].mxu0
      %v887 = vadd.f32 0.0, %v886
      %v888 = vpop.f32.mrb[0].mxu0
      %v889 = vpop.f32.mrb[0].mxu0
      %v890 = vadd.f32 0.0, %v889
      %v891 = vpop.f32.mrb[0].mxu0
      %892 = vmatprep.mubr.bf16.mxu0 0
      %893 = vmatmul.mubr.bf16.gmra.mrb[0].mxu0 %v620
      %v894 = vpop.f32.mrb[0].mxu0
      %v895 = vadd.f32 0.0, %v894
      %v896 = vpop.f32.mrb[0].mxu0
      %v897 = vpop.f32.mrb[0].mxu0
      %v898 = vadd.f32 0.0, %v897
      %v899 = vpop.f32.mrb[0].mxu0
      %900 = vmatprep.mubr.bf16.mxu0 0
      %901 = vmatmul.mubr.bf16.gmra.mrb[0].mxu0 %v623
      %v902 = vpop.f32.mrb[0].mxu0
      %v903 = vadd.f32 0.0, %v902
      %v904 = vpop.f32.mrb[0].mxu0
      %v905 = vpop.f32.mrb[0].mxu0
      %v906 = vadd.f32 0.0, %v905
      %v907 = vpop.f32.mrb[0].mxu0
      %908 = vmatprep.mubr.bf16.mxu0 0
      %909 = vmatmul.mubr.bf16.gmra.mrb[0].mxu0 %v626
      %v910 = vpop.f32.mrb[0].mxu0
      %v911 = vadd.f32 0.0, %v910
      %v912 = vpop.f32.mrb[0].mxu0
      %v913 = vpop.f32.mrb[0].mxu0
      %v914 = vadd.f32 0.0, %v913
      %v915 = vpop.f32.mrb[0].mxu0
      %916 = vmatprep.mubr.bf16.mxu0 0
      %917 = vmatmul.mubr.bf16.gmra.mrb[0].mxu0 %v629
      %v918 = vpop.f32.mrb[0].mxu0
      %v919 = vadd.f32 0.0, %v918
      %v920 = vpop.f32.mrb[0].mxu0
      %v921 = vpop.f32.mrb[0].mxu0
      %v922 = vadd.f32 0.0, %v921
      %v923 = vpop.f32.mrb[0].mxu0
      %924 = vmatprep.mubr.bf16.mxu0 0
      %925 = vmatmul.mubr.bf16.gmra.mrb[0].mxu0 %v632
      %v926 = vpop.f32.mrb[0].mxu0
      %v927 = vadd.f32 0.0, %v926
      %v928 = vpop.f32.mrb[0].mxu0
      %v929 = vpop.f32.mrb[0].mxu0
      %v930 = vadd.f32 0.0, %v929
      %v931 = vpop.f32.mrb[0].mxu0
      %932 = vmatprep.mubr.bf16.mxu0 0
      %933 = vmatmul.mubr.bf16.gmra.mrb[0].mxu0 %v635
      %v934 = vpop.f32.mrb[0].mxu0
      %v935 = vadd.f32 0.0, %v934
      %v936 = vpop.f32.mrb[0].mxu0
      %v937 = vpop.f32.mrb[0].mxu0
      %v938 = vadd.f32 0.0, %v937
      %v939 = vpop.f32.mrb[0].mxu0
      %940 = vmatprep.mubr.bf16.mxu0 0
      %941 = vmatmul.mubr.bf16.gmra.mrb[0].mxu0 %v638
      %v942 = vpop.f32.mrb[0].mxu0
      %v943 = vadd.f32 0.0, %v942
      %v944 = vpop.f32.mrb[0].mxu0
      %v945 = vpop.f32.mrb[0].mxu0
      %v946 = vadd.f32 0.0, %v945
      %v947 = vpop.f32.mrb[0].mxu0
      %948 = vmatprep.mubr.bf16.mxu0 0
      %949 = vmatmul.mubr.bf16.gmra.mrb[0].mxu0 %v641
      %v950 = vpop.f32.mrb[0].mxu0
      %v951 = vadd.f32 0.0, %v950
      %v952 = vpop.f32.mrb[0].mxu0
      %v953 = vpop.f32.mrb[0].mxu0
      %v954 = vadd.f32 0.0, %v953
      %v955 = vpop.f32.mrb[0].mxu0
      %956 = vmatprep.mubr.bf16.mxu0 0
      %957 = vmatmul.mubr.bf16.gmra.mrb[0].mxu0 %v644
      %v958 = vpop.f32.mrb[0].mxu0
      %v959 = vadd.f32 0.0, %v958
      %v960 = vpop.f32.mrb[0].mxu0
      %v961 = vpop.f32.mrb[0].mxu0
      %v962 = vadd.f32 0.0, %v961
      %v963 = vpop.f32.mrb[0].mxu0
      %964 = vdwg.mxu0
      %v965 = vpack.c.bf16 %v874, %v871
      %v966 = vpack.c.bf16 %v882, %v879
      %v967 = vpack.c.bf16 %v890, %v887
      %v968 = vpack.c.bf16 %v898, %v895
      %v969 = vpack.c.bf16 %v906, %v903
      %v970 = vpack.c.bf16 %v914, %v911
      %v971 = vpack.c.bf16 %v922, %v919
      %v972 = vpack.c.bf16 %v930, %v927
      %v973 = vpack.c.bf16 %v938, %v935
      %v974 = vpack.c.bf16 %v946, %v943
      %v975 = vpack.c.bf16 %v954, %v951
      %v976 = vpack.c.bf16 %v962, %v959
      %s977 = scalar_lea.vmem %s1, 128
      %v978 = vld [vmem:[%s977] sm:$0xff]
      %v979 = vld [vmem:[%s977 + $0x8] sm:$0xff]
      %v980 = vld [vmem:[%s977 + $0x10] sm:$0xff]
      %v981 = vld [vmem:[%s977 + $0x18] sm:$0xff]
      %v982 = vld [vmem:[%s977 + $0x20] sm:$0xff]
      %v983 = vld [vmem:[%s977 + $0x28] sm:$0xff]
      %v984 = vld [vmem:[%s977 + $0x30] sm:$0xff]
      %v985 = vld [vmem:[%s977 + $0x38] sm:$0xff]
      %v986 = vld [vmem:[%s977 + $0x40] sm:$0xff]
      %v987 = vld [vmem:[%s977 + $0x48] sm:$0xff]
      %v988 = vld [vmem:[%s977 + $0x50] sm:$0xff]
      %v989 = vld [vmem:[%s977 + $0x58] sm:$0xff]
      %v990 = vld [vmem:[%s977 + $0x60] sm:$0xff]
      %v991 = vld [vmem:[%s977 + $0x68] sm:$0xff]
      %v992 = vld [vmem:[%s977 + $0x70] sm:$0xff]
      %v993 = vld [vmem:[%s977 + $0x78] sm:$0xff]
      %v1010 = vunpack.c.l.b16 %v978
      %v1011 = vunpack.c.h.b16 %v978
      %v1012 = vunpack.c.l.b16 %v979
      %v1013 = vunpack.c.h.b16 %v979
      %v1014 = vunpack.c.l.b16 %v980
      %v1015 = vunpack.c.h.b16 %v980
      %v1016 = vunpack.c.l.b16 %v981
      %v1017 = vunpack.c.h.b16 %v981
      %v1018 = vunpack.c.l.b16 %v982
      %v1019 = vunpack.c.h.b16 %v982
      %v1020 = vunpack.c.l.b16 %v983
      %v1021 = vunpack.c.h.b16 %v983
      %v1022 = vunpack.c.l.b16 %v984
      %v1023 = vunpack.c.h.b16 %v984
      %v1024 = vunpack.c.l.b16 %v985
      %v1025 = vunpack.c.h.b16 %v985
      %v1026 = vunpack.c.l.b16 %v986
      %v1027 = vunpack.c.h.b16 %v986
      %v1028 = vunpack.c.l.b16 %v987
      %v1029 = vunpack.c.h.b16 %v987
      %v1030 = vunpack.c.l.b16 %v988
      %v1031 = vunpack.c.h.b16 %v988
      %v1032 = vunpack.c.l.b16 %v989
      %v1033 = vunpack.c.h.b16 %v989
      %v1034 = vunpack.c.l.b16 %v990
      %v1035 = vunpack.c.h.b16 %v990
      %v1036 = vunpack.c.l.b16 %v991
      %v1037 = vunpack.c.h.b16 %v991
      %v1038 = vunpack.c.l.b16 %v992
      %v1039 = vunpack.c.h.b16 %v992
      %v1040 = vunpack.c.l.b16 %v993
      %v1041 = vunpack.c.h.b16 %v993
      %v1042 = vpack.c.b16 %v1012, %v1010
      %v1043 = vpack.c.b16 %v1013, %v1011
      %v1044 = vpack.c.b16 %v1016, %v1014
      %v1045 = vpack.c.b16 %v1017, %v1015
      %v1046 = vpack.c.b16 %v1020, %v1018
      %v1047 = vpack.c.b16 %v1021, %v1019
      %v1048 = vpack.c.b16 %v1024, %v1022
      %v1049 = vpack.c.b16 %v1025, %v1023
      %v1050 = vpack.c.b16 %v1028, %v1026
      %v1051 = vpack.c.b16 %v1029, %v1027
      %v1052 = vpack.c.b16 %v1032, %v1030
      %v1053 = vpack.c.b16 %v1033, %v1031
      %v1054 = vpack.c.b16 %v1036, %v1034
      %v1055 = vpack.c.b16 %v1037, %v1035
      %v1056 = vpack.c.b16 %v1040, %v1038
      %v1057 = vpack.c.b16 %v1041, %v1039
      %v1067 = vsel %vm609, %v1043, 0
      %v1070 = vsel %vm609, %v1045, 0
      %v1073 = vsel %vm609, %v1047, 0
      %v1076 = vsel %vm609, %v1049, 0
      %v1079 = vsel %vm609, %v1051, 0
      %v1082 = vsel %vm609, %v1053, 0
      %v1085 = vsel %vm609, %v1055, 0
      %v1088 = vsel %vm609, %v1057, 0
      %1090 = vmatprep.subr.bf16.mxu0 0
      %1091 = vmatpush1.bf16.msra.mxu0 %v965
      %1092 = vmatprep.subr.bf16.mxu0 0
      %1093 = vmatpush1.bf16.msra.mxu0 %v966
      %1094 = vmatprep.subr.bf16.mxu0 0
      %1095 = vmatpush1.bf16.msra.mxu0 %v967
      %1096 = vmatprep.subr.bf16.mxu0 0
      %1097 = vmatpush1.bf16.msra.mxu0 %v968
      %1098 = vmatprep.subr.bf16.mxu0 0
      %1099 = vmatpush1.bf16.msra.mxu0 %v969
      %1100 = vmatprep.subr.bf16.mxu0 0
      %1101 = vmatpush1.bf16.msra.mxu0 %v970
      %1102 = vmatprep.subr.bf16.mxu0 0
      %1103 = vmatpush1.bf16.msra.mxu0 %v971
      %1104 = vmatprep.subr.bf16.mxu0 0
      %1105 = vmatpush1.bf16.msra.mxu0 %v972
      %1106 = vmatprep.subr.bf16.mxu0 0
      %1107 = vmatpush1.bf16.msra.mxu0 %v973
      %1108 = vmatprep.subr.bf16.mxu0 0
      %1109 = vmatpush1.bf16.msra.mxu0 %v974
      %1110 = vmatprep.subr.bf16.mxu0 0
      %1111 = vmatpush1.bf16.msra.mxu0 %v975
      %1112 = vmatprep.subr.bf16.mxu0 0
      %1113 = vmatpush1.bf16.msra.mxu0 %v976
      %1114 = vmatprep.subr.bf16.mxu0 0
      %1115 = vmatpush1.bf16.msra.mxu0 0
      %1116 = vmatprep.subr.bf16.mxu0 0
      %1117 = vmatpush1.bf16.msra.mxu0 0
      %1118 = vmatprep.subr.bf16.mxu0 0
      %1119 = vmatpush1.bf16.msra.mxu0 0
      %1120 = vmatprep.subr.bf16.mxu0 0
      %1121 = vmatpush1.bf16.msra.mxu0 0
      %1122 = vmatprep.mubr.bf16.mxu0 %v1067
      %1123 = vmatmul.mubr.bf16.gmra.mrb[0].mxu0 %v1042
      %v1124 = vpop.f32.mrb[0].mxu0
      %v1125 = vadd.f32 0.0, %v1124
      %v1126 = vpop.f32.mrb[0].mxu0
      %v1127 = vpop.f32.mrb[0].mxu0
      %v1128 = vadd.f32 0.0, %v1127
      %v1129 = vpop.f32.mrb[0].mxu0
      %1130 = vmatprep.mubr.bf16.mxu0 %v1070
      %1131 = vmatmul.mubr.bf16.gmra.mrb[0].mxu0 %v1044
      %v1132 = vpop.f32.mrb[0].mxu0
      %v1133 = vadd.f32 0.0, %v1132
      %v1134 = vpop.f32.mrb[0].mxu0
      %v1135 = vpop.f32.mrb[0].mxu0
      %v1136 = vadd.f32 0.0, %v1135
      %v1137 = vpop.f32.mrb[0].mxu0
      %1138 = vmatprep.mubr.bf16.mxu0 %v1073
      %1139 = vmatmul.mubr.bf16.gmra.mrb[0].mxu0 %v1046
      %v1140 = vpop.f32.mrb[0].mxu0
      %v1141 = vadd.f32 0.0, %v1140
      %v1142 = vpop.f32.mrb[0].mxu0
      %v1143 = vpop.f32.mrb[0].mxu0
      %v1144 = vadd.f32 0.0, %v1143
      %v1145 = vpop.f32.mrb[0].mxu0
      %1146 = vmatprep.mubr.bf16.mxu0 %v1076
      %1147 = vmatmul.mubr.bf16.gmra.mrb[0].mxu0 %v1048
      %v1148 = vpop.f32.mrb[0].mxu0
      %v1149 = vadd.f32 0.0, %v1148
      %v1150 = vpop.f32.mrb[0].mxu0
      %v1151 = vpop.f32.mrb[0].mxu0
      %v1152 = vadd.f32 0.0, %v1151
      %v1153 = vpop.f32.mrb[0].mxu0
      %1154 = vmatprep.mubr.bf16.mxu0 %v1079
      %1155 = vmatmul.mubr.bf16.gmra.mrb[0].mxu0 %v1050
      %v1156 = vpop.f32.mrb[0].mxu0
      %v1157 = vadd.f32 0.0, %v1156
      %v1158 = vpop.f32.mrb[0].mxu0
      %v1159 = vpop.f32.mrb[0].mxu0
      %v1160 = vadd.f32 0.0, %v1159
      %v1161 = vpop.f32.mrb[0].mxu0
      %1162 = vmatprep.mubr.bf16.mxu0 %v1082
      %1163 = vmatmul.mubr.bf16.gmra.mrb[0].mxu0 %v1052
      %v1164 = vpop.f32.mrb[0].mxu0
      %v1165 = vadd.f32 0.0, %v1164
      %v1166 = vpop.f32.mrb[0].mxu0
      %v1167 = vpop.f32.mrb[0].mxu0
      %v1168 = vadd.f32 0.0, %v1167
      %v1169 = vpop.f32.mrb[0].mxu0
      %1170 = vmatprep.mubr.bf16.mxu0 %v1085
      %1171 = vmatmul.mubr.bf16.gmra.mrb[0].mxu0 %v1054
      %v1172 = vpop.f32.mrb[0].mxu0
      %v1173 = vadd.f32 0.0, %v1172
      %v1174 = vpop.f32.mrb[0].mxu0
      %v1175 = vpop.f32.mrb[0].mxu0
      %v1176 = vadd.f32 0.0, %v1175
      %v1177 = vpop.f32.mrb[0].mxu0
      %1178 = vmatprep.mubr.bf16.mxu0 %v1088
      %1179 = vmatmul.mubr.bf16.gmra.mrb[0].mxu0 %v1056
      %v1180 = vpop.f32.mrb[0].mxu0
      %v1181 = vadd.f32 0.0, %v1180
      %v1182 = vpop.f32.mrb[0].mxu0
      %v1183 = vpop.f32.mrb[0].mxu0
      %v1184 = vadd.f32 0.0, %v1183
      %v1185 = vpop.f32.mrb[0].mxu0
      %1186 = vdwg.mxu0
      %v1203 = vunpack.c.l.b16 %v787
      %v1204 = vunpack.c.h.b16 %v787
      %v1205 = vunpack.c.l.b16 %v788
      %v1206 = vunpack.c.h.b16 %v788
      %v1207 = vunpack.c.l.b16 %v789
      %v1208 = vunpack.c.h.b16 %v789
      %v1209 = vunpack.c.l.b16 %v790
      %v1210 = vunpack.c.h.b16 %v790
      %v1211 = vunpack.c.l.b16 %v791
      %v1212 = vunpack.c.h.b16 %v791
      %v1213 = vunpack.c.l.b16 %v792
      %v1214 = vunpack.c.h.b16 %v792
      %v1215 = vunpack.c.l.b16 %v793
      %v1216 = vunpack.c.h.b16 %v793
      %v1217 = vunpack.c.l.b16 %v794
      %v1218 = vunpack.c.h.b16 %v794
      %v1219 = vunpack.c.l.b16 %v795
      %v1220 = vunpack.c.h.b16 %v795
      %v1221 = vunpack.c.l.b16 %v796
      %v1222 = vunpack.c.h.b16 %v796
      %v1223 = vunpack.c.l.b16 %v797
      %v1224 = vunpack.c.h.b16 %v797
      %v1225 = vunpack.c.l.b16 %v798
      %v1226 = vunpack.c.h.b16 %v798
      %v1227 = vunpack.c.l.b16 %v799
      %v1228 = vunpack.c.h.b16 %v799
      %v1229 = vunpack.c.l.b16 %v800
      %v1230 = vunpack.c.h.b16 %v800
      %v1231 = vunpack.c.l.b16 %v801
      %v1232 = vunpack.c.h.b16 %v801
      %v1233 = vunpack.c.l.b16 %v802
      %v1234 = vunpack.c.h.b16 %v802
      %v1235 = vpack.c.b16 %v1205, %v1203
      %v1236 = vpack.c.b16 %v1206, %v1204
      %v1237 = vpack.c.b16 %v1209, %v1207
      %v1238 = vpack.c.b16 %v1210, %v1208
      %v1239 = vpack.c.b16 %v1213, %v1211
      %v1240 = vpack.c.b16 %v1214, %v1212
      %v1241 = vpack.c.b16 %v1217, %v1215
      %v1242 = vpack.c.b16 %v1218, %v1216
      %v1243 = vpack.c.b16 %v1221, %v1219
      %v1244 = vpack.c.b16 %v1222, %v1220
      %v1245 = vpack.c.b16 %v1225, %v1223
      %v1246 = vpack.c.b16 %v1226, %v1224
      %v1247 = vpack.c.b16 %v1229, %v1227
      %v1248 = vpack.c.b16 %v1230, %v1228
      %v1249 = vpack.c.b16 %v1233, %v1231
      %v1250 = vpack.c.b16 %v1234, %v1232
      %v1260 = vsel %vm609, %v1236, 0
      %v1263 = vsel %vm609, %v1238, 0
      %v1266 = vsel %vm609, %v1240, 0
      %v1269 = vsel %vm609, %v1242, 0
      %v1272 = vsel %vm609, %v1244, 0
      %v1275 = vsel %vm609, %v1246, 0
      %v1278 = vsel %vm609, %v1248, 0
      %v1281 = vsel %vm609, %v1250, 0
      %1283 = vmatprep.subr.bf16.mxu0 0
      %1284 = vmatpush1.bf16.msra.mxu0 %v775
      %1285 = vmatprep.subr.bf16.mxu0 0
      %1286 = vmatpush1.bf16.msra.mxu0 %v776
      %1287 = vmatprep.subr.bf16.mxu0 0
      %1288 = vmatpush1.bf16.msra.mxu0 %v777
      %1289 = vmatprep.subr.bf16.mxu0 0
      %1290 = vmatpush1.bf16.msra.mxu0 %v778
      %1291 = vmatprep.subr.bf16.mxu0 0
      %1292 = vmatpush1.bf16.msra.mxu0 %v779
      %1293 = vmatprep.subr.bf16.mxu0 0
      %1294 = vmatpush1.bf16.msra.mxu0 %v780
      %1295 = vmatprep.subr.bf16.mxu0 0
      %1296 = vmatpush1.bf16.msra.mxu0 %v781
      %1297 = vmatprep.subr.bf16.mxu0 0
      %1298 = vmatpush1.bf16.msra.mxu0 %v782
      %1299 = vmatprep.subr.bf16.mxu0 0
      %1300 = vmatpush1.bf16.msra.mxu0 %v783
      %1301 = vmatprep.subr.bf16.mxu0 0
      %1302 = vmatpush1.bf16.msra.mxu0 %v784
      %1303 = vmatprep.subr.bf16.mxu0 0
      %1304 = vmatpush1.bf16.msra.mxu0 %v785
      %1305 = vmatprep.subr.bf16.mxu0 0
      %1306 = vmatpush1.bf16.msra.mxu0 %v786
      %1307 = vmatprep.subr.bf16.mxu0 0
      %1308 = vmatpush1.bf16.msra.mxu0 0
      %1309 = vmatprep.subr.bf16.mxu0 0
      %1310 = vmatpush1.bf16.msra.mxu0 0
      %1311 = vmatprep.subr.bf16.mxu0 0
      %1312 = vmatpush1.bf16.msra.mxu0 0
      %1313 = vmatprep.subr.bf16.mxu0 0
      %1314 = vmatpush1.bf16.msra.mxu0 0
      %1315 = vmatprep.mubr.bf16.mxu0 %v1260
      %1316 = vmatmul.mubr.bf16.gmra.mrb[0].mxu0 %v1235
      %v1317 = vpop.f32.mrb[0].mxu0
      %v1318 = vadd.f32 %v1125, %v1317
      %v1319 = vpop.f32.mrb[0].mxu0
      %v1320 = vpop.f32.mrb[0].mxu0
      %v1321 = vadd.f32 %v1128, %v1320
      %v1322 = vpop.f32.mrb[0].mxu0
      %1323 = vmatprep.mubr.bf16.mxu0 %v1263
      %1324 = vmatmul.mubr.bf16.gmra.mrb[0].mxu0 %v1237
      %v1325 = vpop.f32.mrb[0].mxu0
      %v1326 = vadd.f32 %v1133, %v1325
      %v1327 = vpop.f32.mrb[0].mxu0
      %v1328 = vpop.f32.mrb[0].mxu0
      %v1329 = vadd.f32 %v1136, %v1328
      %v1330 = vpop.f32.mrb[0].mxu0
      %1331 = vmatprep.mubr.bf16.mxu0 %v1266
      %1332 = vmatmul.mubr.bf16.gmra.mrb[0].mxu0 %v1239
      %v1333 = vpop.f32.mrb[0].mxu0
      %v1334 = vadd.f32 %v1141, %v1333
      %v1335 = vpop.f32.mrb[0].mxu0
      %v1336 = vpop.f32.mrb[0].mxu0
      %v1337 = vadd.f32 %v1144, %v1336
      %v1338 = vpop.f32.mrb[0].mxu0
      %1339 = vmatprep.mubr.bf16.mxu0 %v1269
      %1340 = vmatmul.mubr.bf16.gmra.mrb[0].mxu0 %v1241
      %v1341 = vpop.f32.mrb[0].mxu0
      %v1342 = vadd.f32 %v1149, %v1341
      %v1343 = vpop.f32.mrb[0].mxu0
      %v1344 = vpop.f32.mrb[0].mxu0
      %v1345 = vadd.f32 %v1152, %v1344
      %v1346 = vpop.f32.mrb[0].mxu0
      %1347 = vmatprep.mubr.bf16.mxu0 %v1272
      %1348 = vmatmul.mubr.bf16.gmra.mrb[0].mxu0 %v1243
      %v1349 = vpop.f32.mrb[0].mxu0
      %v1350 = vadd.f32 %v1157, %v1349
      %v1351 = vpop.f32.mrb[0].mxu0
      %v1352 = vpop.f32.mrb[0].mxu0
      %v1353 = vadd.f32 %v1160, %v1352
      %v1354 = vpop.f32.mrb[0].mxu0
      %1355 = vmatprep.mubr.bf16.mxu0 %v1275
      %1356 = vmatmul.mubr.bf16.gmra.mrb[0].mxu0 %v1245
      %v1357 = vpop.f32.mrb[0].mxu0
      %v1358 = vadd.f32 %v1165, %v1357
      %v1359 = vpop.f32.mrb[0].mxu0
      %v1360 = vpop.f32.mrb[0].mxu0
      %v1361 = vadd.f32 %v1168, %v1360
      %v1362 = vpop.f32.mrb[0].mxu0
      %1363 = vmatprep.mubr.bf16.mxu0 %v1278
      %1364 = vmatmul.mubr.bf16.gmra.mrb[0].mxu0 %v1247
      %v1365 = vpop.f32.mrb[0].mxu0
      %v1366 = vadd.f32 %v1173, %v1365
      %v1367 = vpop.f32.mrb[0].mxu0
      %v1368 = vpop.f32.mrb[0].mxu0
      %v1369 = vadd.f32 %v1176, %v1368
      %v1370 = vpop.f32.mrb[0].mxu0
      %1371 = vmatprep.mubr.bf16.mxu0 %v1281
      %1372 = vmatmul.mubr.bf16.gmra.mrb[0].mxu0 %v1249
      %v1373 = vpop.f32.mrb[0].mxu0
      %v1374 = vadd.f32 %v1181, %v1373
      %v1375 = vpop.f32.mrb[0].mxu0
      %v1376 = vpop.f32.mrb[0].mxu0
      %v1377 = vadd.f32 %v1184, %v1376
      %v1378 = vpop.f32.mrb[0].mxu0
      %1379 = vdwg.mxu0
      %s1380 = scalar_lea.vmem %s2, 64
      %v1381 = vld [vmem:[%s1380] sm:$0xf]
      %v1382 = vld [vmem:[%s1380 + $0x4] sm:$0xf]
      %v1383 = vld [vmem:[%s1380 + $0x8] sm:$0xf]
      %v1384 = vld [vmem:[%s1380 + $0xc] sm:$0xf]
      %v1385 = vld [vmem:[%s1380 + $0x10] sm:$0xf]
      %v1386 = vld [vmem:[%s1380 + $0x14] sm:$0xf]
      %v1387 = vld [vmem:[%s1380 + $0x18] sm:$0xf]
      %v1388 = vld [vmem:[%s1380 + $0x1c] sm:$0xf]
      %v1397 = vunpack.c.l.b16 %v1381
      %v1398 = vunpack.c.l.b16 %v1382
      %v1399 = vunpack.c.l.b16 %v1383
      %v1400 = vunpack.c.l.b16 %v1384
      %v1401 = vunpack.c.l.b16 %v1385
      %v1402 = vunpack.c.l.b16 %v1386
      %v1403 = vunpack.c.l.b16 %v1387
      %v1404 = vunpack.c.l.b16 %v1388
      %v1405 = vpack.c.b16 %v1398, %v1397
      %v1406 = vpack.c.b16 %v1400, %v1399
      %v1407 = vpack.c.b16 %v1402, %v1401
      %v1408 = vpack.c.b16 %v1404, %v1403
      %1413 = vmatprep.subr.bf16.mxu0 0
      %1414 = vmatpush1.bf16.msra.mxu0 %v1405
      %1415 = vmatprep.subr.bf16.mxu0 0
      %1416 = vmatpush1.bf16.msra.mxu0 %v1406
      %1417 = vmatprep.subr.bf16.mxu0 0
      %1418 = vmatpush1.bf16.msra.mxu0 %v1407
      %1419 = vmatprep.subr.bf16.mxu0 0
      %1420 = vmatpush1.bf16.msra.mxu0 %v1408
      %1421 = vmatprep.subr.bf16.mxu0 0
      %1422 = vmatpush1.bf16.msra.mxu0 0
      %1423 = vmatprep.subr.bf16.mxu0 0
      %1424 = vmatpush1.bf16.msra.mxu0 0
      %1425 = vmatprep.subr.bf16.mxu0 0
      %1426 = vmatpush1.bf16.msra.mxu0 0
      %1427 = vmatprep.subr.bf16.mxu0 0
      %1428 = vmatpush1.bf16.msra.mxu0 0
      %1429 = vmatprep.subr.bf16.mxu0 0
      %1430 = vmatpush1.bf16.msra.mxu0 0
      %1431 = vmatprep.subr.bf16.mxu0 0
      %1432 = vmatpush1.bf16.msra.mxu0 0
      %1433 = vmatprep.subr.bf16.mxu0 0
      %1434 = vmatpush1.bf16.msra.mxu0 0
      %1435 = vmatprep.subr.bf16.mxu0 0
      %1436 = vmatpush1.bf16.msra.mxu0 0
      %1437 = vmatprep.subr.bf16.mxu0 0
      %1438 = vmatpush1.bf16.msra.mxu0 0
      %1439 = vmatprep.subr.bf16.mxu0 0
      %1440 = vmatpush1.bf16.msra.mxu0 0
      %1441 = vmatprep.subr.bf16.mxu0 0
      %1442 = vmatpush1.bf16.msra.mxu0 0
      %1443 = vmatprep.subr.bf16.mxu0 0
      %1444 = vmatpush1.bf16.msra.mxu0 0
      %1445 = vmatprep.mubr.bf16.mxu0 0
      %1446 = vmatmul.mubr.bf16.gmra.mrb[0].mxu0 %v611
      %v1447 = vpop.f32.mrb[0].mxu0
      %v1448 = vadd.f32 0.0, %v1447
      %v1449 = vpop.f32.mrb[0].mxu0
      %v1450 = vpop.f32.mrb[0].mxu0
      %v1451 = vadd.f32 0.0, %v1450
      %v1452 = vpop.f32.mrb[0].mxu0
      %1453 = vmatprep.mubr.bf16.mxu0 0
      %1454 = vmatmul.mubr.bf16.gmra.mrb[0].mxu0 %v614
      %v1455 = vpop.f32.mrb[0].mxu0
      %v1456 = vadd.f32 0.0, %v1455
      %v1457 = vpop.f32.mrb[0].mxu0
      %v1458 = vpop.f32.mrb[0].mxu0
      %v1459 = vadd.f32 0.0, %v1458
      %v1460 = vpop.f32.mrb[0].mxu0
      %1461 = vmatprep.mubr.bf16.mxu0 0
      %1462 = vmatmul.mubr.bf16.gmra.mrb[0].mxu0 %v617
      %v1463 = vpop.f32.mrb[0].mxu0
      %v1464 = vadd.f32 0.0, %v1463
      %v1465 = vpop.f32.mrb[0].mxu0
      %v1466 = vpop.f32.mrb[0].mxu0
      %v1467 = vadd.f32 0.0, %v1466
      %v1468 = vpop.f32.mrb[0].mxu0
      %1469 = vmatprep.mubr.bf16.mxu0 0
      %1470 = vmatmul.mubr.bf16.gmra.mrb[0].mxu0 %v620
      %v1471 = vpop.f32.mrb[0].mxu0
      %v1472 = vadd.f32 0.0, %v1471
      %v1473 = vpop.f32.mrb[0].mxu0
      %v1474 = vpop.f32.mrb[0].mxu0
      %v1475 = vadd.f32 0.0, %v1474
      %v1476 = vpop.f32.mrb[0].mxu0
      %1477 = vmatprep.mubr.bf16.mxu0 0
      %1478 = vmatmul.mubr.bf16.gmra.mrb[0].mxu0 %v623
      %v1479 = vpop.f32.mrb[0].mxu0
      %v1480 = vadd.f32 0.0, %v1479
      %v1481 = vpop.f32.mrb[0].mxu0
      %v1482 = vpop.f32.mrb[0].mxu0
      %v1483 = vadd.f32 0.0, %v1482
      %v1484 = vpop.f32.mrb[0].mxu0
      %1485 = vmatprep.mubr.bf16.mxu0 0
      %1486 = vmatmul.mubr.bf16.gmra.mrb[0].mxu0 %v626
      %v1487 = vpop.f32.mrb[0].mxu0
      %v1488 = vadd.f32 0.0, %v1487
      %v1489 = vpop.f32.mrb[0].mxu0
      %v1490 = vpop.f32.mrb[0].mxu0
      %v1491 = vadd.f32 0.0, %v1490
      %v1492 = vpop.f32.mrb[0].mxu0
      %1493 = vmatprep.mubr.bf16.mxu0 0
      %1494 = vmatmul.mubr.bf16.gmra.mrb[0].mxu0 %v629
      %v1495 = vpop.f32.mrb[0].mxu0
      %v1496 = vadd.f32 0.0, %v1495
      %v1497 = vpop.f32.mrb[0].mxu0
      %v1498 = vpop.f32.mrb[0].mxu0
      %v1499 = vadd.f32 0.0, %v1498
      %v1500 = vpop.f32.mrb[0].mxu0
      %1501 = vmatprep.mubr.bf16.mxu0 0
      %1502 = vmatmul.mubr.bf16.gmra.mrb[0].mxu0 %v632
      %v1503 = vpop.f32.mrb[0].mxu0
      %v1504 = vadd.f32 0.0, %v1503
      %v1505 = vpop.f32.mrb[0].mxu0
      %v1506 = vpop.f32.mrb[0].mxu0
      %v1507 = vadd.f32 0.0, %v1506
      %v1508 = vpop.f32.mrb[0].mxu0
      %1509 = vmatprep.mubr.bf16.mxu0 0
      %1510 = vmatmul.mubr.bf16.gmra.mrb[0].mxu0 %v635
      %v1511 = vpop.f32.mrb[0].mxu0
      %v1512 = vadd.f32 0.0, %v1511
      %v1513 = vpop.f32.mrb[0].mxu0
      %v1514 = vpop.f32.mrb[0].mxu0
      %v1515 = vadd.f32 0.0, %v1514
      %v1516 = vpop.f32.mrb[0].mxu0
      %1517 = vmatprep.mubr.bf16.mxu0 0
      %1518 = vmatmul.mubr.bf16.gmra.mrb[0].mxu0 %v638
      %v1519 = vpop.f32.mrb[0].mxu0
      %v1520 = vadd.f32 0.0, %v1519
      %v1521 = vpop.f32.mrb[0].mxu0
      %v1522 = vpop.f32.mrb[0].mxu0
      %v1523 = vadd.f32 0.0, %v1522
      %v1524 = vpop.f32.mrb[0].mxu0
      %1525 = vmatprep.mubr.bf16.mxu0 0
      %1526 = vmatmul.mubr.bf16.gmra.mrb[0].mxu0 %v641
      %v1527 = vpop.f32.mrb[0].mxu0
      %v1528 = vadd.f32 0.0, %v1527
      %v1529 = vpop.f32.mrb[0].mxu0
      %v1530 = vpop.f32.mrb[0].mxu0
      %v1531 = vadd.f32 0.0, %v1530
      %v1532 = vpop.f32.mrb[0].mxu0
      %1533 = vmatprep.mubr.bf16.mxu0 0
      %1534 = vmatmul.mubr.bf16.gmra.mrb[0].mxu0 %v644
      %v1535 = vpop.f32.mrb[0].mxu0
      %v1536 = vadd.f32 0.0, %v1535
      %v1537 = vpop.f32.mrb[0].mxu0
      %v1538 = vpop.f32.mrb[0].mxu0
      %v1539 = vadd.f32 0.0, %v1538
      %v1540 = vpop.f32.mrb[0].mxu0
      %1541 = vdwg.mxu0
      %v1542 = vpack.c.bf16 %v1451, %v1448
      %v1543 = vpack.c.bf16 %v1459, %v1456
      %v1544 = vpack.c.bf16 %v1467, %v1464
      %v1545 = vpack.c.bf16 %v1475, %v1472
      %v1546 = vpack.c.bf16 %v1483, %v1480
      %v1547 = vpack.c.bf16 %v1491, %v1488
      %v1548 = vpack.c.bf16 %v1499, %v1496
      %v1549 = vpack.c.bf16 %v1507, %v1504
      %v1550 = vpack.c.bf16 %v1515, %v1512
      %v1551 = vpack.c.bf16 %v1523, %v1520
      %v1552 = vpack.c.bf16 %v1531, %v1528
      %v1553 = vpack.c.bf16 %v1539, %v1536
      %s1554 = scalar_lea.vmem %s1, 256
      %v1555 = vld [vmem:[%s1554] sm:$0xff]
      %v1556 = vld [vmem:[%s1554 + $0x8] sm:$0xff]
      %v1557 = vld [vmem:[%s1554 + $0x10] sm:$0xff]
      %v1558 = vld [vmem:[%s1554 + $0x18] sm:$0xff]
      %v1559 = vld [vmem:[%s1554 + $0x20] sm:$0xff]
      %v1560 = vld [vmem:[%s1554 + $0x28] sm:$0xff]
      %v1561 = vld [vmem:[%s1554 + $0x30] sm:$0xff]
      %v1562 = vld [vmem:[%s1554 + $0x38] sm:$0xff]
      %v1563 = vld [vmem:[%s1554 + $0x40] sm:$0xff]
      %v1564 = vld [vmem:[%s1554 + $0x48] sm:$0xff]
      %v1565 = vld [vmem:[%s1554 + $0x50] sm:$0xff]
      %v1566 = vld [vmem:[%s1554 + $0x58] sm:$0xff]
      %v1567 = vld [vmem:[%s1554 + $0x60] sm:$0xff]
      %v1568 = vld [vmem:[%s1554 + $0x68] sm:$0xff]
      %v1569 = vld [vmem:[%s1554 + $0x70] sm:$0xff]
      %v1570 = vld [vmem:[%s1554 + $0x78] sm:$0xff]
      %v1587 = vunpack.c.l.b16 %v1555
      %v1588 = vunpack.c.h.b16 %v1555
      %v1589 = vunpack.c.l.b16 %v1556
      %v1590 = vunpack.c.h.b16 %v1556
      %v1591 = vunpack.c.l.b16 %v1557
      %v1592 = vunpack.c.h.b16 %v1557
      %v1593 = vunpack.c.l.b16 %v1558
      %v1594 = vunpack.c.h.b16 %v1558
      %v1595 = vunpack.c.l.b16 %v1559
      %v1596 = vunpack.c.h.b16 %v1559
      %v1597 = vunpack.c.l.b16 %v1560
      %v1598 = vunpack.c.h.b16 %v1560
      %v1599 = vunpack.c.l.b16 %v1561
      %v1600 = vunpack.c.h.b16 %v1561
      %v1601 = vunpack.c.l.b16 %v1562
      %v1602 = vunpack.c.h.b16 %v1562
      %v1603 = vunpack.c.l.b16 %v1563
      %v1604 = vunpack.c.h.b16 %v1563
      %v1605 = vunpack.c.l.b16 %v1564
      %v1606 = vunpack.c.h.b16 %v1564
      %v1607 = vunpack.c.l.b16 %v1565
      %v1608 = vunpack.c.h.b16 %v1565
      %v1609 = vunpack.c.l.b16 %v1566
      %v1610 = vunpack.c.h.b16 %v1566
      %v1611 = vunpack.c.l.b16 %v1567
      %v1612 = vunpack.c.h.b16 %v1567
      %v1613 = vunpack.c.l.b16 %v1568
      %v1614 = vunpack.c.h.b16 %v1568
      %v1615 = vunpack.c.l.b16 %v1569
      %v1616 = vunpack.c.h.b16 %v1569
      %v1617 = vunpack.c.l.b16 %v1570
      %v1618 = vunpack.c.h.b16 %v1570
      %v1619 = vpack.c.b16 %v1589, %v1587
      %v1620 = vpack.c.b16 %v1590, %v1588
      %v1621 = vpack.c.b16 %v1593, %v1591
      %v1622 = vpack.c.b16 %v1594, %v1592
      %v1623 = vpack.c.b16 %v1597, %v1595
      %v1624 = vpack.c.b16 %v1598, %v1596
      %v1625 = vpack.c.b16 %v1601, %v1599
      %v1626 = vpack.c.b16 %v1602, %v1600
      %v1627 = vpack.c.b16 %v1605, %v1603
      %v1628 = vpack.c.b16 %v1606, %v1604
      %v1629 = vpack.c.b16 %v1609, %v1607
      %v1630 = vpack.c.b16 %v1610, %v1608
      %v1631 = vpack.c.b16 %v1613, %v1611
      %v1632 = vpack.c.b16 %v1614, %v1612
      %v1633 = vpack.c.b16 %v1617, %v1615
      %v1634 = vpack.c.b16 %v1618, %v1616
      %v1644 = vsel %vm609, %v1620, 0
      %v1647 = vsel %vm609, %v1622, 0
      %v1650 = vsel %vm609, %v1624, 0
      %v1653 = vsel %vm609, %v1626, 0
      %v1656 = vsel %vm609, %v1628, 0
      %v1659 = vsel %vm609, %v1630, 0
      %v1662 = vsel %vm609, %v1632, 0
      %v1665 = vsel %vm609, %v1634, 0
      %1667 = vmatprep.subr.bf16.mxu0 0
      %1668 = vmatpush1.bf16.msra.mxu0 %v1542
      %1669 = vmatprep.subr.bf16.mxu0 0
      %1670 = vmatpush1.bf16.msra.mxu0 %v1543
      %1671 = vmatprep.subr.bf16.mxu0 0
      %1672 = vmatpush1.bf16.msra.mxu0 %v1544
      %1673 = vmatprep.subr.bf16.mxu0 0
      %1674 = vmatpush1.bf16.msra.mxu0 %v1545
      %1675 = vmatprep.subr.bf16.mxu0 0
      %1676 = vmatpush1.bf16.msra.mxu0 %v1546
      %1677 = vmatprep.subr.bf16.mxu0 0
      %1678 = vmatpush1.bf16.msra.mxu0 %v1547
      %1679 = vmatprep.subr.bf16.mxu0 0
      %1680 = vmatpush1.bf16.msra.mxu0 %v1548
      %1681 = vmatprep.subr.bf16.mxu0 0
      %1682 = vmatpush1.bf16.msra.mxu0 %v1549
      %1683 = vmatprep.subr.bf16.mxu0 0
      %1684 = vmatpush1.bf16.msra.mxu0 %v1550
      %1685 = vmatprep.subr.bf16.mxu0 0
      %1686 = vmatpush1.bf16.msra.mxu0 %v1551
      %1687 = vmatprep.subr.bf16.mxu0 0
      %1688 = vmatpush1.bf16.msra.mxu0 %v1552
      %1689 = vmatprep.subr.bf16.mxu0 0
      %1690 = vmatpush1.bf16.msra.mxu0 %v1553
      %1691 = vmatprep.subr.bf16.mxu0 0
      %1692 = vmatpush1.bf16.msra.mxu0 0
      %1693 = vmatprep.subr.bf16.mxu0 0
      %1694 = vmatpush1.bf16.msra.mxu0 0
      %1695 = vmatprep.subr.bf16.mxu0 0
      %1696 = vmatpush1.bf16.msra.mxu0 0
      %1697 = vmatprep.subr.bf16.mxu0 0
      %1698 = vmatpush1.bf16.msra.mxu0 0
      %1699 = vmatprep.mubr.bf16.mxu0 %v1644
      %1700 = vmatmul.mubr.bf16.gmra.mrb[0].mxu0 %v1619
      %v1701 = vpop.f32.mrb[0].mxu0
      %v1702 = vadd.f32 0.0, %v1701
      %v1703 = vpop.f32.mrb[0].mxu0
      %v1704 = vpop.f32.mrb[0].mxu0
      %v1705 = vadd.f32 0.0, %v1704
      %v1706 = vpop.f32.mrb[0].mxu0
      %1707 = vmatprep.mubr.bf16.mxu0 %v1647
      %1708 = vmatmul.mubr.bf16.gmra.mrb[0].mxu0 %v1621
      %v1709 = vpop.f32.mrb[0].mxu0
      %v1710 = vadd.f32 0.0, %v1709
      %v1711 = vpop.f32.mrb[0].mxu0
      %v1712 = vpop.f32.mrb[0].mxu0
      %v1713 = vadd.f32 0.0, %v1712
      %v1714 = vpop.f32.mrb[0].mxu0
      %1715 = vmatprep.mubr.bf16.mxu0 %v1650
      %1716 = vmatmul.mubr.bf16.gmra.mrb[0].mxu0 %v1623
      %v1717 = vpop.f32.mrb[0].mxu0
      %v1718 = vadd.f32 0.0, %v1717
      %v1719 = vpop.f32.mrb[0].mxu0
      %v1720 = vpop.f32.mrb[0].mxu0
      %v1721 = vadd.f32 0.0, %v1720
      %v1722 = vpop.f32.mrb[0].mxu0
      %1723 = vmatprep.mubr.bf16.mxu0 %v1653
      %1724 = vmatmul.mubr.bf16.gmra.mrb[0].mxu0 %v1625
      %v1725 = vpop.f32.mrb[0].mxu0
      %v1726 = vadd.f32 0.0, %v1725
      %v1727 = vpop.f32.mrb[0].mxu0
      %v1728 = vpop.f32.mrb[0].mxu0
      %v1729 = vadd.f32 0.0, %v1728
      %v1730 = vpop.f32.mrb[0].mxu0
      %1731 = vmatprep.mubr.bf16.mxu0 %v1656
      %1732 = vmatmul.mubr.bf16.gmra.mrb[0].mxu0 %v1627
      %v1733 = vpop.f32.mrb[0].mxu0
      %v1734 = vadd.f32 0.0, %v1733
      %v1735 = vpop.f32.mrb[0].mxu0
      %v1736 = vpop.f32.mrb[0].mxu0
      %v1737 = vadd.f32 0.0, %v1736
      %v1738 = vpop.f32.mrb[0].mxu0
      %1739 = vmatprep.mubr.bf16.mxu0 %v1659
      %1740 = vmatmul.mubr.bf16.gmra.mrb[0].mxu0 %v1629
      %v1741 = vpop.f32.mrb[0].mxu0
      %v1742 = vadd.f32 0.0, %v1741
      %v1743 = vpop.f32.mrb[0].mxu0
      %v1744 = vpop.f32.mrb[0].mxu0
      %v1745 = vadd.f32 0.0, %v1744
      %v1746 = vpop.f32.mrb[0].mxu0
      %1747 = vmatprep.mubr.bf16.mxu0 %v1662
      %1748 = vmatmul.mubr.bf16.gmra.mrb[0].mxu0 %v1631
      %v1749 = vpop.f32.mrb[0].mxu0
      %v1750 = vadd.f32 0.0, %v1749
      %v1751 = vpop.f32.mrb[0].mxu0
      %v1752 = vpop.f32.mrb[0].mxu0
      %v1753 = vadd.f32 0.0, %v1752
      %v1754 = vpop.f32.mrb[0].mxu0
      %1755 = vmatprep.mubr.bf16.mxu0 %v1665
      %1756 = vmatmul.mubr.bf16.gmra.mrb[0].mxu0 %v1633
      %v1757 = vpop.f32.mrb[0].mxu0
      %v1758 = vadd.f32 0.0, %v1757
      %v1759 = vpop.f32.mrb[0].mxu0
      %v1760 = vpop.f32.mrb[0].mxu0
      %v1761 = vadd.f32 0.0, %v1760
      %v1762 = vpop.f32.mrb[0].mxu0
      %1763 = vdwg.mxu0
      %v1764 = vadd.f32 %v1318, %v1702
      %v1765 = vadd.f32 %v1321, %v1705
      %v1766 = vadd.f32 %v1326, %v1710
      %v1767 = vadd.f32 %v1329, %v1713
      %v1768 = vadd.f32 %v1334, %v1718
      %v1769 = vadd.f32 %v1337, %v1721
      %v1770 = vadd.f32 %v1342, %v1726
      %v1771 = vadd.f32 %v1345, %v1729
      %v1772 = vadd.f32 %v1350, %v1734
      %v1773 = vadd.f32 %v1353, %v1737
      %v1774 = vadd.f32 %v1358, %v1742
      %v1775 = vadd.f32 %v1361, %v1745
      %v1776 = vadd.f32 %v1366, %v1750
      %v1777 = vadd.f32 %v1369, %v1753
      %v1778 = vadd.f32 %v1374, %v1758
      %v1779 = vadd.f32 %v1377, %v1761
      %s1780 = scalar_lea.vmem %s2, 96
      %v1781 = vld [vmem:[%s1780] sm:$0xf]
      %v1782 = vld [vmem:[%s1780 + $0x4] sm:$0xf]
      %v1783 = vld [vmem:[%s1780 + $0x8] sm:$0xf]
      %v1784 = vld [vmem:[%s1780 + $0xc] sm:$0xf]
      %v1785 = vld [vmem:[%s1780 + $0x10] sm:$0xf]
      %v1786 = vld [vmem:[%s1780 + $0x14] sm:$0xf]
      %v1787 = vld [vmem:[%s1780 + $0x18] sm:$0xf]
      %v1788 = vld [vmem:[%s1780 + $0x1c] sm:$0xf]
      %v1797 = vunpack.c.l.b16 %v1781
      %v1798 = vunpack.c.l.b16 %v1782
      %v1799 = vunpack.c.l.b16 %v1783
      %v1800 = vunpack.c.l.b16 %v1784
      %v1801 = vunpack.c.l.b16 %v1785
      %v1802 = vunpack.c.l.b16 %v1786
      %v1803 = vunpack.c.l.b16 %v1787
      %v1804 = vunpack.c.l.b16 %v1788
      %v1805 = vpack.c.b16 %v1798, %v1797
      %v1806 = vpack.c.b16 %v1800, %v1799
      %v1807 = vpack.c.b16 %v1802, %v1801
      %v1808 = vpack.c.b16 %v1804, %v1803
      %1813 = vmatprep.subr.bf16.mxu0 0
      %1814 = vmatpush1.bf16.msra.mxu0 %v1805
      %1815 = vmatprep.subr.bf16.mxu0 0
      %1816 = vmatpush1.bf16.msra.mxu0 %v1806
      %1817 = vmatprep.subr.bf16.mxu0 0
      %1818 = vmatpush1.bf16.msra.mxu0 %v1807
      %1819 = vmatprep.subr.bf16.mxu0 0
      %1820 = vmatpush1.bf16.msra.mxu0 %v1808
      %1821 = vmatprep.subr.bf16.mxu0 0
      %1822 = vmatpush1.bf16.msra.mxu0 0
      %1823 = vmatprep.subr.bf16.mxu0 0
      %1824 = vmatpush1.bf16.msra.mxu0 0
      %1825 = vmatprep.subr.bf16.mxu0 0
      %1826 = vmatpush1.bf16.msra.mxu0 0
      %1827 = vmatprep.subr.bf16.mxu0 0
      %1828 = vmatpush1.bf16.msra.mxu0 0
      %1829 = vmatprep.subr.bf16.mxu0 0
      %1830 = vmatpush1.bf16.msra.mxu0 0
      %1831 = vmatprep.subr.bf16.mxu0 0
      %1832 = vmatpush1.bf16.msra.mxu0 0
      %1833 = vmatprep.subr.bf16.mxu0 0
      %1834 = vmatpush1.bf16.msra.mxu0 0
      %1835 = vmatprep.subr.bf16.mxu0 0
      %1836 = vmatpush1.bf16.msra.mxu0 0
      %1837 = vmatprep.subr.bf16.mxu0 0
      %1838 = vmatpush1.bf16.msra.mxu0 0
      %1839 = vmatprep.subr.bf16.mxu0 0
      %1840 = vmatpush1.bf16.msra.mxu0 0
      %1841 = vmatprep.subr.bf16.mxu0 0
      %1842 = vmatpush1.bf16.msra.mxu0 0
      %1843 = vmatprep.subr.bf16.mxu0 0
      %1844 = vmatpush1.bf16.msra.mxu0 0
      %1845 = vmatprep.mubr.bf16.mxu0 0
      %1846 = vmatmul.mubr.bf16.gmra.mrb[0].mxu0 %v611
      %v1847 = vpop.f32.mrb[0].mxu0
      %v1848 = vadd.f32 0.0, %v1847
      %v1849 = vpop.f32.mrb[0].mxu0
      %v1850 = vpop.f32.mrb[0].mxu0
      %v1851 = vadd.f32 0.0, %v1850
      %v1852 = vpop.f32.mrb[0].mxu0
      %1853 = vmatprep.mubr.bf16.mxu0 0
      %1854 = vmatmul.mubr.bf16.gmra.mrb[0].mxu0 %v614
      %v1855 = vpop.f32.mrb[0].mxu0
      %v1856 = vadd.f32 0.0, %v1855
      %v1857 = vpop.f32.mrb[0].mxu0
      %v1858 = vpop.f32.mrb[0].mxu0
      %v1859 = vadd.f32 0.0, %v1858
      %v1860 = vpop.f32.mrb[0].mxu0
      %1861 = vmatprep.mubr.bf16.mxu0 0
      %1862 = vmatmul.mubr.bf16.gmra.mrb[0].mxu0 %v617
      %v1863 = vpop.f32.mrb[0].mxu0
      %v1864 = vadd.f32 0.0, %v1863
      %v1865 = vpop.f32.mrb[0].mxu0
      %v1866 = vpop.f32.mrb[0].mxu0
      %v1867 = vadd.f32 0.0, %v1866
      %v1868 = vpop.f32.mrb[0].mxu0
      %1869 = vmatprep.mubr.bf16.mxu0 0
      %1870 = vmatmul.mubr.bf16.gmra.mrb[0].mxu0 %v620
      %v1871 = vpop.f32.mrb[0].mxu0
      %v1872 = vadd.f32 0.0, %v1871
      %v1873 = vpop.f32.mrb[0].mxu0
      %v1874 = vpop.f32.mrb[0].mxu0
      %v1875 = vadd.f32 0.0, %v1874
      %v1876 = vpop.f32.mrb[0].mxu0
      %1877 = vmatprep.mubr.bf16.mxu0 0
      %1878 = vmatmul.mubr.bf16.gmra.mrb[0].mxu0 %v623
      %v1879 = vpop.f32.mrb[0].mxu0
      %v1880 = vadd.f32 0.0, %v1879
      %v1881 = vpop.f32.mrb[0].mxu0
      %v1882 = vpop.f32.mrb[0].mxu0
      %v1883 = vadd.f32 0.0, %v1882
      %v1884 = vpop.f32.mrb[0].mxu0
      %1885 = vmatprep.mubr.bf16.mxu0 0
      %1886 = vmatmul.mubr.bf16.gmra.mrb[0].mxu0 %v626
      %v1887 = vpop.f32.mrb[0].mxu0
      %v1888 = vadd.f32 0.0, %v1887
      %v1889 = vpop.f32.mrb[0].mxu0
      %v1890 = vpop.f32.mrb[0].mxu0
      %v1891 = vadd.f32 0.0, %v1890
      %v1892 = vpop.f32.mrb[0].mxu0
      %1893 = vmatprep.mubr.bf16.mxu0 0
      %1894 = vmatmul.mubr.bf16.gmra.mrb[0].mxu0 %v629
      %v1895 = vpop.f32.mrb[0].mxu0
      %v1896 = vadd.f32 0.0, %v1895
      %v1897 = vpop.f32.mrb[0].mxu0
      %v1898 = vpop.f32.mrb[0].mxu0
      %v1899 = vadd.f32 0.0, %v1898
      %v1900 = vpop.f32.mrb[0].mxu0
      %1901 = vmatprep.mubr.bf16.mxu0 0
      %1902 = vmatmul.mubr.bf16.gmra.mrb[0].mxu0 %v632
      %v1903 = vpop.f32.mrb[0].mxu0
      %v1904 = vadd.f32 0.0, %v1903
      %v1905 = vpop.f32.mrb[0].mxu0
      %v1906 = vpop.f32.mrb[0].mxu0
      %v1907 = vadd.f32 0.0, %v1906
      %v1908 = vpop.f32.mrb[0].mxu0
      %1909 = vmatprep.mubr.bf16.mxu0 0
      %1910 = vmatmul.mubr.bf16.gmra.mrb[0].mxu0 %v635
      %v1911 = vpop.f32.mrb[0].mxu0
      %v1912 = vadd.f32 0.0, %v1911
      %v1913 = vpop.f32.mrb[0].mxu0
      %v1914 = vpop.f32.mrb[0].mxu0
      %v1915 = vadd.f32 0.0, %v1914
      %v1916 = vpop.f32.mrb[0].mxu0
      %1917 = vmatprep.mubr.bf16.mxu0 0
      %1918 = vmatmul.mubr.bf16.gmra.mrb[0].mxu0 %v638
      %v1919 = vpop.f32.mrb[0].mxu0
      %v1920 = vadd.f32 0.0, %v1919
      %v1921 = vpop.f32.mrb[0].mxu0
      %v1922 = vpop.f32.mrb[0].mxu0
      %v1923 = vadd.f32 0.0, %v1922
      %v1924 = vpop.f32.mrb[0].mxu0
      %1925 = vmatprep.mubr.bf16.mxu0 0
      %1926 = vmatmul.mubr.bf16.gmra.mrb[0].mxu0 %v641
      %v1927 = vpop.f32.mrb[0].mxu0
      %v1928 = vadd.f32 0.0, %v1927
      %v1929 = vpop.f32.mrb[0].mxu0
      %v1930 = vpop.f32.mrb[0].mxu0
      %v1931 = vadd.f32 0.0, %v1930
      %v1932 = vpop.f32.mrb[0].mxu0
      %1933 = vmatprep.mubr.bf16.mxu0 0
      %1934 = vmatmul.mubr.bf16.gmra.mrb[0].mxu0 %v644
      %v1935 = vpop.f32.mrb[0].mxu0
      %v1936 = vadd.f32 0.0, %v1935
      %v1937 = vpop.f32.mrb[0].mxu0
      %v1938 = vpop.f32.mrb[0].mxu0
      %v1939 = vadd.f32 0.0, %v1938
      %v1940 = vpop.f32.mrb[0].mxu0
      %1941 = vdwg.mxu0
      %v1942 = vpack.c.bf16 %v1851, %v1848
      %v1943 = vpack.c.bf16 %v1859, %v1856
      %v1944 = vpack.c.bf16 %v1867, %v1864
      %v1945 = vpack.c.bf16 %v1875, %v1872
      %v1946 = vpack.c.bf16 %v1883, %v1880
      %v1947 = vpack.c.bf16 %v1891, %v1888
      %v1948 = vpack.c.bf16 %v1899, %v1896
      %v1949 = vpack.c.bf16 %v1907, %v1904
      %v1950 = vpack.c.bf16 %v1915, %v1912
      %v1951 = vpack.c.bf16 %v1923, %v1920
      %v1952 = vpack.c.bf16 %v1931, %v1928
      %v1953 = vpack.c.bf16 %v1939, %v1936
      %s1954 = scalar_lea.vmem %s1, 384
      %v1955 = vld [vmem:[%s1954] sm:$0xff]
      %v1956 = vld [vmem:[%s1954 + $0x8] sm:$0xff]
      %v1957 = vld [vmem:[%s1954 + $0x10] sm:$0xff]
      %v1958 = vld [vmem:[%s1954 + $0x18] sm:$0xff]
      %v1959 = vld [vmem:[%s1954 + $0x20] sm:$0xff]
      %v1960 = vld [vmem:[%s1954 + $0x28] sm:$0xff]
      %v1961 = vld [vmem:[%s1954 + $0x30] sm:$0xff]
      %v1962 = vld [vmem:[%s1954 + $0x38] sm:$0xff]
      %v1963 = vld [vmem:[%s1954 + $0x40] sm:$0xff]
      %v1964 = vld [vmem:[%s1954 + $0x48] sm:$0xff]
      %v1965 = vld [vmem:[%s1954 + $0x50] sm:$0xff]
      %v1966 = vld [vmem:[%s1954 + $0x58] sm:$0xff]
      %v1967 = vld [vmem:[%s1954 + $0x60] sm:$0xff]
      %v1968 = vld [vmem:[%s1954 + $0x68] sm:$0xff]
      %v1969 = vld [vmem:[%s1954 + $0x70] sm:$0xff]
      %v1970 = vld [vmem:[%s1954 + $0x78] sm:$0xff]
      %v1987 = vunpack.c.l.b16 %v1955
      %v1988 = vunpack.c.h.b16 %v1955
      %v1989 = vunpack.c.l.b16 %v1956
      %v1990 = vunpack.c.h.b16 %v1956
      %v1991 = vunpack.c.l.b16 %v1957
      %v1992 = vunpack.c.h.b16 %v1957
      %v1993 = vunpack.c.l.b16 %v1958
      %v1994 = vunpack.c.h.b16 %v1958
      %v1995 = vunpack.c.l.b16 %v1959
      %v1996 = vunpack.c.h.b16 %v1959
      %v1997 = vunpack.c.l.b16 %v1960
      %v1998 = vunpack.c.h.b16 %v1960
      %v1999 = vunpack.c.l.b16 %v1961
      %v2000 = vunpack.c.h.b16 %v1961
      %v2001 = vunpack.c.l.b16 %v1962
      %v2002 = vunpack.c.h.b16 %v1962
      %v2003 = vunpack.c.l.b16 %v1963
      %v2004 = vunpack.c.h.b16 %v1963
      %v2005 = vunpack.c.l.b16 %v1964
      %v2006 = vunpack.c.h.b16 %v1964
      %v2007 = vunpack.c.l.b16 %v1965
      %v2008 = vunpack.c.h.b16 %v1965
      %v2009 = vunpack.c.l.b16 %v1966
      %v2010 = vunpack.c.h.b16 %v1966
      %v2011 = vunpack.c.l.b16 %v1967
      %v2012 = vunpack.c.h.b16 %v1967
      %v2013 = vunpack.c.l.b16 %v1968
      %v2014 = vunpack.c.h.b16 %v1968
      %v2015 = vunpack.c.l.b16 %v1969
      %v2016 = vunpack.c.h.b16 %v1969
      %v2017 = vunpack.c.l.b16 %v1970
      %v2018 = vunpack.c.h.b16 %v1970
      %v2019 = vpack.c.b16 %v1989, %v1987
      %v2020 = vpack.c.b16 %v1990, %v1988
      %v2021 = vpack.c.b16 %v1993, %v1991
      %v2022 = vpack.c.b16 %v1994, %v1992
      %v2023 = vpack.c.b16 %v1997, %v1995
      %v2024 = vpack.c.b16 %v1998, %v1996
      %v2025 = vpack.c.b16 %v2001, %v1999
      %v2026 = vpack.c.b16 %v2002, %v2000
      %v2027 = vpack.c.b16 %v2005, %v2003
      %v2028 = vpack.c.b16 %v2006, %v2004
      %v2029 = vpack.c.b16 %v2009, %v2007
      %v2030 = vpack.c.b16 %v2010, %v2008
      %v2031 = vpack.c.b16 %v2013, %v2011
      %v2032 = vpack.c.b16 %v2014, %v2012
      %v2033 = vpack.c.b16 %v2017, %v2015
      %v2034 = vpack.c.b16 %v2018, %v2016
      %v2044 = vsel %vm609, %v2020, 0
      %v2047 = vsel %vm609, %v2022, 0
      %v2050 = vsel %vm609, %v2024, 0
      %v2053 = vsel %vm609, %v2026, 0
      %v2056 = vsel %vm609, %v2028, 0
      %v2059 = vsel %vm609, %v2030, 0
      %v2062 = vsel %vm609, %v2032, 0
      %v2065 = vsel %vm609, %v2034, 0
      %2067 = vmatprep.subr.bf16.mxu0 0
      %2068 = vmatpush1.bf16.msra.mxu0 %v1942
      %2069 = vmatprep.subr.bf16.mxu0 0
      %2070 = vmatpush1.bf16.msra.mxu0 %v1943
      %2071 = vmatprep.subr.bf16.mxu0 0
      %2072 = vmatpush1.bf16.msra.mxu0 %v1944
      %2073 = vmatprep.subr.bf16.mxu0 0
      %2074 = vmatpush1.bf16.msra.mxu0 %v1945
      %2075 = vmatprep.subr.bf16.mxu0 0
      %2076 = vmatpush1.bf16.msra.mxu0 %v1946
      %2077 = vmatprep.subr.bf16.mxu0 0
      %2078 = vmatpush1.bf16.msra.mxu0 %v1947
      %2079 = vmatprep.subr.bf16.mxu0 0
      %2080 = vmatpush1.bf16.msra.mxu0 %v1948
      %2081 = vmatprep.subr.bf16.mxu0 0
      %2082 = vmatpush1.bf16.msra.mxu0 %v1949
      %2083 = vmatprep.subr.bf16.mxu0 0
      %2084 = vmatpush1.bf16.msra.mxu0 %v1950
      %2085 = vmatprep.subr.bf16.mxu0 0
      %2086 = vmatpush1.bf16.msra.mxu0 %v1951
      %2087 = vmatprep.subr.bf16.mxu0 0
      %2088 = vmatpush1.bf16.msra.mxu0 %v1952
      %2089 = vmatprep.subr.bf16.mxu0 0
      %2090 = vmatpush1.bf16.msra.mxu0 %v1953
      %2091 = vmatprep.subr.bf16.mxu0 0
      %2092 = vmatpush1.bf16.msra.mxu0 0
      %2093 = vmatprep.subr.bf16.mxu0 0
      %2094 = vmatpush1.bf16.msra.mxu0 0
      %2095 = vmatprep.subr.bf16.mxu0 0
      %2096 = vmatpush1.bf16.msra.mxu0 0
      %2097 = vmatprep.subr.bf16.mxu0 0
      %2098 = vmatpush1.bf16.msra.mxu0 0
      %2099 = vmatprep.mubr.bf16.mxu0 %v2044
      %2100 = vmatmul.mubr.bf16.gmra.mrb[0].mxu0 %v2019
      %v2101 = vpop.f32.mrb[0].mxu0
      %v2102 = vadd.f32 0.0, %v2101
      %v2103 = vpop.f32.mrb[0].mxu0
      %v2104 = vpop.f32.mrb[0].mxu0
      %v2105 = vadd.f32 0.0, %v2104
      %v2106 = vpop.f32.mrb[0].mxu0
      %2107 = vmatprep.mubr.bf16.mxu0 %v2047
      %2108 = vmatmul.mubr.bf16.gmra.mrb[0].mxu0 %v2021
      %v2109 = vpop.f32.mrb[0].mxu0
      %v2110 = vadd.f32 0.0, %v2109
      %v2111 = vpop.f32.mrb[0].mxu0
      %v2112 = vpop.f32.mrb[0].mxu0
      %v2113 = vadd.f32 0.0, %v2112
      %v2114 = vpop.f32.mrb[0].mxu0
      %2115 = vmatprep.mubr.bf16.mxu0 %v2050
      %2116 = vmatmul.mubr.bf16.gmra.mrb[0].mxu0 %v2023
      %v2117 = vpop.f32.mrb[0].mxu0
      %v2118 = vadd.f32 0.0, %v2117
      %v2119 = vpop.f32.mrb[0].mxu0
      %v2120 = vpop.f32.mrb[0].mxu0
      %v2121 = vadd.f32 0.0, %v2120
      %v2122 = vpop.f32.mrb[0].mxu0
      %2123 = vmatprep.mubr.bf16.mxu0 %v2053
      %2124 = vmatmul.mubr.bf16.gmra.mrb[0].mxu0 %v2025
      %v2125 = vpop.f32.mrb[0].mxu0
      %v2126 = vadd.f32 0.0, %v2125
      %v2127 = vpop.f32.mrb[0].mxu0
      %v2128 = vpop.f32.mrb[0].mxu0
      %v2129 = vadd.f32 0.0, %v2128
      %v2130 = vpop.f32.mrb[0].mxu0
      %2131 = vmatprep.mubr.bf16.mxu0 %v2056
      %2132 = vmatmul.mubr.bf16.gmra.mrb[0].mxu0 %v2027
      %v2133 = vpop.f32.mrb[0].mxu0
      %v2134 = vadd.f32 0.0, %v2133
      %v2135 = vpop.f32.mrb[0].mxu0
      %v2136 = vpop.f32.mrb[0].mxu0
      %v2137 = vadd.f32 0.0, %v2136
      %v2138 = vpop.f32.mrb[0].mxu0
      %2139 = vmatprep.mubr.bf16.mxu0 %v2059
      %2140 = vmatmul.mubr.bf16.gmra.mrb[0].mxu0 %v2029
      %v2141 = vpop.f32.mrb[0].mxu0
      %v2142 = vadd.f32 0.0, %v2141
      %v2143 = vpop.f32.mrb[0].mxu0
      %v2144 = vpop.f32.mrb[0].mxu0
      %v2145 = vadd.f32 0.0, %v2144
      %v2146 = vpop.f32.mrb[0].mxu0
      %2147 = vmatprep.mubr.bf16.mxu0 %v2062
      %2148 = vmatmul.mubr.bf16.gmra.mrb[0].mxu0 %v2031
      %v2149 = vpop.f32.mrb[0].mxu0
      %v2150 = vadd.f32 0.0, %v2149
      %v2151 = vpop.f32.mrb[0].mxu0
      %v2152 = vpop.f32.mrb[0].mxu0
      %v2153 = vadd.f32 0.0, %v2152
      %v2154 = vpop.f32.mrb[0].mxu0
      %2155 = vmatprep.mubr.bf16.mxu0 %v2065
      %2156 = vmatmul.mubr.bf16.gmra.mrb[0].mxu0 %v2033
      %v2157 = vpop.f32.mrb[0].mxu0
      %v2158 = vadd.f32 0.0, %v2157
      %v2159 = vpop.f32.mrb[0].mxu0
      %v2160 = vpop.f32.mrb[0].mxu0
      %v2161 = vadd.f32 0.0, %v2160
      %v2162 = vpop.f32.mrb[0].mxu0
      %2163 = vdwg.mxu0
      %v2164 = vadd.f32 %v1764, %v2102
      %v2165 = vadd.f32 %v1765, %v2105
      %v2166 = vadd.f32 %v1766, %v2110
      %v2167 = vadd.f32 %v1767, %v2113
      %v2168 = vadd.f32 %v1768, %v2118
      %v2169 = vadd.f32 %v1769, %v2121
      %v2170 = vadd.f32 %v1770, %v2126
      %v2171 = vadd.f32 %v1771, %v2129
      %v2172 = vadd.f32 %v1772, %v2134
      %v2173 = vadd.f32 %v1773, %v2137
      %v2174 = vadd.f32 %v1774, %v2142
      %v2175 = vadd.f32 %v1775, %v2145
      %v2176 = vadd.f32 %v1776, %v2150
      %v2177 = vadd.f32 %v1777, %v2153
      %v2178 = vadd.f32 %v1778, %v2158
      %v2179 = vadd.f32 %v1779, %v2161
      %vm2180 = vcmp.ge.f32.partialorder %v2164, 0.0
      %vm2181 = vcmp.ge.f32.partialorder %v2165, 0.0
      %vm2182 = vcmp.ge.f32.partialorder %v2166, 0.0
      %vm2183 = vcmp.ge.f32.partialorder %v2167, 0.0
      %vm2184 = vcmp.ge.f32.partialorder %v2168, 0.0
      %vm2185 = vcmp.ge.f32.partialorder %v2169, 0.0
      %vm2186 = vcmp.ge.f32.partialorder %v2170, 0.0
      %vm2187 = vcmp.ge.f32.partialorder %v2171, 0.0
      %vm2188 = vcmp.ge.f32.partialorder %v2172, 0.0
      %vm2189 = vcmp.ge.f32.partialorder %v2173, 0.0
      %vm2190 = vcmp.ge.f32.partialorder %v2174, 0.0
      %vm2191 = vcmp.ge.f32.partialorder %v2175, 0.0
      %vm2192 = vcmp.ge.f32.partialorder %v2176, 0.0
      %vm2193 = vcmp.ge.f32.partialorder %v2177, 0.0
      %vm2194 = vcmp.ge.f32.partialorder %v2178, 0.0
      %vm2195 = vcmp.ge.f32.partialorder %v2179, 0.0
      %v2196 = vmul.f32 %v2164, 0.2
      %v2197 = vmul.f32 %v2165, 0.2
      %v2198 = vmul.f32 %v2166, 0.2
      %v2199 = vmul.f32 %v2167, 0.2
      %v2200 = vmul.f32 %v2168, 0.2
      %v2201 = vmul.f32 %v2169, 0.2
      %v2202 = vmul.f32 %v2170, 0.2
      %v2203 = vmul.f32 %v2171, 0.2
      %v2204 = vmul.f32 %v2172, 0.2
      %v2205 = vmul.f32 %v2173, 0.2
      %v2206 = vmul.f32 %v2174, 0.2
      %v2207 = vmul.f32 %v2175, 0.2
      %v2208 = vmul.f32 %v2176, 0.2
      %v2209 = vmul.f32 %v2177, 0.2
      %v2210 = vmul.f32 %v2178, 0.2
      %v2211 = vmul.f32 %v2179, 0.2
      %v2212 = vsel %vm2180, %v2164, %v2196
      %v2213 = vsel %vm2181, %v2165, %v2197
      %v2214 = vsel %vm2182, %v2166, %v2198
      %v2215 = vsel %vm2183, %v2167, %v2199
      %v2216 = vsel %vm2184, %v2168, %v2200
      %v2217 = vsel %vm2185, %v2169, %v2201
      %v2218 = vsel %vm2186, %v2170, %v2202
      %v2219 = vsel %vm2187, %v2171, %v2203
      %v2220 = vsel %vm2188, %v2172, %v2204
      %v2221 = vsel %vm2189, %v2173, %v2205
      %v2222 = vsel %vm2190, %v2174, %v2206
      %v2223 = vsel %vm2191, %v2175, %v2207
      %v2224 = vsel %vm2192, %v2176, %v2208
      %v2225 = vsel %vm2193, %v2177, %v2209
      %v2226 = vsel %vm2194, %v2178, %v2210
      %v2227 = vsel %vm2195, %v2179, %v2211
      %v2228 = vpack.c.bf16 %v2213, %v2212
      %v2229 = vpack.c.bf16 %v2215, %v2214
      %v2230 = vpack.c.bf16 %v2217, %v2216
      %v2231 = vpack.c.bf16 %v2219, %v2218
      %v2232 = vpack.c.bf16 %v2221, %v2220
      %v2233 = vpack.c.bf16 %v2223, %v2222
      %v2234 = vpack.c.bf16 %v2225, %v2224
      %v2235 = vpack.c.bf16 %v2227, %v2226
      %v2236 = vld [vmem:[%s4] sm:$0xf]
      %v2237 = vld [vmem:[%s4 + $0x4] sm:$0xf]
      %v2238 = vld [vmem:[%s4 + $0x8] sm:$0xf]
      %v2239 = vld [vmem:[%s4 + $0xc] sm:$0xf]
      %v2244 = vunpack.c.l.b16 %v2236
      %v2245 = vunpack.c.l.b16 %v2237
      %v2246 = vunpack.c.l.b16 %v2238
      %v2247 = vunpack.c.l.b16 %v2239
      %v2248 = vpack.c.b16 %v2245, %v2244
      %v2249 = vpack.c.b16 %v2247, %v2246
      %vm2252 = vcmask 261120
      %v2254 = vsel %vm2252, %v2228, 0
      %v2257 = vsel %vm2252, %v2229, 0
      %v2260 = vsel %vm2252, %v2230, 0
      %v2263 = vsel %vm2252, %v2231, 0
      %v2266 = vsel %vm2252, %v2232, 0
      %v2269 = vsel %vm2252, %v2233, 0
      %v2272 = vsel %vm2252, %v2234, 0
      %v2275 = vsel %vm2252, %v2235, 0
      %2277 = vmatprep.subr.bf16.mxu0 0
      %2278 = vmatpush1.bf16.msra.mxu0 %v2248
      %2279 = vmatprep.subr.bf16.mxu0 0
      %2280 = vmatpush1.bf16.msra.mxu0 %v2249
      %2281 = vmatprep.subr.bf16.mxu0 0
      %2282 = vmatpush1.bf16.msra.mxu0 0
      %2283 = vmatprep.subr.bf16.mxu0 0
      %2284 = vmatpush1.bf16.msra.mxu0 0
      %2285 = vmatprep.subr.bf16.mxu0 0
      %2286 = vmatpush1.bf16.msra.mxu0 0
      %2287 = vmatprep.subr.bf16.mxu0 0
      %2288 = vmatpush1.bf16.msra.mxu0 0
      %2289 = vmatprep.subr.bf16.mxu0 0
      %2290 = vmatpush1.bf16.msra.mxu0 0
      %2291 = vmatprep.subr.bf16.mxu0 0
      %2292 = vmatpush1.bf16.msra.mxu0 0
      %2293 = vmatprep.subr.bf16.mxu0 0
      %2294 = vmatpush1.bf16.msra.mxu0 0
      %2295 = vmatprep.subr.bf16.mxu0 0
      %2296 = vmatpush1.bf16.msra.mxu0 0
      %2297 = vmatprep.subr.bf16.mxu0 0
      %2298 = vmatpush1.bf16.msra.mxu0 0
      %2299 = vmatprep.subr.bf16.mxu0 0
      %2300 = vmatpush1.bf16.msra.mxu0 0
      %2301 = vmatprep.subr.bf16.mxu0 0
      %2302 = vmatpush1.bf16.msra.mxu0 0
      %2303 = vmatprep.subr.bf16.mxu0 0
      %2304 = vmatpush1.bf16.msra.mxu0 0
      %2305 = vmatprep.subr.bf16.mxu0 0
      %2306 = vmatpush1.bf16.msra.mxu0 0
      %2307 = vmatprep.subr.bf16.mxu0 0
      %2308 = vmatpush1.bf16.msra.mxu0 0
      %2309 = vmatprep.mubr.bf16.mxu0 0
      %2310 = vmatmul.mubr.bf16.gmra.mrb[0].mxu0 %v2254
      %v2311 = vpop.f32.mrb[0].mxu0
      %v2312 = vadd.f32 0.0, %v2311
      %v2313 = vpop.f32.mrb[0].mxu0
      %v2314 = vpop.f32.mrb[0].mxu0
      %v2315 = vadd.f32 0.0, %v2314
      %v2316 = vpop.f32.mrb[0].mxu0
      %2317 = vmatprep.mubr.bf16.mxu0 0
      %2318 = vmatmul.mubr.bf16.gmra.mrb[0].mxu0 %v2257
      %v2319 = vpop.f32.mrb[0].mxu0
      %v2320 = vadd.f32 0.0, %v2319
      %v2321 = vpop.f32.mrb[0].mxu0
      %v2322 = vpop.f32.mrb[0].mxu0
      %v2323 = vadd.f32 0.0, %v2322
      %v2324 = vpop.f32.mrb[0].mxu0
      %2325 = vmatprep.mubr.bf16.mxu0 0
      %2326 = vmatmul.mubr.bf16.gmra.mrb[0].mxu0 %v2260
      %v2327 = vpop.f32.mrb[0].mxu0
      %v2328 = vadd.f32 0.0, %v2327
      %v2329 = vpop.f32.mrb[0].mxu0
      %v2330 = vpop.f32.mrb[0].mxu0
      %v2331 = vadd.f32 0.0, %v2330
      %v2332 = vpop.f32.mrb[0].mxu0
      %2333 = vmatprep.mubr.bf16.mxu0 0
      %2334 = vmatmul.mubr.bf16.gmra.mrb[0].mxu0 %v2263
      %v2335 = vpop.f32.mrb[0].mxu0
      %v2336 = vadd.f32 0.0, %v2335
      %v2337 = vpop.f32.mrb[0].mxu0
      %v2338 = vpop.f32.mrb[0].mxu0
      %v2339 = vadd.f32 0.0, %v2338
      %v2340 = vpop.f32.mrb[0].mxu0
      %2341 = vmatprep.mubr.bf16.mxu0 0
      %2342 = vmatmul.mubr.bf16.gmra.mrb[0].mxu0 %v2266
      %v2343 = vpop.f32.mrb[0].mxu0
      %v2344 = vadd.f32 0.0, %v2343
      %v2345 = vpop.f32.mrb[0].mxu0
      %v2346 = vpop.f32.mrb[0].mxu0
      %v2347 = vadd.f32 0.0, %v2346
      %v2348 = vpop.f32.mrb[0].mxu0
      %2349 = vmatprep.mubr.bf16.mxu0 0
      %2350 = vmatmul.mubr.bf16.gmra.mrb[0].mxu0 %v2269
      %v2351 = vpop.f32.mrb[0].mxu0
      %v2352 = vadd.f32 0.0, %v2351
      %v2353 = vpop.f32.mrb[0].mxu0
      %v2354 = vpop.f32.mrb[0].mxu0
      %v2355 = vadd.f32 0.0, %v2354
      %v2356 = vpop.f32.mrb[0].mxu0
      %2357 = vmatprep.mubr.bf16.mxu0 0
      %2358 = vmatmul.mubr.bf16.gmra.mrb[0].mxu0 %v2272
      %v2359 = vpop.f32.mrb[0].mxu0
      %v2360 = vadd.f32 0.0, %v2359
      %v2361 = vpop.f32.mrb[0].mxu0
      %v2362 = vpop.f32.mrb[0].mxu0
      %v2363 = vadd.f32 0.0, %v2362
      %v2364 = vpop.f32.mrb[0].mxu0
      %2365 = vmatprep.mubr.bf16.mxu0 0
      %2366 = vmatmul.mubr.bf16.gmra.mrb[0].mxu0 %v2275
      %v2367 = vpop.f32.mrb[0].mxu0
      %v2368 = vadd.f32 0.0, %v2367
      %v2369 = vpop.f32.mrb[0].mxu0
      %v2370 = vpop.f32.mrb[0].mxu0
      %v2371 = vadd.f32 0.0, %v2370
      %v2372 = vpop.f32.mrb[0].mxu0
      %2373 = vdwg.mxu0
      %v2374 = vpack.c.bf16 %v2315, %v2312
      %v2375 = vpack.c.bf16 %v2323, %v2320
      %v2376 = vpack.c.bf16 %v2331, %v2328
      %v2377 = vpack.c.bf16 %v2339, %v2336
      %v2378 = vpack.c.bf16 %v2347, %v2344
      %v2379 = vpack.c.bf16 %v2355, %v2352
      %v2380 = vpack.c.bf16 %v2363, %v2360
      %v2381 = vpack.c.bf16 %v2371, %v2368
      %v2382 = vld [vmem:[%s3] sm:$0xf]
      %v2383 = vld [vmem:[%s3 + $0x4] sm:$0xf]
      %v2384 = vld [vmem:[%s3 + $0x8] sm:$0xf]
      %v2385 = vld [vmem:[%s3 + $0xc] sm:$0xf]
      %v2386 = vld [vmem:[%s3 + $0x10] sm:$0xf]
      %v2387 = vld [vmem:[%s3 + $0x14] sm:$0xf]
      %v2388 = vld [vmem:[%s3 + $0x18] sm:$0xf]
      %v2389 = vld [vmem:[%s3 + $0x1c] sm:$0xf]
      %v2390 = vld [vmem:[%s3 + $0x20] sm:$0xf]
      %v2391 = vld [vmem:[%s3 + $0x24] sm:$0xf]
      %v2392 = vld [vmem:[%s3 + $0x28] sm:$0xf]
      %v2393 = vld [vmem:[%s3 + $0x2c] sm:$0xf]
      %v2394 = vld [vmem:[%s3 + $0x30] sm:$0xf]
      %v2395 = vld [vmem:[%s3 + $0x34] sm:$0xf]
      %v2396 = vld [vmem:[%s3 + $0x38] sm:$0xf]
      %v2397 = vld [vmem:[%s3 + $0x3c] sm:$0xf]
      %s2398 = scalar_lea.vmem %s4, 16
      %v2399 = vld [vmem:[%s2398] sm:$0xf]
      %v2400 = vld [vmem:[%s2398 + $0x4] sm:$0xf]
      %v2401 = vld [vmem:[%s2398 + $0x8] sm:$0xf]
      %v2402 = vld [vmem:[%s2398 + $0xc] sm:$0xf]
      %v2407 = vunpack.c.l.b16 %v2399
      %v2408 = vunpack.c.l.b16 %v2400
      %v2409 = vunpack.c.l.b16 %v2401
      %v2410 = vunpack.c.l.b16 %v2402
      %v2411 = vpack.c.b16 %v2408, %v2407
      %v2412 = vpack.c.b16 %v2410, %v2409
      %2415 = vmatprep.subr.bf16.mxu0 0
      %2416 = vmatpush1.bf16.msra.mxu0 %v2411
      %2417 = vmatprep.subr.bf16.mxu0 0
      %2418 = vmatpush1.bf16.msra.mxu0 %v2412
      %2419 = vmatprep.subr.bf16.mxu0 0
      %2420 = vmatpush1.bf16.msra.mxu0 0
      %2421 = vmatprep.subr.bf16.mxu0 0
      %2422 = vmatpush1.bf16.msra.mxu0 0
      %2423 = vmatprep.subr.bf16.mxu0 0
      %2424 = vmatpush1.bf16.msra.mxu0 0
      %2425 = vmatprep.subr.bf16.mxu0 0
      %2426 = vmatpush1.bf16.msra.mxu0 0
      %2427 = vmatprep.subr.bf16.mxu0 0
      %2428 = vmatpush1.bf16.msra.mxu0 0
      %2429 = vmatprep.subr.bf16.mxu0 0
      %2430 = vmatpush1.bf16.msra.mxu0 0
      %2431 = vmatprep.subr.bf16.mxu0 0
      %2432 = vmatpush1.bf16.msra.mxu0 0
      %2433 = vmatprep.subr.bf16.mxu0 0
      %2434 = vmatpush1.bf16.msra.mxu0 0
      %2435 = vmatprep.subr.bf16.mxu0 0
      %2436 = vmatpush1.bf16.msra.mxu0 0
      %2437 = vmatprep.subr.bf16.mxu0 0
      %2438 = vmatpush1.bf16.msra.mxu0 0
      %2439 = vmatprep.subr.bf16.mxu0 0
      %2440 = vmatpush1.bf16.msra.mxu0 0
      %2441 = vmatprep.subr.bf16.mxu0 0
      %2442 = vmatpush1.bf16.msra.mxu0 0
      %2443 = vmatprep.subr.bf16.mxu0 0
      %2444 = vmatpush1.bf16.msra.mxu0 0
      %2445 = vmatprep.subr.bf16.mxu0 0
      %2446 = vmatpush1.bf16.msra.mxu0 0
      %2447 = vmatprep.mubr.bf16.mxu0 0
      %2448 = vmatmul.mubr.bf16.gmra.mrb[0].mxu0 %v2254
      %v2449 = vpop.f32.mrb[0].mxu0
      %v2450 = vadd.f32 0.0, %v2449
      %v2451 = vpop.f32.mrb[0].mxu0
      %v2452 = vpop.f32.mrb[0].mxu0
      %v2453 = vadd.f32 0.0, %v2452
      %v2454 = vpop.f32.mrb[0].mxu0
      %2455 = vmatprep.mubr.bf16.mxu0 0
      %2456 = vmatmul.mubr.bf16.gmra.mrb[0].mxu0 %v2257
      %v2457 = vpop.f32.mrb[0].mxu0
      %v2458 = vadd.f32 0.0, %v2457
      %v2459 = vpop.f32.mrb[0].mxu0
      %v2460 = vpop.f32.mrb[0].mxu0
      %v2461 = vadd.f32 0.0, %v2460
      %v2462 = vpop.f32.mrb[0].mxu0
      %2463 = vmatprep.mubr.bf16.mxu0 0
      %2464 = vmatmul.mubr.bf16.gmra.mrb[0].mxu0 %v2260
      %v2465 = vpop.f32.mrb[0].mxu0
      %v2466 = vadd.f32 0.0, %v2465
      %v2467 = vpop.f32.mrb[0].mxu0
      %v2468 = vpop.f32.mrb[0].mxu0
      %v2469 = vadd.f32 0.0, %v2468
      %v2470 = vpop.f32.mrb[0].mxu0
      %2471 = vmatprep.mubr.bf16.mxu0 0
      %2472 = vmatmul.mubr.bf16.gmra.mrb[0].mxu0 %v2263
      %v2473 = vpop.f32.mrb[0].mxu0
      %v2474 = vadd.f32 0.0, %v2473
      %v2475 = vpop.f32.mrb[0].mxu0
      %v2476 = vpop.f32.mrb[0].mxu0
      %v2477 = vadd.f32 0.0, %v2476
      %v2478 = vpop.f32.mrb[0].mxu0
      %2479 = vmatprep.mubr.bf16.mxu0 0
      %2480 = vmatmul.mubr.bf16.gmra.mrb[0].mxu0 %v2266
      %v2481 = vpop.f32.mrb[0].mxu0
      %v2482 = vadd.f32 0.0, %v2481
      %v2483 = vpop.f32.mrb[0].mxu0
      %v2484 = vpop.f32.mrb[0].mxu0
      %v2485 = vadd.f32 0.0, %v2484
      %v2486 = vpop.f32.mrb[0].mxu0
      %2487 = vmatprep.mubr.bf16.mxu0 0
      %2488 = vmatmul.mubr.bf16.gmra.mrb[0].mxu0 %v2269
      %v2489 = vpop.f32.mrb[0].mxu0
      %v2490 = vadd.f32 0.0, %v2489
      %v2491 = vpop.f32.mrb[0].mxu0
      %v2492 = vpop.f32.mrb[0].mxu0
      %v2493 = vadd.f32 0.0, %v2492
      %v2494 = vpop.f32.mrb[0].mxu0
      %2495 = vmatprep.mubr.bf16.mxu0 0
      %2496 = vmatmul.mubr.bf16.gmra.mrb[0].mxu0 %v2272
      %v2497 = vpop.f32.mrb[0].mxu0
      %v2498 = vadd.f32 0.0, %v2497
      %v2499 = vpop.f32.mrb[0].mxu0
      %v2500 = vpop.f32.mrb[0].mxu0
      %v2501 = vadd.f32 0.0, %v2500
      %v2502 = vpop.f32.mrb[0].mxu0
      %2503 = vmatprep.mubr.bf16.mxu0 0
      %2504 = vmatmul.mubr.bf16.gmra.mrb[0].mxu0 %v2275
      %v2505 = vpop.f32.mrb[0].mxu0
      %v2506 = vadd.f32 0.0, %v2505
      %v2507 = vpop.f32.mrb[0].mxu0
      %v2508 = vpop.f32.mrb[0].mxu0
      %v2509 = vadd.f32 0.0, %v2508
      %v2510 = vpop.f32.mrb[0].mxu0
      %2511 = vdwg.mxu0
      %v2512 = vpack.c.bf16 %v2453, %v2450
      %v2513 = vpack.c.bf16 %v2461, %v2458
      %v2514 = vpack.c.bf16 %v2469, %v2466
      %v2515 = vpack.c.bf16 %v2477, %v2474
      %v2516 = vpack.c.bf16 %v2485, %v2482
      %v2517 = vpack.c.bf16 %v2493, %v2490
      %v2518 = vpack.c.bf16 %v2501, %v2498
      %v2519 = vpack.c.bf16 %v2509, %v2506
      %s2520 = scalar_lea.vmem %s3, 64
      %v2521 = vld [vmem:[%s2520] sm:$0xf]
      %v2522 = vld [vmem:[%s2520 + $0x4] sm:$0xf]
      %v2523 = vld [vmem:[%s2520 + $0x8] sm:$0xf]
      %v2524 = vld [vmem:[%s2520 + $0xc] sm:$0xf]
      %v2525 = vld [vmem:[%s2520 + $0x10] sm:$0xf]
      %v2526 = vld [vmem:[%s2520 + $0x14] sm:$0xf]
      %v2527 = vld [vmem:[%s2520 + $0x18] sm:$0xf]
      %v2528 = vld [vmem:[%s2520 + $0x1c] sm:$0xf]
      %v2529 = vld [vmem:[%s2520 + $0x20] sm:$0xf]
      %v2530 = vld [vmem:[%s2520 + $0x24] sm:$0xf]
      %v2531 = vld [vmem:[%s2520 + $0x28] sm:$0xf]
      %v2532 = vld [vmem:[%s2520 + $0x2c] sm:$0xf]
      %v2533 = vld [vmem:[%s2520 + $0x30] sm:$0xf]
      %v2534 = vld [vmem:[%s2520 + $0x34] sm:$0xf]
      %v2535 = vld [vmem:[%s2520 + $0x38] sm:$0xf]
      %v2536 = vld [vmem:[%s2520 + $0x3c] sm:$0xf]
      %v2553 = vunpack.c.l.b16 %v2521
      %v2554 = vunpack.c.l.b16 %v2522
      %v2555 = vunpack.c.l.b16 %v2523
      %v2556 = vunpack.c.l.b16 %v2524
      %v2557 = vunpack.c.l.b16 %v2525
      %v2558 = vunpack.c.l.b16 %v2526
      %v2559 = vunpack.c.l.b16 %v2527
      %v2560 = vunpack.c.l.b16 %v2528
      %v2561 = vunpack.c.l.b16 %v2529
      %v2562 = vunpack.c.l.b16 %v2530
      %v2563 = vunpack.c.l.b16 %v2531
      %v2564 = vunpack.c.l.b16 %v2532
      %v2565 = vunpack.c.l.b16 %v2533
      %v2566 = vunpack.c.l.b16 %v2534
      %v2567 = vunpack.c.l.b16 %v2535
      %v2568 = vunpack.c.l.b16 %v2536
      %v2569 = vpack.c.b16 %v2554, %v2553
      %v2570 = vpack.c.b16 %v2556, %v2555
      %v2571 = vpack.c.b16 %v2558, %v2557
      %v2572 = vpack.c.b16 %v2560, %v2559
      %v2573 = vpack.c.b16 %v2562, %v2561
      %v2574 = vpack.c.b16 %v2564, %v2563
      %v2575 = vpack.c.b16 %v2566, %v2565
      %v2576 = vpack.c.b16 %v2568, %v2567
      %2585 = vmatprep.subr.bf16.mxu0 0
      %2586 = vmatpush1.bf16.msra.mxu0 %v2512
      %2587 = vmatprep.subr.bf16.mxu0 0
      %2588 = vmatpush1.bf16.msra.mxu0 %v2513
      %2589 = vmatprep.subr.bf16.mxu0 0
      %2590 = vmatpush1.bf16.msra.mxu0 %v2514
      %2591 = vmatprep.subr.bf16.mxu0 0
      %2592 = vmatpush1.bf16.msra.mxu0 %v2515
      %2593 = vmatprep.subr.bf16.mxu0 0
      %2594 = vmatpush1.bf16.msra.mxu0 %v2516
      %2595 = vmatprep.subr.bf16.mxu0 0
      %2596 = vmatpush1.bf16.msra.mxu0 %v2517
      %2597 = vmatprep.subr.bf16.mxu0 0
      %2598 = vmatpush1.bf16.msra.mxu0 %v2518
      %2599 = vmatprep.subr.bf16.mxu0 0
      %2600 = vmatpush1.bf16.msra.mxu0 %v2519
      %2601 = vmatprep.subr.bf16.mxu0 0
      %2602 = vmatpush1.bf16.msra.mxu0 0
      %2603 = vmatprep.subr.bf16.mxu0 0
      %2604 = vmatpush1.bf16.msra.mxu0 0
      %2605 = vmatprep.subr.bf16.mxu0 0
      %2606 = vmatpush1.bf16.msra.mxu0 0
      %2607 = vmatprep.subr.bf16.mxu0 0
      %2608 = vmatpush1.bf16.msra.mxu0 0
      %2609 = vmatprep.subr.bf16.mxu0 0
      %2610 = vmatpush1.bf16.msra.mxu0 0
      %2611 = vmatprep.subr.bf16.mxu0 0
      %2612 = vmatpush1.bf16.msra.mxu0 0
      %2613 = vmatprep.subr.bf16.mxu0 0
      %2614 = vmatpush1.bf16.msra.mxu0 0
      %2615 = vmatprep.subr.bf16.mxu0 0
      %2616 = vmatpush1.bf16.msra.mxu0 0
      %2617 = vmatprep.mubr.bf16.mxu0 0
      %2618 = vmatmul.mubr.bf16.gmra.mrb[0].mxu0 %v2569
      %v2619 = vpop.f32.mrb[0].mxu0
      %v2620 = vadd.f32 0.0, %v2619
      %v2621 = vpop.f32.mrb[0].mxu0
      %v2622 = vpop.f32.mrb[0].mxu0
      %v2623 = vadd.f32 0.0, %v2622
      %v2624 = vpop.f32.mrb[0].mxu0
      %2625 = vmatprep.mubr.bf16.mxu0 0
      %2626 = vmatmul.mubr.bf16.gmra.mrb[0].mxu0 %v2570
      %v2627 = vpop.f32.mrb[0].mxu0
      %v2628 = vadd.f32 0.0, %v2627
      %v2629 = vpop.f32.mrb[0].mxu0
      %v2630 = vpop.f32.mrb[0].mxu0
      %v2631 = vadd.f32 0.0, %v2630
      %v2632 = vpop.f32.mrb[0].mxu0
      %2633 = vmatprep.mubr.bf16.mxu0 0
      %2634 = vmatmul.mubr.bf16.gmra.mrb[0].mxu0 %v2571
      %v2635 = vpop.f32.mrb[0].mxu0
      %v2636 = vadd.f32 0.0, %v2635
      %v2637 = vpop.f32.mrb[0].mxu0
      %v2638 = vpop.f32.mrb[0].mxu0
      %v2639 = vadd.f32 0.0, %v2638
      %v2640 = vpop.f32.mrb[0].mxu0
      %2641 = vmatprep.mubr.bf16.mxu0 0
      %2642 = vmatmul.mubr.bf16.gmra.mrb[0].mxu0 %v2572
      %v2643 = vpop.f32.mrb[0].mxu0
      %v2644 = vadd.f32 0.0, %v2643
      %v2645 = vpop.f32.mrb[0].mxu0
      %v2646 = vpop.f32.mrb[0].mxu0
      %v2647 = vadd.f32 0.0, %v2646
      %v2648 = vpop.f32.mrb[0].mxu0
      %2649 = vmatprep.mubr.bf16.mxu0 0
      %2650 = vmatmul.mubr.bf16.gmra.mrb[0].mxu0 %v2573
      %v2651 = vpop.f32.mrb[0].mxu0
      %v2652 = vadd.f32 0.0, %v2651
      %v2653 = vpop.f32.mrb[0].mxu0
      %v2654 = vpop.f32.mrb[0].mxu0
      %v2655 = vadd.f32 0.0, %v2654
      %v2656 = vpop.f32.mrb[0].mxu0
      %2657 = vmatprep.mubr.bf16.mxu0 0
      %2658 = vmatmul.mubr.bf16.gmra.mrb[0].mxu0 %v2574
      %v2659 = vpop.f32.mrb[0].mxu0
      %v2660 = vadd.f32 0.0, %v2659
      %v2661 = vpop.f32.mrb[0].mxu0
      %v2662 = vpop.f32.mrb[0].mxu0
      %v2663 = vadd.f32 0.0, %v2662
      %v2664 = vpop.f32.mrb[0].mxu0
      %2665 = vmatprep.mubr.bf16.mxu0 0
      %2666 = vmatmul.mubr.bf16.gmra.mrb[0].mxu0 %v2575
      %v2667 = vpop.f32.mrb[0].mxu0
      %v2668 = vadd.f32 0.0, %v2667
      %v2669 = vpop.f32.mrb[0].mxu0
      %v2670 = vpop.f32.mrb[0].mxu0
      %v2671 = vadd.f32 0.0, %v2670
      %v2672 = vpop.f32.mrb[0].mxu0
      %2673 = vmatprep.mubr.bf16.mxu0 0
      %2674 = vmatmul.mubr.bf16.gmra.mrb[0].mxu0 %v2576
      %v2675 = vpop.f32.mrb[0].mxu0
      %v2676 = vadd.f32 0.0, %v2675
      %v2677 = vpop.f32.mrb[0].mxu0
      %v2678 = vpop.f32.mrb[0].mxu0
      %v2679 = vadd.f32 0.0, %v2678
      %v2680 = vpop.f32.mrb[0].mxu0
      %2681 = vdwg.mxu0
      %v2698 = vunpack.c.l.b16 %v2382
      %v2699 = vunpack.c.l.b16 %v2383
      %v2700 = vunpack.c.l.b16 %v2384
      %v2701 = vunpack.c.l.b16 %v2385
      %v2702 = vunpack.c.l.b16 %v2386
      %v2703 = vunpack.c.l.b16 %v2387
      %v2704 = vunpack.c.l.b16 %v2388
      %v2705 = vunpack.c.l.b16 %v2389
      %v2706 = vunpack.c.l.b16 %v2390
      %v2707 = vunpack.c.l.b16 %v2391
      %v2708 = vunpack.c.l.b16 %v2392
      %v2709 = vunpack.c.l.b16 %v2393
      %v2710 = vunpack.c.l.b16 %v2394
      %v2711 = vunpack.c.l.b16 %v2395
      %v2712 = vunpack.c.l.b16 %v2396
      %v2713 = vunpack.c.l.b16 %v2397
      %v2714 = vpack.c.b16 %v2699, %v2698
      %v2715 = vpack.c.b16 %v2701, %v2700
      %v2716 = vpack.c.b16 %v2703, %v2702
      %v2717 = vpack.c.b16 %v2705, %v2704
      %v2718 = vpack.c.b16 %v2707, %v2706
      %v2719 = vpack.c.b16 %v2709, %v2708
      %v2720 = vpack.c.b16 %v2711, %v2710
      %v2721 = vpack.c.b16 %v2713, %v2712
      %2730 = vmatprep.subr.bf16.mxu0 0
      %2731 = vmatpush1.bf16.msra.mxu0 %v2374
      %2732 = vmatprep.subr.bf16.mxu0 0
      %2733 = vmatpush1.bf16.msra.mxu0 %v2375
      %2734 = vmatprep.subr.bf16.mxu0 0
      %2735 = vmatpush1.bf16.msra.mxu0 %v2376
      %2736 = vmatprep.subr.bf16.mxu0 0
      %2737 = vmatpush1.bf16.msra.mxu0 %v2377
      %2738 = vmatprep.subr.bf16.mxu0 0
      %2739 = vmatpush1.bf16.msra.mxu0 %v2378
      %2740 = vmatprep.subr.bf16.mxu0 0
      %2741 = vmatpush1.bf16.msra.mxu0 %v2379
      %2742 = vmatprep.subr.bf16.mxu0 0
      %2743 = vmatpush1.bf16.msra.mxu0 %v2380
      %2744 = vmatprep.subr.bf16.mxu0 0
      %2745 = vmatpush1.bf16.msra.mxu0 %v2381
      %2746 = vmatprep.subr.bf16.mxu0 0
      %2747 = vmatpush1.bf16.msra.mxu0 0
      %2748 = vmatprep.subr.bf16.mxu0 0
      %2749 = vmatpush1.bf16.msra.mxu0 0
      %2750 = vmatprep.subr.bf16.mxu0 0
      %2751 = vmatpush1.bf16.msra.mxu0 0
      %2752 = vmatprep.subr.bf16.mxu0 0
      %2753 = vmatpush1.bf16.msra.mxu0 0
      %2754 = vmatprep.subr.bf16.mxu0 0
      %2755 = vmatpush1.bf16.msra.mxu0 0
      %2756 = vmatprep.subr.bf16.mxu0 0
      %2757 = vmatpush1.bf16.msra.mxu0 0
      %2758 = vmatprep.subr.bf16.mxu0 0
      %2759 = vmatpush1.bf16.msra.mxu0 0
      %2760 = vmatprep.subr.bf16.mxu0 0
      %2761 = vmatpush1.bf16.msra.mxu0 0
      %2762 = vmatprep.mubr.bf16.mxu0 0
      %2763 = vmatmul.mubr.bf16.gmra.mrb[0].mxu0 %v2714
      %v2764 = vpop.f32.mrb[0].mxu0
      %v2765 = vadd.f32 %v2620, %v2764
      %v2766 = vpop.f32.mrb[0].mxu0
      %v2767 = vpop.f32.mrb[0].mxu0
      %v2768 = vadd.f32 %v2623, %v2767
      %v2769 = vpop.f32.mrb[0].mxu0
      %2770 = vmatprep.mubr.bf16.mxu0 0
      %2771 = vmatmul.mubr.bf16.gmra.mrb[0].mxu0 %v2715
      %v2772 = vpop.f32.mrb[0].mxu0
      %v2773 = vadd.f32 %v2628, %v2772
      %v2774 = vpop.f32.mrb[0].mxu0
      %v2775 = vpop.f32.mrb[0].mxu0
      %v2776 = vadd.f32 %v2631, %v2775
      %v2777 = vpop.f32.mrb[0].mxu0
      %2778 = vmatprep.mubr.bf16.mxu0 0
      %2779 = vmatmul.mubr.bf16.gmra.mrb[0].mxu0 %v2716
      %v2780 = vpop.f32.mrb[0].mxu0
      %v2781 = vadd.f32 %v2636, %v2780
      %v2782 = vpop.f32.mrb[0].mxu0
      %v2783 = vpop.f32.mrb[0].mxu0
      %v2784 = vadd.f32 %v2639, %v2783
      %v2785 = vpop.f32.mrb[0].mxu0
      %2786 = vmatprep.mubr.bf16.mxu0 0
      %2787 = vmatmul.mubr.bf16.gmra.mrb[0].mxu0 %v2717
      %v2788 = vpop.f32.mrb[0].mxu0
      %v2789 = vadd.f32 %v2644, %v2788
      %v2790 = vpop.f32.mrb[0].mxu0
      %v2791 = vpop.f32.mrb[0].mxu0
      %v2792 = vadd.f32 %v2647, %v2791
      %v2793 = vpop.f32.mrb[0].mxu0
      %2794 = vmatprep.mubr.bf16.mxu0 0
      %2795 = vmatmul.mubr.bf16.gmra.mrb[0].mxu0 %v2718
      %v2796 = vpop.f32.mrb[0].mxu0
      %v2797 = vadd.f32 %v2652, %v2796
      %v2798 = vpop.f32.mrb[0].mxu0
      %v2799 = vpop.f32.mrb[0].mxu0
      %v2800 = vadd.f32 %v2655, %v2799
      %v2801 = vpop.f32.mrb[0].mxu0
      %2802 = vmatprep.mubr.bf16.mxu0 0
      %2803 = vmatmul.mubr.bf16.gmra.mrb[0].mxu0 %v2719
      %v2804 = vpop.f32.mrb[0].mxu0
      %v2805 = vadd.f32 %v2660, %v2804
      %v2806 = vpop.f32.mrb[0].mxu0
      %v2807 = vpop.f32.mrb[0].mxu0
      %v2808 = vadd.f32 %v2663, %v2807
      %v2809 = vpop.f32.mrb[0].mxu0
      %2810 = vmatprep.mubr.bf16.mxu0 0
      %2811 = vmatmul.mubr.bf16.gmra.mrb[0].mxu0 %v2720
      %v2812 = vpop.f32.mrb[0].mxu0
      %v2813 = vadd.f32 %v2668, %v2812
      %v2814 = vpop.f32.mrb[0].mxu0
      %v2815 = vpop.f32.mrb[0].mxu0
      %v2816 = vadd.f32 %v2671, %v2815
      %v2817 = vpop.f32.mrb[0].mxu0
      %2818 = vmatprep.mubr.bf16.mxu0 0
      %2819 = vmatmul.mubr.bf16.gmra.mrb[0].mxu0 %v2721
      %v2820 = vpop.f32.mrb[0].mxu0
      %v2821 = vadd.f32 %v2676, %v2820
      %v2822 = vpop.f32.mrb[0].mxu0
      %v2823 = vpop.f32.mrb[0].mxu0
      %v2824 = vadd.f32 %v2679, %v2823
      %v2825 = vpop.f32.mrb[0].mxu0
      %2826 = vdwg.mxu0
      %s2827 = scalar_lea.vmem %s4, 32
      %v2828 = vld [vmem:[%s2827] sm:$0xf]
      %v2829 = vld [vmem:[%s2827 + $0x4] sm:$0xf]
      %v2830 = vld [vmem:[%s2827 + $0x8] sm:$0xf]
      %v2831 = vld [vmem:[%s2827 + $0xc] sm:$0xf]
      %v2836 = vunpack.c.l.b16 %v2828
      %v2837 = vunpack.c.l.b16 %v2829
      %v2838 = vunpack.c.l.b16 %v2830
      %v2839 = vunpack.c.l.b16 %v2831
      %v2840 = vpack.c.b16 %v2837, %v2836
      %v2841 = vpack.c.b16 %v2839, %v2838
      %2844 = vmatprep.subr.bf16.mxu0 0
      %2845 = vmatpush1.bf16.msra.mxu0 %v2840
      %2846 = vmatprep.subr.bf16.mxu0 0
      %2847 = vmatpush1.bf16.msra.mxu0 %v2841
      %2848 = vmatprep.subr.bf16.mxu0 0
      %2849 = vmatpush1.bf16.msra.mxu0 0
      %2850 = vmatprep.subr.bf16.mxu0 0
      %2851 = vmatpush1.bf16.msra.mxu0 0
      %2852 = vmatprep.subr.bf16.mxu0 0
      %2853 = vmatpush1.bf16.msra.mxu0 0
      %2854 = vmatprep.subr.bf16.mxu0 0
      %2855 = vmatpush1.bf16.msra.mxu0 0
      %2856 = vmatprep.subr.bf16.mxu0 0
      %2857 = vmatpush1.bf16.msra.mxu0 0
      %2858 = vmatprep.subr.bf16.mxu0 0
      %2859 = vmatpush1.bf16.msra.mxu0 0
      %2860 = vmatprep.subr.bf16.mxu0 0
      %2861 = vmatpush1.bf16.msra.mxu0 0
      %2862 = vmatprep.subr.bf16.mxu0 0
      %2863 = vmatpush1.bf16.msra.mxu0 0
      %2864 = vmatprep.subr.bf16.mxu0 0
      %2865 = vmatpush1.bf16.msra.mxu0 0
      %2866 = vmatprep.subr.bf16.mxu0 0
      %2867 = vmatpush1.bf16.msra.mxu0 0
      %2868 = vmatprep.subr.bf16.mxu0 0
      %2869 = vmatpush1.bf16.msra.mxu0 0
      %2870 = vmatprep.subr.bf16.mxu0 0
      %2871 = vmatpush1.bf16.msra.mxu0 0
      %2872 = vmatprep.subr.bf16.mxu0 0
      %2873 = vmatpush1.bf16.msra.mxu0 0
      %2874 = vmatprep.subr.bf16.mxu0 0
      %2875 = vmatpush1.bf16.msra.mxu0 0
      %2876 = vmatprep.mubr.bf16.mxu0 0
      %2877 = vmatmul.mubr.bf16.gmra.mrb[0].mxu0 %v2254
      %v2878 = vpop.f32.mrb[0].mxu0
      %v2879 = vadd.f32 0.0, %v2878
      %v2880 = vpop.f32.mrb[0].mxu0
      %v2881 = vpop.f32.mrb[0].mxu0
      %v2882 = vadd.f32 0.0, %v2881
      %v2883 = vpop.f32.mrb[0].mxu0
      %2884 = vmatprep.mubr.bf16.mxu0 0
      %2885 = vmatmul.mubr.bf16.gmra.mrb[0].mxu0 %v2257
      %v2886 = vpop.f32.mrb[0].mxu0
      %v2887 = vadd.f32 0.0, %v2886
      %v2888 = vpop.f32.mrb[0].mxu0
      %v2889 = vpop.f32.mrb[0].mxu0
      %v2890 = vadd.f32 0.0, %v2889
      %v2891 = vpop.f32.mrb[0].mxu0
      %2892 = vmatprep.mubr.bf16.mxu0 0
      %2893 = vmatmul.mubr.bf16.gmra.mrb[0].mxu0 %v2260
      %v2894 = vpop.f32.mrb[0].mxu0
      %v2895 = vadd.f32 0.0, %v2894
      %v2896 = vpop.f32.mrb[0].mxu0
      %v2897 = vpop.f32.mrb[0].mxu0
      %v2898 = vadd.f32 0.0, %v2897
      %v2899 = vpop.f32.mrb[0].mxu0
      %2900 = vmatprep.mubr.bf16.mxu0 0
      %2901 = vmatmul.mubr.bf16.gmra.mrb[0].mxu0 %v2263
      %v2902 = vpop.f32.mrb[0].mxu0
      %v2903 = vadd.f32 0.0, %v2902
      %v2904 = vpop.f32.mrb[0].mxu0
      %v2905 = vpop.f32.mrb[0].mxu0
      %v2906 = vadd.f32 0.0, %v2905
      %v2907 = vpop.f32.mrb[0].mxu0
      %2908 = vmatprep.mubr.bf16.mxu0 0
      %2909 = vmatmul.mubr.bf16.gmra.mrb[0].mxu0 %v2266
      %v2910 = vpop.f32.mrb[0].mxu0
      %v2911 = vadd.f32 0.0, %v2910
      %v2912 = vpop.f32.mrb[0].mxu0
      %v2913 = vpop.f32.mrb[0].mxu0
      %v2914 = vadd.f32 0.0, %v2913
      %v2915 = vpop.f32.mrb[0].mxu0
      %2916 = vmatprep.mubr.bf16.mxu0 0
      %2917 = vmatmul.mubr.bf16.gmra.mrb[0].mxu0 %v2269
      %v2918 = vpop.f32.mrb[0].mxu0
      %v2919 = vadd.f32 0.0, %v2918
      %v2920 = vpop.f32.mrb[0].mxu0
      %v2921 = vpop.f32.mrb[0].mxu0
      %v2922 = vadd.f32 0.0, %v2921
      %v2923 = vpop.f32.mrb[0].mxu0
      %2924 = vmatprep.mubr.bf16.mxu0 0
      %2925 = vmatmul.mubr.bf16.gmra.mrb[0].mxu0 %v2272
      %v2926 = vpop.f32.mrb[0].mxu0
      %v2927 = vadd.f32 0.0, %v2926
      %v2928 = vpop.f32.mrb[0].mxu0
      %v2929 = vpop.f32.mrb[0].mxu0
      %v2930 = vadd.f32 0.0, %v2929
      %v2931 = vpop.f32.mrb[0].mxu0
      %2932 = vmatprep.mubr.bf16.mxu0 0
      %2933 = vmatmul.mubr.bf16.gmra.mrb[0].mxu0 %v2275
      %v2934 = vpop.f32.mrb[0].mxu0
      %v2935 = vadd.f32 0.0, %v2934
      %v2936 = vpop.f32.mrb[0].mxu0
      %v2937 = vpop.f32.mrb[0].mxu0
      %v2938 = vadd.f32 0.0, %v2937
      %v2939 = vpop.f32.mrb[0].mxu0
      %2940 = vdwg.mxu0
      %v2941 = vpack.c.bf16 %v2882, %v2879
      %v2942 = vpack.c.bf16 %v2890, %v2887
      %v2943 = vpack.c.bf16 %v2898, %v2895
      %v2944 = vpack.c.bf16 %v2906, %v2903
      %v2945 = vpack.c.bf16 %v2914, %v2911
      %v2946 = vpack.c.bf16 %v2922, %v2919
      %v2947 = vpack.c.bf16 %v2930, %v2927
      %v2948 = vpack.c.bf16 %v2938, %v2935
      %s2949 = scalar_lea.vmem %s3, 128
      %v2950 = vld [vmem:[%s2949] sm:$0xf]
      %v2951 = vld [vmem:[%s2949 + $0x4] sm:$0xf]
      %v2952 = vld [vmem:[%s2949 + $0x8] sm:$0xf]
      %v2953 = vld [vmem:[%s2949 + $0xc] sm:$0xf]
      %v2954 = vld [vmem:[%s2949 + $0x10] sm:$0xf]
      %v2955 = vld [vmem:[%s2949 + $0x14] sm:$0xf]
      %v2956 = vld [vmem:[%s2949 + $0x18] sm:$0xf]
      %v2957 = vld [vmem:[%s2949 + $0x1c] sm:$0xf]
      %v2958 = vld [vmem:[%s2949 + $0x20] sm:$0xf]
      %v2959 = vld [vmem:[%s2949 + $0x24] sm:$0xf]
      %v2960 = vld [vmem:[%s2949 + $0x28] sm:$0xf]
      %v2961 = vld [vmem:[%s2949 + $0x2c] sm:$0xf]
      %v2962 = vld [vmem:[%s2949 + $0x30] sm:$0xf]
      %v2963 = vld [vmem:[%s2949 + $0x34] sm:$0xf]
      %v2964 = vld [vmem:[%s2949 + $0x38] sm:$0xf]
      %v2965 = vld [vmem:[%s2949 + $0x3c] sm:$0xf]
      %v2982 = vunpack.c.l.b16 %v2950
      %v2983 = vunpack.c.l.b16 %v2951
      %v2984 = vunpack.c.l.b16 %v2952
      %v2985 = vunpack.c.l.b16 %v2953
      %v2986 = vunpack.c.l.b16 %v2954
      %v2987 = vunpack.c.l.b16 %v2955
      %v2988 = vunpack.c.l.b16 %v2956
      %v2989 = vunpack.c.l.b16 %v2957
      %v2990 = vunpack.c.l.b16 %v2958
      %v2991 = vunpack.c.l.b16 %v2959
      %v2992 = vunpack.c.l.b16 %v2960
      %v2993 = vunpack.c.l.b16 %v2961
      %v2994 = vunpack.c.l.b16 %v2962
      %v2995 = vunpack.c.l.b16 %v2963
      %v2996 = vunpack.c.l.b16 %v2964
      %v2997 = vunpack.c.l.b16 %v2965
      %v2998 = vpack.c.b16 %v2983, %v2982
      %v2999 = vpack.c.b16 %v2985, %v2984
      %v3000 = vpack.c.b16 %v2987, %v2986
      %v3001 = vpack.c.b16 %v2989, %v2988
      %v3002 = vpack.c.b16 %v2991, %v2990
      %v3003 = vpack.c.b16 %v2993, %v2992
      %v3004 = vpack.c.b16 %v2995, %v2994
      %v3005 = vpack.c.b16 %v2997, %v2996
      %3014 = vmatprep.subr.bf16.mxu0 0
      %3015 = vmatpush1.bf16.msra.mxu0 %v2941
      %3016 = vmatprep.subr.bf16.mxu0 0
      %3017 = vmatpush1.bf16.msra.mxu0 %v2942
      %3018 = vmatprep.subr.bf16.mxu0 0
      %3019 = vmatpush1.bf16.msra.mxu0 %v2943
      %3020 = vmatprep.subr.bf16.mxu0 0
      %3021 = vmatpush1.bf16.msra.mxu0 %v2944
      %3022 = vmatprep.subr.bf16.mxu0 0
      %3023 = vmatpush1.bf16.msra.mxu0 %v2945
      %3024 = vmatprep.subr.bf16.mxu0 0
      %3025 = vmatpush1.bf16.msra.mxu0 %v2946
      %3026 = vmatprep.subr.bf16.mxu0 0
      %3027 = vmatpush1.bf16.msra.mxu0 %v2947
      %3028 = vmatprep.subr.bf16.mxu0 0
      %3029 = vmatpush1.bf16.msra.mxu0 %v2948
      %3030 = vmatprep.subr.bf16.mxu0 0
      %3031 = vmatpush1.bf16.msra.mxu0 0
      %3032 = vmatprep.subr.bf16.mxu0 0
      %3033 = vmatpush1.bf16.msra.mxu0 0
      %3034 = vmatprep.subr.bf16.mxu0 0
      %3035 = vmatpush1.bf16.msra.mxu0 0
      %3036 = vmatprep.subr.bf16.mxu0 0
      %3037 = vmatpush1.bf16.msra.mxu0 0
      %3038 = vmatprep.subr.bf16.mxu0 0
      %3039 = vmatpush1.bf16.msra.mxu0 0
      %3040 = vmatprep.subr.bf16.mxu0 0
      %3041 = vmatpush1.bf16.msra.mxu0 0
      %3042 = vmatprep.subr.bf16.mxu0 0
      %3043 = vmatpush1.bf16.msra.mxu0 0
      %3044 = vmatprep.subr.bf16.mxu0 0
      %3045 = vmatpush1.bf16.msra.mxu0 0
      %3046 = vmatprep.mubr.bf16.mxu0 0
      %3047 = vmatmul.mubr.bf16.gmra.mrb[0].mxu0 %v2998
      %v3048 = vpop.f32.mrb[0].mxu0
      %v3049 = vadd.f32 0.0, %v3048
      %v3050 = vpop.f32.mrb[0].mxu0
      %v3051 = vpop.f32.mrb[0].mxu0
      %v3052 = vadd.f32 0.0, %v3051
      %v3053 = vpop.f32.mrb[0].mxu0
      %3054 = vmatprep.mubr.bf16.mxu0 0
      %3055 = vmatmul.mubr.bf16.gmra.mrb[0].mxu0 %v2999
      %v3056 = vpop.f32.mrb[0].mxu0
      %v3057 = vadd.f32 0.0, %v3056
      %v3058 = vpop.f32.mrb[0].mxu0
      %v3059 = vpop.f32.mrb[0].mxu0
      %v3060 = vadd.f32 0.0, %v3059
      %v3061 = vpop.f32.mrb[0].mxu0
      %3062 = vmatprep.mubr.bf16.mxu0 0
      %3063 = vmatmul.mubr.bf16.gmra.mrb[0].mxu0 %v3000
      %v3064 = vpop.f32.mrb[0].mxu0
      %v3065 = vadd.f32 0.0, %v3064
      %v3066 = vpop.f32.mrb[0].mxu0
      %v3067 = vpop.f32.mrb[0].mxu0
      %v3068 = vadd.f32 0.0, %v3067
      %v3069 = vpop.f32.mrb[0].mxu0
      %3070 = vmatprep.mubr.bf16.mxu0 0
      %3071 = vmatmul.mubr.bf16.gmra.mrb[0].mxu0 %v3001
      %v3072 = vpop.f32.mrb[0].mxu0
      %v3073 = vadd.f32 0.0, %v3072
      %v3074 = vpop.f32.mrb[0].mxu0
      %v3075 = vpop.f32.mrb[0].mxu0
      %v3076 = vadd.f32 0.0, %v3075
      %v3077 = vpop.f32.mrb[0].mxu0
      %3078 = vmatprep.mubr.bf16.mxu0 0
      %3079 = vmatmul.mubr.bf16.gmra.mrb[0].mxu0 %v3002
      %v3080 = vpop.f32.mrb[0].mxu0
      %v3081 = vadd.f32 0.0, %v3080
      %v3082 = vpop.f32.mrb[0].mxu0
      %v3083 = vpop.f32.mrb[0].mxu0
      %v3084 = vadd.f32 0.0, %v3083
      %v3085 = vpop.f32.mrb[0].mxu0
      %3086 = vmatprep.mubr.bf16.mxu0 0
      %3087 = vmatmul.mubr.bf16.gmra.mrb[0].mxu0 %v3003
      %v3088 = vpop.f32.mrb[0].mxu0
      %v3089 = vadd.f32 0.0, %v3088
      %v3090 = vpop.f32.mrb[0].mxu0
      %v3091 = vpop.f32.mrb[0].mxu0
      %v3092 = vadd.f32 0.0, %v3091
      %v3093 = vpop.f32.mrb[0].mxu0
      %3094 = vmatprep.mubr.bf16.mxu0 0
      %3095 = vmatmul.mubr.bf16.gmra.mrb[0].mxu0 %v3004
      %v3096 = vpop.f32.mrb[0].mxu0
      %v3097 = vadd.f32 0.0, %v3096
      %v3098 = vpop.f32.mrb[0].mxu0
      %v3099 = vpop.f32.mrb[0].mxu0
      %v3100 = vadd.f32 0.0, %v3099
      %v3101 = vpop.f32.mrb[0].mxu0
      %3102 = vmatprep.mubr.bf16.mxu0 0
      %3103 = vmatmul.mubr.bf16.gmra.mrb[0].mxu0 %v3005
      %v3104 = vpop.f32.mrb[0].mxu0
      %v3105 = vadd.f32 0.0, %v3104
      %v3106 = vpop.f32.mrb[0].mxu0
      %v3107 = vpop.f32.mrb[0].mxu0
      %v3108 = vadd.f32 0.0, %v3107
      %v3109 = vpop.f32.mrb[0].mxu0
      %3110 = vdwg.mxu0
      %v3111 = vadd.f32 %v2765, %v3049
      %v3112 = vadd.f32 %v2768, %v3052
      %v3113 = vadd.f32 %v2773, %v3057
      %v3114 = vadd.f32 %v2776, %v3060
      %v3115 = vadd.f32 %v2781, %v3065
      %v3116 = vadd.f32 %v2784, %v3068
      %v3117 = vadd.f32 %v2789, %v3073
      %v3118 = vadd.f32 %v2792, %v3076
      %v3119 = vadd.f32 %v2797, %v3081
      %v3120 = vadd.f32 %v2800, %v3084
      %v3121 = vadd.f32 %v2805, %v3089
      %v3122 = vadd.f32 %v2808, %v3092
      %v3123 = vadd.f32 %v2813, %v3097
      %v3124 = vadd.f32 %v2816, %v3100
      %v3125 = vadd.f32 %v2821, %v3105
      %v3126 = vadd.f32 %v2824, %v3108
      %s3127 = scalar_lea.vmem %s4, 48
      %v3128 = vld [vmem:[%s3127] sm:$0xf]
      %v3129 = vld [vmem:[%s3127 + $0x4] sm:$0xf]
      %v3130 = vld [vmem:[%s3127 + $0x8] sm:$0xf]
      %v3131 = vld [vmem:[%s3127 + $0xc] sm:$0xf]
      %v3136 = vunpack.c.l.b16 %v3128
      %v3137 = vunpack.c.l.b16 %v3129
      %v3138 = vunpack.c.l.b16 %v3130
      %v3139 = vunpack.c.l.b16 %v3131
      %v3140 = vpack.c.b16 %v3137, %v3136
      %v3141 = vpack.c.b16 %v3139, %v3138
      %3144 = vmatprep.subr.bf16.mxu0 0
      %3145 = vmatpush1.bf16.msra.mxu0 %v3140
      %3146 = vmatprep.subr.bf16.mxu0 0
      %3147 = vmatpush1.bf16.msra.mxu0 %v3141
      %3148 = vmatprep.subr.bf16.mxu0 0
      %3149 = vmatpush1.bf16.msra.mxu0 0
      %3150 = vmatprep.subr.bf16.mxu0 0
      %3151 = vmatpush1.bf16.msra.mxu0 0
      %3152 = vmatprep.subr.bf16.mxu0 0
      %3153 = vmatpush1.bf16.msra.mxu0 0
      %3154 = vmatprep.subr.bf16.mxu0 0
      %3155 = vmatpush1.bf16.msra.mxu0 0
      %3156 = vmatprep.subr.bf16.mxu0 0
      %3157 = vmatpush1.bf16.msra.mxu0 0
      %3158 = vmatprep.subr.bf16.mxu0 0
      %3159 = vmatpush1.bf16.msra.mxu0 0
      %3160 = vmatprep.subr.bf16.mxu0 0
      %3161 = vmatpush1.bf16.msra.mxu0 0
      %3162 = vmatprep.subr.bf16.mxu0 0
      %3163 = vmatpush1.bf16.msra.mxu0 0
      %3164 = vmatprep.subr.bf16.mxu0 0
      %3165 = vmatpush1.bf16.msra.mxu0 0
      %3166 = vmatprep.subr.bf16.mxu0 0
      %3167 = vmatpush1.bf16.msra.mxu0 0
      %3168 = vmatprep.subr.bf16.mxu0 0
      %3169 = vmatpush1.bf16.msra.mxu0 0
      %3170 = vmatprep.subr.bf16.mxu0 0
      %3171 = vmatpush1.bf16.msra.mxu0 0
      %3172 = vmatprep.subr.bf16.mxu0 0
      %3173 = vmatpush1.bf16.msra.mxu0 0
      %3174 = vmatprep.subr.bf16.mxu0 0
      %3175 = vmatpush1.bf16.msra.mxu0 0
      %3176 = vmatprep.mubr.bf16.mxu0 0
      %3177 = vmatmul.mubr.bf16.gmra.mrb[0].mxu0 %v2254
      %v3178 = vpop.f32.mrb[0].mxu0
      %v3179 = vadd.f32 0.0, %v3178
      %v3180 = vpop.f32.mrb[0].mxu0
      %v3181 = vpop.f32.mrb[0].mxu0
      %v3182 = vadd.f32 0.0, %v3181
      %v3183 = vpop.f32.mrb[0].mxu0
      %3184 = vmatprep.mubr.bf16.mxu0 0
      %3185 = vmatmul.mubr.bf16.gmra.mrb[0].mxu0 %v2257
      %v3186 = vpop.f32.mrb[0].mxu0
      %v3187 = vadd.f32 0.0, %v3186
      %v3188 = vpop.f32.mrb[0].mxu0
      %v3189 = vpop.f32.mrb[0].mxu0
      %v3190 = vadd.f32 0.0, %v3189
      %v3191 = vpop.f32.mrb[0].mxu0
      %3192 = vmatprep.mubr.bf16.mxu0 0
      %3193 = vmatmul.mubr.bf16.gmra.mrb[0].mxu0 %v2260
      %v3194 = vpop.f32.mrb[0].mxu0
      %v3195 = vadd.f32 0.0, %v3194
      %v3196 = vpop.f32.mrb[0].mxu0
      %v3197 = vpop.f32.mrb[0].mxu0
      %v3198 = vadd.f32 0.0, %v3197
      %v3199 = vpop.f32.mrb[0].mxu0
      %3200 = vmatprep.mubr.bf16.mxu0 0
      %3201 = vmatmul.mubr.bf16.gmra.mrb[0].mxu0 %v2263
      %v3202 = vpop.f32.mrb[0].mxu0
      %v3203 = vadd.f32 0.0, %v3202
      %v3204 = vpop.f32.mrb[0].mxu0
      %v3205 = vpop.f32.mrb[0].mxu0
      %v3206 = vadd.f32 0.0, %v3205
      %v3207 = vpop.f32.mrb[0].mxu0
      %3208 = vmatprep.mubr.bf16.mxu0 0
      %3209 = vmatmul.mubr.bf16.gmra.mrb[0].mxu0 %v2266
      %v3210 = vpop.f32.mrb[0].mxu0
      %v3211 = vadd.f32 0.0, %v3210
      %v3212 = vpop.f32.mrb[0].mxu0
      %v3213 = vpop.f32.mrb[0].mxu0
      %v3214 = vadd.f32 0.0, %v3213
      %v3215 = vpop.f32.mrb[0].mxu0
      %3216 = vmatprep.mubr.bf16.mxu0 0
      %3217 = vmatmul.mubr.bf16.gmra.mrb[0].mxu0 %v2269
      %v3218 = vpop.f32.mrb[0].mxu0
      %v3219 = vadd.f32 0.0, %v3218
      %v3220 = vpop.f32.mrb[0].mxu0
      %v3221 = vpop.f32.mrb[0].mxu0
      %v3222 = vadd.f32 0.0, %v3221
      %v3223 = vpop.f32.mrb[0].mxu0
      %3224 = vmatprep.mubr.bf16.mxu0 0
      %3225 = vmatmul.mubr.bf16.gmra.mrb[0].mxu0 %v2272
      %v3226 = vpop.f32.mrb[0].mxu0
      %v3227 = vadd.f32 0.0, %v3226
      %v3228 = vpop.f32.mrb[0].mxu0
      %v3229 = vpop.f32.mrb[0].mxu0
      %v3230 = vadd.f32 0.0, %v3229
      %v3231 = vpop.f32.mrb[0].mxu0
      %3232 = vmatprep.mubr.bf16.mxu0 0
      %3233 = vmatmul.mubr.bf16.gmra.mrb[0].mxu0 %v2275
      %v3234 = vpop.f32.mrb[0].mxu0
      %v3235 = vadd.f32 0.0, %v3234
      %v3236 = vpop.f32.mrb[0].mxu0
      %v3237 = vpop.f32.mrb[0].mxu0
      %v3238 = vadd.f32 0.0, %v3237
      %v3239 = vpop.f32.mrb[0].mxu0
      %3240 = vdwg.mxu0
      %v3241 = vpack.c.bf16 %v3182, %v3179
      %v3242 = vpack.c.bf16 %v3190, %v3187
      %v3243 = vpack.c.bf16 %v3198, %v3195
      %v3244 = vpack.c.bf16 %v3206, %v3203
      %v3245 = vpack.c.bf16 %v3214, %v3211
      %v3246 = vpack.c.bf16 %v3222, %v3219
      %v3247 = vpack.c.bf16 %v3230, %v3227
      %v3248 = vpack.c.bf16 %v3238, %v3235
      %s3249 = scalar_lea.vmem %s3, 192
      %v3250 = vld [vmem:[%s3249] sm:$0xf]
      %v3251 = vld [vmem:[%s3249 + $0x4] sm:$0xf]
      %v3252 = vld [vmem:[%s3249 + $0x8] sm:$0xf]
      %v3253 = vld [vmem:[%s3249 + $0xc] sm:$0xf]
      %v3254 = vld [vmem:[%s3249 + $0x10] sm:$0xf]
      %v3255 = vld [vmem:[%s3249 + $0x14] sm:$0xf]
      %v3256 = vld [vmem:[%s3249 + $0x18] sm:$0xf]
      %v3257 = vld [vmem:[%s3249 + $0x1c] sm:$0xf]
      %v3258 = vld [vmem:[%s3249 + $0x20] sm:$0xf]
      %v3259 = vld [vmem:[%s3249 + $0x24] sm:$0xf]
      %v3260 = vld [vmem:[%s3249 + $0x28] sm:$0xf]
      %v3261 = vld [vmem:[%s3249 + $0x2c] sm:$0xf]
      %v3262 = vld [vmem:[%s3249 + $0x30] sm:$0xf]
      %v3263 = vld [vmem:[%s3249 + $0x34] sm:$0xf]
      %v3264 = vld [vmem:[%s3249 + $0x38] sm:$0xf]
      %v3265 = vld [vmem:[%s3249 + $0x3c] sm:$0xf]
      %v3282 = vunpack.c.l.b16 %v3250
      %v3283 = vunpack.c.l.b16 %v3251
      %v3284 = vunpack.c.l.b16 %v3252
      %v3285 = vunpack.c.l.b16 %v3253
      %v3286 = vunpack.c.l.b16 %v3254
      %v3287 = vunpack.c.l.b16 %v3255
      %v3288 = vunpack.c.l.b16 %v3256
      %v3289 = vunpack.c.l.b16 %v3257
      %v3290 = vunpack.c.l.b16 %v3258
      %v3291 = vunpack.c.l.b16 %v3259
      %v3292 = vunpack.c.l.b16 %v3260
      %v3293 = vunpack.c.l.b16 %v3261
      %v3294 = vunpack.c.l.b16 %v3262
      %v3295 = vunpack.c.l.b16 %v3263
      %v3296 = vunpack.c.l.b16 %v3264
      %v3297 = vunpack.c.l.b16 %v3265
      %v3298 = vpack.c.b16 %v3283, %v3282
      %v3299 = vpack.c.b16 %v3285, %v3284
      %v3300 = vpack.c.b16 %v3287, %v3286
      %v3301 = vpack.c.b16 %v3289, %v3288
      %v3302 = vpack.c.b16 %v3291, %v3290
      %v3303 = vpack.c.b16 %v3293, %v3292
      %v3304 = vpack.c.b16 %v3295, %v3294
      %v3305 = vpack.c.b16 %v3297, %v3296
      %3314 = vmatprep.subr.bf16.mxu0 0
      %3315 = vmatpush1.bf16.msra.mxu0 %v3241
      %3316 = vmatprep.subr.bf16.mxu0 0
      %3317 = vmatpush1.bf16.msra.mxu0 %v3242
      %3318 = vmatprep.subr.bf16.mxu0 0
      %3319 = vmatpush1.bf16.msra.mxu0 %v3243
      %3320 = vmatprep.subr.bf16.mxu0 0
      %3321 = vmatpush1.bf16.msra.mxu0 %v3244
      %3322 = vmatprep.subr.bf16.mxu0 0
      %3323 = vmatpush1.bf16.msra.mxu0 %v3245
      %3324 = vmatprep.subr.bf16.mxu0 0
      %3325 = vmatpush1.bf16.msra.mxu0 %v3246
      %3326 = vmatprep.subr.bf16.mxu0 0
      %3327 = vmatpush1.bf16.msra.mxu0 %v3247
      %3328 = vmatprep.subr.bf16.mxu0 0
      %3329 = vmatpush1.bf16.msra.mxu0 %v3248
      %3330 = vmatprep.subr.bf16.mxu0 0
      %3331 = vmatpush1.bf16.msra.mxu0 0
      %3332 = vmatprep.subr.bf16.mxu0 0
      %3333 = vmatpush1.bf16.msra.mxu0 0
      %3334 = vmatprep.subr.bf16.mxu0 0
      %3335 = vmatpush1.bf16.msra.mxu0 0
      %3336 = vmatprep.subr.bf16.mxu0 0
      %3337 = vmatpush1.bf16.msra.mxu0 0
      %3338 = vmatprep.subr.bf16.mxu0 0
      %3339 = vmatpush1.bf16.msra.mxu0 0
      %3340 = vmatprep.subr.bf16.mxu0 0
      %3341 = vmatpush1.bf16.msra.mxu0 0
      %3342 = vmatprep.subr.bf16.mxu0 0
      %3343 = vmatpush1.bf16.msra.mxu0 0
      %3344 = vmatprep.subr.bf16.mxu0 0
      %3345 = vmatpush1.bf16.msra.mxu0 0
      %3346 = vmatprep.mubr.bf16.mxu0 0
      %3347 = vmatmul.mubr.bf16.gmra.mrb[0].mxu0 %v3298
      %v3348 = vpop.f32.mrb[0].mxu0
      %v3349 = vadd.f32 0.0, %v3348
      %v3350 = vpop.f32.mrb[0].mxu0
      %v3351 = vpop.f32.mrb[0].mxu0
      %v3352 = vadd.f32 0.0, %v3351
      %v3353 = vpop.f32.mrb[0].mxu0
      %3354 = vmatprep.mubr.bf16.mxu0 0
      %3355 = vmatmul.mubr.bf16.gmra.mrb[0].mxu0 %v3299
      %v3356 = vpop.f32.mrb[0].mxu0
      %v3357 = vadd.f32 0.0, %v3356
      %v3358 = vpop.f32.mrb[0].mxu0
      %v3359 = vpop.f32.mrb[0].mxu0
      %v3360 = vadd.f32 0.0, %v3359
      %v3361 = vpop.f32.mrb[0].mxu0
      %3362 = vmatprep.mubr.bf16.mxu0 0
      %3363 = vmatmul.mubr.bf16.gmra.mrb[0].mxu0 %v3300
      %v3364 = vpop.f32.mrb[0].mxu0
      %v3365 = vadd.f32 0.0, %v3364
      %v3366 = vpop.f32.mrb[0].mxu0
      %v3367 = vpop.f32.mrb[0].mxu0
      %v3368 = vadd.f32 0.0, %v3367
      %v3369 = vpop.f32.mrb[0].mxu0
      %3370 = vmatprep.mubr.bf16.mxu0 0
      %3371 = vmatmul.mubr.bf16.gmra.mrb[0].mxu0 %v3301
      %v3372 = vpop.f32.mrb[0].mxu0
      %v3373 = vadd.f32 0.0, %v3372
      %v3374 = vpop.f32.mrb[0].mxu0
      %v3375 = vpop.f32.mrb[0].mxu0
      %v3376 = vadd.f32 0.0, %v3375
      %v3377 = vpop.f32.mrb[0].mxu0
      %3378 = vmatprep.mubr.bf16.mxu0 0
      %3379 = vmatmul.mubr.bf16.gmra.mrb[0].mxu0 %v3302
      %v3380 = vpop.f32.mrb[0].mxu0
      %v3381 = vadd.f32 0.0, %v3380
      %v3382 = vpop.f32.mrb[0].mxu0
      %v3383 = vpop.f32.mrb[0].mxu0
      %v3384 = vadd.f32 0.0, %v3383
      %v3385 = vpop.f32.mrb[0].mxu0
      %3386 = vmatprep.mubr.bf16.mxu0 0
      %3387 = vmatmul.mubr.bf16.gmra.mrb[0].mxu0 %v3303
      %v3388 = vpop.f32.mrb[0].mxu0
      %v3389 = vadd.f32 0.0, %v3388
      %v3390 = vpop.f32.mrb[0].mxu0
      %v3391 = vpop.f32.mrb[0].mxu0
      %v3392 = vadd.f32 0.0, %v3391
      %v3393 = vpop.f32.mrb[0].mxu0
      %3394 = vmatprep.mubr.bf16.mxu0 0
      %3395 = vmatmul.mubr.bf16.gmra.mrb[0].mxu0 %v3304
      %v3396 = vpop.f32.mrb[0].mxu0
      %v3397 = vadd.f32 0.0, %v3396
      %v3398 = vpop.f32.mrb[0].mxu0
      %v3399 = vpop.f32.mrb[0].mxu0
      %v3400 = vadd.f32 0.0, %v3399
      %v3401 = vpop.f32.mrb[0].mxu0
      %3402 = vmatprep.mubr.bf16.mxu0 0
      %3403 = vmatmul.mubr.bf16.gmra.mrb[0].mxu0 %v3305
      %v3404 = vpop.f32.mrb[0].mxu0
      %v3405 = vadd.f32 0.0, %v3404
      %v3406 = vpop.f32.mrb[0].mxu0
      %v3407 = vpop.f32.mrb[0].mxu0
      %v3408 = vadd.f32 0.0, %v3407
      %v3409 = vpop.f32.mrb[0].mxu0
      %3410 = vdwg.mxu0
      %v3411 = vadd.f32 %v3111, %v3349
      %v3412 = vadd.f32 %v3112, %v3352
      %v3413 = vadd.f32 %v3113, %v3357
      %v3414 = vadd.f32 %v3114, %v3360
      %v3415 = vadd.f32 %v3115, %v3365
      %v3416 = vadd.f32 %v3116, %v3368
      %v3417 = vadd.f32 %v3117, %v3373
      %v3418 = vadd.f32 %v3118, %v3376
      %v3419 = vadd.f32 %v3119, %v3381
      %v3420 = vadd.f32 %v3120, %v3384
      %v3421 = vadd.f32 %v3121, %v3389
      %v3422 = vadd.f32 %v3122, %v3392
      %v3423 = vadd.f32 %v3123, %v3397
      %v3424 = vadd.f32 %v3124, %v3400
      %v3425 = vadd.f32 %v3125, %v3405
      %v3426 = vadd.f32 %v3126, %v3408
      %v3427 = vld [vmem:[%s5] sm:$0xff]
      %v3428 = vld [vmem:[%s5 + $0x8] sm:$0xff]
      %v3429 = vld [vmem:[%s5 + $0x10] sm:$0xff]
      %v3430 = vld [vmem:[%s5 + $0x18] sm:$0xff]
      %v3431 = vld [vmem:[%s5 + $0x20] sm:$0xff]
      %v3432 = vld [vmem:[%s5 + $0x28] sm:$0xff]
      %v3433 = vld [vmem:[%s5 + $0x30] sm:$0xff]
      %v3434 = vld [vmem:[%s5 + $0x38] sm:$0xff]
      %v3435 = vld [vmem:[%s5 + $0x40] sm:$0xff]
      %v3436 = vld [vmem:[%s5 + $0x48] sm:$0xff]
      %v3437 = vld [vmem:[%s5 + $0x50] sm:$0xff]
      %v3438 = vld [vmem:[%s5 + $0x58] sm:$0xff]
      %v3439 = vld [vmem:[%s5 + $0x60] sm:$0xff]
      %v3440 = vld [vmem:[%s5 + $0x68] sm:$0xff]
      %v3441 = vld [vmem:[%s5 + $0x70] sm:$0xff]
      %v3442 = vld [vmem:[%s5 + $0x78] sm:$0xff]
      %vm3443 = vcmask 130048
      %v3444 = vsel %vm3443, %v3411, 0.0
      %3445 = vadd.xlane.f32.xlu0 %v3444
      %v3446 = vpop.xlane.xlu0 %3445
      %v3447 = vsel %vm3443, %v3412, 0.0
      %3448 = vadd.xlane.f32.xlu0 %v3447
      %v3449 = vpop.xlane.xlu0 %3448
      %v3450 = vsel %vm3443, %v3413, 0.0
      %3451 = vadd.xlane.f32.xlu0 %v3450
      %v3452 = vpop.xlane.xlu0 %3451
      %v3453 = vsel %vm3443, %v3414, 0.0
      %3454 = vadd.xlane.f32.xlu0 %v3453
      %v3455 = vpop.xlane.xlu0 %3454
      %v3456 = vsel %vm3443, %v3415, 0.0
      %3457 = vadd.xlane.f32.xlu0 %v3456
      %v3458 = vpop.xlane.xlu0 %3457
      %v3459 = vsel %vm3443, %v3416, 0.0
      %3460 = vadd.xlane.f32.xlu0 %v3459
      %v3461 = vpop.xlane.xlu0 %3460
      %v3462 = vsel %vm3443, %v3417, 0.0
      %3463 = vadd.xlane.f32.xlu0 %v3462
      %v3464 = vpop.xlane.xlu0 %3463
      %v3465 = vsel %vm3443, %v3418, 0.0
      %3466 = vadd.xlane.f32.xlu0 %v3465
      %v3467 = vpop.xlane.xlu0 %3466
      %v3468 = vsel %vm3443, %v3419, 0.0
      %3469 = vadd.xlane.f32.xlu0 %v3468
      %v3470 = vpop.xlane.xlu0 %3469
      %v3471 = vsel %vm3443, %v3420, 0.0
      %3472 = vadd.xlane.f32.xlu0 %v3471
      %v3473 = vpop.xlane.xlu0 %3472
      %v3474 = vsel %vm3443, %v3421, 0.0
      %3475 = vadd.xlane.f32.xlu0 %v3474
      %v3476 = vpop.xlane.xlu0 %3475
      %v3477 = vsel %vm3443, %v3422, 0.0
      %3478 = vadd.xlane.f32.xlu0 %v3477
      %v3479 = vpop.xlane.xlu0 %3478
      %v3480 = vsel %vm3443, %v3423, 0.0
      %3481 = vadd.xlane.f32.xlu0 %v3480
      %v3482 = vpop.xlane.xlu0 %3481
      %v3483 = vsel %vm3443, %v3424, 0.0
      %3484 = vadd.xlane.f32.xlu0 %v3483
      %v3485 = vpop.xlane.xlu0 %3484
      %v3486 = vsel %vm3443, %v3425, 0.0
      %3487 = vadd.xlane.f32.xlu0 %v3486
      %v3488 = vpop.xlane.xlu0 %3487
      %v3489 = vsel %vm3443, %v3426, 0.0
      %3490 = vadd.xlane.f32.xlu0 %v3489
      %v3491 = vpop.xlane.xlu0 %3490
      %3492 = vmatprep.subr.mxu0 0.0
      %3493 = vmatpush1.msra.mxu0 %v3446
      %3494 = vmatprep.subr.mxu0 0.0
      %3495 = vmatpush1.msra.mxu0 %v3449
      %3496 = vmatprep.subr.mxu0 0.0
      %3497 = vmatpush1.msra.mxu0 %v3452
      %3498 = vmatprep.subr.mxu0 0.0
      %3499 = vmatpush1.msra.mxu0 %v3455
      %3500 = vmatprep.subr.mxu0 0.0
      %3501 = vmatpush1.msra.mxu0 %v3458
      %3502 = vmatprep.subr.mxu0 0.0
      %3503 = vmatpush1.msra.mxu0 %v3461
      %3504 = vmatprep.subr.mxu0 0.0
      %3505 = vmatpush1.msra.mxu0 %v3464
      %3506 = vmatprep.subr.mxu0 0.0
      %3507 = vmatpush1.msra.mxu0 %v3467
      %3508 = vmatprep.subr.mxu0 0.0
      %3509 = vmatpush1.msra.mxu0 %v3470
      %3510 = vmatprep.subr.mxu0 0.0
      %3511 = vmatpush1.msra.mxu0 %v3473
      %3512 = vmatprep.subr.mxu0 0.0
      %3513 = vmatpush1.msra.mxu0 %v3476
      %3514 = vmatprep.subr.mxu0 0.0
      %3515 = vmatpush1.msra.mxu0 %v3479
      %3516 = vmatprep.subr.mxu0 0.0
      %3517 = vmatpush1.msra.mxu0 %v3482
      %3518 = vmatprep.subr.mxu0 0.0
      %3519 = vmatpush1.msra.mxu0 %v3485
      %3520 = vmatprep.subr.mxu0 0.0
      %3521 = vmatpush1.msra.mxu0 %v3488
      %3522 = vmatprep.subr.mxu0 0.0
      %3523 = vmatpush1.msra.mxu0 %v3491
      %3524 = vmatprep.subr.mxu0 0.0
      %3525 = vmatpush1.msra.mxu0 0.0
      %3526 = vmatprep.subr.mxu0 0.0
      %3527 = vmatpush1.msra.mxu0 0.0
      %3528 = vmatprep.subr.mxu0 0.0
      %3529 = vmatpush1.msra.mxu0 0.0
      %3530 = vmatprep.subr.mxu0 0.0
      %3531 = vmatpush1.msra.mxu0 0.0
      %3532 = vmatprep.subr.mxu0 0.0
      %3533 = vmatpush1.msra.mxu0 0.0
      %3534 = vmatprep.subr.mxu0 0.0
      %3535 = vmatpush1.msra.mxu0 0.0
      %3536 = vmatprep.subr.mxu0 0.0
      %3537 = vmatpush1.msra.mxu0 0.0
      %3538 = vmatprep.subr.mxu0 0.0
      %3539 = vmatpush1.msra.mxu0 0.0
      %3540 = vmatprep.subr.mxu0 0.0
      %3541 = vmatpush1.msra.mxu0 0.0
      %3542 = vmatprep.subr.mxu0 0.0
      %3543 = vmatpush1.msra.mxu0 0.0
      %3544 = vmatprep.subr.mxu0 0.0
      %3545 = vmatpush1.msra.mxu0 0.0
      %3546 = vmatprep.subr.mxu0 0.0
      %3547 = vmatpush1.msra.mxu0 0.0
      %3548 = vmatprep.subr.mxu0 0.0
      %3549 = vmatpush1.msra.mxu0 0.0
      %3550 = vmatprep.subr.mxu0 0.0
      %3551 = vmatpush1.msra.mxu0 0.0
      %3552 = vmatprep.subr.mxu0 0.0
      %3553 = vmatpush1.msra.mxu0 0.0
      %3554 = vmatprep.subr.mxu0 0.0
      %3555 = vmatpush1.msra.mxu0 0.0
      %3556 = vmatprep.mubr.f32.mxu0 0.0
      %3557 = vmatmul.mubr.f32.gmra.mrb[0].mxu0 %v3427
      %v3558 = vpop.f32.mrb[0].mxu0
      %v3559 = vadd.f32 0.0, %v3558
      %v3560 = vpop.f32.mrb[0].mxu0
      %3561 = vmatprep.mubr.f32.mxu0 0.0
      %3562 = vmatmul.mubr.f32.gmra.mrb[0].mxu0 %v3428
      %v3563 = vpop.f32.mrb[0].mxu0
      %v3564 = vadd.f32 0.0, %v3563
      %v3565 = vpop.f32.mrb[0].mxu0
      %3566 = vmatprep.mubr.f32.mxu0 0.0
      %3567 = vmatmul.mubr.f32.gmra.mrb[0].mxu0 %v3429
      %v3568 = vpop.f32.mrb[0].mxu0
      %v3569 = vadd.f32 0.0, %v3568
      %v3570 = vpop.f32.mrb[0].mxu0
      %3571 = vmatprep.mubr.f32.mxu0 0.0
      %3572 = vmatmul.mubr.f32.gmra.mrb[0].mxu0 %v3430
      %v3573 = vpop.f32.mrb[0].mxu0
      %v3574 = vadd.f32 0.0, %v3573
      %v3575 = vpop.f32.mrb[0].mxu0
      %3576 = vmatprep.mubr.f32.mxu0 0.0
      %3577 = vmatmul.mubr.f32.gmra.mrb[0].mxu0 %v3431
      %v3578 = vpop.f32.mrb[0].mxu0
      %v3579 = vadd.f32 0.0, %v3578
      %v3580 = vpop.f32.mrb[0].mxu0
      %3581 = vmatprep.mubr.f32.mxu0 0.0
      %3582 = vmatmul.mubr.f32.gmra.mrb[0].mxu0 %v3432
      %v3583 = vpop.f32.mrb[0].mxu0
      %v3584 = vadd.f32 0.0, %v3583
      %v3585 = vpop.f32.mrb[0].mxu0
      %3586 = vmatprep.mubr.f32.mxu0 0.0
      %3587 = vmatmul.mubr.f32.gmra.mrb[0].mxu0 %v3433
      %v3588 = vpop.f32.mrb[0].mxu0
      %v3589 = vadd.f32 0.0, %v3588
      %v3590 = vpop.f32.mrb[0].mxu0
      %3591 = vmatprep.mubr.f32.mxu0 0.0
      %3592 = vmatmul.mubr.f32.gmra.mrb[0].mxu0 %v3434
      %v3593 = vpop.f32.mrb[0].mxu0
      %v3594 = vadd.f32 0.0, %v3593
      %v3595 = vpop.f32.mrb[0].mxu0
      %3596 = vmatprep.mubr.f32.mxu0 0.0
      %3597 = vmatmul.mubr.f32.gmra.mrb[0].mxu0 %v3435
      %v3598 = vpop.f32.mrb[0].mxu0
      %v3599 = vadd.f32 0.0, %v3598
      %v3600 = vpop.f32.mrb[0].mxu0
      %3601 = vmatprep.mubr.f32.mxu0 0.0
      %3602 = vmatmul.mubr.f32.gmra.mrb[0].mxu0 %v3436
      %v3603 = vpop.f32.mrb[0].mxu0
      %v3604 = vadd.f32 0.0, %v3603
      %v3605 = vpop.f32.mrb[0].mxu0
      %3606 = vmatprep.mubr.f32.mxu0 0.0
      %3607 = vmatmul.mubr.f32.gmra.mrb[0].mxu0 %v3437
      %v3608 = vpop.f32.mrb[0].mxu0
      %v3609 = vadd.f32 0.0, %v3608
      %v3610 = vpop.f32.mrb[0].mxu0
      %3611 = vmatprep.mubr.f32.mxu0 0.0
      %3612 = vmatmul.mubr.f32.gmra.mrb[0].mxu0 %v3438
      %v3613 = vpop.f32.mrb[0].mxu0
      %v3614 = vadd.f32 0.0, %v3613
      %v3615 = vpop.f32.mrb[0].mxu0
      %3616 = vmatprep.mubr.f32.mxu0 0.0
      %3617 = vmatmul.mubr.f32.gmra.mrb[0].mxu0 %v3439
      %v3618 = vpop.f32.mrb[0].mxu0
      %v3619 = vadd.f32 0.0, %v3618
      %v3620 = vpop.f32.mrb[0].mxu0
      %3621 = vmatprep.mubr.f32.mxu0 0.0
      %3622 = vmatmul.mubr.f32.gmra.mrb[0].mxu0 %v3440
      %v3623 = vpop.f32.mrb[0].mxu0
      %v3624 = vadd.f32 0.0, %v3623
      %v3625 = vpop.f32.mrb[0].mxu0
      %3626 = vmatprep.mubr.f32.mxu0 0.0
      %3627 = vmatmul.mubr.f32.gmra.mrb[0].mxu0 %v3441
      %v3628 = vpop.f32.mrb[0].mxu0
      %v3629 = vadd.f32 0.0, %v3628
      %v3630 = vpop.f32.mrb[0].mxu0
      %3631 = vmatprep.mubr.f32.mxu0 0.0
      %3632 = vmatmul.mubr.f32.gmra.mrb[0].mxu0 %v3442
      %v3633 = vpop.f32.mrb[0].mxu0
      %v3634 = vadd.f32 0.0, %v3633
      %v3635 = vpop.f32.mrb[0].mxu0
      %3636 = vdwg.mxu0
      %3638 = vset.pattern.permute.xlu0 0
      %3639 = vperm.xlu0 %3638, %v3559
      %v3640 = vpop.permute.xlu0 %3639
      %3643 = vset.pattern.permute.xlu0 0
      %3644 = vperm.xlu0 %3643, %v3564
      %v3645 = vpop.permute.xlu0 %3644
      %3648 = vset.pattern.permute.xlu0 0
      %3649 = vperm.xlu0 %3648, %v3569
      %v3650 = vpop.permute.xlu0 %3649
      %3653 = vset.pattern.permute.xlu0 0
      %3654 = vperm.xlu0 %3653, %v3574
      %v3655 = vpop.permute.xlu0 %3654
      %3658 = vset.pattern.permute.xlu0 0
      %3659 = vperm.xlu0 %3658, %v3579
      %v3660 = vpop.permute.xlu0 %3659
      %3663 = vset.pattern.permute.xlu0 0
      %3664 = vperm.xlu0 %3663, %v3584
      %v3665 = vpop.permute.xlu0 %3664
      %3668 = vset.pattern.permute.xlu0 0
      %3669 = vperm.xlu0 %3668, %v3589
      %v3670 = vpop.permute.xlu0 %3669
      %3673 = vset.pattern.permute.xlu0 0
      %3674 = vperm.xlu0 %3673, %v3594
      %v3675 = vpop.permute.xlu0 %3674
      %3678 = vset.pattern.permute.xlu0 0
      %3679 = vperm.xlu0 %3678, %v3599
      %v3680 = vpop.permute.xlu0 %3679
      %3683 = vset.pattern.permute.xlu0 0
      %3684 = vperm.xlu0 %3683, %v3604
      %v3685 = vpop.permute.xlu0 %3684
      %3688 = vset.pattern.permute.xlu0 0
      %3689 = vperm.xlu0 %3688, %v3609
      %v3690 = vpop.permute.xlu0 %3689
      %3693 = vset.pattern.permute.xlu0 0
      %3694 = vperm.xlu0 %3693, %v3614
      %v3695 = vpop.permute.xlu0 %3694
      %3698 = vset.pattern.permute.xlu0 0
      %3699 = vperm.xlu0 %3698, %v3619
      %v3700 = vpop.permute.xlu0 %3699
      %3703 = vset.pattern.permute.xlu0 0
      %3704 = vperm.xlu0 %3703, %v3624
      %v3705 = vpop.permute.xlu0 %3704
      %3708 = vset.pattern.permute.xlu0 0
      %3709 = vperm.xlu0 %3708, %v3629
      %v3710 = vpop.permute.xlu0 %3709
      %3713 = vset.pattern.permute.xlu0 0
      %3714 = vperm.xlu0 %3713, %v3634
      %v3715 = vpop.permute.xlu0 %3714
      %v3717 = vsub.f32 %v3411, %v3640
      %v3718 = vsub.f32 %v3412, %v3645
      %v3719 = vsub.f32 %v3413, %v3650
      %v3720 = vsub.f32 %v3414, %v3655
      %v3721 = vsub.f32 %v3415, %v3660
      %v3722 = vsub.f32 %v3416, %v3665
      %v3723 = vsub.f32 %v3417, %v3670
      %v3724 = vsub.f32 %v3418, %v3675
      %v3725 = vsub.f32 %v3419, %v3680
      %v3726 = vsub.f32 %v3420, %v3685
      %v3727 = vsub.f32 %v3421, %v3690
      %v3728 = vsub.f32 %v3422, %v3695
      %v3729 = vsub.f32 %v3423, %v3700
      %v3730 = vsub.f32 %v3424, %v3705
      %v3731 = vsub.f32 %v3425, %v3710
      %v3732 = vsub.f32 %v3426, %v3715
      %v3733 = vmul.f32 %v3717, %v3717
      %v3734 = vmul.f32 %v3718, %v3718
      %v3735 = vmul.f32 %v3719, %v3719
      %v3736 = vmul.f32 %v3720, %v3720
      %v3737 = vmul.f32 %v3721, %v3721
      %v3738 = vmul.f32 %v3722, %v3722
      %v3739 = vmul.f32 %v3723, %v3723
      %v3740 = vmul.f32 %v3724, %v3724
      %v3741 = vmul.f32 %v3725, %v3725
      %v3742 = vmul.f32 %v3726, %v3726
      %v3743 = vmul.f32 %v3727, %v3727
      %v3744 = vmul.f32 %v3728, %v3728
      %v3745 = vmul.f32 %v3729, %v3729
      %v3746 = vmul.f32 %v3730, %v3730
      %v3747 = vmul.f32 %v3731, %v3731
      %v3748 = vmul.f32 %v3732, %v3732
      %v3749 = vsel %vm3443, %v3733, 0.0
      %3750 = vadd.xlane.f32.xlu0 %v3749
      %v3751 = vpop.xlane.xlu0 %3750
      %v3752 = vsel %vm3443, %v3734, 0.0
      %3753 = vadd.xlane.f32.xlu0 %v3752
      %v3754 = vpop.xlane.xlu0 %3753
      %v3755 = vsel %vm3443, %v3735, 0.0
      %3756 = vadd.xlane.f32.xlu0 %v3755
      %v3757 = vpop.xlane.xlu0 %3756
      %v3758 = vsel %vm3443, %v3736, 0.0
      %3759 = vadd.xlane.f32.xlu0 %v3758
      %v3760 = vpop.xlane.xlu0 %3759
      %v3761 = vsel %vm3443, %v3737, 0.0
      %3762 = vadd.xlane.f32.xlu0 %v3761
      %v3763 = vpop.xlane.xlu0 %3762
      %v3764 = vsel %vm3443, %v3738, 0.0
      %3765 = vadd.xlane.f32.xlu0 %v3764
      %v3766 = vpop.xlane.xlu0 %3765
      %v3767 = vsel %vm3443, %v3739, 0.0
      %3768 = vadd.xlane.f32.xlu0 %v3767
      %v3769 = vpop.xlane.xlu0 %3768
      %v3770 = vsel %vm3443, %v3740, 0.0
      %3771 = vadd.xlane.f32.xlu0 %v3770
      %v3772 = vpop.xlane.xlu0 %3771
      %v3773 = vsel %vm3443, %v3741, 0.0
      %3774 = vadd.xlane.f32.xlu0 %v3773
      %v3775 = vpop.xlane.xlu0 %3774
      %v3776 = vsel %vm3443, %v3742, 0.0
      %3777 = vadd.xlane.f32.xlu0 %v3776
      %v3778 = vpop.xlane.xlu0 %3777
      %v3779 = vsel %vm3443, %v3743, 0.0
      %3780 = vadd.xlane.f32.xlu0 %v3779
      %v3781 = vpop.xlane.xlu0 %3780
      %v3782 = vsel %vm3443, %v3744, 0.0
      %3783 = vadd.xlane.f32.xlu0 %v3782
      %v3784 = vpop.xlane.xlu0 %3783
      %v3785 = vsel %vm3443, %v3745, 0.0
      %3786 = vadd.xlane.f32.xlu0 %v3785
      %v3787 = vpop.xlane.xlu0 %3786
      %v3788 = vsel %vm3443, %v3746, 0.0
      %3789 = vadd.xlane.f32.xlu0 %v3788
      %v3790 = vpop.xlane.xlu0 %3789
      %v3791 = vsel %vm3443, %v3747, 0.0
      %3792 = vadd.xlane.f32.xlu0 %v3791
      %v3793 = vpop.xlane.xlu0 %3792
      %v3794 = vsel %vm3443, %v3748, 0.0
      %3795 = vadd.xlane.f32.xlu0 %v3794
      %v3796 = vpop.xlane.xlu0 %3795
      %3797 = vmatprep.subr.mxu0 0.0
      %3798 = vmatpush1.msra.mxu0 %v3751
      %3799 = vmatprep.subr.mxu0 0.0
      %3800 = vmatpush1.msra.mxu0 %v3754
      %3801 = vmatprep.subr.mxu0 0.0
      %3802 = vmatpush1.msra.mxu0 %v3757
      %3803 = vmatprep.subr.mxu0 0.0
      %3804 = vmatpush1.msra.mxu0 %v3760
      %3805 = vmatprep.subr.mxu0 0.0
      %3806 = vmatpush1.msra.mxu0 %v3763
      %3807 = vmatprep.subr.mxu0 0.0
      %3808 = vmatpush1.msra.mxu0 %v3766
      %3809 = vmatprep.subr.mxu0 0.0
      %3810 = vmatpush1.msra.mxu0 %v3769
      %3811 = vmatprep.subr.mxu0 0.0
      %3812 = vmatpush1.msra.mxu0 %v3772
      %3813 = vmatprep.subr.mxu0 0.0
      %3814 = vmatpush1.msra.mxu0 %v3775
      %3815 = vmatprep.subr.mxu0 0.0
      %3816 = vmatpush1.msra.mxu0 %v3778
      %3817 = vmatprep.subr.mxu0 0.0
      %3818 = vmatpush1.msra.mxu0 %v3781
      %3819 = vmatprep.subr.mxu0 0.0
      %3820 = vmatpush1.msra.mxu0 %v3784
      %3821 = vmatprep.subr.mxu0 0.0
      %3822 = vmatpush1.msra.mxu0 %v3787
      %3823 = vmatprep.subr.mxu0 0.0
      %3824 = vmatpush1.msra.mxu0 %v3790
      %3825 = vmatprep.subr.mxu0 0.0
      %3826 = vmatpush1.msra.mxu0 %v3793
      %3827 = vmatprep.subr.mxu0 0.0
      %3828 = vmatpush1.msra.mxu0 %v3796
      %3829 = vmatprep.subr.mxu0 0.0
      %3830 = vmatpush1.msra.mxu0 0.0
      %3831 = vmatprep.subr.mxu0 0.0
      %3832 = vmatpush1.msra.mxu0 0.0
      %3833 = vmatprep.subr.mxu0 0.0
      %3834 = vmatpush1.msra.mxu0 0.0
      %3835 = vmatprep.subr.mxu0 0.0
      %3836 = vmatpush1.msra.mxu0 0.0
      %3837 = vmatprep.subr.mxu0 0.0
      %3838 = vmatpush1.msra.mxu0 0.0
      %3839 = vmatprep.subr.mxu0 0.0
      %3840 = vmatpush1.msra.mxu0 0.0
      %3841 = vmatprep.subr.mxu0 0.0
      %3842 = vmatpush1.msra.mxu0 0.0
      %3843 = vmatprep.subr.mxu0 0.0
      %3844 = vmatpush1.msra.mxu0 0.0
      %3845 = vmatprep.subr.mxu0 0.0
      %3846 = vmatpush1.msra.mxu0 0.0
      %3847 = vmatprep.subr.mxu0 0.0
      %3848 = vmatpush1.msra.mxu0 0.0
      %3849 = vmatprep.subr.mxu0 0.0
      %3850 = vmatpush1.msra.mxu0 0.0
      %3851 = vmatprep.subr.mxu0 0.0
      %3852 = vmatpush1.msra.mxu0 0.0
      %3853 = vmatprep.subr.mxu0 0.0
      %3854 = vmatpush1.msra.mxu0 0.0
      %3855 = vmatprep.subr.mxu0 0.0
      %3856 = vmatpush1.msra.mxu0 0.0
      %3857 = vmatprep.subr.mxu0 0.0
      %3858 = vmatpush1.msra.mxu0 0.0
      %3859 = vmatprep.subr.mxu0 0.0
      %3860 = vmatpush1.msra.mxu0 0.0
      %3861 = vmatprep.mubr.f32.mxu0 0.0
      %3862 = vmatmul.mubr.f32.gmra.mrb[0].mxu0 %v3427
      %v3863 = vpop.f32.mrb[0].mxu0
      %v3864 = vadd.f32 1e-05, %v3863
      %v3865 = vpop.f32.mrb[0].mxu0
      %3866 = vmatprep.mubr.f32.mxu0 0.0
      %3867 = vmatmul.mubr.f32.gmra.mrb[0].mxu0 %v3428
      %v3868 = vpop.f32.mrb[0].mxu0
      %v3869 = vadd.f32 1e-05, %v3868
      %v3870 = vpop.f32.mrb[0].mxu0
      %3871 = vmatprep.mubr.f32.mxu0 0.0
      %3872 = vmatmul.mubr.f32.gmra.mrb[0].mxu0 %v3429
      %v3873 = vpop.f32.mrb[0].mxu0
      %v3874 = vadd.f32 1e-05, %v3873
      %v3875 = vpop.f32.mrb[0].mxu0
      %3876 = vmatprep.mubr.f32.mxu0 0.0
      %3877 = vmatmul.mubr.f32.gmra.mrb[0].mxu0 %v3430
      %v3878 = vpop.f32.mrb[0].mxu0
      %v3879 = vadd.f32 1e-05, %v3878
      %v3880 = vpop.f32.mrb[0].mxu0
      %3881 = vmatprep.mubr.f32.mxu0 0.0
      %3882 = vmatmul.mubr.f32.gmra.mrb[0].mxu0 %v3431
      %v3883 = vpop.f32.mrb[0].mxu0
      %v3884 = vadd.f32 1e-05, %v3883
      %v3885 = vpop.f32.mrb[0].mxu0
      %3886 = vmatprep.mubr.f32.mxu0 0.0
      %3887 = vmatmul.mubr.f32.gmra.mrb[0].mxu0 %v3432
      %v3888 = vpop.f32.mrb[0].mxu0
      %v3889 = vadd.f32 1e-05, %v3888
      %v3890 = vpop.f32.mrb[0].mxu0
      %3891 = vmatprep.mubr.f32.mxu0 0.0
      %3892 = vmatmul.mubr.f32.gmra.mrb[0].mxu0 %v3433
      %v3893 = vpop.f32.mrb[0].mxu0
      %v3894 = vadd.f32 1e-05, %v3893
      %v3895 = vpop.f32.mrb[0].mxu0
      %3896 = vmatprep.mubr.f32.mxu0 0.0
      %3897 = vmatmul.mubr.f32.gmra.mrb[0].mxu0 %v3434
      %v3898 = vpop.f32.mrb[0].mxu0
      %v3899 = vadd.f32 1e-05, %v3898
      %v3900 = vpop.f32.mrb[0].mxu0
      %3901 = vmatprep.mubr.f32.mxu0 0.0
      %3902 = vmatmul.mubr.f32.gmra.mrb[0].mxu0 %v3435
      %v3903 = vpop.f32.mrb[0].mxu0
      %v3904 = vadd.f32 1e-05, %v3903
      %v3905 = vpop.f32.mrb[0].mxu0
      %3906 = vmatprep.mubr.f32.mxu0 0.0
      %3907 = vmatmul.mubr.f32.gmra.mrb[0].mxu0 %v3436
      %v3908 = vpop.f32.mrb[0].mxu0
      %v3909 = vadd.f32 1e-05, %v3908
      %v3910 = vpop.f32.mrb[0].mxu0
      %3911 = vmatprep.mubr.f32.mxu0 0.0
      %3912 = vmatmul.mubr.f32.gmra.mrb[0].mxu0 %v3437
      %v3913 = vpop.f32.mrb[0].mxu0
      %v3914 = vadd.f32 1e-05, %v3913
      %v3915 = vpop.f32.mrb[0].mxu0
      %3916 = vmatprep.mubr.f32.mxu0 0.0
      %3917 = vmatmul.mubr.f32.gmra.mrb[0].mxu0 %v3438
      %v3918 = vpop.f32.mrb[0].mxu0
      %v3919 = vadd.f32 1e-05, %v3918
      %v3920 = vpop.f32.mrb[0].mxu0
      %3921 = vmatprep.mubr.f32.mxu0 0.0
      %3922 = vmatmul.mubr.f32.gmra.mrb[0].mxu0 %v3439
      %v3923 = vpop.f32.mrb[0].mxu0
      %v3924 = vadd.f32 1e-05, %v3923
      %v3925 = vpop.f32.mrb[0].mxu0
      %3926 = vmatprep.mubr.f32.mxu0 0.0
      %3927 = vmatmul.mubr.f32.gmra.mrb[0].mxu0 %v3440
      %v3928 = vpop.f32.mrb[0].mxu0
      %v3929 = vadd.f32 1e-05, %v3928
      %v3930 = vpop.f32.mrb[0].mxu0
      %3931 = vmatprep.mubr.f32.mxu0 0.0
      %3932 = vmatmul.mubr.f32.gmra.mrb[0].mxu0 %v3441
      %v3933 = vpop.f32.mrb[0].mxu0
      %v3934 = vadd.f32 1e-05, %v3933
      %v3935 = vpop.f32.mrb[0].mxu0
      %3936 = vmatprep.mubr.f32.mxu0 0.0
      %3937 = vmatmul.mubr.f32.gmra.mrb[0].mxu0 %v3442
      %v3938 = vpop.f32.mrb[0].mxu0
      %v3939 = vadd.f32 1e-05, %v3938
      %v3940 = vpop.f32.mrb[0].mxu0
      %3941 = vdwg.mxu0
      %v3942 = vrsqrt.pop %v3864
      %v3943 = vrsqrt.pop %v3869
      %v3944 = vrsqrt.pop %v3874
      %v3945 = vrsqrt.pop %v3879
      %v3946 = vrsqrt.pop %v3884
      %v3947 = vrsqrt.pop %v3889
      %v3948 = vrsqrt.pop %v3894
      %v3949 = vrsqrt.pop %v3899
      %v3950 = vrsqrt.pop %v3904
      %v3951 = vrsqrt.pop %v3909
      %v3952 = vrsqrt.pop %v3914
      %v3953 = vrsqrt.pop %v3919
      %v3954 = vrsqrt.pop %v3924
      %v3955 = vrsqrt.pop %v3929
      %v3956 = vrsqrt.pop %v3934
      %v3957 = vrsqrt.pop %v3939
      %3959 = vset.pattern.permute.xlu0 0
      %3960 = vperm.xlu0 %3959, %v3942
      %v3961 = vpop.permute.xlu0 %3960
      %3964 = vset.pattern.permute.xlu0 0
      %3965 = vperm.xlu0 %3964, %v3943
      %v3966 = vpop.permute.xlu0 %3965
      %3969 = vset.pattern.permute.xlu0 0
      %3970 = vperm.xlu0 %3969, %v3944
      %v3971 = vpop.permute.xlu0 %3970
      %3974 = vset.pattern.permute.xlu0 0
      %3975 = vperm.xlu0 %3974, %v3945
      %v3976 = vpop.permute.xlu0 %3975
      %3979 = vset.pattern.permute.xlu0 0
      %3980 = vperm.xlu0 %3979, %v3946
      %v3981 = vpop.permute.xlu0 %3980
      %3984 = vset.pattern.permute.xlu0 0
      %3985 = vperm.xlu0 %3984, %v3947
      %v3986 = vpop.permute.xlu0 %3985
      %3989 = vset.pattern.permute.xlu0 0
      %3990 = vperm.xlu0 %3989, %v3948
      %v3991 = vpop.permute.xlu0 %3990
      %3994 = vset.pattern.permute.xlu0 0
      %3995 = vperm.xlu0 %3994, %v3949
      %v3996 = vpop.permute.xlu0 %3995
      %3999 = vset.pattern.permute.xlu0 0
      %4000 = vperm.xlu0 %3999, %v3950
      %v4001 = vpop.permute.xlu0 %4000
      %4004 = vset.pattern.permute.xlu0 0
      %4005 = vperm.xlu0 %4004, %v3951
      %v4006 = vpop.permute.xlu0 %4005
      %4009 = vset.pattern.permute.xlu0 0
      %4010 = vperm.xlu0 %4009, %v3952
      %v4011 = vpop.permute.xlu0 %4010
      %4014 = vset.pattern.permute.xlu0 0
      %4015 = vperm.xlu0 %4014, %v3953
      %v4016 = vpop.permute.xlu0 %4015
      %4019 = vset.pattern.permute.xlu0 0
      %4020 = vperm.xlu0 %4019, %v3954
      %v4021 = vpop.permute.xlu0 %4020
      %4024 = vset.pattern.permute.xlu0 0
      %4025 = vperm.xlu0 %4024, %v3955
      %v4026 = vpop.permute.xlu0 %4025
      %4029 = vset.pattern.permute.xlu0 0
      %4030 = vperm.xlu0 %4029, %v3956
      %v4031 = vpop.permute.xlu0 %4030
      %4034 = vset.pattern.permute.xlu0 0
      %4035 = vperm.xlu0 %4034, %v3957
      %v4036 = vpop.permute.xlu0 %4035
      %v4038 = vmul.f32 %v3717, %v3961
      %v4039 = vmul.f32 %v3718, %v3966
      %v4040 = vmul.f32 %v3719, %v3971
      %v4041 = vmul.f32 %v3720, %v3976
      %v4042 = vmul.f32 %v3721, %v3981
      %v4043 = vmul.f32 %v3722, %v3986
      %v4044 = vmul.f32 %v3723, %v3991
      %v4045 = vmul.f32 %v3724, %v3996
      %v4046 = vmul.f32 %v3725, %v4001
      %v4047 = vmul.f32 %v3726, %v4006
      %v4048 = vmul.f32 %v3727, %v4011
      %v4049 = vmul.f32 %v3728, %v4016
      %v4050 = vmul.f32 %v3729, %v4021
      %v4051 = vmul.f32 %v3730, %v4026
      %v4052 = vmul.f32 %v3731, %v4031
      %v4053 = vmul.f32 %v3732, %v4036
      %vm4054 = vcmp.ge.f32.partialorder %v4038, 0.0
      %vm4055 = vcmp.ge.f32.partialorder %v4039, 0.0
      %vm4056 = vcmp.ge.f32.partialorder %v4040, 0.0
      %vm4057 = vcmp.ge.f32.partialorder %v4041, 0.0
      %vm4058 = vcmp.ge.f32.partialorder %v4042, 0.0
      %vm4059 = vcmp.ge.f32.partialorder %v4043, 0.0
      %vm4060 = vcmp.ge.f32.partialorder %v4044, 0.0
      %vm4061 = vcmp.ge.f32.partialorder %v4045, 0.0
      %vm4062 = vcmp.ge.f32.partialorder %v4046, 0.0
      %vm4063 = vcmp.ge.f32.partialorder %v4047, 0.0
      %vm4064 = vcmp.ge.f32.partialorder %v4048, 0.0
      %vm4065 = vcmp.ge.f32.partialorder %v4049, 0.0
      %vm4066 = vcmp.ge.f32.partialorder %v4050, 0.0
      %vm4067 = vcmp.ge.f32.partialorder %v4051, 0.0
      %vm4068 = vcmp.ge.f32.partialorder %v4052, 0.0
      %vm4069 = vcmp.ge.f32.partialorder %v4053, 0.0
      %v4070 = vmul.f32 %v4038, 0.2
      %v4071 = vmul.f32 %v4039, 0.2
      %v4072 = vmul.f32 %v4040, 0.2
      %v4073 = vmul.f32 %v4041, 0.2
      %v4074 = vmul.f32 %v4042, 0.2
      %v4075 = vmul.f32 %v4043, 0.2
      %v4076 = vmul.f32 %v4044, 0.2
      %v4077 = vmul.f32 %v4045, 0.2
      %v4078 = vmul.f32 %v4046, 0.2
      %v4079 = vmul.f32 %v4047, 0.2
      %v4080 = vmul.f32 %v4048, 0.2
      %v4081 = vmul.f32 %v4049, 0.2
      %v4082 = vmul.f32 %v4050, 0.2
      %v4083 = vmul.f32 %v4051, 0.2
      %v4084 = vmul.f32 %v4052, 0.2
      %v4085 = vmul.f32 %v4053, 0.2
      %v4086 = vsel %vm4054, %v4038, %v4070
      %v4087 = vsel %vm4055, %v4039, %v4071
      %v4088 = vsel %vm4056, %v4040, %v4072
      %v4089 = vsel %vm4057, %v4041, %v4073
      %v4090 = vsel %vm4058, %v4042, %v4074
      %v4091 = vsel %vm4059, %v4043, %v4075
      %v4092 = vsel %vm4060, %v4044, %v4076
      %v4093 = vsel %vm4061, %v4045, %v4077
      %v4094 = vsel %vm4062, %v4046, %v4078
      %v4095 = vsel %vm4063, %v4047, %v4079
      %v4096 = vsel %vm4064, %v4048, %v4080
      %v4097 = vsel %vm4065, %v4049, %v4081
      %v4098 = vsel %vm4066, %v4050, %v4082
      %v4099 = vsel %vm4067, %v4051, %v4083
      %v4100 = vsel %vm4068, %v4052, %v4084
      %v4101 = vsel %vm4069, %v4053, %v4085
      %v4102 = vpack.c.bf16 %v4087, %v4086
      %v4103 = vpack.c.bf16 %v4089, %v4088
      %v4104 = vpack.c.bf16 %v4091, %v4090
      %v4105 = vpack.c.bf16 %v4093, %v4092
      %v4106 = vpack.c.bf16 %v4095, %v4094
      %v4107 = vpack.c.bf16 %v4097, %v4096
      %v4108 = vpack.c.bf16 %v4099, %v4098
      %v4109 = vpack.c.bf16 %v4101, %v4100
      %v4110 = vld [vmem:[%s7] sm:$0xf]
      %v4111 = vld [vmem:[%s7 + $0x4] sm:$0xf]
      %v4114 = vunpack.c.l.b16 %v4110
      %v4115 = vunpack.c.l.b16 %v4111
      %v4116 = vpack.c.b16 %v4115, %v4114
      %v4119 = vsel %vm3443, %v4102, 0
      %v4122 = vsel %vm3443, %v4103, 0
      %v4125 = vsel %vm3443, %v4104, 0
      %v4128 = vsel %vm3443, %v4105, 0
      %v4131 = vsel %vm3443, %v4106, 0
      %v4134 = vsel %vm3443, %v4107, 0
      %v4137 = vsel %vm3443, %v4108, 0
      %v4140 = vsel %vm3443, %v4109, 0
      %4142 = vmatprep.subr.bf16.mxu0 0
      %4143 = vmatpush1.bf16.msra.mxu0 %v4116
      %4144 = vmatprep.subr.bf16.mxu0 0
      %4145 = vmatpush1.bf16.msra.mxu0 0
      %4146 = vmatprep.subr.bf16.mxu0 0
      %4147 = vmatpush1.bf16.msra.mxu0 0
      %4148 = vmatprep.subr.bf16.mxu0 0
      %4149 = vmatpush1.bf16.msra.mxu0 0
      %4150 = vmatprep.subr.bf16.mxu0 0
      %4151 = vmatpush1.bf16.msra.mxu0 0
      %4152 = vmatprep.subr.bf16.mxu0 0
      %4153 = vmatpush1.bf16.msra.mxu0 0
      %4154 = vmatprep.subr.bf16.mxu0 0
      %4155 = vmatpush1.bf16.msra.mxu0 0
      %4156 = vmatprep.subr.bf16.mxu0 0
      %4157 = vmatpush1.bf16.msra.mxu0 0
      %4158 = vmatprep.subr.bf16.mxu0 0
      %4159 = vmatpush1.bf16.msra.mxu0 0
      %4160 = vmatprep.subr.bf16.mxu0 0
      %4161 = vmatpush1.bf16.msra.mxu0 0
      %4162 = vmatprep.subr.bf16.mxu0 0
      %4163 = vmatpush1.bf16.msra.mxu0 0
      %4164 = vmatprep.subr.bf16.mxu0 0
      %4165 = vmatpush1.bf16.msra.mxu0 0
      %4166 = vmatprep.subr.bf16.mxu0 0
      %4167 = vmatpush1.bf16.msra.mxu0 0
      %4168 = vmatprep.subr.bf16.mxu0 0
      %4169 = vmatpush1.bf16.msra.mxu0 0
      %4170 = vmatprep.subr.bf16.mxu0 0
      %4171 = vmatpush1.bf16.msra.mxu0 0
      %4172 = vmatprep.subr.bf16.mxu0 0
      %4173 = vmatpush1.bf16.msra.mxu0 0
      %4174 = vmatprep.mubr.bf16.mxu0 0
      %4175 = vmatmul.mubr.bf16.gmra.mrb[0].mxu0 %v4119
      %v4176 = vpop.f32.mrb[0].mxu0
      %v4177 = vadd.f32 0.0, %v4176
      %v4178 = vpop.f32.mrb[0].mxu0
      %v4179 = vpop.f32.mrb[0].mxu0
      %v4180 = vadd.f32 0.0, %v4179
      %v4181 = vpop.f32.mrb[0].mxu0
      %4182 = vmatprep.mubr.bf16.mxu0 0
      %4183 = vmatmul.mubr.bf16.gmra.mrb[0].mxu0 %v4122
      %v4184 = vpop.f32.mrb[0].mxu0
      %v4185 = vadd.f32 0.0, %v4184
      %v4186 = vpop.f32.mrb[0].mxu0
      %v4187 = vpop.f32.mrb[0].mxu0
      %v4188 = vadd.f32 0.0, %v4187
      %v4189 = vpop.f32.mrb[0].mxu0
      %4190 = vmatprep.mubr.bf16.mxu0 0
      %4191 = vmatmul.mubr.bf16.gmra.mrb[0].mxu0 %v4125
      %v4192 = vpop.f32.mrb[0].mxu0
      %v4193 = vadd.f32 0.0, %v4192
      %v4194 = vpop.f32.mrb[0].mxu0
      %v4195 = vpop.f32.mrb[0].mxu0
      %v4196 = vadd.f32 0.0, %v4195
      %v4197 = vpop.f32.mrb[0].mxu0
      %4198 = vmatprep.mubr.bf16.mxu0 0
      %4199 = vmatmul.mubr.bf16.gmra.mrb[0].mxu0 %v4128
      %v4200 = vpop.f32.mrb[0].mxu0
      %v4201 = vadd.f32 0.0, %v4200
      %v4202 = vpop.f32.mrb[0].mxu0
      %v4203 = vpop.f32.mrb[0].mxu0
      %v4204 = vadd.f32 0.0, %v4203
      %v4205 = vpop.f32.mrb[0].mxu0
      %4206 = vmatprep.mubr.bf16.mxu0 0
      %4207 = vmatmul.mubr.bf16.gmra.mrb[0].mxu0 %v4131
      %v4208 = vpop.f32.mrb[0].mxu0
      %v4209 = vadd.f32 0.0, %v4208
      %v4210 = vpop.f32.mrb[0].mxu0
      %v4211 = vpop.f32.mrb[0].mxu0
      %v4212 = vadd.f32 0.0, %v4211
      %v4213 = vpop.f32.mrb[0].mxu0
      %4214 = vmatprep.mubr.bf16.mxu0 0
      %4215 = vmatmul.mubr.bf16.gmra.mrb[0].mxu0 %v4134
      %v4216 = vpop.f32.mrb[0].mxu0
      %v4217 = vadd.f32 0.0, %v4216
      %v4218 = vpop.f32.mrb[0].mxu0
      %v4219 = vpop.f32.mrb[0].mxu0
      %v4220 = vadd.f32 0.0, %v4219
      %v4221 = vpop.f32.mrb[0].mxu0
      %4222 = vmatprep.mubr.bf16.mxu0 0
      %4223 = vmatmul.mubr.bf16.gmra.mrb[0].mxu0 %v4137
      %v4224 = vpop.f32.mrb[0].mxu0
      %v4225 = vadd.f32 0.0, %v4224
      %v4226 = vpop.f32.mrb[0].mxu0
      %v4227 = vpop.f32.mrb[0].mxu0
      %v4228 = vadd.f32 0.0, %v4227
      %v4229 = vpop.f32.mrb[0].mxu0
      %4230 = vmatprep.mubr.bf16.mxu0 0
      %4231 = vmatmul.mubr.bf16.gmra.mrb[0].mxu0 %v4140
      %v4232 = vpop.f32.mrb[0].mxu0
      %v4233 = vadd.f32 0.0, %v4232
      %v4234 = vpop.f32.mrb[0].mxu0
      %v4235 = vpop.f32.mrb[0].mxu0
      %v4236 = vadd.f32 0.0, %v4235
      %v4237 = vpop.f32.mrb[0].mxu0
      %4238 = vdwg.mxu0
      %v4239 = vpack.c.bf16 %v4180, %v4177
      %v4240 = vpack.c.bf16 %v4188, %v4185
      %v4241 = vpack.c.bf16 %v4196, %v4193
      %v4242 = vpack.c.bf16 %v4204, %v4201
      %v4243 = vpack.c.bf16 %v4212, %v4209
      %v4244 = vpack.c.bf16 %v4220, %v4217
      %v4245 = vpack.c.bf16 %v4228, %v4225
      %v4246 = vpack.c.bf16 %v4236, %v4233
      %v4247 = vld [vmem:[%s6] sm:$0xf]
      %v4248 = vld [vmem:[%s6 + $0x4] sm:$0xf]
      %v4249 = vld [vmem:[%s6 + $0x8] sm:$0xf]
      %v4250 = vld [vmem:[%s6 + $0xc] sm:$0xf]
      %v4251 = vld [vmem:[%s6 + $0x10] sm:$0xf]
      %v4252 = vld [vmem:[%s6 + $0x14] sm:$0xf]
      %v4253 = vld [vmem:[%s6 + $0x18] sm:$0xf]
      %v4254 = vld [vmem:[%s6 + $0x1c] sm:$0xf]
      %v4255 = vld [vmem:[%s6 + $0x20] sm:$0xf]
      %v4256 = vld [vmem:[%s6 + $0x24] sm:$0xf]
      %v4257 = vld [vmem:[%s6 + $0x28] sm:$0xf]
      %v4258 = vld [vmem:[%s6 + $0x2c] sm:$0xf]
      %v4259 = vld [vmem:[%s6 + $0x30] sm:$0xf]
      %v4260 = vld [vmem:[%s6 + $0x34] sm:$0xf]
      %v4261 = vld [vmem:[%s6 + $0x38] sm:$0xf]
      %v4262 = vld [vmem:[%s6 + $0x3c] sm:$0xf]
      %s4263 = scalar_lea.vmem %s7, 8
      %v4264 = vld [vmem:[%s4263] sm:$0xf]
      %v4265 = vld [vmem:[%s4263 + $0x4] sm:$0xf]
      %v4268 = vunpack.c.l.b16 %v4264
      %v4269 = vunpack.c.l.b16 %v4265
      %v4270 = vpack.c.b16 %v4269, %v4268
      %4272 = vmatprep.subr.bf16.mxu0 0
      %4273 = vmatpush1.bf16.msra.mxu0 %v4270
      %4274 = vmatprep.subr.bf16.mxu0 0
      %4275 = vmatpush1.bf16.msra.mxu0 0
      %4276 = vmatprep.subr.bf16.mxu0 0
      %4277 = vmatpush1.bf16.msra.mxu0 0
      %4278 = vmatprep.subr.bf16.mxu0 0
      %4279 = vmatpush1.bf16.msra.mxu0 0
      %4280 = vmatprep.subr.bf16.mxu0 0
      %4281 = vmatpush1.bf16.msra.mxu0 0
      %4282 = vmatprep.subr.bf16.mxu0 0
      %4283 = vmatpush1.bf16.msra.mxu0 0
      %4284 = vmatprep.subr.bf16.mxu0 0
      %4285 = vmatpush1.bf16.msra.mxu0 0
      %4286 = vmatprep.subr.bf16.mxu0 0
      %4287 = vmatpush1.bf16.msra.mxu0 0
      %4288 = vmatprep.subr.bf16.mxu0 0
      %4289 = vmatpush1.bf16.msra.mxu0 0
      %4290 = vmatprep.subr.bf16.mxu0 0
      %4291 = vmatpush1.bf16.msra.mxu0 0
      %4292 = vmatprep.subr.bf16.mxu0 0
      %4293 = vmatpush1.bf16.msra.mxu0 0
      %4294 = vmatprep.subr.bf16.mxu0 0
      %4295 = vmatpush1.bf16.msra.mxu0 0
      %4296 = vmatprep.subr.bf16.mxu0 0
      %4297 = vmatpush1.bf16.msra.mxu0 0
      %4298 = vmatprep.subr.bf16.mxu0 0
      %4299 = vmatpush1.bf16.msra.mxu0 0
      %4300 = vmatprep.subr.bf16.mxu0 0
      %4301 = vmatpush1.bf16.msra.mxu0 0
      %4302 = vmatprep.subr.bf16.mxu0 0
      %4303 = vmatpush1.bf16.msra.mxu0 0
      %4304 = vmatprep.mubr.bf16.mxu0 0
      %4305 = vmatmul.mubr.bf16.gmra.mrb[0].mxu0 %v4119
      %v4306 = vpop.f32.mrb[0].mxu0
      %v4307 = vadd.f32 0.0, %v4306
      %v4308 = vpop.f32.mrb[0].mxu0
      %v4309 = vpop.f32.mrb[0].mxu0
      %v4310 = vadd.f32 0.0, %v4309
      %v4311 = vpop.f32.mrb[0].mxu0
      %4312 = vmatprep.mubr.bf16.mxu0 0
      %4313 = vmatmul.mubr.bf16.gmra.mrb[0].mxu0 %v4122
      %v4314 = vpop.f32.mrb[0].mxu0
      %v4315 = vadd.f32 0.0, %v4314
      %v4316 = vpop.f32.mrb[0].mxu0
      %v4317 = vpop.f32.mrb[0].mxu0
      %v4318 = vadd.f32 0.0, %v4317
      %v4319 = vpop.f32.mrb[0].mxu0
      %4320 = vmatprep.mubr.bf16.mxu0 0
      %4321 = vmatmul.mubr.bf16.gmra.mrb[0].mxu0 %v4125
      %v4322 = vpop.f32.mrb[0].mxu0
      %v4323 = vadd.f32 0.0, %v4322
      %v4324 = vpop.f32.mrb[0].mxu0
      %v4325 = vpop.f32.mrb[0].mxu0
      %v4326 = vadd.f32 0.0, %v4325
      %v4327 = vpop.f32.mrb[0].mxu0
      %4328 = vmatprep.mubr.bf16.mxu0 0
      %4329 = vmatmul.mubr.bf16.gmra.mrb[0].mxu0 %v4128
      %v4330 = vpop.f32.mrb[0].mxu0
      %v4331 = vadd.f32 0.0, %v4330
      %v4332 = vpop.f32.mrb[0].mxu0
      %v4333 = vpop.f32.mrb[0].mxu0
      %v4334 = vadd.f32 0.0, %v4333
      %v4335 = vpop.f32.mrb[0].mxu0
      %4336 = vmatprep.mubr.bf16.mxu0 0
      %4337 = vmatmul.mubr.bf16.gmra.mrb[0].mxu0 %v4131
      %v4338 = vpop.f32.mrb[0].mxu0
      %v4339 = vadd.f32 0.0, %v4338
      %v4340 = vpop.f32.mrb[0].mxu0
      %v4341 = vpop.f32.mrb[0].mxu0
      %v4342 = vadd.f32 0.0, %v4341
      %v4343 = vpop.f32.mrb[0].mxu0
      %4344 = vmatprep.mubr.bf16.mxu0 0
      %4345 = vmatmul.mubr.bf16.gmra.mrb[0].mxu0 %v4134
      %v4346 = vpop.f32.mrb[0].mxu0
      %v4347 = vadd.f32 0.0, %v4346
      %v4348 = vpop.f32.mrb[0].mxu0
      %v4349 = vpop.f32.mrb[0].mxu0
      %v4350 = vadd.f32 0.0, %v4349
      %v4351 = vpop.f32.mrb[0].mxu0
      %4352 = vmatprep.mubr.bf16.mxu0 0
      %4353 = vmatmul.mubr.bf16.gmra.mrb[0].mxu0 %v4137
      %v4354 = vpop.f32.mrb[0].mxu0
      %v4355 = vadd.f32 0.0, %v4354
      %v4356 = vpop.f32.mrb[0].mxu0
      %v4357 = vpop.f32.mrb[0].mxu0
      %v4358 = vadd.f32 0.0, %v4357
      %v4359 = vpop.f32.mrb[0].mxu0
      %4360 = vmatprep.mubr.bf16.mxu0 0
      %4361 = vmatmul.mubr.bf16.gmra.mrb[0].mxu0 %v4140
      %v4362 = vpop.f32.mrb[0].mxu0
      %v4363 = vadd.f32 0.0, %v4362
      %v4364 = vpop.f32.mrb[0].mxu0
      %v4365 = vpop.f32.mrb[0].mxu0
      %v4366 = vadd.f32 0.0, %v4365
      %v4367 = vpop.f32.mrb[0].mxu0
      %4368 = vdwg.mxu0
      %v4369 = vpack.c.bf16 %v4310, %v4307
      %v4370 = vpack.c.bf16 %v4318, %v4315
      %v4371 = vpack.c.bf16 %v4326, %v4323
      %v4372 = vpack.c.bf16 %v4334, %v4331
      %v4373 = vpack.c.bf16 %v4342, %v4339
      %v4374 = vpack.c.bf16 %v4350, %v4347
      %v4375 = vpack.c.bf16 %v4358, %v4355
      %v4376 = vpack.c.bf16 %v4366, %v4363
      %s4377 = scalar_lea.vmem %s6, 64
      %v4378 = vld [vmem:[%s4377] sm:$0xf]
      %v4379 = vld [vmem:[%s4377 + $0x4] sm:$0xf]
      %v4380 = vld [vmem:[%s4377 + $0x8] sm:$0xf]
      %v4381 = vld [vmem:[%s4377 + $0xc] sm:$0xf]
      %v4382 = vld [vmem:[%s4377 + $0x10] sm:$0xf]
      %v4383 = vld [vmem:[%s4377 + $0x14] sm:$0xf]
      %v4384 = vld [vmem:[%s4377 + $0x18] sm:$0xf]
      %v4385 = vld [vmem:[%s4377 + $0x1c] sm:$0xf]
      %v4386 = vld [vmem:[%s4377 + $0x20] sm:$0xf]
      %v4387 = vld [vmem:[%s4377 + $0x24] sm:$0xf]
      %v4388 = vld [vmem:[%s4377 + $0x28] sm:$0xf]
      %v4389 = vld [vmem:[%s4377 + $0x2c] sm:$0xf]
      %v4390 = vld [vmem:[%s4377 + $0x30] sm:$0xf]
      %v4391 = vld [vmem:[%s4377 + $0x34] sm:$0xf]
      %v4392 = vld [vmem:[%s4377 + $0x38] sm:$0xf]
      %v4393 = vld [vmem:[%s4377 + $0x3c] sm:$0xf]
      %v4410 = vunpack.c.l.b16 %v4378
      %v4411 = vunpack.c.l.b16 %v4379
      %v4412 = vunpack.c.l.b16 %v4380
      %v4413 = vunpack.c.l.b16 %v4381
      %v4414 = vunpack.c.l.b16 %v4382
      %v4415 = vunpack.c.l.b16 %v4383
      %v4416 = vunpack.c.l.b16 %v4384
      %v4417 = vunpack.c.l.b16 %v4385
      %v4418 = vunpack.c.l.b16 %v4386
      %v4419 = vunpack.c.l.b16 %v4387
      %v4420 = vunpack.c.l.b16 %v4388
      %v4421 = vunpack.c.l.b16 %v4389
      %v4422 = vunpack.c.l.b16 %v4390
      %v4423 = vunpack.c.l.b16 %v4391
      %v4424 = vunpack.c.l.b16 %v4392
      %v4425 = vunpack.c.l.b16 %v4393
      %v4426 = vpack.c.b16 %v4411, %v4410
      %v4427 = vpack.c.b16 %v4413, %v4412
      %v4428 = vpack.c.b16 %v4415, %v4414
      %v4429 = vpack.c.b16 %v4417, %v4416
      %v4430 = vpack.c.b16 %v4419, %v4418
      %v4431 = vpack.c.b16 %v4421, %v4420
      %v4432 = vpack.c.b16 %v4423, %v4422
      %v4433 = vpack.c.b16 %v4425, %v4424
      %4442 = vmatprep.subr.bf16.mxu0 0
      %4443 = vmatpush1.bf16.msra.mxu0 %v4369
      %4444 = vmatprep.subr.bf16.mxu0 0
      %4445 = vmatpush1.bf16.msra.mxu0 %v4370
      %4446 = vmatprep.subr.bf16.mxu0 0
      %4447 = vmatpush1.bf16.msra.mxu0 %v4371
      %4448 = vmatprep.subr.bf16.mxu0 0
      %4449 = vmatpush1.bf16.msra.mxu0 %v4372
      %4450 = vmatprep.subr.bf16.mxu0 0
      %4451 = vmatpush1.bf16.msra.mxu0 %v4373
      %4452 = vmatprep.subr.bf16.mxu0 0
      %4453 = vmatpush1.bf16.msra.mxu0 %v4374
      %4454 = vmatprep.subr.bf16.mxu0 0
      %4455 = vmatpush1.bf16.msra.mxu0 %v4375
      %4456 = vmatprep.subr.bf16.mxu0 0
      %4457 = vmatpush1.bf16.msra.mxu0 %v4376
      %4458 = vmatprep.subr.bf16.mxu0 0
      %4459 = vmatpush1.bf16.msra.mxu0 0
      %4460 = vmatprep.subr.bf16.mxu0 0
      %4461 = vmatpush1.bf16.msra.mxu0 0
      %4462 = vmatprep.subr.bf16.mxu0 0
      %4463 = vmatpush1.bf16.msra.mxu0 0
      %4464 = vmatprep.subr.bf16.mxu0 0
      %4465 = vmatpush1.bf16.msra.mxu0 0
      %4466 = vmatprep.subr.bf16.mxu0 0
      %4467 = vmatpush1.bf16.msra.mxu0 0
      %4468 = vmatprep.subr.bf16.mxu0 0
      %4469 = vmatpush1.bf16.msra.mxu0 0
      %4470 = vmatprep.subr.bf16.mxu0 0
      %4471 = vmatpush1.bf16.msra.mxu0 0
      %4472 = vmatprep.subr.bf16.mxu0 0
      %4473 = vmatpush1.bf16.msra.mxu0 0
      %4474 = vmatprep.mubr.bf16.mxu0 0
      %4475 = vmatmul.mubr.bf16.gmra.mrb[0].mxu0 %v4426
      %v4476 = vpop.f32.mrb[0].mxu0
      %v4477 = vadd.f32 0.0, %v4476
      %v4478 = vpop.f32.mrb[0].mxu0
      %v4479 = vpop.f32.mrb[0].mxu0
      %v4480 = vadd.f32 0.0, %v4479
      %v4481 = vpop.f32.mrb[0].mxu0
      %4482 = vmatprep.mubr.bf16.mxu0 0
      %4483 = vmatmul.mubr.bf16.gmra.mrb[0].mxu0 %v4427
      %v4484 = vpop.f32.mrb[0].mxu0
      %v4485 = vadd.f32 0.0, %v4484
      %v4486 = vpop.f32.mrb[0].mxu0
      %v4487 = vpop.f32.mrb[0].mxu0
      %v4488 = vadd.f32 0.0, %v4487
      %v4489 = vpop.f32.mrb[0].mxu0
      %4490 = vmatprep.mubr.bf16.mxu0 0
      %4491 = vmatmul.mubr.bf16.gmra.mrb[0].mxu0 %v4428
      %v4492 = vpop.f32.mrb[0].mxu0
      %v4493 = vadd.f32 0.0, %v4492
      %v4494 = vpop.f32.mrb[0].mxu0
      %v4495 = vpop.f32.mrb[0].mxu0
      %v4496 = vadd.f32 0.0, %v4495
      %v4497 = vpop.f32.mrb[0].mxu0
      %4498 = vmatprep.mubr.bf16.mxu0 0
      %4499 = vmatmul.mubr.bf16.gmra.mrb[0].mxu0 %v4429
      %v4500 = vpop.f32.mrb[0].mxu0
      %v4501 = vadd.f32 0.0, %v4500
      %v4502 = vpop.f32.mrb[0].mxu0
      %v4503 = vpop.f32.mrb[0].mxu0
      %v4504 = vadd.f32 0.0, %v4503
      %v4505 = vpop.f32.mrb[0].mxu0
      %4506 = vmatprep.mubr.bf16.mxu0 0
      %4507 = vmatmul.mubr.bf16.gmra.mrb[0].mxu0 %v4430
      %v4508 = vpop.f32.mrb[0].mxu0
      %v4509 = vadd.f32 0.0, %v4508
      %v4510 = vpop.f32.mrb[0].mxu0
      %v4511 = vpop.f32.mrb[0].mxu0
      %v4512 = vadd.f32 0.0, %v4511
      %v4513 = vpop.f32.mrb[0].mxu0
      %4514 = vmatprep.mubr.bf16.mxu0 0
      %4515 = vmatmul.mubr.bf16.gmra.mrb[0].mxu0 %v4431
      %v4516 = vpop.f32.mrb[0].mxu0
      %v4517 = vadd.f32 0.0, %v4516
      %v4518 = vpop.f32.mrb[0].mxu0
      %v4519 = vpop.f32.mrb[0].mxu0
      %v4520 = vadd.f32 0.0, %v4519
      %v4521 = vpop.f32.mrb[0].mxu0
      %4522 = vmatprep.mubr.bf16.mxu0 0
      %4523 = vmatmul.mubr.bf16.gmra.mrb[0].mxu0 %v4432
      %v4524 = vpop.f32.mrb[0].mxu0
      %v4525 = vadd.f32 0.0, %v4524
      %v4526 = vpop.f32.mrb[0].mxu0
      %v4527 = vpop.f32.mrb[0].mxu0
      %v4528 = vadd.f32 0.0, %v4527
      %v4529 = vpop.f32.mrb[0].mxu0
      %4530 = vmatprep.mubr.bf16.mxu0 0
      %4531 = vmatmul.mubr.bf16.gmra.mrb[0].mxu0 %v4433
      %v4532 = vpop.f32.mrb[0].mxu0
      %v4533 = vadd.f32 0.0, %v4532
      %v4534 = vpop.f32.mrb[0].mxu0
      %v4535 = vpop.f32.mrb[0].mxu0
      %v4536 = vadd.f32 0.0, %v4535
      %v4537 = vpop.f32.mrb[0].mxu0
      %4538 = vdwg.mxu0
      %v4555 = vunpack.c.l.b16 %v4247
      %v4556 = vunpack.c.l.b16 %v4248
      %v4557 = vunpack.c.l.b16 %v4249
      %v4558 = vunpack.c.l.b16 %v4250
      %v4559 = vunpack.c.l.b16 %v4251
      %v4560 = vunpack.c.l.b16 %v4252
      %v4561 = vunpack.c.l.b16 %v4253
      %v4562 = vunpack.c.l.b16 %v4254
      %v4563 = vunpack.c.l.b16 %v4255
      %v4564 = vunpack.c.l.b16 %v4256
      %v4565 = vunpack.c.l.b16 %v4257
      %v4566 = vunpack.c.l.b16 %v4258
      %v4567 = vunpack.c.l.b16 %v4259
      %v4568 = vunpack.c.l.b16 %v4260
      %v4569 = vunpack.c.l.b16 %v4261
      %v4570 = vunpack.c.l.b16 %v4262
      %v4571 = vpack.c.b16 %v4556, %v4555
      %v4572 = vpack.c.b16 %v4558, %v4557
      %v4573 = vpack.c.b16 %v4560, %v4559
      %v4574 = vpack.c.b16 %v4562, %v4561
      %v4575 = vpack.c.b16 %v4564, %v4563
      %v4576 = vpack.c.b16 %v4566, %v4565
      %v4577 = vpack.c.b16 %v4568, %v4567
      %v4578 = vpack.c.b16 %v4570, %v4569
      %4587 = vmatprep.subr.bf16.mxu0 0
      %4588 = vmatpush1.bf16.msra.mxu0 %v4239
      %4589 = vmatprep.subr.bf16.mxu0 0
      %4590 = vmatpush1.bf16.msra.mxu0 %v4240
      %4591 = vmatprep.subr.bf16.mxu0 0
      %4592 = vmatpush1.bf16.msra.mxu0 %v4241
      %4593 = vmatprep.subr.bf16.mxu0 0
      %4594 = vmatpush1.bf16.msra.mxu0 %v4242
      %4595 = vmatprep.subr.bf16.mxu0 0
      %4596 = vmatpush1.bf16.msra.mxu0 %v4243
      %4597 = vmatprep.subr.bf16.mxu0 0
      %4598 = vmatpush1.bf16.msra.mxu0 %v4244
      %4599 = vmatprep.subr.bf16.mxu0 0
      %4600 = vmatpush1.bf16.msra.mxu0 %v4245
      %4601 = vmatprep.subr.bf16.mxu0 0
      %4602 = vmatpush1.bf16.msra.mxu0 %v4246
      %4603 = vmatprep.subr.bf16.mxu0 0
      %4604 = vmatpush1.bf16.msra.mxu0 0
      %4605 = vmatprep.subr.bf16.mxu0 0
      %4606 = vmatpush1.bf16.msra.mxu0 0
      %4607 = vmatprep.subr.bf16.mxu0 0
      %4608 = vmatpush1.bf16.msra.mxu0 0
      %4609 = vmatprep.subr.bf16.mxu0 0
      %4610 = vmatpush1.bf16.msra.mxu0 0
      %4611 = vmatprep.subr.bf16.mxu0 0
      %4612 = vmatpush1.bf16.msra.mxu0 0
      %4613 = vmatprep.subr.bf16.mxu0 0
      %4614 = vmatpush1.bf16.msra.mxu0 0
      %4615 = vmatprep.subr.bf16.mxu0 0
      %4616 = vmatpush1.bf16.msra.mxu0 0
      %4617 = vmatprep.subr.bf16.mxu0 0
      %4618 = vmatpush1.bf16.msra.mxu0 0
      %4619 = vmatprep.mubr.bf16.mxu0 0
      %4620 = vmatmul.mubr.bf16.gmra.mrb[0].mxu0 %v4571
      %v4621 = vpop.f32.mrb[0].mxu0
      %v4622 = vadd.f32 %v4477, %v4621
      %v4623 = vpop.f32.mrb[0].mxu0
      %v4624 = vpop.f32.mrb[0].mxu0
      %v4625 = vadd.f32 %v4480, %v4624
      %v4626 = vpop.f32.mrb[0].mxu0
      %4627 = vmatprep.mubr.bf16.mxu0 0
      %4628 = vmatmul.mubr.bf16.gmra.mrb[0].mxu0 %v4572
      %v4629 = vpop.f32.mrb[0].mxu0
      %v4630 = vadd.f32 %v4485, %v4629
      %v4631 = vpop.f32.mrb[0].mxu0
      %v4632 = vpop.f32.mrb[0].mxu0
      %v4633 = vadd.f32 %v4488, %v4632
      %v4634 = vpop.f32.mrb[0].mxu0
      %4635 = vmatprep.mubr.bf16.mxu0 0
      %4636 = vmatmul.mubr.bf16.gmra.mrb[0].mxu0 %v4573
      %v4637 = vpop.f32.mrb[0].mxu0
      %v4638 = vadd.f32 %v4493, %v4637
      %v4639 = vpop.f32.mrb[0].mxu0
      %v4640 = vpop.f32.mrb[0].mxu0
      %v4641 = vadd.f32 %v4496, %v4640
      %v4642 = vpop.f32.mrb[0].mxu0
      %4643 = vmatprep.mubr.bf16.mxu0 0
      %4644 = vmatmul.mubr.bf16.gmra.mrb[0].mxu0 %v4574
      %v4645 = vpop.f32.mrb[0].mxu0
      %v4646 = vadd.f32 %v4501, %v4645
      %v4647 = vpop.f32.mrb[0].mxu0
      %v4648 = vpop.f32.mrb[0].mxu0
      %v4649 = vadd.f32 %v4504, %v4648
      %v4650 = vpop.f32.mrb[0].mxu0
      %4651 = vmatprep.mubr.bf16.mxu0 0
      %4652 = vmatmul.mubr.bf16.gmra.mrb[0].mxu0 %v4575
      %v4653 = vpop.f32.mrb[0].mxu0
      %v4654 = vadd.f32 %v4509, %v4653
      %v4655 = vpop.f32.mrb[0].mxu0
      %v4656 = vpop.f32.mrb[0].mxu0
      %v4657 = vadd.f32 %v4512, %v4656
      %v4658 = vpop.f32.mrb[0].mxu0
      %4659 = vmatprep.mubr.bf16.mxu0 0
      %4660 = vmatmul.mubr.bf16.gmra.mrb[0].mxu0 %v4576
      %v4661 = vpop.f32.mrb[0].mxu0
      %v4662 = vadd.f32 %v4517, %v4661
      %v4663 = vpop.f32.mrb[0].mxu0
      %v4664 = vpop.f32.mrb[0].mxu0
      %v4665 = vadd.f32 %v4520, %v4664
      %v4666 = vpop.f32.mrb[0].mxu0
      %4667 = vmatprep.mubr.bf16.mxu0 0
      %4668 = vmatmul.mubr.bf16.gmra.mrb[0].mxu0 %v4577
      %v4669 = vpop.f32.mrb[0].mxu0
      %v4670 = vadd.f32 %v4525, %v4669
      %v4671 = vpop.f32.mrb[0].mxu0
      %v4672 = vpop.f32.mrb[0].mxu0
      %v4673 = vadd.f32 %v4528, %v4672
      %v4674 = vpop.f32.mrb[0].mxu0
      %4675 = vmatprep.mubr.bf16.mxu0 0
      %4676 = vmatmul.mubr.bf16.gmra.mrb[0].mxu0 %v4578
      %v4677 = vpop.f32.mrb[0].mxu0
      %v4678 = vadd.f32 %v4533, %v4677
      %v4679 = vpop.f32.mrb[0].mxu0
      %v4680 = vpop.f32.mrb[0].mxu0
      %v4681 = vadd.f32 %v4536, %v4680
      %v4682 = vpop.f32.mrb[0].mxu0
      %4683 = vdwg.mxu0
      %s4684 = scalar_lea.vmem %s7, 16
      %v4685 = vld [vmem:[%s4684] sm:$0xf]
      %v4686 = vld [vmem:[%s4684 + $0x4] sm:$0xf]
      %v4689 = vunpack.c.l.b16 %v4685
      %v4690 = vunpack.c.l.b16 %v4686
      %v4691 = vpack.c.b16 %v4690, %v4689
      %4693 = vmatprep.subr.bf16.mxu0 0
      %4694 = vmatpush1.bf16.msra.mxu0 %v4691
      %4695 = vmatprep.subr.bf16.mxu0 0
      %4696 = vmatpush1.bf16.msra.mxu0 0
      %4697 = vmatprep.subr.bf16.mxu0 0
      %4698 = vmatpush1.bf16.msra.mxu0 0
      %4699 = vmatprep.subr.bf16.mxu0 0
      %4700 = vmatpush1.bf16.msra.mxu0 0
      %4701 = vmatprep.subr.bf16.mxu0 0
      %4702 = vmatpush1.bf16.msra.mxu0 0
      %4703 = vmatprep.subr.bf16.mxu0 0
      %4704 = vmatpush1.bf16.msra.mxu0 0
      %4705 = vmatprep.subr.bf16.mxu0 0
      %4706 = vmatpush1.bf16.msra.mxu0 0
      %4707 = vmatprep.subr.bf16.mxu0 0
      %4708 = vmatpush1.bf16.msra.mxu0 0
      %4709 = vmatprep.subr.bf16.mxu0 0
      %4710 = vmatpush1.bf16.msra.mxu0 0
      %4711 = vmatprep.subr.bf16.mxu0 0
      %4712 = vmatpush1.bf16.msra.mxu0 0
      %4713 = vmatprep.subr.bf16.mxu0 0
      %4714 = vmatpush1.bf16.msra.mxu0 0
      %4715 = vmatprep.subr.bf16.mxu0 0
      %4716 = vmatpush1.bf16.msra.mxu0 0
      %4717 = vmatprep.subr.bf16.mxu0 0
      %4718 = vmatpush1.bf16.msra.mxu0 0
      %4719 = vmatprep.subr.bf16.mxu0 0
      %4720 = vmatpush1.bf16.msra.mxu0 0
      %4721 = vmatprep.subr.bf16.mxu0 0
      %4722 = vmatpush1.bf16.msra.mxu0 0
      %4723 = vmatprep.subr.bf16.mxu0 0
      %4724 = vmatpush1.bf16.msra.mxu0 0
      %4725 = vmatprep.mubr.bf16.mxu0 0
      %4726 = vmatmul.mubr.bf16.gmra.mrb[0].mxu0 %v4119
      %v4727 = vpop.f32.mrb[0].mxu0
      %v4728 = vadd.f32 0.0, %v4727
      %v4729 = vpop.f32.mrb[0].mxu0
      %v4730 = vpop.f32.mrb[0].mxu0
      %v4731 = vadd.f32 0.0, %v4730
      %v4732 = vpop.f32.mrb[0].mxu0
      %4733 = vmatprep.mubr.bf16.mxu0 0
      %4734 = vmatmul.mubr.bf16.gmra.mrb[0].mxu0 %v4122
      %v4735 = vpop.f32.mrb[0].mxu0
      %v4736 = vadd.f32 0.0, %v4735
      %v4737 = vpop.f32.mrb[0].mxu0
      %v4738 = vpop.f32.mrb[0].mxu0
      %v4739 = vadd.f32 0.0, %v4738
      %v4740 = vpop.f32.mrb[0].mxu0
      %4741 = vmatprep.mubr.bf16.mxu0 0
      %4742 = vmatmul.mubr.bf16.gmra.mrb[0].mxu0 %v4125
      %v4743 = vpop.f32.mrb[0].mxu0
      %v4744 = vadd.f32 0.0, %v4743
      %v4745 = vpop.f32.mrb[0].mxu0
      %v4746 = vpop.f32.mrb[0].mxu0
      %v4747 = vadd.f32 0.0, %v4746
      %v4748 = vpop.f32.mrb[0].mxu0
      %4749 = vmatprep.mubr.bf16.mxu0 0
      %4750 = vmatmul.mubr.bf16.gmra.mrb[0].mxu0 %v4128
      %v4751 = vpop.f32.mrb[0].mxu0
      %v4752 = vadd.f32 0.0, %v4751
      %v4753 = vpop.f32.mrb[0].mxu0
      %v4754 = vpop.f32.mrb[0].mxu0
      %v4755 = vadd.f32 0.0, %v4754
      %v4756 = vpop.f32.mrb[0].mxu0
      %4757 = vmatprep.mubr.bf16.mxu0 0
      %4758 = vmatmul.mubr.bf16.gmra.mrb[0].mxu0 %v4131
      %v4759 = vpop.f32.mrb[0].mxu0
      %v4760 = vadd.f32 0.0, %v4759
      %v4761 = vpop.f32.mrb[0].mxu0
      %v4762 = vpop.f32.mrb[0].mxu0
      %v4763 = vadd.f32 0.0, %v4762
      %v4764 = vpop.f32.mrb[0].mxu0
      %4765 = vmatprep.mubr.bf16.mxu0 0
      %4766 = vmatmul.mubr.bf16.gmra.mrb[0].mxu0 %v4134
      %v4767 = vpop.f32.mrb[0].mxu0
      %v4768 = vadd.f32 0.0, %v4767
      %v4769 = vpop.f32.mrb[0].mxu0
      %v4770 = vpop.f32.mrb[0].mxu0
      %v4771 = vadd.f32 0.0, %v4770
      %v4772 = vpop.f32.mrb[0].mxu0
      %4773 = vmatprep.mubr.bf16.mxu0 0
      %4774 = vmatmul.mubr.bf16.gmra.mrb[0].mxu0 %v4137
      %v4775 = vpop.f32.mrb[0].mxu0
      %v4776 = vadd.f32 0.0, %v4775
      %v4777 = vpop.f32.mrb[0].mxu0
      %v4778 = vpop.f32.mrb[0].mxu0
      %v4779 = vadd.f32 0.0, %v4778
      %v4780 = vpop.f32.mrb[0].mxu0
      %4781 = vmatprep.mubr.bf16.mxu0 0
      %4782 = vmatmul.mubr.bf16.gmra.mrb[0].mxu0 %v4140
      %v4783 = vpop.f32.mrb[0].mxu0
      %v4784 = vadd.f32 0.0, %v4783
      %v4785 = vpop.f32.mrb[0].mxu0
      %v4786 = vpop.f32.mrb[0].mxu0
      %v4787 = vadd.f32 0.0, %v4786
      %v4788 = vpop.f32.mrb[0].mxu0
      %4789 = vdwg.mxu0
      %v4790 = vpack.c.bf16 %v4731, %v4728
      %v4791 = vpack.c.bf16 %v4739, %v4736
      %v4792 = vpack.c.bf16 %v4747, %v4744
      %v4793 = vpack.c.bf16 %v4755, %v4752
      %v4794 = vpack.c.bf16 %v4763, %v4760
      %v4795 = vpack.c.bf16 %v4771, %v4768
      %v4796 = vpack.c.bf16 %v4779, %v4776
      %v4797 = vpack.c.bf16 %v4787, %v4784
      %s4798 = scalar_lea.vmem %s6, 128
      %v4799 = vld [vmem:[%s4798] sm:$0xf]
      %v4800 = vld [vmem:[%s4798 + $0x4] sm:$0xf]
      %v4801 = vld [vmem:[%s4798 + $0x8] sm:$0xf]
      %v4802 = vld [vmem:[%s4798 + $0xc] sm:$0xf]
      %v4803 = vld [vmem:[%s4798 + $0x10] sm:$0xf]
      %v4804 = vld [vmem:[%s4798 + $0x14] sm:$0xf]
      %v4805 = vld [vmem:[%s4798 + $0x18] sm:$0xf]
      %v4806 = vld [vmem:[%s4798 + $0x1c] sm:$0xf]
      %v4807 = vld [vmem:[%s4798 + $0x20] sm:$0xf]
      %v4808 = vld [vmem:[%s4798 + $0x24] sm:$0xf]
      %v4809 = vld [vmem:[%s4798 + $0x28] sm:$0xf]
      %v4810 = vld [vmem:[%s4798 + $0x2c] sm:$0xf]
      %v4811 = vld [vmem:[%s4798 + $0x30] sm:$0xf]
      %v4812 = vld [vmem:[%s4798 + $0x34] sm:$0xf]
      %v4813 = vld [vmem:[%s4798 + $0x38] sm:$0xf]
      %v4814 = vld [vmem:[%s4798 + $0x3c] sm:$0xf]
      %v4831 = vunpack.c.l.b16 %v4799
      %v4832 = vunpack.c.l.b16 %v4800
      %v4833 = vunpack.c.l.b16 %v4801
      %v4834 = vunpack.c.l.b16 %v4802
      %v4835 = vunpack.c.l.b16 %v4803
      %v4836 = vunpack.c.l.b16 %v4804
      %v4837 = vunpack.c.l.b16 %v4805
      %v4838 = vunpack.c.l.b16 %v4806
      %v4839 = vunpack.c.l.b16 %v4807
      %v4840 = vunpack.c.l.b16 %v4808
      %v4841 = vunpack.c.l.b16 %v4809
      %v4842 = vunpack.c.l.b16 %v4810
      %v4843 = vunpack.c.l.b16 %v4811
      %v4844 = vunpack.c.l.b16 %v4812
      %v4845 = vunpack.c.l.b16 %v4813
      %v4846 = vunpack.c.l.b16 %v4814
      %v4847 = vpack.c.b16 %v4832, %v4831
      %v4848 = vpack.c.b16 %v4834, %v4833
      %v4849 = vpack.c.b16 %v4836, %v4835
      %v4850 = vpack.c.b16 %v4838, %v4837
      %v4851 = vpack.c.b16 %v4840, %v4839
      %v4852 = vpack.c.b16 %v4842, %v4841
      %v4853 = vpack.c.b16 %v4844, %v4843
      %v4854 = vpack.c.b16 %v4846, %v4845
      %4863 = vmatprep.subr.bf16.mxu0 0
      %4864 = vmatpush1.bf16.msra.mxu0 %v4790
      %4865 = vmatprep.subr.bf16.mxu0 0
      %4866 = vmatpush1.bf16.msra.mxu0 %v4791
      %4867 = vmatprep.subr.bf16.mxu0 0
      %4868 = vmatpush1.bf16.msra.mxu0 %v4792
      %4869 = vmatprep.subr.bf16.mxu0 0
      %4870 = vmatpush1.bf16.msra.mxu0 %v4793
      %4871 = vmatprep.subr.bf16.mxu0 0
      %4872 = vmatpush1.bf16.msra.mxu0 %v4794
      %4873 = vmatprep.subr.bf16.mxu0 0
      %4874 = vmatpush1.bf16.msra.mxu0 %v4795
      %4875 = vmatprep.subr.bf16.mxu0 0
      %4876 = vmatpush1.bf16.msra.mxu0 %v4796
      %4877 = vmatprep.subr.bf16.mxu0 0
      %4878 = vmatpush1.bf16.msra.mxu0 %v4797
      %4879 = vmatprep.subr.bf16.mxu0 0
      %4880 = vmatpush1.bf16.msra.mxu0 0
      %4881 = vmatprep.subr.bf16.mxu0 0
      %4882 = vmatpush1.bf16.msra.mxu0 0
      %4883 = vmatprep.subr.bf16.mxu0 0
      %4884 = vmatpush1.bf16.msra.mxu0 0
      %4885 = vmatprep.subr.bf16.mxu0 0
      %4886 = vmatpush1.bf16.msra.mxu0 0
      %4887 = vmatprep.subr.bf16.mxu0 0
      %4888 = vmatpush1.bf16.msra.mxu0 0
      %4889 = vmatprep.subr.bf16.mxu0 0
      %4890 = vmatpush1.bf16.msra.mxu0 0
      %4891 = vmatprep.subr.bf16.mxu0 0
      %4892 = vmatpush1.bf16.msra.mxu0 0
      %4893 = vmatprep.subr.bf16.mxu0 0
      %4894 = vmatpush1.bf16.msra.mxu0 0
      %4895 = vmatprep.mubr.bf16.mxu0 0
      %4896 = vmatmul.mubr.bf16.gmra.mrb[0].mxu0 %v4847
      %v4897 = vpop.f32.mrb[0].mxu0
      %v4898 = vadd.f32 0.0, %v4897
      %v4899 = vpop.f32.mrb[0].mxu0
      %v4900 = vpop.f32.mrb[0].mxu0
      %v4901 = vadd.f32 0.0, %v4900
      %v4902 = vpop.f32.mrb[0].mxu0
      %4903 = vmatprep.mubr.bf16.mxu0 0
      %4904 = vmatmul.mubr.bf16.gmra.mrb[0].mxu0 %v4848
      %v4905 = vpop.f32.mrb[0].mxu0
      %v4906 = vadd.f32 0.0, %v4905
      %v4907 = vpop.f32.mrb[0].mxu0
      %v4908 = vpop.f32.mrb[0].mxu0
      %v4909 = vadd.f32 0.0, %v4908
      %v4910 = vpop.f32.mrb[0].mxu0
      %4911 = vmatprep.mubr.bf16.mxu0 0
      %4912 = vmatmul.mubr.bf16.gmra.mrb[0].mxu0 %v4849
      %v4913 = vpop.f32.mrb[0].mxu0
      %v4914 = vadd.f32 0.0, %v4913
      %v4915 = vpop.f32.mrb[0].mxu0
      %v4916 = vpop.f32.mrb[0].mxu0
      %v4917 = vadd.f32 0.0, %v4916
      %v4918 = vpop.f32.mrb[0].mxu0
      %4919 = vmatprep.mubr.bf16.mxu0 0
      %4920 = vmatmul.mubr.bf16.gmra.mrb[0].mxu0 %v4850
      %v4921 = vpop.f32.mrb[0].mxu0
      %v4922 = vadd.f32 0.0, %v4921
      %v4923 = vpop.f32.mrb[0].mxu0
      %v4924 = vpop.f32.mrb[0].mxu0
      %v4925 = vadd.f32 0.0, %v4924
      %v4926 = vpop.f32.mrb[0].mxu0
      %4927 = vmatprep.mubr.bf16.mxu0 0
      %4928 = vmatmul.mubr.bf16.gmra.mrb[0].mxu0 %v4851
      %v4929 = vpop.f32.mrb[0].mxu0
      %v4930 = vadd.f32 0.0, %v4929
      %v4931 = vpop.f32.mrb[0].mxu0
      %v4932 = vpop.f32.mrb[0].mxu0
      %v4933 = vadd.f32 0.0, %v4932
      %v4934 = vpop.f32.mrb[0].mxu0
      %4935 = vmatprep.mubr.bf16.mxu0 0
      %4936 = vmatmul.mubr.bf16.gmra.mrb[0].mxu0 %v4852
      %v4937 = vpop.f32.mrb[0].mxu0
      %v4938 = vadd.f32 0.0, %v4937
      %v4939 = vpop.f32.mrb[0].mxu0
      %v4940 = vpop.f32.mrb[0].mxu0
      %v4941 = vadd.f32 0.0, %v4940
      %v4942 = vpop.f32.mrb[0].mxu0
      %4943 = vmatprep.mubr.bf16.mxu0 0
      %4944 = vmatmul.mubr.bf16.gmra.mrb[0].mxu0 %v4853
      %v4945 = vpop.f32.mrb[0].mxu0
      %v4946 = vadd.f32 0.0, %v4945
      %v4947 = vpop.f32.mrb[0].mxu0
      %v4948 = vpop.f32.mrb[0].mxu0
      %v4949 = vadd.f32 0.0, %v4948
      %v4950 = vpop.f32.mrb[0].mxu0
      %4951 = vmatprep.mubr.bf16.mxu0 0
      %4952 = vmatmul.mubr.bf16.gmra.mrb[0].mxu0 %v4854
      %v4953 = vpop.f32.mrb[0].mxu0
      %v4954 = vadd.f32 0.0, %v4953
      %v4955 = vpop.f32.mrb[0].mxu0
      %v4956 = vpop.f32.mrb[0].mxu0
      %v4957 = vadd.f32 0.0, %v4956
      %v4958 = vpop.f32.mrb[0].mxu0
      %4959 = vdwg.mxu0
      %v4960 = vadd.f32 %v4622, %v4898
      %v4961 = vadd.f32 %v4625, %v4901
      %v4962 = vadd.f32 %v4630, %v4906
      %v4963 = vadd.f32 %v4633, %v4909
      %v4964 = vadd.f32 %v4638, %v4914
      %v4965 = vadd.f32 %v4641, %v4917
      %v4966 = vadd.f32 %v4646, %v4922
      %v4967 = vadd.f32 %v4649, %v4925
      %v4968 = vadd.f32 %v4654, %v4930
      %v4969 = vadd.f32 %v4657, %v4933
      %v4970 = vadd.f32 %v4662, %v4938
      %v4971 = vadd.f32 %v4665, %v4941
      %v4972 = vadd.f32 %v4670, %v4946
      %v4973 = vadd.f32 %v4673, %v4949
      %v4974 = vadd.f32 %v4678, %v4954
      %v4975 = vadd.f32 %v4681, %v4957
      %s4976 = scalar_lea.vmem %s7, 24
      %v4977 = vld [vmem:[%s4976] sm:$0xf]
      %v4978 = vld [vmem:[%s4976 + $0x4] sm:$0xf]
      %v4981 = vunpack.c.l.b16 %v4977
      %v4982 = vunpack.c.l.b16 %v4978
      %v4983 = vpack.c.b16 %v4982, %v4981
      %4985 = vmatprep.subr.bf16.mxu0 0
      %4986 = vmatpush1.bf16.msra.mxu0 %v4983
      %4987 = vmatprep.subr.bf16.mxu0 0
      %4988 = vmatpush1.bf16.msra.mxu0 0
      %4989 = vmatprep.subr.bf16.mxu0 0
      %4990 = vmatpush1.bf16.msra.mxu0 0
      %4991 = vmatprep.subr.bf16.mxu0 0
      %4992 = vmatpush1.bf16.msra.mxu0 0
      %4993 = vmatprep.subr.bf16.mxu0 0
      %4994 = vmatpush1.bf16.msra.mxu0 0
      %4995 = vmatprep.subr.bf16.mxu0 0
      %4996 = vmatpush1.bf16.msra.mxu0 0
      %4997 = vmatprep.subr.bf16.mxu0 0
      %4998 = vmatpush1.bf16.msra.mxu0 0
      %4999 = vmatprep.subr.bf16.mxu0 0
      %5000 = vmatpush1.bf16.msra.mxu0 0
      %5001 = vmatprep.subr.bf16.mxu0 0
      %5002 = vmatpush1.bf16.msra.mxu0 0
      %5003 = vmatprep.subr.bf16.mxu0 0
      %5004 = vmatpush1.bf16.msra.mxu0 0
      %5005 = vmatprep.subr.bf16.mxu0 0
      %5006 = vmatpush1.bf16.msra.mxu0 0
      %5007 = vmatprep.subr.bf16.mxu0 0
      %5008 = vmatpush1.bf16.msra.mxu0 0
      %5009 = vmatprep.subr.bf16.mxu0 0
      %5010 = vmatpush1.bf16.msra.mxu0 0
      %5011 = vmatprep.subr.bf16.mxu0 0
      %5012 = vmatpush1.bf16.msra.mxu0 0
      %5013 = vmatprep.subr.bf16.mxu0 0
      %5014 = vmatpush1.bf16.msra.mxu0 0
      %5015 = vmatprep.subr.bf16.mxu0 0
      %5016 = vmatpush1.bf16.msra.mxu0 0
      %5017 = vmatprep.mubr.bf16.mxu0 0
      %5018 = vmatmul.mubr.bf16.gmra.mrb[0].mxu0 %v4119
      %v5019 = vpop.f32.mrb[0].mxu0
      %v5020 = vadd.f32 0.0, %v5019
      %v5021 = vpop.f32.mrb[0].mxu0
      %v5022 = vpop.f32.mrb[0].mxu0
      %v5023 = vadd.f32 0.0, %v5022
      %v5024 = vpop.f32.mrb[0].mxu0
      %5025 = vmatprep.mubr.bf16.mxu0 0
      %5026 = vmatmul.mubr.bf16.gmra.mrb[0].mxu0 %v4122
      %v5027 = vpop.f32.mrb[0].mxu0
      %v5028 = vadd.f32 0.0, %v5027
      %v5029 = vpop.f32.mrb[0].mxu0
      %v5030 = vpop.f32.mrb[0].mxu0
      %v5031 = vadd.f32 0.0, %v5030
      %v5032 = vpop.f32.mrb[0].mxu0
      %5033 = vmatprep.mubr.bf16.mxu0 0
      %5034 = vmatmul.mubr.bf16.gmra.mrb[0].mxu0 %v4125
      %v5035 = vpop.f32.mrb[0].mxu0
      %v5036 = vadd.f32 0.0, %v5035
      %v5037 = vpop.f32.mrb[0].mxu0
      %v5038 = vpop.f32.mrb[0].mxu0
      %v5039 = vadd.f32 0.0, %v5038
      %v5040 = vpop.f32.mrb[0].mxu0
      %5041 = vmatprep.mubr.bf16.mxu0 0
      %5042 = vmatmul.mubr.bf16.gmra.mrb[0].mxu0 %v4128
      %v5043 = vpop.f32.mrb[0].mxu0
      %v5044 = vadd.f32 0.0, %v5043
      %v5045 = vpop.f32.mrb[0].mxu0
      %v5046 = vpop.f32.mrb[0].mxu0
      %v5047 = vadd.f32 0.0, %v5046
      %v5048 = vpop.f32.mrb[0].mxu0
      %5049 = vmatprep.mubr.bf16.mxu0 0
      %5050 = vmatmul.mubr.bf16.gmra.mrb[0].mxu0 %v4131
      %v5051 = vpop.f32.mrb[0].mxu0
      %v5052 = vadd.f32 0.0, %v5051
      %v5053 = vpop.f32.mrb[0].mxu0
      %v5054 = vpop.f32.mrb[0].mxu0
      %v5055 = vadd.f32 0.0, %v5054
      %v5056 = vpop.f32.mrb[0].mxu0
      %5057 = vmatprep.mubr.bf16.mxu0 0
      %5058 = vmatmul.mubr.bf16.gmra.mrb[0].mxu0 %v4134
      %v5059 = vpop.f32.mrb[0].mxu0
      %v5060 = vadd.f32 0.0, %v5059
      %v5061 = vpop.f32.mrb[0].mxu0
      %v5062 = vpop.f32.mrb[0].mxu0
      %v5063 = vadd.f32 0.0, %v5062
      %v5064 = vpop.f32.mrb[0].mxu0
      %5065 = vmatprep.mubr.bf16.mxu0 0
      %5066 = vmatmul.mubr.bf16.gmra.mrb[0].mxu0 %v4137
      %v5067 = vpop.f32.mrb[0].mxu0
      %v5068 = vadd.f32 0.0, %v5067
      %v5069 = vpop.f32.mrb[0].mxu0
      %v5070 = vpop.f32.mrb[0].mxu0
      %v5071 = vadd.f32 0.0, %v5070
      %v5072 = vpop.f32.mrb[0].mxu0
      %5073 = vmatprep.mubr.bf16.mxu0 0
      %5074 = vmatmul.mubr.bf16.gmra.mrb[0].mxu0 %v4140
      %v5075 = vpop.f32.mrb[0].mxu0
      %v5076 = vadd.f32 0.0, %v5075
      %v5077 = vpop.f32.mrb[0].mxu0
      %v5078 = vpop.f32.mrb[0].mxu0
      %v5079 = vadd.f32 0.0, %v5078
      %v5080 = vpop.f32.mrb[0].mxu0
      %5081 = vdwg.mxu0
      %v5082 = vpack.c.bf16 %v5023, %v5020
      %v5083 = vpack.c.bf16 %v5031, %v5028
      %v5084 = vpack.c.bf16 %v5039, %v5036
      %v5085 = vpack.c.bf16 %v5047, %v5044
      %v5086 = vpack.c.bf16 %v5055, %v5052
      %v5087 = vpack.c.bf16 %v5063, %v5060
      %v5088 = vpack.c.bf16 %v5071, %v5068
      %v5089 = vpack.c.bf16 %v5079, %v5076
      %s5090 = scalar_lea.vmem %s6, 192
      %v5091 = vld [vmem:[%s5090] sm:$0xf]
      %v5092 = vld [vmem:[%s5090 + $0x4] sm:$0xf]
      %v5093 = vld [vmem:[%s5090 + $0x8] sm:$0xf]
      %v5094 = vld [vmem:[%s5090 + $0xc] sm:$0xf]
      %v5095 = vld [vmem:[%s5090 + $0x10] sm:$0xf]
      %v5096 = vld [vmem:[%s5090 + $0x14] sm:$0xf]
      %v5097 = vld [vmem:[%s5090 + $0x18] sm:$0xf]
      %v5098 = vld [vmem:[%s5090 + $0x1c] sm:$0xf]
      %v5099 = vld [vmem:[%s5090 + $0x20] sm:$0xf]
      %v5100 = vld [vmem:[%s5090 + $0x24] sm:$0xf]
      %v5101 = vld [vmem:[%s5090 + $0x28] sm:$0xf]
      %v5102 = vld [vmem:[%s5090 + $0x2c] sm:$0xf]
      %v5103 = vld [vmem:[%s5090 + $0x30] sm:$0xf]
      %v5104 = vld [vmem:[%s5090 + $0x34] sm:$0xf]
      %v5105 = vld [vmem:[%s5090 + $0x38] sm:$0xf]
      %v5106 = vld [vmem:[%s5090 + $0x3c] sm:$0xf]
      %v5123 = vunpack.c.l.b16 %v5091
      %v5124 = vunpack.c.l.b16 %v5092
      %v5125 = vunpack.c.l.b16 %v5093
      %v5126 = vunpack.c.l.b16 %v5094
      %v5127 = vunpack.c.l.b16 %v5095
      %v5128 = vunpack.c.l.b16 %v5096
      %v5129 = vunpack.c.l.b16 %v5097
      %v5130 = vunpack.c.l.b16 %v5098
      %v5131 = vunpack.c.l.b16 %v5099
      %v5132 = vunpack.c.l.b16 %v5100
      %v5133 = vunpack.c.l.b16 %v5101
      %v5134 = vunpack.c.l.b16 %v5102
      %v5135 = vunpack.c.l.b16 %v5103
      %v5136 = vunpack.c.l.b16 %v5104
      %v5137 = vunpack.c.l.b16 %v5105
      %v5138 = vunpack.c.l.b16 %v5106
      %v5139 = vpack.c.b16 %v5124, %v5123
      %v5140 = vpack.c.b16 %v5126, %v5125
      %v5141 = vpack.c.b16 %v5128, %v5127
      %v5142 = vpack.c.b16 %v5130, %v5129
      %v5143 = vpack.c.b16 %v5132, %v5131
      %v5144 = vpack.c.b16 %v5134, %v5133
      %v5145 = vpack.c.b16 %v5136, %v5135
      %v5146 = vpack.c.b16 %v5138, %v5137
      %5155 = vmatprep.subr.bf16.mxu0 0
      %5156 = vmatpush1.bf16.msra.mxu0 %v5082
      %5157 = vmatprep.subr.bf16.mxu0 0
      %5158 = vmatpush1.bf16.msra.mxu0 %v5083
      %5159 = vmatprep.subr.bf16.mxu0 0
      %5160 = vmatpush1.bf16.msra.mxu0 %v5084
      %5161 = vmatprep.subr.bf16.mxu0 0
      %5162 = vmatpush1.bf16.msra.mxu0 %v5085
      %5163 = vmatprep.subr.bf16.mxu0 0
      %5164 = vmatpush1.bf16.msra.mxu0 %v5086
      %5165 = vmatprep.subr.bf16.mxu0 0
      %5166 = vmatpush1.bf16.msra.mxu0 %v5087
      %5167 = vmatprep.subr.bf16.mxu0 0
      %5168 = vmatpush1.bf16.msra.mxu0 %v5088
      %5169 = vmatprep.subr.bf16.mxu0 0
      %5170 = vmatpush1.bf16.msra.mxu0 %v5089
      %5171 = vmatprep.subr.bf16.mxu0 0
      %5172 = vmatpush1.bf16.msra.mxu0 0
      %5173 = vmatprep.subr.bf16.mxu0 0
      %5174 = vmatpush1.bf16.msra.mxu0 0
      %5175 = vmatprep.subr.bf16.mxu0 0
      %5176 = vmatpush1.bf16.msra.mxu0 0
      %5177 = vmatprep.subr.bf16.mxu0 0
      %5178 = vmatpush1.bf16.msra.mxu0 0
      %5179 = vmatprep.subr.bf16.mxu0 0
      %5180 = vmatpush1.bf16.msra.mxu0 0
      %5181 = vmatprep.subr.bf16.mxu0 0
      %5182 = vmatpush1.bf16.msra.mxu0 0
      %5183 = vmatprep.subr.bf16.mxu0 0
      %5184 = vmatpush1.bf16.msra.mxu0 0
      %5185 = vmatprep.subr.bf16.mxu0 0
      %5186 = vmatpush1.bf16.msra.mxu0 0
      %5187 = vmatprep.mubr.bf16.mxu0 0
      %5188 = vmatmul.mubr.bf16.gmra.mrb[0].mxu0 %v5139
      %v5189 = vpop.f32.mrb[0].mxu0
      %v5190 = vadd.f32 0.0, %v5189
      %v5191 = vpop.f32.mrb[0].mxu0
      %v5192 = vpop.f32.mrb[0].mxu0
      %v5193 = vadd.f32 0.0, %v5192
      %v5194 = vpop.f32.mrb[0].mxu0
      %5195 = vmatprep.mubr.bf16.mxu0 0
      %5196 = vmatmul.mubr.bf16.gmra.mrb[0].mxu0 %v5140
      %v5197 = vpop.f32.mrb[0].mxu0
      %v5198 = vadd.f32 0.0, %v5197
      %v5199 = vpop.f32.mrb[0].mxu0
      %v5200 = vpop.f32.mrb[0].mxu0
      %v5201 = vadd.f32 0.0, %v5200
      %v5202 = vpop.f32.mrb[0].mxu0
      %5203 = vmatprep.mubr.bf16.mxu0 0
      %5204 = vmatmul.mubr.bf16.gmra.mrb[0].mxu0 %v5141
      %v5205 = vpop.f32.mrb[0].mxu0
      %v5206 = vadd.f32 0.0, %v5205
      %v5207 = vpop.f32.mrb[0].mxu0
      %v5208 = vpop.f32.mrb[0].mxu0
      %v5209 = vadd.f32 0.0, %v5208
      %v5210 = vpop.f32.mrb[0].mxu0
      %5211 = vmatprep.mubr.bf16.mxu0 0
      %5212 = vmatmul.mubr.bf16.gmra.mrb[0].mxu0 %v5142
      %v5213 = vpop.f32.mrb[0].mxu0
      %v5214 = vadd.f32 0.0, %v5213
      %v5215 = vpop.f32.mrb[0].mxu0
      %v5216 = vpop.f32.mrb[0].mxu0
      %v5217 = vadd.f32 0.0, %v5216
      %v5218 = vpop.f32.mrb[0].mxu0
      %5219 = vmatprep.mubr.bf16.mxu0 0
      %5220 = vmatmul.mubr.bf16.gmra.mrb[0].mxu0 %v5143
      %v5221 = vpop.f32.mrb[0].mxu0
      %v5222 = vadd.f32 0.0, %v5221
      %v5223 = vpop.f32.mrb[0].mxu0
      %v5224 = vpop.f32.mrb[0].mxu0
      %v5225 = vadd.f32 0.0, %v5224
      %v5226 = vpop.f32.mrb[0].mxu0
      %5227 = vmatprep.mubr.bf16.mxu0 0
      %5228 = vmatmul.mubr.bf16.gmra.mrb[0].mxu0 %v5144
      %v5229 = vpop.f32.mrb[0].mxu0
      %v5230 = vadd.f32 0.0, %v5229
      %v5231 = vpop.f32.mrb[0].mxu0
      %v5232 = vpop.f32.mrb[0].mxu0
      %v5233 = vadd.f32 0.0, %v5232
      %v5234 = vpop.f32.mrb[0].mxu0
      %5235 = vmatprep.mubr.bf16.mxu0 0
      %5236 = vmatmul.mubr.bf16.gmra.mrb[0].mxu0 %v5145
      %v5237 = vpop.f32.mrb[0].mxu0
      %v5238 = vadd.f32 0.0, %v5237
      %v5239 = vpop.f32.mrb[0].mxu0
      %v5240 = vpop.f32.mrb[0].mxu0
      %v5241 = vadd.f32 0.0, %v5240
      %v5242 = vpop.f32.mrb[0].mxu0
      %5243 = vmatprep.mubr.bf16.mxu0 0
      %5244 = vmatmul.mubr.bf16.gmra.mrb[0].mxu0 %v5146
      %v5245 = vpop.f32.mrb[0].mxu0
      %v5246 = vadd.f32 0.0, %v5245
      %v5247 = vpop.f32.mrb[0].mxu0
      %v5248 = vpop.f32.mrb[0].mxu0
      %v5249 = vadd.f32 0.0, %v5248
      %v5250 = vpop.f32.mrb[0].mxu0
      %5251 = vdwg.mxu0
      %v5252 = vadd.f32 %v4960, %v5190
      %v5253 = vadd.f32 %v4961, %v5193
      %v5254 = vadd.f32 %v4962, %v5198
      %v5255 = vadd.f32 %v4963, %v5201
      %v5256 = vadd.f32 %v4964, %v5206
      %v5257 = vadd.f32 %v4965, %v5209
      %v5258 = vadd.f32 %v4966, %v5214
      %v5259 = vadd.f32 %v4967, %v5217
      %v5260 = vadd.f32 %v4968, %v5222
      %v5261 = vadd.f32 %v4969, %v5225
      %v5262 = vadd.f32 %v4970, %v5230
      %v5263 = vadd.f32 %v4971, %v5233
      %v5264 = vadd.f32 %v4972, %v5238
      %v5265 = vadd.f32 %v4973, %v5241
      %v5266 = vadd.f32 %v4974, %v5246
      %v5267 = vadd.f32 %v4975, %v5249
      %v5268 = vld [vmem:[%s8] sm:$0xff]
      %v5269 = vld [vmem:[%s8 + $0x8] sm:$0xff]
      %v5270 = vld [vmem:[%s8 + $0x10] sm:$0xff]
      %v5271 = vld [vmem:[%s8 + $0x18] sm:$0xff]
      %v5272 = vld [vmem:[%s8 + $0x20] sm:$0xff]
      %v5273 = vld [vmem:[%s8 + $0x28] sm:$0xff]
      %v5274 = vld [vmem:[%s8 + $0x30] sm:$0xff]
      %v5275 = vld [vmem:[%s8 + $0x38] sm:$0xff]
      %v5276 = vld [vmem:[%s8 + $0x40] sm:$0xff]
      %v5277 = vld [vmem:[%s8 + $0x48] sm:$0xff]
      %v5278 = vld [vmem:[%s8 + $0x50] sm:$0xff]
      %v5279 = vld [vmem:[%s8 + $0x58] sm:$0xff]
      %v5280 = vld [vmem:[%s8 + $0x60] sm:$0xff]
      %v5281 = vld [vmem:[%s8 + $0x68] sm:$0xff]
      %v5282 = vld [vmem:[%s8 + $0x70] sm:$0xff]
      %v5283 = vld [vmem:[%s8 + $0x78] sm:$0xff]
      %vm5284 = vcmask 64512
      %v5285 = vsel %vm5284, %v5252, 0.0
      %5286 = vadd.xlane.f32.xlu0 %v5285
      %v5287 = vpop.xlane.xlu0 %5286
      %v5288 = vsel %vm5284, %v5253, 0.0
      %5289 = vadd.xlane.f32.xlu0 %v5288
      %v5290 = vpop.xlane.xlu0 %5289
      %v5291 = vsel %vm5284, %v5254, 0.0
      %5292 = vadd.xlane.f32.xlu0 %v5291
      %v5293 = vpop.xlane.xlu0 %5292
      %v5294 = vsel %vm5284, %v5255, 0.0
      %5295 = vadd.xlane.f32.xlu0 %v5294
      %v5296 = vpop.xlane.xlu0 %5295
      %v5297 = vsel %vm5284, %v5256, 0.0
      %5298 = vadd.xlane.f32.xlu0 %v5297
      %v5299 = vpop.xlane.xlu0 %5298
      %v5300 = vsel %vm5284, %v5257, 0.0
      %5301 = vadd.xlane.f32.xlu0 %v5300
      %v5302 = vpop.xlane.xlu0 %5301
      %v5303 = vsel %vm5284, %v5258, 0.0
      %5304 = vadd.xlane.f32.xlu0 %v5303
      %v5305 = vpop.xlane.xlu0 %5304
      %v5306 = vsel %vm5284, %v5259, 0.0
      %5307 = vadd.xlane.f32.xlu0 %v5306
      %v5308 = vpop.xlane.xlu0 %5307
      %v5309 = vsel %vm5284, %v5260, 0.0
      %5310 = vadd.xlane.f32.xlu0 %v5309
      %v5311 = vpop.xlane.xlu0 %5310
      %v5312 = vsel %vm5284, %v5261, 0.0
      %5313 = vadd.xlane.f32.xlu0 %v5312
      %v5314 = vpop.xlane.xlu0 %5313
      %v5315 = vsel %vm5284, %v5262, 0.0
      %5316 = vadd.xlane.f32.xlu0 %v5315
      %v5317 = vpop.xlane.xlu0 %5316
      %v5318 = vsel %vm5284, %v5263, 0.0
      %5319 = vadd.xlane.f32.xlu0 %v5318
      %v5320 = vpop.xlane.xlu0 %5319
      %v5321 = vsel %vm5284, %v5264, 0.0
      %5322 = vadd.xlane.f32.xlu0 %v5321
      %v5323 = vpop.xlane.xlu0 %5322
      %v5324 = vsel %vm5284, %v5265, 0.0
      %5325 = vadd.xlane.f32.xlu0 %v5324
      %v5326 = vpop.xlane.xlu0 %5325
      %v5327 = vsel %vm5284, %v5266, 0.0
      %5328 = vadd.xlane.f32.xlu0 %v5327
      %v5329 = vpop.xlane.xlu0 %5328
      %v5330 = vsel %vm5284, %v5267, 0.0
      %5331 = vadd.xlane.f32.xlu0 %v5330
      %v5332 = vpop.xlane.xlu0 %5331
      %5333 = vmatprep.subr.mxu0 0.0
      %5334 = vmatpush1.msra.mxu0 %v5287
      %5335 = vmatprep.subr.mxu0 0.0
      %5336 = vmatpush1.msra.mxu0 %v5290
      %5337 = vmatprep.subr.mxu0 0.0
      %5338 = vmatpush1.msra.mxu0 %v5293
      %5339 = vmatprep.subr.mxu0 0.0
      %5340 = vmatpush1.msra.mxu0 %v5296
      %5341 = vmatprep.subr.mxu0 0.0
      %5342 = vmatpush1.msra.mxu0 %v5299
      %5343 = vmatprep.subr.mxu0 0.0
      %5344 = vmatpush1.msra.mxu0 %v5302
      %5345 = vmatprep.subr.mxu0 0.0
      %5346 = vmatpush1.msra.mxu0 %v5305
      %5347 = vmatprep.subr.mxu0 0.0
      %5348 = vmatpush1.msra.mxu0 %v5308
      %5349 = vmatprep.subr.mxu0 0.0
      %5350 = vmatpush1.msra.mxu0 %v5311
      %5351 = vmatprep.subr.mxu0 0.0
      %5352 = vmatpush1.msra.mxu0 %v5314
      %5353 = vmatprep.subr.mxu0 0.0
      %5354 = vmatpush1.msra.mxu0 %v5317
      %5355 = vmatprep.subr.mxu0 0.0
      %5356 = vmatpush1.msra.mxu0 %v5320
      %5357 = vmatprep.subr.mxu0 0.0
      %5358 = vmatpush1.msra.mxu0 %v5323
      %5359 = vmatprep.subr.mxu0 0.0
      %5360 = vmatpush1.msra.mxu0 %v5326
      %5361 = vmatprep.subr.mxu0 0.0
      %5362 = vmatpush1.msra.mxu0 %v5329
      %5363 = vmatprep.subr.mxu0 0.0
      %5364 = vmatpush1.msra.mxu0 %v5332
      %5365 = vmatprep.subr.mxu0 0.0
      %5366 = vmatpush1.msra.mxu0 0.0
      %5367 = vmatprep.subr.mxu0 0.0
      %5368 = vmatpush1.msra.mxu0 0.0
      %5369 = vmatprep.subr.mxu0 0.0
      %5370 = vmatpush1.msra.mxu0 0.0
      %5371 = vmatprep.subr.mxu0 0.0
      %5372 = vmatpush1.msra.mxu0 0.0
      %5373 = vmatprep.subr.mxu0 0.0
      %5374 = vmatpush1.msra.mxu0 0.0
      %5375 = vmatprep.subr.mxu0 0.0
      %5376 = vmatpush1.msra.mxu0 0.0
      %5377 = vmatprep.subr.mxu0 0.0
      %5378 = vmatpush1.msra.mxu0 0.0
      %5379 = vmatprep.subr.mxu0 0.0
      %5380 = vmatpush1.msra.mxu0 0.0
      %5381 = vmatprep.subr.mxu0 0.0
      %5382 = vmatpush1.msra.mxu0 0.0
      %5383 = vmatprep.subr.mxu0 0.0
      %5384 = vmatpush1.msra.mxu0 0.0
      %5385 = vmatprep.subr.mxu0 0.0
      %5386 = vmatpush1.msra.mxu0 0.0
      %5387 = vmatprep.subr.mxu0 0.0
      %5388 = vmatpush1.msra.mxu0 0.0
      %5389 = vmatprep.subr.mxu0 0.0
      %5390 = vmatpush1.msra.mxu0 0.0
      %5391 = vmatprep.subr.mxu0 0.0
      %5392 = vmatpush1.msra.mxu0 0.0
      %5393 = vmatprep.subr.mxu0 0.0
      %5394 = vmatpush1.msra.mxu0 0.0
      %5395 = vmatprep.subr.mxu0 0.0
      %5396 = vmatpush1.msra.mxu0 0.0
      %5397 = vmatprep.mubr.f32.mxu0 0.0
      %5398 = vmatmul.mubr.f32.gmra.mrb[0].mxu0 %v5268
      %v5399 = vpop.f32.mrb[0].mxu0
      %v5400 = vadd.f32 0.0, %v5399
      %v5401 = vpop.f32.mrb[0].mxu0
      %5402 = vmatprep.mubr.f32.mxu0 0.0
      %5403 = vmatmul.mubr.f32.gmra.mrb[0].mxu0 %v5269
      %v5404 = vpop.f32.mrb[0].mxu0
      %v5405 = vadd.f32 0.0, %v5404
      %v5406 = vpop.f32.mrb[0].mxu0
      %5407 = vmatprep.mubr.f32.mxu0 0.0
      %5408 = vmatmul.mubr.f32.gmra.mrb[0].mxu0 %v5270
      %v5409 = vpop.f32.mrb[0].mxu0
      %v5410 = vadd.f32 0.0, %v5409
      %v5411 = vpop.f32.mrb[0].mxu0
      %5412 = vmatprep.mubr.f32.mxu0 0.0
      %5413 = vmatmul.mubr.f32.gmra.mrb[0].mxu0 %v5271
      %v5414 = vpop.f32.mrb[0].mxu0
      %v5415 = vadd.f32 0.0, %v5414
      %v5416 = vpop.f32.mrb[0].mxu0
      %5417 = vmatprep.mubr.f32.mxu0 0.0
      %5418 = vmatmul.mubr.f32.gmra.mrb[0].mxu0 %v5272
      %v5419 = vpop.f32.mrb[0].mxu0
      %v5420 = vadd.f32 0.0, %v5419
      %v5421 = vpop.f32.mrb[0].mxu0
      %5422 = vmatprep.mubr.f32.mxu0 0.0
      %5423 = vmatmul.mubr.f32.gmra.mrb[0].mxu0 %v5273
      %v5424 = vpop.f32.mrb[0].mxu0
      %v5425 = vadd.f32 0.0, %v5424
      %v5426 = vpop.f32.mrb[0].mxu0
      %5427 = vmatprep.mubr.f32.mxu0 0.0
      %5428 = vmatmul.mubr.f32.gmra.mrb[0].mxu0 %v5274
      %v5429 = vpop.f32.mrb[0].mxu0
      %v5430 = vadd.f32 0.0, %v5429
      %v5431 = vpop.f32.mrb[0].mxu0
      %5432 = vmatprep.mubr.f32.mxu0 0.0
      %5433 = vmatmul.mubr.f32.gmra.mrb[0].mxu0 %v5275
      %v5434 = vpop.f32.mrb[0].mxu0
      %v5435 = vadd.f32 0.0, %v5434
      %v5436 = vpop.f32.mrb[0].mxu0
      %5437 = vmatprep.mubr.f32.mxu0 0.0
      %5438 = vmatmul.mubr.f32.gmra.mrb[0].mxu0 %v5276
      %v5439 = vpop.f32.mrb[0].mxu0
      %v5440 = vadd.f32 0.0, %v5439
      %v5441 = vpop.f32.mrb[0].mxu0
      %5442 = vmatprep.mubr.f32.mxu0 0.0
      %5443 = vmatmul.mubr.f32.gmra.mrb[0].mxu0 %v5277
      %v5444 = vpop.f32.mrb[0].mxu0
      %v5445 = vadd.f32 0.0, %v5444
      %v5446 = vpop.f32.mrb[0].mxu0
      %5447 = vmatprep.mubr.f32.mxu0 0.0
      %5448 = vmatmul.mubr.f32.gmra.mrb[0].mxu0 %v5278
      %v5449 = vpop.f32.mrb[0].mxu0
      %v5450 = vadd.f32 0.0, %v5449
      %v5451 = vpop.f32.mrb[0].mxu0
      %5452 = vmatprep.mubr.f32.mxu0 0.0
      %5453 = vmatmul.mubr.f32.gmra.mrb[0].mxu0 %v5279
      %v5454 = vpop.f32.mrb[0].mxu0
      %v5455 = vadd.f32 0.0, %v5454
      %v5456 = vpop.f32.mrb[0].mxu0
      %5457 = vmatprep.mubr.f32.mxu0 0.0
      %5458 = vmatmul.mubr.f32.gmra.mrb[0].mxu0 %v5280
      %v5459 = vpop.f32.mrb[0].mxu0
      %v5460 = vadd.f32 0.0, %v5459
      %v5461 = vpop.f32.mrb[0].mxu0
      %5462 = vmatprep.mubr.f32.mxu0 0.0
      %5463 = vmatmul.mubr.f32.gmra.mrb[0].mxu0 %v5281
      %v5464 = vpop.f32.mrb[0].mxu0
      %v5465 = vadd.f32 0.0, %v5464
      %v5466 = vpop.f32.mrb[0].mxu0
      %5467 = vmatprep.mubr.f32.mxu0 0.0
      %5468 = vmatmul.mubr.f32.gmra.mrb[0].mxu0 %v5282
      %v5469 = vpop.f32.mrb[0].mxu0
      %v5470 = vadd.f32 0.0, %v5469
      %v5471 = vpop.f32.mrb[0].mxu0
      %5472 = vmatprep.mubr.f32.mxu0 0.0
      %5473 = vmatmul.mubr.f32.gmra.mrb[0].mxu0 %v5283
      %v5474 = vpop.f32.mrb[0].mxu0
      %v5475 = vadd.f32 0.0, %v5474
      %v5476 = vpop.f32.mrb[0].mxu0
      %5477 = vdwg.mxu0
      %5479 = vset.pattern.permute.xlu0 0
      %5480 = vperm.xlu0 %5479, %v5400
      %v5481 = vpop.permute.xlu0 %5480
      %5484 = vset.pattern.permute.xlu0 0
      %5485 = vperm.xlu0 %5484, %v5405
      %v5486 = vpop.permute.xlu0 %5485
      %5489 = vset.pattern.permute.xlu0 0
      %5490 = vperm.xlu0 %5489, %v5410
      %v5491 = vpop.permute.xlu0 %5490
      %5494 = vset.pattern.permute.xlu0 0
      %5495 = vperm.xlu0 %5494, %v5415
      %v5496 = vpop.permute.xlu0 %5495
      %5499 = vset.pattern.permute.xlu0 0
      %5500 = vperm.xlu0 %5499, %v5420
      %v5501 = vpop.permute.xlu0 %5500
      %5504 = vset.pattern.permute.xlu0 0
      %5505 = vperm.xlu0 %5504, %v5425
      %v5506 = vpop.permute.xlu0 %5505
      %5509 = vset.pattern.permute.xlu0 0
      %5510 = vperm.xlu0 %5509, %v5430
      %v5511 = vpop.permute.xlu0 %5510
      %5514 = vset.pattern.permute.xlu0 0
      %5515 = vperm.xlu0 %5514, %v5435
      %v5516 = vpop.permute.xlu0 %5515
      %5519 = vset.pattern.permute.xlu0 0
      %5520 = vperm.xlu0 %5519, %v5440
      %v5521 = vpop.permute.xlu0 %5520
      %5524 = vset.pattern.permute.xlu0 0
      %5525 = vperm.xlu0 %5524, %v5445
      %v5526 = vpop.permute.xlu0 %5525
      %5529 = vset.pattern.permute.xlu0 0
      %5530 = vperm.xlu0 %5529, %v5450
      %v5531 = vpop.permute.xlu0 %5530
      %5534 = vset.pattern.permute.xlu0 0
      %5535 = vperm.xlu0 %5534, %v5455
      %v5536 = vpop.permute.xlu0 %5535
      %5539 = vset.pattern.permute.xlu0 0
      %5540 = vperm.xlu0 %5539, %v5460
      %v5541 = vpop.permute.xlu0 %5540
      %5544 = vset.pattern.permute.xlu0 0
      %5545 = vperm.xlu0 %5544, %v5465
      %v5546 = vpop.permute.xlu0 %5545
      %5549 = vset.pattern.permute.xlu0 0
      %5550 = vperm.xlu0 %5549, %v5470
      %v5551 = vpop.permute.xlu0 %5550
      %5554 = vset.pattern.permute.xlu0 0
      %5555 = vperm.xlu0 %5554, %v5475
      %v5556 = vpop.permute.xlu0 %5555
      %v5558 = vsub.f32 %v5252, %v5481
      %v5559 = vsub.f32 %v5253, %v5486
      %v5560 = vsub.f32 %v5254, %v5491
      %v5561 = vsub.f32 %v5255, %v5496
      %v5562 = vsub.f32 %v5256, %v5501
      %v5563 = vsub.f32 %v5257, %v5506
      %v5564 = vsub.f32 %v5258, %v5511
      %v5565 = vsub.f32 %v5259, %v5516
      %v5566 = vsub.f32 %v5260, %v5521
      %v5567 = vsub.f32 %v5261, %v5526
      %v5568 = vsub.f32 %v5262, %v5531
      %v5569 = vsub.f32 %v5263, %v5536
      %v5570 = vsub.f32 %v5264, %v5541
      %v5571 = vsub.f32 %v5265, %v5546
      %v5572 = vsub.f32 %v5266, %v5551
      %v5573 = vsub.f32 %v5267, %v5556
      %v5574 = vmul.f32 %v5558, %v5558
      %v5575 = vmul.f32 %v5559, %v5559
      %v5576 = vmul.f32 %v5560, %v5560
      %v5577 = vmul.f32 %v5561, %v5561
      %v5578 = vmul.f32 %v5562, %v5562
      %v5579 = vmul.f32 %v5563, %v5563
      %v5580 = vmul.f32 %v5564, %v5564
      %v5581 = vmul.f32 %v5565, %v5565
      %v5582 = vmul.f32 %v5566, %v5566
      %v5583 = vmul.f32 %v5567, %v5567
      %v5584 = vmul.f32 %v5568, %v5568
      %v5585 = vmul.f32 %v5569, %v5569
      %v5586 = vmul.f32 %v5570, %v5570
      %v5587 = vmul.f32 %v5571, %v5571
      %v5588 = vmul.f32 %v5572, %v5572
      %v5589 = vmul.f32 %v5573, %v5573
      %v5590 = vsel %vm5284, %v5574, 0.0
      %5591 = vadd.xlane.f32.xlu0 %v5590
      %v5592 = vpop.xlane.xlu0 %5591
      %v5593 = vsel %vm5284, %v5575, 0.0
      %5594 = vadd.xlane.f32.xlu0 %v5593
      %v5595 = vpop.xlane.xlu0 %5594
      %v5596 = vsel %vm5284, %v5576, 0.0
      %5597 = vadd.xlane.f32.xlu0 %v5596
      %v5598 = vpop.xlane.xlu0 %5597
      %v5599 = vsel %vm5284, %v5577, 0.0
      %5600 = vadd.xlane.f32.xlu0 %v5599
      %v5601 = vpop.xlane.xlu0 %5600
      %v5602 = vsel %vm5284, %v5578, 0.0
      %5603 = vadd.xlane.f32.xlu0 %v5602
      %v5604 = vpop.xlane.xlu0 %5603
      %v5605 = vsel %vm5284, %v5579, 0.0
      %5606 = vadd.xlane.f32.xlu0 %v5605
      %v5607 = vpop.xlane.xlu0 %5606
      %v5608 = vsel %vm5284, %v5580, 0.0
      %5609 = vadd.xlane.f32.xlu0 %v5608
      %v5610 = vpop.xlane.xlu0 %5609
      %v5611 = vsel %vm5284, %v5581, 0.0
      %5612 = vadd.xlane.f32.xlu0 %v5611
      %v5613 = vpop.xlane.xlu0 %5612
      %v5614 = vsel %vm5284, %v5582, 0.0
      %5615 = vadd.xlane.f32.xlu0 %v5614
      %v5616 = vpop.xlane.xlu0 %5615
      %v5617 = vsel %vm5284, %v5583, 0.0
      %5618 = vadd.xlane.f32.xlu0 %v5617
      %v5619 = vpop.xlane.xlu0 %5618
      %v5620 = vsel %vm5284, %v5584, 0.0
      %5621 = vadd.xlane.f32.xlu0 %v5620
      %v5622 = vpop.xlane.xlu0 %5621
      %v5623 = vsel %vm5284, %v5585, 0.0
      %5624 = vadd.xlane.f32.xlu0 %v5623
      %v5625 = vpop.xlane.xlu0 %5624
      %v5626 = vsel %vm5284, %v5586, 0.0
      %5627 = vadd.xlane.f32.xlu0 %v5626
      %v5628 = vpop.xlane.xlu0 %5627
      %v5629 = vsel %vm5284, %v5587, 0.0
      %5630 = vadd.xlane.f32.xlu0 %v5629
      %v5631 = vpop.xlane.xlu0 %5630
      %v5632 = vsel %vm5284, %v5588, 0.0
      %5633 = vadd.xlane.f32.xlu0 %v5632
      %v5634 = vpop.xlane.xlu0 %5633
      %v5635 = vsel %vm5284, %v5589, 0.0
      %5636 = vadd.xlane.f32.xlu0 %v5635
      %v5637 = vpop.xlane.xlu0 %5636
      %5638 = vmatprep.subr.mxu0 0.0
      %5639 = vmatpush1.msra.mxu0 %v5592
      %5640 = vmatprep.subr.mxu0 0.0
      %5641 = vmatpush1.msra.mxu0 %v5595
      %5642 = vmatprep.subr.mxu0 0.0
      %5643 = vmatpush1.msra.mxu0 %v5598
      %5644 = vmatprep.subr.mxu0 0.0
      %5645 = vmatpush1.msra.mxu0 %v5601
      %5646 = vmatprep.subr.mxu0 0.0
      %5647 = vmatpush1.msra.mxu0 %v5604
      %5648 = vmatprep.subr.mxu0 0.0
      %5649 = vmatpush1.msra.mxu0 %v5607
      %5650 = vmatprep.subr.mxu0 0.0
      %5651 = vmatpush1.msra.mxu0 %v5610
      %5652 = vmatprep.subr.mxu0 0.0
      %5653 = vmatpush1.msra.mxu0 %v5613
      %5654 = vmatprep.subr.mxu0 0.0
      %5655 = vmatpush1.msra.mxu0 %v5616
      %5656 = vmatprep.subr.mxu0 0.0
      %5657 = vmatpush1.msra.mxu0 %v5619
      %5658 = vmatprep.subr.mxu0 0.0
      %5659 = vmatpush1.msra.mxu0 %v5622
      %5660 = vmatprep.subr.mxu0 0.0
      %5661 = vmatpush1.msra.mxu0 %v5625
      %5662 = vmatprep.subr.mxu0 0.0
      %5663 = vmatpush1.msra.mxu0 %v5628
      %5664 = vmatprep.subr.mxu0 0.0
      %5665 = vmatpush1.msra.mxu0 %v5631
      %5666 = vmatprep.subr.mxu0 0.0
      %5667 = vmatpush1.msra.mxu0 %v5634
      %5668 = vmatprep.subr.mxu0 0.0
      %5669 = vmatpush1.msra.mxu0 %v5637
      %5670 = vmatprep.subr.mxu0 0.0
      %5671 = vmatpush1.msra.mxu0 0.0
      %5672 = vmatprep.subr.mxu0 0.0
      %5673 = vmatpush1.msra.mxu0 0.0
      %5674 = vmatprep.subr.mxu0 0.0
      %5675 = vmatpush1.msra.mxu0 0.0
      %5676 = vmatprep.subr.mxu0 0.0
      %5677 = vmatpush1.msra.mxu0 0.0
      %5678 = vmatprep.subr.mxu0 0.0
      %5679 = vmatpush1.msra.mxu0 0.0
      %5680 = vmatprep.subr.mxu0 0.0
      %5681 = vmatpush1.msra.mxu0 0.0
      %5682 = vmatprep.subr.mxu0 0.0
      %5683 = vmatpush1.msra.mxu0 0.0
      %5684 = vmatprep.subr.mxu0 0.0
      %5685 = vmatpush1.msra.mxu0 0.0
      %5686 = vmatprep.subr.mxu0 0.0
      %5687 = vmatpush1.msra.mxu0 0.0
      %5688 = vmatprep.subr.mxu0 0.0
      %5689 = vmatpush1.msra.mxu0 0.0
      %5690 = vmatprep.subr.mxu0 0.0
      %5691 = vmatpush1.msra.mxu0 0.0
      %5692 = vmatprep.subr.mxu0 0.0
      %5693 = vmatpush1.msra.mxu0 0.0
      %5694 = vmatprep.subr.mxu0 0.0
      %5695 = vmatpush1.msra.mxu0 0.0
      %5696 = vmatprep.subr.mxu0 0.0
      %5697 = vmatpush1.msra.mxu0 0.0
      %5698 = vmatprep.subr.mxu0 0.0
      %5699 = vmatpush1.msra.mxu0 0.0
      %5700 = vmatprep.subr.mxu0 0.0
      %5701 = vmatpush1.msra.mxu0 0.0
      %5702 = vmatprep.mubr.f32.mxu0 0.0
      %5703 = vmatmul.mubr.f32.gmra.mrb[0].mxu0 %v5268
      %v5704 = vpop.f32.mrb[0].mxu0
      %v5705 = vadd.f32 1e-05, %v5704
      %v5706 = vpop.f32.mrb[0].mxu0
      %5707 = vmatprep.mubr.f32.mxu0 0.0
      %5708 = vmatmul.mubr.f32.gmra.mrb[0].mxu0 %v5269
      %v5709 = vpop.f32.mrb[0].mxu0
      %v5710 = vadd.f32 1e-05, %v5709
      %v5711 = vpop.f32.mrb[0].mxu0
      %5712 = vmatprep.mubr.f32.mxu0 0.0
      %5713 = vmatmul.mubr.f32.gmra.mrb[0].mxu0 %v5270
      %v5714 = vpop.f32.mrb[0].mxu0
      %v5715 = vadd.f32 1e-05, %v5714
      %v5716 = vpop.f32.mrb[0].mxu0
      %5717 = vmatprep.mubr.f32.mxu0 0.0
      %5718 = vmatmul.mubr.f32.gmra.mrb[0].mxu0 %v5271
      %v5719 = vpop.f32.mrb[0].mxu0
      %v5720 = vadd.f32 1e-05, %v5719
      %v5721 = vpop.f32.mrb[0].mxu0
      %5722 = vmatprep.mubr.f32.mxu0 0.0
      %5723 = vmatmul.mubr.f32.gmra.mrb[0].mxu0 %v5272
      %v5724 = vpop.f32.mrb[0].mxu0
      %v5725 = vadd.f32 1e-05, %v5724
      %v5726 = vpop.f32.mrb[0].mxu0
      %5727 = vmatprep.mubr.f32.mxu0 0.0
      %5728 = vmatmul.mubr.f32.gmra.mrb[0].mxu0 %v5273
      %v5729 = vpop.f32.mrb[0].mxu0
      %v5730 = vadd.f32 1e-05, %v5729
      %v5731 = vpop.f32.mrb[0].mxu0
      %5732 = vmatprep.mubr.f32.mxu0 0.0
      %5733 = vmatmul.mubr.f32.gmra.mrb[0].mxu0 %v5274
      %v5734 = vpop.f32.mrb[0].mxu0
      %v5735 = vadd.f32 1e-05, %v5734
      %v5736 = vpop.f32.mrb[0].mxu0
      %5737 = vmatprep.mubr.f32.mxu0 0.0
      %5738 = vmatmul.mubr.f32.gmra.mrb[0].mxu0 %v5275
      %v5739 = vpop.f32.mrb[0].mxu0
      %v5740 = vadd.f32 1e-05, %v5739
      %v5741 = vpop.f32.mrb[0].mxu0
      %5742 = vmatprep.mubr.f32.mxu0 0.0
      %5743 = vmatmul.mubr.f32.gmra.mrb[0].mxu0 %v5276
      %v5744 = vpop.f32.mrb[0].mxu0
      %v5745 = vadd.f32 1e-05, %v5744
      %v5746 = vpop.f32.mrb[0].mxu0
      %5747 = vmatprep.mubr.f32.mxu0 0.0
      %5748 = vmatmul.mubr.f32.gmra.mrb[0].mxu0 %v5277
      %v5749 = vpop.f32.mrb[0].mxu0
      %v5750 = vadd.f32 1e-05, %v5749
      %v5751 = vpop.f32.mrb[0].mxu0
      %5752 = vmatprep.mubr.f32.mxu0 0.0
      %5753 = vmatmul.mubr.f32.gmra.mrb[0].mxu0 %v5278
      %v5754 = vpop.f32.mrb[0].mxu0
      %v5755 = vadd.f32 1e-05, %v5754
      %v5756 = vpop.f32.mrb[0].mxu0
      %5757 = vmatprep.mubr.f32.mxu0 0.0
      %5758 = vmatmul.mubr.f32.gmra.mrb[0].mxu0 %v5279
      %v5759 = vpop.f32.mrb[0].mxu0
      %v5760 = vadd.f32 1e-05, %v5759
      %v5761 = vpop.f32.mrb[0].mxu0
      %5762 = vmatprep.mubr.f32.mxu0 0.0
      %5763 = vmatmul.mubr.f32.gmra.mrb[0].mxu0 %v5280
      %v5764 = vpop.f32.mrb[0].mxu0
      %v5765 = vadd.f32 1e-05, %v5764
      %v5766 = vpop.f32.mrb[0].mxu0
      %5767 = vmatprep.mubr.f32.mxu0 0.0
      %5768 = vmatmul.mubr.f32.gmra.mrb[0].mxu0 %v5281
      %v5769 = vpop.f32.mrb[0].mxu0
      %v5770 = vadd.f32 1e-05, %v5769
      %v5771 = vpop.f32.mrb[0].mxu0
      %5772 = vmatprep.mubr.f32.mxu0 0.0
      %5773 = vmatmul.mubr.f32.gmra.mrb[0].mxu0 %v5282
      %v5774 = vpop.f32.mrb[0].mxu0
      %v5775 = vadd.f32 1e-05, %v5774
      %v5776 = vpop.f32.mrb[0].mxu0
      %5777 = vmatprep.mubr.f32.mxu0 0.0
      %5778 = vmatmul.mubr.f32.gmra.mrb[0].mxu0 %v5283
      %v5779 = vpop.f32.mrb[0].mxu0
      %v5780 = vadd.f32 1e-05, %v5779
      %v5781 = vpop.f32.mrb[0].mxu0
      %5782 = vdwg.mxu0
      %v5783 = vrsqrt.pop %v5705
      %v5784 = vrsqrt.pop %v5710
      %v5785 = vrsqrt.pop %v5715
      %v5786 = vrsqrt.pop %v5720
      %v5787 = vrsqrt.pop %v5725
      %v5788 = vrsqrt.pop %v5730
      %v5789 = vrsqrt.pop %v5735
      %v5790 = vrsqrt.pop %v5740
      %v5791 = vrsqrt.pop %v5745
      %v5792 = vrsqrt.pop %v5750
      %v5793 = vrsqrt.pop %v5755
      %v5794 = vrsqrt.pop %v5760
      %v5795 = vrsqrt.pop %v5765
      %v5796 = vrsqrt.pop %v5770
      %v5797 = vrsqrt.pop %v5775
      %v5798 = vrsqrt.pop %v5780
      %5800 = vset.pattern.permute.xlu0 0
      %5801 = vperm.xlu0 %5800, %v5783
      %v5802 = vpop.permute.xlu0 %5801
      %5805 = vset.pattern.permute.xlu0 0
      %5806 = vperm.xlu0 %5805, %v5784
      %v5807 = vpop.permute.xlu0 %5806
      %5810 = vset.pattern.permute.xlu0 0
      %5811 = vperm.xlu0 %5810, %v5785
      %v5812 = vpop.permute.xlu0 %5811
      %5815 = vset.pattern.permute.xlu0 0
      %5816 = vperm.xlu0 %5815, %v5786
      %v5817 = vpop.permute.xlu0 %5816
      %5820 = vset.pattern.permute.xlu0 0
      %5821 = vperm.xlu0 %5820, %v5787
      %v5822 = vpop.permute.xlu0 %5821
      %5825 = vset.pattern.permute.xlu0 0
      %5826 = vperm.xlu0 %5825, %v5788
      %v5827 = vpop.permute.xlu0 %5826
      %5830 = vset.pattern.permute.xlu0 0
      %5831 = vperm.xlu0 %5830, %v5789
      %v5832 = vpop.permute.xlu0 %5831
      %5835 = vset.pattern.permute.xlu0 0
      %5836 = vperm.xlu0 %5835, %v5790
      %v5837 = vpop.permute.xlu0 %5836
      %5840 = vset.pattern.permute.xlu0 0
      %5841 = vperm.xlu0 %5840, %v5791
      %v5842 = vpop.permute.xlu0 %5841
      %5845 = vset.pattern.permute.xlu0 0
      %5846 = vperm.xlu0 %5845, %v5792
      %v5847 = vpop.permute.xlu0 %5846
      %5850 = vset.pattern.permute.xlu0 0
      %5851 = vperm.xlu0 %5850, %v5793
      %v5852 = vpop.permute.xlu0 %5851
      %5855 = vset.pattern.permute.xlu0 0
      %5856 = vperm.xlu0 %5855, %v5794
      %v5857 = vpop.permute.xlu0 %5856
      %5860 = vset.pattern.permute.xlu0 0
      %5861 = vperm.xlu0 %5860, %v5795
      %v5862 = vpop.permute.xlu0 %5861
      %5865 = vset.pattern.permute.xlu0 0
      %5866 = vperm.xlu0 %5865, %v5796
      %v5867 = vpop.permute.xlu0 %5866
      %5870 = vset.pattern.permute.xlu0 0
      %5871 = vperm.xlu0 %5870, %v5797
      %v5872 = vpop.permute.xlu0 %5871
      %5875 = vset.pattern.permute.xlu0 0
      %5876 = vperm.xlu0 %5875, %v5798
      %v5877 = vpop.permute.xlu0 %5876
      %v5879 = vmul.f32 %v5558, %v5802
      %v5880 = vmul.f32 %v5559, %v5807
      %v5881 = vmul.f32 %v5560, %v5812
      %v5882 = vmul.f32 %v5561, %v5817
      %v5883 = vmul.f32 %v5562, %v5822
      %v5884 = vmul.f32 %v5563, %v5827
      %v5885 = vmul.f32 %v5564, %v5832
      %v5886 = vmul.f32 %v5565, %v5837
      %v5887 = vmul.f32 %v5566, %v5842
      %v5888 = vmul.f32 %v5567, %v5847
      %v5889 = vmul.f32 %v5568, %v5852
      %v5890 = vmul.f32 %v5569, %v5857
      %v5891 = vmul.f32 %v5570, %v5862
      %v5892 = vmul.f32 %v5571, %v5867
      %v5893 = vmul.f32 %v5572, %v5872
      %v5894 = vmul.f32 %v5573, %v5877
      %vm5895 = vcmp.ge.f32.partialorder %v5879, 0.0
      %vm5896 = vcmp.ge.f32.partialorder %v5880, 0.0
      %vm5897 = vcmp.ge.f32.partialorder %v5881, 0.0
      %vm5898 = vcmp.ge.f32.partialorder %v5882, 0.0
      %vm5899 = vcmp.ge.f32.partialorder %v5883, 0.0
      %vm5900 = vcmp.ge.f32.partialorder %v5884, 0.0
      %vm5901 = vcmp.ge.f32.partialorder %v5885, 0.0
      %vm5902 = vcmp.ge.f32.partialorder %v5886, 0.0
      %vm5903 = vcmp.ge.f32.partialorder %v5887, 0.0
      %vm5904 = vcmp.ge.f32.partialorder %v5888, 0.0
      %vm5905 = vcmp.ge.f32.partialorder %v5889, 0.0
      %vm5906 = vcmp.ge.f32.partialorder %v5890, 0.0
      %vm5907 = vcmp.ge.f32.partialorder %v5891, 0.0
      %vm5908 = vcmp.ge.f32.partialorder %v5892, 0.0
      %vm5909 = vcmp.ge.f32.partialorder %v5893, 0.0
      %vm5910 = vcmp.ge.f32.partialorder %v5894, 0.0
      %v5911 = vmul.f32 %v5879, 0.2
      %v5912 = vmul.f32 %v5880, 0.2
      %v5913 = vmul.f32 %v5881, 0.2
      %v5914 = vmul.f32 %v5882, 0.2
      %v5915 = vmul.f32 %v5883, 0.2
      %v5916 = vmul.f32 %v5884, 0.2
      %v5917 = vmul.f32 %v5885, 0.2
      %v5918 = vmul.f32 %v5886, 0.2
      %v5919 = vmul.f32 %v5887, 0.2
      %v5920 = vmul.f32 %v5888, 0.2
      %v5921 = vmul.f32 %v5889, 0.2
      %v5922 = vmul.f32 %v5890, 0.2
      %v5923 = vmul.f32 %v5891, 0.2
      %v5924 = vmul.f32 %v5892, 0.2
      %v5925 = vmul.f32 %v5893, 0.2
      %v5926 = vmul.f32 %v5894, 0.2
      %v5927 = vsel %vm5895, %v5879, %v5911
      %v5928 = vsel %vm5896, %v5880, %v5912
      %v5929 = vsel %vm5897, %v5881, %v5913
      %v5930 = vsel %vm5898, %v5882, %v5914
      %v5931 = vsel %vm5899, %v5883, %v5915
      %v5932 = vsel %vm5900, %v5884, %v5916
      %v5933 = vsel %vm5901, %v5885, %v5917
      %v5934 = vsel %vm5902, %v5886, %v5918
      %v5935 = vsel %vm5903, %v5887, %v5919
      %v5936 = vsel %vm5904, %v5888, %v5920
      %v5937 = vsel %vm5905, %v5889, %v5921
      %v5938 = vsel %vm5906, %v5890, %v5922
      %v5939 = vsel %vm5907, %v5891, %v5923
      %v5940 = vsel %vm5908, %v5892, %v5924
      %v5941 = vsel %vm5909, %v5893, %v5925
      %v5942 = vsel %vm5910, %v5894, %v5926
      %v5943 = vpack.c.bf16 %v5928, %v5927
      %v5944 = vpack.c.bf16 %v5930, %v5929
      %v5945 = vpack.c.bf16 %v5932, %v5931
      %v5946 = vpack.c.bf16 %v5934, %v5933
      %v5947 = vpack.c.bf16 %v5936, %v5935
      %v5948 = vpack.c.bf16 %v5938, %v5937
      %v5949 = vpack.c.bf16 %v5940, %v5939
      %v5950 = vpack.c.bf16 %v5942, %v5941
      %v5951 = vld [vmem:[%s10] sm:$0xf]
      %v5953 = vsel %vm5284, %v5943, 0
      %v5956 = vsel %vm5284, %v5944, 0
      %v5959 = vsel %vm5284, %v5945, 0
      %v5962 = vsel %vm5284, %v5946, 0
      %v5965 = vsel %vm5284, %v5947, 0
      %v5968 = vsel %vm5284, %v5948, 0
      %v5971 = vsel %vm5284, %v5949, 0
      %v5974 = vsel %vm5284, %v5950, 0
      %vm5976 = vcmask 1043456
      %v5978 = vsel %vm5976, %v5951, 0
      %5980 = vmatprep.subr.bf16.mxu0 0
      %5981 = vmatpush1.bf16.msra.mxu0 %v5978
      %5982 = vmatprep.subr.bf16.mxu0 0
      %5983 = vmatpush1.bf16.msra.mxu0 0
      %5984 = vmatprep.subr.bf16.mxu0 0
      %5985 = vmatpush1.bf16.msra.mxu0 0
      %5986 = vmatprep.subr.bf16.mxu0 0
      %5987 = vmatpush1.bf16.msra.mxu0 0
      %5988 = vmatprep.subr.bf16.mxu0 0
      %5989 = vmatpush1.bf16.msra.mxu0 0
      %5990 = vmatprep.subr.bf16.mxu0 0
      %5991 = vmatpush1.bf16.msra.mxu0 0
      %5992 = vmatprep.subr.bf16.mxu0 0
      %5993 = vmatpush1.bf16.msra.mxu0 0
      %5994 = vmatprep.subr.bf16.mxu0 0
      %5995 = vmatpush1.bf16.msra.mxu0 0
      %5996 = vmatprep.subr.bf16.mxu0 0
      %5997 = vmatpush1.bf16.msra.mxu0 0
      %5998 = vmatprep.subr.bf16.mxu0 0
      %5999 = vmatpush1.bf16.msra.mxu0 0
      %6000 = vmatprep.subr.bf16.mxu0 0
      %6001 = vmatpush1.bf16.msra.mxu0 0
      %6002 = vmatprep.subr.bf16.mxu0 0
      %6003 = vmatpush1.bf16.msra.mxu0 0
      %6004 = vmatprep.subr.bf16.mxu0 0
      %6005 = vmatpush1.bf16.msra.mxu0 0
      %6006 = vmatprep.subr.bf16.mxu0 0
      %6007 = vmatpush1.bf16.msra.mxu0 0
      %6008 = vmatprep.subr.bf16.mxu0 0
      %6009 = vmatpush1.bf16.msra.mxu0 0
      %6010 = vmatprep.subr.bf16.mxu0 0
      %6011 = vmatpush1.bf16.msra.mxu0 0
      %6012 = vmatprep.mubr.bf16.mxu0 0
      %6013 = vmatmul.mubr.bf16.gmra.mrb[0].mxu0 %v5953
      %v6014 = vpop.f32.mrb[0].mxu0
      %v6015 = vadd.f32 0.0, %v6014
      %v6016 = vpop.f32.mrb[0].mxu0
      %v6017 = vpop.f32.mrb[0].mxu0
      %v6018 = vadd.f32 0.0, %v6017
      %v6019 = vpop.f32.mrb[0].mxu0
      %6020 = vmatprep.mubr.bf16.mxu0 0
      %6021 = vmatmul.mubr.bf16.gmra.mrb[0].mxu0 %v5956
      %v6022 = vpop.f32.mrb[0].mxu0
      %v6023 = vadd.f32 0.0, %v6022
      %v6024 = vpop.f32.mrb[0].mxu0
      %v6025 = vpop.f32.mrb[0].mxu0
      %v6026 = vadd.f32 0.0, %v6025
      %v6027 = vpop.f32.mrb[0].mxu0
      %6028 = vmatprep.mubr.bf16.mxu0 0
      %6029 = vmatmul.mubr.bf16.gmra.mrb[0].mxu0 %v5959
      %v6030 = vpop.f32.mrb[0].mxu0
      %v6031 = vadd.f32 0.0, %v6030
      %v6032 = vpop.f32.mrb[0].mxu0
      %v6033 = vpop.f32.mrb[0].mxu0
      %v6034 = vadd.f32 0.0, %v6033
      %v6035 = vpop.f32.mrb[0].mxu0
      %6036 = vmatprep.mubr.bf16.mxu0 0
      %6037 = vmatmul.mubr.bf16.gmra.mrb[0].mxu0 %v5962
      %v6038 = vpop.f32.mrb[0].mxu0
      %v6039 = vadd.f32 0.0, %v6038
      %v6040 = vpop.f32.mrb[0].mxu0
      %v6041 = vpop.f32.mrb[0].mxu0
      %v6042 = vadd.f32 0.0, %v6041
      %v6043 = vpop.f32.mrb[0].mxu0
      %6044 = vmatprep.mubr.bf16.mxu0 0
      %6045 = vmatmul.mubr.bf16.gmra.mrb[0].mxu0 %v5965
      %v6046 = vpop.f32.mrb[0].mxu0
      %v6047 = vadd.f32 0.0, %v6046
      %v6048 = vpop.f32.mrb[0].mxu0
      %v6049 = vpop.f32.mrb[0].mxu0
      %v6050 = vadd.f32 0.0, %v6049
      %v6051 = vpop.f32.mrb[0].mxu0
      %6052 = vmatprep.mubr.bf16.mxu0 0
      %6053 = vmatmul.mubr.bf16.gmra.mrb[0].mxu0 %v5968
      %v6054 = vpop.f32.mrb[0].mxu0
      %v6055 = vadd.f32 0.0, %v6054
      %v6056 = vpop.f32.mrb[0].mxu0
      %v6057 = vpop.f32.mrb[0].mxu0
      %v6058 = vadd.f32 0.0, %v6057
      %v6059 = vpop.f32.mrb[0].mxu0
      %6060 = vmatprep.mubr.bf16.mxu0 0
      %6061 = vmatmul.mubr.bf16.gmra.mrb[0].mxu0 %v5971
      %v6062 = vpop.f32.mrb[0].mxu0
      %v6063 = vadd.f32 0.0, %v6062
      %v6064 = vpop.f32.mrb[0].mxu0
      %v6065 = vpop.f32.mrb[0].mxu0
      %v6066 = vadd.f32 0.0, %v6065
      %v6067 = vpop.f32.mrb[0].mxu0
      %6068 = vmatprep.mubr.bf16.mxu0 0
      %6069 = vmatmul.mubr.bf16.gmra.mrb[0].mxu0 %v5974
      %v6070 = vpop.f32.mrb[0].mxu0
      %v6071 = vadd.f32 0.0, %v6070
      %v6072 = vpop.f32.mrb[0].mxu0
      %v6073 = vpop.f32.mrb[0].mxu0
      %v6074 = vadd.f32 0.0, %v6073
      %v6075 = vpop.f32.mrb[0].mxu0
      %6076 = vdwg.mxu0
      %v6077 = vpack.c.bf16 %v6018, %v6015
      %v6078 = vpack.c.bf16 %v6026, %v6023
      %v6079 = vpack.c.bf16 %v6034, %v6031
      %v6080 = vpack.c.bf16 %v6042, %v6039
      %v6081 = vpack.c.bf16 %v6050, %v6047
      %v6082 = vpack.c.bf16 %v6058, %v6055
      %v6083 = vpack.c.bf16 %v6066, %v6063
      %v6084 = vpack.c.bf16 %v6074, %v6071
      %v6085 = vld [vmem:[%s9] sm:$0xf]
      %v6086 = vld [vmem:[%s9 + $0x4] sm:$0xf]
      %v6087 = vld [vmem:[%s9 + $0x8] sm:$0xf]
      %v6088 = vld [vmem:[%s9 + $0xc] sm:$0xf]
      %v6089 = vld [vmem:[%s9 + $0x10] sm:$0xf]
      %v6090 = vld [vmem:[%s9 + $0x14] sm:$0xf]
      %v6091 = vld [vmem:[%s9 + $0x18] sm:$0xf]
      %v6092 = vld [vmem:[%s9 + $0x1c] sm:$0xf]
      %v6093 = vld [vmem:[%s9 + $0x20] sm:$0xf]
      %v6094 = vld [vmem:[%s9 + $0x24] sm:$0xf]
      %v6095 = vld [vmem:[%s9 + $0x28] sm:$0xf]
      %v6096 = vld [vmem:[%s9 + $0x2c] sm:$0xf]
      %v6097 = vld [vmem:[%s9 + $0x30] sm:$0xf]
      %v6098 = vld [vmem:[%s9 + $0x34] sm:$0xf]
      %v6099 = vld [vmem:[%s9 + $0x38] sm:$0xf]
      %v6100 = vld [vmem:[%s9 + $0x3c] sm:$0xf]
      %s6101 = scalar_lea.vmem %s10, 4
      %v6102 = vld [vmem:[%s6101] sm:$0xf]
      %v6104 = vsel %vm5976, %v6102, 0
      %6106 = vmatprep.subr.bf16.mxu0 0
      %6107 = vmatpush1.bf16.msra.mxu0 %v6104
      %6108 = vmatprep.subr.bf16.mxu0 0
      %6109 = vmatpush1.bf16.msra.mxu0 0
      %6110 = vmatprep.subr.bf16.mxu0 0
      %6111 = vmatpush1.bf16.msra.mxu0 0
      %6112 = vmatprep.subr.bf16.mxu0 0
      %6113 = vmatpush1.bf16.msra.mxu0 0
      %6114 = vmatprep.subr.bf16.mxu0 0
      %6115 = vmatpush1.bf16.msra.mxu0 0
      %6116 = vmatprep.subr.bf16.mxu0 0
      %6117 = vmatpush1.bf16.msra.mxu0 0
      %6118 = vmatprep.subr.bf16.mxu0 0
      %6119 = vmatpush1.bf16.msra.mxu0 0
      %6120 = vmatprep.subr.bf16.mxu0 0
      %6121 = vmatpush1.bf16.msra.mxu0 0
      %6122 = vmatprep.subr.bf16.mxu0 0
      %6123 = vmatpush1.bf16.msra.mxu0 0
      %6124 = vmatprep.subr.bf16.mxu0 0
      %6125 = vmatpush1.bf16.msra.mxu0 0
      %6126 = vmatprep.subr.bf16.mxu0 0
      %6127 = vmatpush1.bf16.msra.mxu0 0
      %6128 = vmatprep.subr.bf16.mxu0 0
      %6129 = vmatpush1.bf16.msra.mxu0 0
      %6130 = vmatprep.subr.bf16.mxu0 0
      %6131 = vmatpush1.bf16.msra.mxu0 0
      %6132 = vmatprep.subr.bf16.mxu0 0
      %6133 = vmatpush1.bf16.msra.mxu0 0
      %6134 = vmatprep.subr.bf16.mxu0 0
      %6135 = vmatpush1.bf16.msra.mxu0 0
      %6136 = vmatprep.subr.bf16.mxu0 0
      %6137 = vmatpush1.bf16.msra.mxu0 0
      %6138 = vmatprep.mubr.bf16.mxu0 0
      %6139 = vmatmul.mubr.bf16.gmra.mrb[0].mxu0 %v5953
      %v6140 = vpop.f32.mrb[0].mxu0
      %v6141 = vadd.f32 0.0, %v6140
      %v6142 = vpop.f32.mrb[0].mxu0
      %v6143 = vpop.f32.mrb[0].mxu0
      %v6144 = vadd.f32 0.0, %v6143
      %v6145 = vpop.f32.mrb[0].mxu0
      %6146 = vmatprep.mubr.bf16.mxu0 0
      %6147 = vmatmul.mubr.bf16.gmra.mrb[0].mxu0 %v5956
      %v6148 = vpop.f32.mrb[0].mxu0
      %v6149 = vadd.f32 0.0, %v6148
      %v6150 = vpop.f32.mrb[0].mxu0
      %v6151 = vpop.f32.mrb[0].mxu0
      %v6152 = vadd.f32 0.0, %v6151
      %v6153 = vpop.f32.mrb[0].mxu0
      %6154 = vmatprep.mubr.bf16.mxu0 0
      %6155 = vmatmul.mubr.bf16.gmra.mrb[0].mxu0 %v5959
      %v6156 = vpop.f32.mrb[0].mxu0
      %v6157 = vadd.f32 0.0, %v6156
      %v6158 = vpop.f32.mrb[0].mxu0
      %v6159 = vpop.f32.mrb[0].mxu0
      %v6160 = vadd.f32 0.0, %v6159
      %v6161 = vpop.f32.mrb[0].mxu0
      %6162 = vmatprep.mubr.bf16.mxu0 0
      %6163 = vmatmul.mubr.bf16.gmra.mrb[0].mxu0 %v5962
      %v6164 = vpop.f32.mrb[0].mxu0
      %v6165 = vadd.f32 0.0, %v6164
      %v6166 = vpop.f32.mrb[0].mxu0
      %v6167 = vpop.f32.mrb[0].mxu0
      %v6168 = vadd.f32 0.0, %v6167
      %v6169 = vpop.f32.mrb[0].mxu0
      %6170 = vmatprep.mubr.bf16.mxu0 0
      %6171 = vmatmul.mubr.bf16.gmra.mrb[0].mxu0 %v5965
      %v6172 = vpop.f32.mrb[0].mxu0
      %v6173 = vadd.f32 0.0, %v6172
      %v6174 = vpop.f32.mrb[0].mxu0
      %v6175 = vpop.f32.mrb[0].mxu0
      %v6176 = vadd.f32 0.0, %v6175
      %v6177 = vpop.f32.mrb[0].mxu0
      %6178 = vmatprep.mubr.bf16.mxu0 0
      %6179 = vmatmul.mubr.bf16.gmra.mrb[0].mxu0 %v5968
      %v6180 = vpop.f32.mrb[0].mxu0
      %v6181 = vadd.f32 0.0, %v6180
      %v6182 = vpop.f32.mrb[0].mxu0
      %v6183 = vpop.f32.mrb[0].mxu0
      %v6184 = vadd.f32 0.0, %v6183
      %v6185 = vpop.f32.mrb[0].mxu0
      %6186 = vmatprep.mubr.bf16.mxu0 0
      %6187 = vmatmul.mubr.bf16.gmra.mrb[0].mxu0 %v5971
      %v6188 = vpop.f32.mrb[0].mxu0
      %v6189 = vadd.f32 0.0, %v6188
      %v6190 = vpop.f32.mrb[0].mxu0
      %v6191 = vpop.f32.mrb[0].mxu0
      %v6192 = vadd.f32 0.0, %v6191
      %v6193 = vpop.f32.mrb[0].mxu0
      %6194 = vmatprep.mubr.bf16.mxu0 0
      %6195 = vmatmul.mubr.bf16.gmra.mrb[0].mxu0 %v5974
      %v6196 = vpop.f32.mrb[0].mxu0
      %v6197 = vadd.f32 0.0, %v6196
      %v6198 = vpop.f32.mrb[0].mxu0
      %v6199 = vpop.f32.mrb[0].mxu0
      %v6200 = vadd.f32 0.0, %v6199
      %v6201 = vpop.f32.mrb[0].mxu0
      %6202 = vdwg.mxu0
      %v6203 = vpack.c.bf16 %v6144, %v6141
      %v6204 = vpack.c.bf16 %v6152, %v6149
      %v6205 = vpack.c.bf16 %v6160, %v6157
      %v6206 = vpack.c.bf16 %v6168, %v6165
      %v6207 = vpack.c.bf16 %v6176, %v6173
      %v6208 = vpack.c.bf16 %v6184, %v6181
      %v6209 = vpack.c.bf16 %v6192, %v6189
      %v6210 = vpack.c.bf16 %v6200, %v6197
      %s6211 = scalar_lea.vmem %s9, 64
      %v6212 = vld [vmem:[%s6211] sm:$0xf]
      %v6213 = vld [vmem:[%s6211 + $0x4] sm:$0xf]
      %v6214 = vld [vmem:[%s6211 + $0x8] sm:$0xf]
      %v6215 = vld [vmem:[%s6211 + $0xc] sm:$0xf]
      %v6216 = vld [vmem:[%s6211 + $0x10] sm:$0xf]
      %v6217 = vld [vmem:[%s6211 + $0x14] sm:$0xf]
      %v6218 = vld [vmem:[%s6211 + $0x18] sm:$0xf]
      %v6219 = vld [vmem:[%s6211 + $0x1c] sm:$0xf]
      %v6220 = vld [vmem:[%s6211 + $0x20] sm:$0xf]
      %v6221 = vld [vmem:[%s6211 + $0x24] sm:$0xf]
      %v6222 = vld [vmem:[%s6211 + $0x28] sm:$0xf]
      %v6223 = vld [vmem:[%s6211 + $0x2c] sm:$0xf]
      %v6224 = vld [vmem:[%s6211 + $0x30] sm:$0xf]
      %v6225 = vld [vmem:[%s6211 + $0x34] sm:$0xf]
      %v6226 = vld [vmem:[%s6211 + $0x38] sm:$0xf]
      %v6227 = vld [vmem:[%s6211 + $0x3c] sm:$0xf]
      %v6244 = vunpack.c.l.b16 %v6212
      %v6245 = vunpack.c.l.b16 %v6213
      %v6246 = vunpack.c.l.b16 %v6214
      %v6247 = vunpack.c.l.b16 %v6215
      %v6248 = vunpack.c.l.b16 %v6216
      %v6249 = vunpack.c.l.b16 %v6217
      %v6250 = vunpack.c.l.b16 %v6218
      %v6251 = vunpack.c.l.b16 %v6219
      %v6252 = vunpack.c.l.b16 %v6220
      %v6253 = vunpack.c.l.b16 %v6221
      %v6254 = vunpack.c.l.b16 %v6222
      %v6255 = vunpack.c.l.b16 %v6223
      %v6256 = vunpack.c.l.b16 %v6224
      %v6257 = vunpack.c.l.b16 %v6225
      %v6258 = vunpack.c.l.b16 %v6226
      %v6259 = vunpack.c.l.b16 %v6227
      %v6260 = vpack.c.b16 %v6245, %v6244
      %v6261 = vpack.c.b16 %v6247, %v6246
      %v6262 = vpack.c.b16 %v6249, %v6248
      %v6263 = vpack.c.b16 %v6251, %v6250
      %v6264 = vpack.c.b16 %v6253, %v6252
      %v6265 = vpack.c.b16 %v6255, %v6254
      %v6266 = vpack.c.b16 %v6257, %v6256
      %v6267 = vpack.c.b16 %v6259, %v6258
      %6276 = vmatprep.subr.bf16.mxu0 0
      %6277 = vmatpush1.bf16.msra.mxu0 %v6203
      %6278 = vmatprep.subr.bf16.mxu0 0
      %6279 = vmatpush1.bf16.msra.mxu0 %v6204
      %6280 = vmatprep.subr.bf16.mxu0 0
      %6281 = vmatpush1.bf16.msra.mxu0 %v6205
      %6282 = vmatprep.subr.bf16.mxu0 0
      %6283 = vmatpush1.bf16.msra.mxu0 %v6206
      %6284 = vmatprep.subr.bf16.mxu0 0
      %6285 = vmatpush1.bf16.msra.mxu0 %v6207
      %6286 = vmatprep.subr.bf16.mxu0 0
      %6287 = vmatpush1.bf16.msra.mxu0 %v6208
      %6288 = vmatprep.subr.bf16.mxu0 0
      %6289 = vmatpush1.bf16.msra.mxu0 %v6209
      %6290 = vmatprep.subr.bf16.mxu0 0
      %6291 = vmatpush1.bf16.msra.mxu0 %v6210
      %6292 = vmatprep.subr.bf16.mxu0 0
      %6293 = vmatpush1.bf16.msra.mxu0 0
      %6294 = vmatprep.subr.bf16.mxu0 0
      %6295 = vmatpush1.bf16.msra.mxu0 0
      %6296 = vmatprep.subr.bf16.mxu0 0
      %6297 = vmatpush1.bf16.msra.mxu0 0
      %6298 = vmatprep.subr.bf16.mxu0 0
      %6299 = vmatpush1.bf16.msra.mxu0 0
      %6300 = vmatprep.subr.bf16.mxu0 0
      %6301 = vmatpush1.bf16.msra.mxu0 0
      %6302 = vmatprep.subr.bf16.mxu0 0
      %6303 = vmatpush1.bf16.msra.mxu0 0
      %6304 = vmatprep.subr.bf16.mxu0 0
      %6305 = vmatpush1.bf16.msra.mxu0 0
      %6306 = vmatprep.subr.bf16.mxu0 0
      %6307 = vmatpush1.bf16.msra.mxu0 0
      %6308 = vmatprep.mubr.bf16.mxu0 0
      %6309 = vmatmul.mubr.bf16.gmra.mrb[0].mxu0 %v6260
      %v6310 = vpop.f32.mrb[0].mxu0
      %v6311 = vadd.f32 0.0, %v6310
      %v6312 = vpop.f32.mrb[0].mxu0
      %v6313 = vpop.f32.mrb[0].mxu0
      %v6314 = vadd.f32 0.0, %v6313
      %v6315 = vpop.f32.mrb[0].mxu0
      %6316 = vmatprep.mubr.bf16.mxu0 0
      %6317 = vmatmul.mubr.bf16.gmra.mrb[0].mxu0 %v6261
      %v6318 = vpop.f32.mrb[0].mxu0
      %v6319 = vadd.f32 0.0, %v6318
      %v6320 = vpop.f32.mrb[0].mxu0
      %v6321 = vpop.f32.mrb[0].mxu0
      %v6322 = vadd.f32 0.0, %v6321
      %v6323 = vpop.f32.mrb[0].mxu0
      %6324 = vmatprep.mubr.bf16.mxu0 0
      %6325 = vmatmul.mubr.bf16.gmra.mrb[0].mxu0 %v6262
      %v6326 = vpop.f32.mrb[0].mxu0
      %v6327 = vadd.f32 0.0, %v6326
      %v6328 = vpop.f32.mrb[0].mxu0
      %v6329 = vpop.f32.mrb[0].mxu0
      %v6330 = vadd.f32 0.0, %v6329
      %v6331 = vpop.f32.mrb[0].mxu0
      %6332 = vmatprep.mubr.bf16.mxu0 0
      %6333 = vmatmul.mubr.bf16.gmra.mrb[0].mxu0 %v6263
      %v6334 = vpop.f32.mrb[0].mxu0
      %v6335 = vadd.f32 0.0, %v6334
      %v6336 = vpop.f32.mrb[0].mxu0
      %v6337 = vpop.f32.mrb[0].mxu0
      %v6338 = vadd.f32 0.0, %v6337
      %v6339 = vpop.f32.mrb[0].mxu0
      %6340 = vmatprep.mubr.bf16.mxu0 0
      %6341 = vmatmul.mubr.bf16.gmra.mrb[0].mxu0 %v6264
      %v6342 = vpop.f32.mrb[0].mxu0
      %v6343 = vadd.f32 0.0, %v6342
      %v6344 = vpop.f32.mrb[0].mxu0
      %v6345 = vpop.f32.mrb[0].mxu0
      %v6346 = vadd.f32 0.0, %v6345
      %v6347 = vpop.f32.mrb[0].mxu0
      %6348 = vmatprep.mubr.bf16.mxu0 0
      %6349 = vmatmul.mubr.bf16.gmra.mrb[0].mxu0 %v6265
      %v6350 = vpop.f32.mrb[0].mxu0
      %v6351 = vadd.f32 0.0, %v6350
      %v6352 = vpop.f32.mrb[0].mxu0
      %v6353 = vpop.f32.mrb[0].mxu0
      %v6354 = vadd.f32 0.0, %v6353
      %v6355 = vpop.f32.mrb[0].mxu0
      %6356 = vmatprep.mubr.bf16.mxu0 0
      %6357 = vmatmul.mubr.bf16.gmra.mrb[0].mxu0 %v6266
      %v6358 = vpop.f32.mrb[0].mxu0
      %v6359 = vadd.f32 0.0, %v6358
      %v6360 = vpop.f32.mrb[0].mxu0
      %v6361 = vpop.f32.mrb[0].mxu0
      %v6362 = vadd.f32 0.0, %v6361
      %v6363 = vpop.f32.mrb[0].mxu0
      %6364 = vmatprep.mubr.bf16.mxu0 0
      %6365 = vmatmul.mubr.bf16.gmra.mrb[0].mxu0 %v6267
      %v6366 = vpop.f32.mrb[0].mxu0
      %v6367 = vadd.f32 0.0, %v6366
      %v6368 = vpop.f32.mrb[0].mxu0
      %v6369 = vpop.f32.mrb[0].mxu0
      %v6370 = vadd.f32 0.0, %v6369
      %v6371 = vpop.f32.mrb[0].mxu0
      %6372 = vdwg.mxu0
      %v6389 = vunpack.c.l.b16 %v6085
      %v6390 = vunpack.c.l.b16 %v6086
      %v6391 = vunpack.c.l.b16 %v6087
      %v6392 = vunpack.c.l.b16 %v6088
      %v6393 = vunpack.c.l.b16 %v6089
      %v6394 = vunpack.c.l.b16 %v6090
      %v6395 = vunpack.c.l.b16 %v6091
      %v6396 = vunpack.c.l.b16 %v6092
      %v6397 = vunpack.c.l.b16 %v6093
      %v6398 = vunpack.c.l.b16 %v6094
      %v6399 = vunpack.c.l.b16 %v6095
      %v6400 = vunpack.c.l.b16 %v6096
      %v6401 = vunpack.c.l.b16 %v6097
      %v6402 = vunpack.c.l.b16 %v6098
      %v6403 = vunpack.c.l.b16 %v6099
      %v6404 = vunpack.c.l.b16 %v6100
      %v6405 = vpack.c.b16 %v6390, %v6389
      %v6406 = vpack.c.b16 %v6392, %v6391
      %v6407 = vpack.c.b16 %v6394, %v6393
      %v6408 = vpack.c.b16 %v6396, %v6395
      %v6409 = vpack.c.b16 %v6398, %v6397
      %v6410 = vpack.c.b16 %v6400, %v6399
      %v6411 = vpack.c.b16 %v6402, %v6401
      %v6412 = vpack.c.b16 %v6404, %v6403
      %6421 = vmatprep.subr.bf16.mxu0 0
      %6422 = vmatpush1.bf16.msra.mxu0 %v6077
      %6423 = vmatprep.subr.bf16.mxu0 0
      %6424 = vmatpush1.bf16.msra.mxu0 %v6078
      %6425 = vmatprep.subr.bf16.mxu0 0
      %6426 = vmatpush1.bf16.msra.mxu0 %v6079
      %6427 = vmatprep.subr.bf16.mxu0 0
      %6428 = vmatpush1.bf16.msra.mxu0 %v6080
      %6429 = vmatprep.subr.bf16.mxu0 0
      %6430 = vmatpush1.bf16.msra.mxu0 %v6081
      %6431 = vmatprep.subr.bf16.mxu0 0
      %6432 = vmatpush1.bf16.msra.mxu0 %v6082
      %6433 = vmatprep.subr.bf16.mxu0 0
      %6434 = vmatpush1.bf16.msra.mxu0 %v6083
      %6435 = vmatprep.subr.bf16.mxu0 0
      %6436 = vmatpush1.bf16.msra.mxu0 %v6084
      %6437 = vmatprep.subr.bf16.mxu0 0
      %6438 = vmatpush1.bf16.msra.mxu0 0
      %6439 = vmatprep.subr.bf16.mxu0 0
      %6440 = vmatpush1.bf16.msra.mxu0 0
      %6441 = vmatprep.subr.bf16.mxu0 0
      %6442 = vmatpush1.bf16.msra.mxu0 0
      %6443 = vmatprep.subr.bf16.mxu0 0
      %6444 = vmatpush1.bf16.msra.mxu0 0
      %6445 = vmatprep.subr.bf16.mxu0 0
      %6446 = vmatpush1.bf16.msra.mxu0 0
      %6447 = vmatprep.subr.bf16.mxu0 0
      %6448 = vmatpush1.bf16.msra.mxu0 0
      %6449 = vmatprep.subr.bf16.mxu0 0
      %6450 = vmatpush1.bf16.msra.mxu0 0
      %6451 = vmatprep.subr.bf16.mxu0 0
      %6452 = vmatpush1.bf16.msra.mxu0 0
      %6453 = vmatprep.mubr.bf16.mxu0 0
      %6454 = vmatmul.mubr.bf16.gmra.mrb[0].mxu0 %v6405
      %v6455 = vpop.f32.mrb[0].mxu0
      %v6456 = vadd.f32 %v6311, %v6455
      %v6457 = vpop.f32.mrb[0].mxu0
      %v6458 = vpop.f32.mrb[0].mxu0
      %v6459 = vadd.f32 %v6314, %v6458
      %v6460 = vpop.f32.mrb[0].mxu0
      %6461 = vmatprep.mubr.bf16.mxu0 0
      %6462 = vmatmul.mubr.bf16.gmra.mrb[0].mxu0 %v6406
      %v6463 = vpop.f32.mrb[0].mxu0
      %v6464 = vadd.f32 %v6319, %v6463
      %v6465 = vpop.f32.mrb[0].mxu0
      %v6466 = vpop.f32.mrb[0].mxu0
      %v6467 = vadd.f32 %v6322, %v6466
      %v6468 = vpop.f32.mrb[0].mxu0
      %6469 = vmatprep.mubr.bf16.mxu0 0
      %6470 = vmatmul.mubr.bf16.gmra.mrb[0].mxu0 %v6407
      %v6471 = vpop.f32.mrb[0].mxu0
      %v6472 = vadd.f32 %v6327, %v6471
      %v6473 = vpop.f32.mrb[0].mxu0
      %v6474 = vpop.f32.mrb[0].mxu0
      %v6475 = vadd.f32 %v6330, %v6474
      %v6476 = vpop.f32.mrb[0].mxu0
      %6477 = vmatprep.mubr.bf16.mxu0 0
      %6478 = vmatmul.mubr.bf16.gmra.mrb[0].mxu0 %v6408
      %v6479 = vpop.f32.mrb[0].mxu0
      %v6480 = vadd.f32 %v6335, %v6479
      %v6481 = vpop.f32.mrb[0].mxu0
      %v6482 = vpop.f32.mrb[0].mxu0
      %v6483 = vadd.f32 %v6338, %v6482
      %v6484 = vpop.f32.mrb[0].mxu0
      %6485 = vmatprep.mubr.bf16.mxu0 0
      %6486 = vmatmul.mubr.bf16.gmra.mrb[0].mxu0 %v6409
      %v6487 = vpop.f32.mrb[0].mxu0
      %v6488 = vadd.f32 %v6343, %v6487
      %v6489 = vpop.f32.mrb[0].mxu0
      %v6490 = vpop.f32.mrb[0].mxu0
      %v6491 = vadd.f32 %v6346, %v6490
      %v6492 = vpop.f32.mrb[0].mxu0
      %6493 = vmatprep.mubr.bf16.mxu0 0
      %6494 = vmatmul.mubr.bf16.gmra.mrb[0].mxu0 %v6410
      %v6495 = vpop.f32.mrb[0].mxu0
      %v6496 = vadd.f32 %v6351, %v6495
      %v6497 = vpop.f32.mrb[0].mxu0
      %v6498 = vpop.f32.mrb[0].mxu0
      %v6499 = vadd.f32 %v6354, %v6498
      %v6500 = vpop.f32.mrb[0].mxu0
      %6501 = vmatprep.mubr.bf16.mxu0 0
      %6502 = vmatmul.mubr.bf16.gmra.mrb[0].mxu0 %v6411
      %v6503 = vpop.f32.mrb[0].mxu0
      %v6504 = vadd.f32 %v6359, %v6503
      %v6505 = vpop.f32.mrb[0].mxu0
      %v6506 = vpop.f32.mrb[0].mxu0
      %v6507 = vadd.f32 %v6362, %v6506
      %v6508 = vpop.f32.mrb[0].mxu0
      %6509 = vmatprep.mubr.bf16.mxu0 0
      %6510 = vmatmul.mubr.bf16.gmra.mrb[0].mxu0 %v6412
      %v6511 = vpop.f32.mrb[0].mxu0
      %v6512 = vadd.f32 %v6367, %v6511
      %v6513 = vpop.f32.mrb[0].mxu0
      %v6514 = vpop.f32.mrb[0].mxu0
      %v6515 = vadd.f32 %v6370, %v6514
      %v6516 = vpop.f32.mrb[0].mxu0
      %6517 = vdwg.mxu0
      %s6518 = scalar_lea.vmem %s10, 8
      %v6519 = vld [vmem:[%s6518] sm:$0xf]
      %v6521 = vsel %vm5976, %v6519, 0
      %6523 = vmatprep.subr.bf16.mxu0 0
      %6524 = vmatpush1.bf16.msra.mxu0 %v6521
      %6525 = vmatprep.subr.bf16.mxu0 0
      %6526 = vmatpush1.bf16.msra.mxu0 0
      %6527 = vmatprep.subr.bf16.mxu0 0
      %6528 = vmatpush1.bf16.msra.mxu0 0
      %6529 = vmatprep.subr.bf16.mxu0 0
      %6530 = vmatpush1.bf16.msra.mxu0 0
      %6531 = vmatprep.subr.bf16.mxu0 0
      %6532 = vmatpush1.bf16.msra.mxu0 0
      %6533 = vmatprep.subr.bf16.mxu0 0
      %6534 = vmatpush1.bf16.msra.mxu0 0
      %6535 = vmatprep.subr.bf16.mxu0 0
      %6536 = vmatpush1.bf16.msra.mxu0 0
      %6537 = vmatprep.subr.bf16.mxu0 0
      %6538 = vmatpush1.bf16.msra.mxu0 0
      %6539 = vmatprep.subr.bf16.mxu0 0
      %6540 = vmatpush1.bf16.msra.mxu0 0
      %6541 = vmatprep.subr.bf16.mxu0 0
      %6542 = vmatpush1.bf16.msra.mxu0 0
      %6543 = vmatprep.subr.bf16.mxu0 0
      %6544 = vmatpush1.bf16.msra.mxu0 0
      %6545 = vmatprep.subr.bf16.mxu0 0
      %6546 = vmatpush1.bf16.msra.mxu0 0
      %6547 = vmatprep.subr.bf16.mxu0 0
      %6548 = vmatpush1.bf16.msra.mxu0 0
      %6549 = vmatprep.subr.bf16.mxu0 0
      %6550 = vmatpush1.bf16.msra.mxu0 0
      %6551 = vmatprep.subr.bf16.mxu0 0
      %6552 = vmatpush1.bf16.msra.mxu0 0
      %6553 = vmatprep.subr.bf16.mxu0 0
      %6554 = vmatpush1.bf16.msra.mxu0 0
      %6555 = vmatprep.mubr.bf16.mxu0 0
      %6556 = vmatmul.mubr.bf16.gmra.mrb[0].mxu0 %v5953
      %v6557 = vpop.f32.mrb[0].mxu0
      %v6558 = vadd.f32 0.0, %v6557
      %v6559 = vpop.f32.mrb[0].mxu0
      %v6560 = vpop.f32.mrb[0].mxu0
      %v6561 = vadd.f32 0.0, %v6560
      %v6562 = vpop.f32.mrb[0].mxu0
      %6563 = vmatprep.mubr.bf16.mxu0 0
      %6564 = vmatmul.mubr.bf16.gmra.mrb[0].mxu0 %v5956
      %v6565 = vpop.f32.mrb[0].mxu0
      %v6566 = vadd.f32 0.0, %v6565
      %v6567 = vpop.f32.mrb[0].mxu0
      %v6568 = vpop.f32.mrb[0].mxu0
      %v6569 = vadd.f32 0.0, %v6568
      %v6570 = vpop.f32.mrb[0].mxu0
      %6571 = vmatprep.mubr.bf16.mxu0 0
      %6572 = vmatmul.mubr.bf16.gmra.mrb[0].mxu0 %v5959
      %v6573 = vpop.f32.mrb[0].mxu0
      %v6574 = vadd.f32 0.0, %v6573
      %v6575 = vpop.f32.mrb[0].mxu0
      %v6576 = vpop.f32.mrb[0].mxu0
      %v6577 = vadd.f32 0.0, %v6576
      %v6578 = vpop.f32.mrb[0].mxu0
      %6579 = vmatprep.mubr.bf16.mxu0 0
      %6580 = vmatmul.mubr.bf16.gmra.mrb[0].mxu0 %v5962
      %v6581 = vpop.f32.mrb[0].mxu0
      %v6582 = vadd.f32 0.0, %v6581
      %v6583 = vpop.f32.mrb[0].mxu0
      %v6584 = vpop.f32.mrb[0].mxu0
      %v6585 = vadd.f32 0.0, %v6584
      %v6586 = vpop.f32.mrb[0].mxu0
      %6587 = vmatprep.mubr.bf16.mxu0 0
      %6588 = vmatmul.mubr.bf16.gmra.mrb[0].mxu0 %v5965
      %v6589 = vpop.f32.mrb[0].mxu0
      %v6590 = vadd.f32 0.0, %v6589
      %v6591 = vpop.f32.mrb[0].mxu0
      %v6592 = vpop.f32.mrb[0].mxu0
      %v6593 = vadd.f32 0.0, %v6592
      %v6594 = vpop.f32.mrb[0].mxu0
      %6595 = vmatprep.mubr.bf16.mxu0 0
      %6596 = vmatmul.mubr.bf16.gmra.mrb[0].mxu0 %v5968
      %v6597 = vpop.f32.mrb[0].mxu0
      %v6598 = vadd.f32 0.0, %v6597
      %v6599 = vpop.f32.mrb[0].mxu0
      %v6600 = vpop.f32.mrb[0].mxu0
      %v6601 = vadd.f32 0.0, %v6600
      %v6602 = vpop.f32.mrb[0].mxu0
      %6603 = vmatprep.mubr.bf16.mxu0 0
      %6604 = vmatmul.mubr.bf16.gmra.mrb[0].mxu0 %v5971
      %v6605 = vpop.f32.mrb[0].mxu0
      %v6606 = vadd.f32 0.0, %v6605
      %v6607 = vpop.f32.mrb[0].mxu0
      %v6608 = vpop.f32.mrb[0].mxu0
      %v6609 = vadd.f32 0.0, %v6608
      %v6610 = vpop.f32.mrb[0].mxu0
      %6611 = vmatprep.mubr.bf16.mxu0 0
      %6612 = vmatmul.mubr.bf16.gmra.mrb[0].mxu0 %v5974
      %v6613 = vpop.f32.mrb[0].mxu0
      %v6614 = vadd.f32 0.0, %v6613
      %v6615 = vpop.f32.mrb[0].mxu0
      %v6616 = vpop.f32.mrb[0].mxu0
      %v6617 = vadd.f32 0.0, %v6616
      %v6618 = vpop.f32.mrb[0].mxu0
      %6619 = vdwg.mxu0
      %v6620 = vpack.c.bf16 %v6561, %v6558
      %v6621 = vpack.c.bf16 %v6569, %v6566
      %v6622 = vpack.c.bf16 %v6577, %v6574
      %v6623 = vpack.c.bf16 %v6585, %v6582
      %v6624 = vpack.c.bf16 %v6593, %v6590
      %v6625 = vpack.c.bf16 %v6601, %v6598
      %v6626 = vpack.c.bf16 %v6609, %v6606
      %v6627 = vpack.c.bf16 %v6617, %v6614
      %s6628 = scalar_lea.vmem %s9, 128
      %v6629 = vld [vmem:[%s6628] sm:$0xf]
      %v6630 = vld [vmem:[%s6628 + $0x4] sm:$0xf]
      %v6631 = vld [vmem:[%s6628 + $0x8] sm:$0xf]
      %v6632 = vld [vmem:[%s6628 + $0xc] sm:$0xf]
      %v6633 = vld [vmem:[%s6628 + $0x10] sm:$0xf]
      %v6634 = vld [vmem:[%s6628 + $0x14] sm:$0xf]
      %v6635 = vld [vmem:[%s6628 + $0x18] sm:$0xf]
      %v6636 = vld [vmem:[%s6628 + $0x1c] sm:$0xf]
      %v6637 = vld [vmem:[%s6628 + $0x20] sm:$0xf]
      %v6638 = vld [vmem:[%s6628 + $0x24] sm:$0xf]
      %v6639 = vld [vmem:[%s6628 + $0x28] sm:$0xf]
      %v6640 = vld [vmem:[%s6628 + $0x2c] sm:$0xf]
      %v6641 = vld [vmem:[%s6628 + $0x30] sm:$0xf]
      %v6642 = vld [vmem:[%s6628 + $0x34] sm:$0xf]
      %v6643 = vld [vmem:[%s6628 + $0x38] sm:$0xf]
      %v6644 = vld [vmem:[%s6628 + $0x3c] sm:$0xf]
      %v6661 = vunpack.c.l.b16 %v6629
      %v6662 = vunpack.c.l.b16 %v6630
      %v6663 = vunpack.c.l.b16 %v6631
      %v6664 = vunpack.c.l.b16 %v6632
      %v6665 = vunpack.c.l.b16 %v6633
      %v6666 = vunpack.c.l.b16 %v6634
      %v6667 = vunpack.c.l.b16 %v6635
      %v6668 = vunpack.c.l.b16 %v6636
      %v6669 = vunpack.c.l.b16 %v6637
      %v6670 = vunpack.c.l.b16 %v6638
      %v6671 = vunpack.c.l.b16 %v6639
      %v6672 = vunpack.c.l.b16 %v6640
      %v6673 = vunpack.c.l.b16 %v6641
      %v6674 = vunpack.c.l.b16 %v6642
      %v6675 = vunpack.c.l.b16 %v6643
      %v6676 = vunpack.c.l.b16 %v6644
      %v6677 = vpack.c.b16 %v6662, %v6661
      %v6678 = vpack.c.b16 %v6664, %v6663
      %v6679 = vpack.c.b16 %v6666, %v6665
      %v6680 = vpack.c.b16 %v6668, %v6667
      %v6681 = vpack.c.b16 %v6670, %v6669
      %v6682 = vpack.c.b16 %v6672, %v6671
      %v6683 = vpack.c.b16 %v6674, %v6673
      %v6684 = vpack.c.b16 %v6676, %v6675
      %6693 = vmatprep.subr.bf16.mxu0 0
      %6694 = vmatpush1.bf16.msra.mxu0 %v6620
      %6695 = vmatprep.subr.bf16.mxu0 0
      %6696 = vmatpush1.bf16.msra.mxu0 %v6621
      %6697 = vmatprep.subr.bf16.mxu0 0
      %6698 = vmatpush1.bf16.msra.mxu0 %v6622
      %6699 = vmatprep.subr.bf16.mxu0 0
      %6700 = vmatpush1.bf16.msra.mxu0 %v6623
      %6701 = vmatprep.subr.bf16.mxu0 0
      %6702 = vmatpush1.bf16.msra.mxu0 %v6624
      %6703 = vmatprep.subr.bf16.mxu0 0
      %6704 = vmatpush1.bf16.msra.mxu0 %v6625
      %6705 = vmatprep.subr.bf16.mxu0 0
      %6706 = vmatpush1.bf16.msra.mxu0 %v6626
      %6707 = vmatprep.subr.bf16.mxu0 0
      %6708 = vmatpush1.bf16.msra.mxu0 %v6627
      %6709 = vmatprep.subr.bf16.mxu0 0
      %6710 = vmatpush1.bf16.msra.mxu0 0
      %6711 = vmatprep.subr.bf16.mxu0 0
      %6712 = vmatpush1.bf16.msra.mxu0 0
      %6713 = vmatprep.subr.bf16.mxu0 0
      %6714 = vmatpush1.bf16.msra.mxu0 0
      %6715 = vmatprep.subr.bf16.mxu0 0
      %6716 = vmatpush1.bf16.msra.mxu0 0
      %6717 = vmatprep.subr.bf16.mxu0 0
      %6718 = vmatpush1.bf16.msra.mxu0 0
      %6719 = vmatprep.subr.bf16.mxu0 0
      %6720 = vmatpush1.bf16.msra.mxu0 0
      %6721 = vmatprep.subr.bf16.mxu0 0
      %6722 = vmatpush1.bf16.msra.mxu0 0
      %6723 = vmatprep.subr.bf16.mxu0 0
      %6724 = vmatpush1.bf16.msra.mxu0 0
      %6725 = vmatprep.mubr.bf16.mxu0 0
      %6726 = vmatmul.mubr.bf16.gmra.mrb[0].mxu0 %v6677
      %v6727 = vpop.f32.mrb[0].mxu0
      %v6728 = vadd.f32 0.0, %v6727
      %v6729 = vpop.f32.mrb[0].mxu0
      %v6730 = vpop.f32.mrb[0].mxu0
      %v6731 = vadd.f32 0.0, %v6730
      %v6732 = vpop.f32.mrb[0].mxu0
      %6733 = vmatprep.mubr.bf16.mxu0 0
      %6734 = vmatmul.mubr.bf16.gmra.mrb[0].mxu0 %v6678
      %v6735 = vpop.f32.mrb[0].mxu0
      %v6736 = vadd.f32 0.0, %v6735
      %v6737 = vpop.f32.mrb[0].mxu0
      %v6738 = vpop.f32.mrb[0].mxu0
      %v6739 = vadd.f32 0.0, %v6738
      %v6740 = vpop.f32.mrb[0].mxu0
      %6741 = vmatprep.mubr.bf16.mxu0 0
      %6742 = vmatmul.mubr.bf16.gmra.mrb[0].mxu0 %v6679
      %v6743 = vpop.f32.mrb[0].mxu0
      %v6744 = vadd.f32 0.0, %v6743
      %v6745 = vpop.f32.mrb[0].mxu0
      %v6746 = vpop.f32.mrb[0].mxu0
      %v6747 = vadd.f32 0.0, %v6746
      %v6748 = vpop.f32.mrb[0].mxu0
      %6749 = vmatprep.mubr.bf16.mxu0 0
      %6750 = vmatmul.mubr.bf16.gmra.mrb[0].mxu0 %v6680
      %v6751 = vpop.f32.mrb[0].mxu0
      %v6752 = vadd.f32 0.0, %v6751
      %v6753 = vpop.f32.mrb[0].mxu0
      %v6754 = vpop.f32.mrb[0].mxu0
      %v6755 = vadd.f32 0.0, %v6754
      %v6756 = vpop.f32.mrb[0].mxu0
      %6757 = vmatprep.mubr.bf16.mxu0 0
      %6758 = vmatmul.mubr.bf16.gmra.mrb[0].mxu0 %v6681
      %v6759 = vpop.f32.mrb[0].mxu0
      %v6760 = vadd.f32 0.0, %v6759
      %v6761 = vpop.f32.mrb[0].mxu0
      %v6762 = vpop.f32.mrb[0].mxu0
      %v6763 = vadd.f32 0.0, %v6762
      %v6764 = vpop.f32.mrb[0].mxu0
      %6765 = vmatprep.mubr.bf16.mxu0 0
      %6766 = vmatmul.mubr.bf16.gmra.mrb[0].mxu0 %v6682
      %v6767 = vpop.f32.mrb[0].mxu0
      %v6768 = vadd.f32 0.0, %v6767
      %v6769 = vpop.f32.mrb[0].mxu0
      %v6770 = vpop.f32.mrb[0].mxu0
      %v6771 = vadd.f32 0.0, %v6770
      %v6772 = vpop.f32.mrb[0].mxu0
      %6773 = vmatprep.mubr.bf16.mxu0 0
      %6774 = vmatmul.mubr.bf16.gmra.mrb[0].mxu0 %v6683
      %v6775 = vpop.f32.mrb[0].mxu0
      %v6776 = vadd.f32 0.0, %v6775
      %v6777 = vpop.f32.mrb[0].mxu0
      %v6778 = vpop.f32.mrb[0].mxu0
      %v6779 = vadd.f32 0.0, %v6778
      %v6780 = vpop.f32.mrb[0].mxu0
      %6781 = vmatprep.mubr.bf16.mxu0 0
      %6782 = vmatmul.mubr.bf16.gmra.mrb[0].mxu0 %v6684
      %v6783 = vpop.f32.mrb[0].mxu0
      %v6784 = vadd.f32 0.0, %v6783
      %v6785 = vpop.f32.mrb[0].mxu0
      %v6786 = vpop.f32.mrb[0].mxu0
      %v6787 = vadd.f32 0.0, %v6786
      %v6788 = vpop.f32.mrb[0].mxu0
      %6789 = vdwg.mxu0
      %v6790 = vadd.f32 %v6456, %v6728
      %v6791 = vadd.f32 %v6459, %v6731
      %v6792 = vadd.f32 %v6464, %v6736
      %v6793 = vadd.f32 %v6467, %v6739
      %v6794 = vadd.f32 %v6472, %v6744
      %v6795 = vadd.f32 %v6475, %v6747
      %v6796 = vadd.f32 %v6480, %v6752
      %v6797 = vadd.f32 %v6483, %v6755
      %v6798 = vadd.f32 %v6488, %v6760
      %v6799 = vadd.f32 %v6491, %v6763
      %v6800 = vadd.f32 %v6496, %v6768
      %v6801 = vadd.f32 %v6499, %v6771
      %v6802 = vadd.f32 %v6504, %v6776
      %v6803 = vadd.f32 %v6507, %v6779
      %v6804 = vadd.f32 %v6512, %v6784
      %v6805 = vadd.f32 %v6515, %v6787
      %s6806 = scalar_lea.vmem %s10, 12
      %v6807 = vld [vmem:[%s6806] sm:$0xf]
      %v6809 = vsel %vm5976, %v6807, 0
      %6811 = vmatprep.subr.bf16.mxu0 0
      %6812 = vmatpush1.bf16.msra.mxu0 %v6809
      %6813 = vmatprep.subr.bf16.mxu0 0
      %6814 = vmatpush1.bf16.msra.mxu0 0
      %6815 = vmatprep.subr.bf16.mxu0 0
      %6816 = vmatpush1.bf16.msra.mxu0 0
      %6817 = vmatprep.subr.bf16.mxu0 0
      %6818 = vmatpush1.bf16.msra.mxu0 0
      %6819 = vmatprep.subr.bf16.mxu0 0
      %6820 = vmatpush1.bf16.msra.mxu0 0
      %6821 = vmatprep.subr.bf16.mxu0 0
      %6822 = vmatpush1.bf16.msra.mxu0 0
      %6823 = vmatprep.subr.bf16.mxu0 0
      %6824 = vmatpush1.bf16.msra.mxu0 0
      %6825 = vmatprep.subr.bf16.mxu0 0
      %6826 = vmatpush1.bf16.msra.mxu0 0
      %6827 = vmatprep.subr.bf16.mxu0 0
      %6828 = vmatpush1.bf16.msra.mxu0 0
      %6829 = vmatprep.subr.bf16.mxu0 0
      %6830 = vmatpush1.bf16.msra.mxu0 0
      %6831 = vmatprep.subr.bf16.mxu0 0
      %6832 = vmatpush1.bf16.msra.mxu0 0
      %6833 = vmatprep.subr.bf16.mxu0 0
      %6834 = vmatpush1.bf16.msra.mxu0 0
      %6835 = vmatprep.subr.bf16.mxu0 0
      %6836 = vmatpush1.bf16.msra.mxu0 0
      %6837 = vmatprep.subr.bf16.mxu0 0
      %6838 = vmatpush1.bf16.msra.mxu0 0
      %6839 = vmatprep.subr.bf16.mxu0 0
      %6840 = vmatpush1.bf16.msra.mxu0 0
      %6841 = vmatprep.subr.bf16.mxu0 0
      %6842 = vmatpush1.bf16.msra.mxu0 0
      %6843 = vmatprep.mubr.bf16.mxu0 0
      %6844 = vmatmul.mubr.bf16.gmra.mrb[0].mxu0 %v5953
      %v6845 = vpop.f32.mrb[0].mxu0
      %v6846 = vadd.f32 0.0, %v6845
      %v6847 = vpop.f32.mrb[0].mxu0
      %v6848 = vpop.f32.mrb[0].mxu0
      %v6849 = vadd.f32 0.0, %v6848
      %v6850 = vpop.f32.mrb[0].mxu0
      %6851 = vmatprep.mubr.bf16.mxu0 0
      %6852 = vmatmul.mubr.bf16.gmra.mrb[0].mxu0 %v5956
      %v6853 = vpop.f32.mrb[0].mxu0
      %v6854 = vadd.f32 0.0, %v6853
      %v6855 = vpop.f32.mrb[0].mxu0
      %v6856 = vpop.f32.mrb[0].mxu0
      %v6857 = vadd.f32 0.0, %v6856
      %v6858 = vpop.f32.mrb[0].mxu0
      %6859 = vmatprep.mubr.bf16.mxu0 0
      %6860 = vmatmul.mubr.bf16.gmra.mrb[0].mxu0 %v5959
      %v6861 = vpop.f32.mrb[0].mxu0
      %v6862 = vadd.f32 0.0, %v6861
      %v6863 = vpop.f32.mrb[0].mxu0
      %v6864 = vpop.f32.mrb[0].mxu0
      %v6865 = vadd.f32 0.0, %v6864
      %v6866 = vpop.f32.mrb[0].mxu0
      %6867 = vmatprep.mubr.bf16.mxu0 0
      %6868 = vmatmul.mubr.bf16.gmra.mrb[0].mxu0 %v5962
      %v6869 = vpop.f32.mrb[0].mxu0
      %v6870 = vadd.f32 0.0, %v6869
      %v6871 = vpop.f32.mrb[0].mxu0
      %v6872 = vpop.f32.mrb[0].mxu0
      %v6873 = vadd.f32 0.0, %v6872
      %v6874 = vpop.f32.mrb[0].mxu0
      %6875 = vmatprep.mubr.bf16.mxu0 0
      %6876 = vmatmul.mubr.bf16.gmra.mrb[0].mxu0 %v5965
      %v6877 = vpop.f32.mrb[0].mxu0
      %v6878 = vadd.f32 0.0, %v6877
      %v6879 = vpop.f32.mrb[0].mxu0
      %v6880 = vpop.f32.mrb[0].mxu0
      %v6881 = vadd.f32 0.0, %v6880
      %v6882 = vpop.f32.mrb[0].mxu0
      %6883 = vmatprep.mubr.bf16.mxu0 0
      %6884 = vmatmul.mubr.bf16.gmra.mrb[0].mxu0 %v5968
      %v6885 = vpop.f32.mrb[0].mxu0
      %v6886 = vadd.f32 0.0, %v6885
      %v6887 = vpop.f32.mrb[0].mxu0
      %v6888 = vpop.f32.mrb[0].mxu0
      %v6889 = vadd.f32 0.0, %v6888
      %v6890 = vpop.f32.mrb[0].mxu0
      %6891 = vmatprep.mubr.bf16.mxu0 0
      %6892 = vmatmul.mubr.bf16.gmra.mrb[0].mxu0 %v5971
      %v6893 = vpop.f32.mrb[0].mxu0
      %v6894 = vadd.f32 0.0, %v6893
      %v6895 = vpop.f32.mrb[0].mxu0
      %v6896 = vpop.f32.mrb[0].mxu0
      %v6897 = vadd.f32 0.0, %v6896
      %v6898 = vpop.f32.mrb[0].mxu0
      %6899 = vmatprep.mubr.bf16.mxu0 0
      %6900 = vmatmul.mubr.bf16.gmra.mrb[0].mxu0 %v5974
      %v6901 = vpop.f32.mrb[0].mxu0
      %v6902 = vadd.f32 0.0, %v6901
      %v6903 = vpop.f32.mrb[0].mxu0
      %v6904 = vpop.f32.mrb[0].mxu0
      %v6905 = vadd.f32 0.0, %v6904
      %v6906 = vpop.f32.mrb[0].mxu0
      %6907 = vdwg.mxu0
      %v6908 = vpack.c.bf16 %v6849, %v6846
      %v6909 = vpack.c.bf16 %v6857, %v6854
      %v6910 = vpack.c.bf16 %v6865, %v6862
      %v6911 = vpack.c.bf16 %v6873, %v6870
      %v6912 = vpack.c.bf16 %v6881, %v6878
      %v6913 = vpack.c.bf16 %v6889, %v6886
      %v6914 = vpack.c.bf16 %v6897, %v6894
      %v6915 = vpack.c.bf16 %v6905, %v6902
      %s6916 = scalar_lea.vmem %s9, 192
      %v6917 = vld [vmem:[%s6916] sm:$0xf]
      %v6918 = vld [vmem:[%s6916 + $0x4] sm:$0xf]
      %v6919 = vld [vmem:[%s6916 + $0x8] sm:$0xf]
      %v6920 = vld [vmem:[%s6916 + $0xc] sm:$0xf]
      %v6921 = vld [vmem:[%s6916 + $0x10] sm:$0xf]
      %v6922 = vld [vmem:[%s6916 + $0x14] sm:$0xf]
      %v6923 = vld [vmem:[%s6916 + $0x18] sm:$0xf]
      %v6924 = vld [vmem:[%s6916 + $0x1c] sm:$0xf]
      %v6925 = vld [vmem:[%s6916 + $0x20] sm:$0xf]
      %v6926 = vld [vmem:[%s6916 + $0x24] sm:$0xf]
      %v6927 = vld [vmem:[%s6916 + $0x28] sm:$0xf]
      %v6928 = vld [vmem:[%s6916 + $0x2c] sm:$0xf]
      %v6929 = vld [vmem:[%s6916 + $0x30] sm:$0xf]
      %v6930 = vld [vmem:[%s6916 + $0x34] sm:$0xf]
      %v6931 = vld [vmem:[%s6916 + $0x38] sm:$0xf]
      %v6932 = vld [vmem:[%s6916 + $0x3c] sm:$0xf]
      %v6949 = vunpack.c.l.b16 %v6917
      %v6950 = vunpack.c.l.b16 %v6918
      %v6951 = vunpack.c.l.b16 %v6919
      %v6952 = vunpack.c.l.b16 %v6920
      %v6953 = vunpack.c.l.b16 %v6921
      %v6954 = vunpack.c.l.b16 %v6922
      %v6955 = vunpack.c.l.b16 %v6923
      %v6956 = vunpack.c.l.b16 %v6924
      %v6957 = vunpack.c.l.b16 %v6925
      %v6958 = vunpack.c.l.b16 %v6926
      %v6959 = vunpack.c.l.b16 %v6927
      %v6960 = vunpack.c.l.b16 %v6928
      %v6961 = vunpack.c.l.b16 %v6929
      %v6962 = vunpack.c.l.b16 %v6930
      %v6963 = vunpack.c.l.b16 %v6931
      %v6964 = vunpack.c.l.b16 %v6932
      %v6965 = vpack.c.b16 %v6950, %v6949
      %v6966 = vpack.c.b16 %v6952, %v6951
      %v6967 = vpack.c.b16 %v6954, %v6953
      %v6968 = vpack.c.b16 %v6956, %v6955
      %v6969 = vpack.c.b16 %v6958, %v6957
      %v6970 = vpack.c.b16 %v6960, %v6959
      %v6971 = vpack.c.b16 %v6962, %v6961
      %v6972 = vpack.c.b16 %v6964, %v6963
      %6981 = vmatprep.subr.bf16.mxu0 0
      %6982 = vmatpush1.bf16.msra.mxu0 %v6908
      %6983 = vmatprep.subr.bf16.mxu0 0
      %6984 = vmatpush1.bf16.msra.mxu0 %v6909
      %6985 = vmatprep.subr.bf16.mxu0 0
      %6986 = vmatpush1.bf16.msra.mxu0 %v6910
      %6987 = vmatprep.subr.bf16.mxu0 0
      %6988 = vmatpush1.bf16.msra.mxu0 %v6911
      %6989 = vmatprep.subr.bf16.mxu0 0
      %6990 = vmatpush1.bf16.msra.mxu0 %v6912
      %6991 = vmatprep.subr.bf16.mxu0 0
      %6992 = vmatpush1.bf16.msra.mxu0 %v6913
      %6993 = vmatprep.subr.bf16.mxu0 0
      %6994 = vmatpush1.bf16.msra.mxu0 %v6914
      %6995 = vmatprep.subr.bf16.mxu0 0
      %6996 = vmatpush1.bf16.msra.mxu0 %v6915
      %6997 = vmatprep.subr.bf16.mxu0 0
      %6998 = vmatpush1.bf16.msra.mxu0 0
      %6999 = vmatprep.subr.bf16.mxu0 0
      %7000 = vmatpush1.bf16.msra.mxu0 0
      %7001 = vmatprep.subr.bf16.mxu0 0
      %7002 = vmatpush1.bf16.msra.mxu0 0
      %7003 = vmatprep.subr.bf16.mxu0 0
      %7004 = vmatpush1.bf16.msra.mxu0 0
      %7005 = vmatprep.subr.bf16.mxu0 0
      %7006 = vmatpush1.bf16.msra.mxu0 0
      %7007 = vmatprep.subr.bf16.mxu0 0
      %7008 = vmatpush1.bf16.msra.mxu0 0
      %7009 = vmatprep.subr.bf16.mxu0 0
      %7010 = vmatpush1.bf16.msra.mxu0 0
      %7011 = vmatprep.subr.bf16.mxu0 0
      %7012 = vmatpush1.bf16.msra.mxu0 0
      %7013 = vmatprep.mubr.bf16.mxu0 0
      %7014 = vmatmul.mubr.bf16.gmra.mrb[0].mxu0 %v6965
      %v7015 = vpop.f32.mrb[0].mxu0
      %v7016 = vadd.f32 0.0, %v7015
      %v7017 = vpop.f32.mrb[0].mxu0
      %v7018 = vpop.f32.mrb[0].mxu0
      %v7019 = vadd.f32 0.0, %v7018
      %v7020 = vpop.f32.mrb[0].mxu0
      %7021 = vmatprep.mubr.bf16.mxu0 0
      %7022 = vmatmul.mubr.bf16.gmra.mrb[0].mxu0 %v6966
      %v7023 = vpop.f32.mrb[0].mxu0
      %v7024 = vadd.f32 0.0, %v7023
      %v7025 = vpop.f32.mrb[0].mxu0
      %v7026 = vpop.f32.mrb[0].mxu0
      %v7027 = vadd.f32 0.0, %v7026
      %v7028 = vpop.f32.mrb[0].mxu0
      %7029 = vmatprep.mubr.bf16.mxu0 0
      %7030 = vmatmul.mubr.bf16.gmra.mrb[0].mxu0 %v6967
      %v7031 = vpop.f32.mrb[0].mxu0
      %v7032 = vadd.f32 0.0, %v7031
      %v7033 = vpop.f32.mrb[0].mxu0
      %v7034 = vpop.f32.mrb[0].mxu0
      %v7035 = vadd.f32 0.0, %v7034
      %v7036 = vpop.f32.mrb[0].mxu0
      %7037 = vmatprep.mubr.bf16.mxu0 0
      %7038 = vmatmul.mubr.bf16.gmra.mrb[0].mxu0 %v6968
      %v7039 = vpop.f32.mrb[0].mxu0
      %v7040 = vadd.f32 0.0, %v7039
      %v7041 = vpop.f32.mrb[0].mxu0
      %v7042 = vpop.f32.mrb[0].mxu0
      %v7043 = vadd.f32 0.0, %v7042
      %v7044 = vpop.f32.mrb[0].mxu0
      %7045 = vmatprep.mubr.bf16.mxu0 0
      %7046 = vmatmul.mubr.bf16.gmra.mrb[0].mxu0 %v6969
      %v7047 = vpop.f32.mrb[0].mxu0
      %v7048 = vadd.f32 0.0, %v7047
      %v7049 = vpop.f32.mrb[0].mxu0
      %v7050 = vpop.f32.mrb[0].mxu0
      %v7051 = vadd.f32 0.0, %v7050
      %v7052 = vpop.f32.mrb[0].mxu0
      %7053 = vmatprep.mubr.bf16.mxu0 0
      %7054 = vmatmul.mubr.bf16.gmra.mrb[0].mxu0 %v6970
      %v7055 = vpop.f32.mrb[0].mxu0
      %v7056 = vadd.f32 0.0, %v7055
      %v7057 = vpop.f32.mrb[0].mxu0
      %v7058 = vpop.f32.mrb[0].mxu0
      %v7059 = vadd.f32 0.0, %v7058
      %v7060 = vpop.f32.mrb[0].mxu0
      %7061 = vmatprep.mubr.bf16.mxu0 0
      %7062 = vmatmul.mubr.bf16.gmra.mrb[0].mxu0 %v6971
      %v7063 = vpop.f32.mrb[0].mxu0
      %v7064 = vadd.f32 0.0, %v7063
      %v7065 = vpop.f32.mrb[0].mxu0
      %v7066 = vpop.f32.mrb[0].mxu0
      %v7067 = vadd.f32 0.0, %v7066
      %v7068 = vpop.f32.mrb[0].mxu0
      %7069 = vmatprep.mubr.bf16.mxu0 0
      %7070 = vmatmul.mubr.bf16.gmra.mrb[0].mxu0 %v6972
      %v7071 = vpop.f32.mrb[0].mxu0
      %v7072 = vadd.f32 0.0, %v7071
      %v7073 = vpop.f32.mrb[0].mxu0
      %v7074 = vpop.f32.mrb[0].mxu0
      %v7075 = vadd.f32 0.0, %v7074
      %v7076 = vpop.f32.mrb[0].mxu0
      %7077 = vdwg.mxu0
      %v7078 = vadd.f32 %v6790, %v7016
      %v7079 = vadd.f32 %v6791, %v7019
      %v7080 = vadd.f32 %v6792, %v7024
      %v7081 = vadd.f32 %v6793, %v7027
      %v7082 = vadd.f32 %v6794, %v7032
      %v7083 = vadd.f32 %v6795, %v7035
      %v7084 = vadd.f32 %v6796, %v7040
      %v7085 = vadd.f32 %v6797, %v7043
      %v7086 = vadd.f32 %v6798, %v7048
      %v7087 = vadd.f32 %v6799, %v7051
      %v7088 = vadd.f32 %v6800, %v7056
      %v7089 = vadd.f32 %v6801, %v7059
      %v7090 = vadd.f32 %v6802, %v7064
      %v7091 = vadd.f32 %v6803, %v7067
      %v7092 = vadd.f32 %v6804, %v7072
      %v7093 = vadd.f32 %v6805, %v7075
      %v7094 = vld [vmem:[%s11] sm:$0xff]
      %v7095 = vld [vmem:[%s11 + $0x8] sm:$0xff]
      %v7096 = vld [vmem:[%s11 + $0x10] sm:$0xff]
      %v7097 = vld [vmem:[%s11 + $0x18] sm:$0xff]
      %v7098 = vld [vmem:[%s11 + $0x20] sm:$0xff]
      %v7099 = vld [vmem:[%s11 + $0x28] sm:$0xff]
      %v7100 = vld [vmem:[%s11 + $0x30] sm:$0xff]
      %v7101 = vld [vmem:[%s11 + $0x38] sm:$0xff]
      %v7102 = vld [vmem:[%s11 + $0x40] sm:$0xff]
      %v7103 = vld [vmem:[%s11 + $0x48] sm:$0xff]
      %v7104 = vld [vmem:[%s11 + $0x50] sm:$0xff]
      %v7105 = vld [vmem:[%s11 + $0x58] sm:$0xff]
      %v7106 = vld [vmem:[%s11 + $0x60] sm:$0xff]
      %v7107 = vld [vmem:[%s11 + $0x68] sm:$0xff]
      %v7108 = vld [vmem:[%s11 + $0x70] sm:$0xff]
      %v7109 = vld [vmem:[%s11 + $0x78] sm:$0xff]
      %vm7110 = vcmask 31744
      %v7111 = vsel %vm7110, %v7078, 0.0
      %7112 = vadd.xlane.f32.xlu0 %v7111
      %v7113 = vpop.xlane.xlu0 %7112
      %v7114 = vsel %vm7110, %v7079, 0.0
      %7115 = vadd.xlane.f32.xlu0 %v7114
      %v7116 = vpop.xlane.xlu0 %7115
      %v7117 = vsel %vm7110, %v7080, 0.0
      %7118 = vadd.xlane.f32.xlu0 %v7117
      %v7119 = vpop.xlane.xlu0 %7118
      %v7120 = vsel %vm7110, %v7081, 0.0
      %7121 = vadd.xlane.f32.xlu0 %v7120
      %v7122 = vpop.xlane.xlu0 %7121
      %v7123 = vsel %vm7110, %v7082, 0.0
      %7124 = vadd.xlane.f32.xlu0 %v7123
      %v7125 = vpop.xlane.xlu0 %7124
      %v7126 = vsel %vm7110, %v7083, 0.0
      %7127 = vadd.xlane.f32.xlu0 %v7126
      %v7128 = vpop.xlane.xlu0 %7127
      %v7129 = vsel %vm7110, %v7084, 0.0
      %7130 = vadd.xlane.f32.xlu0 %v7129
      %v7131 = vpop.xlane.xlu0 %7130
      %v7132 = vsel %vm7110, %v7085, 0.0
      %7133 = vadd.xlane.f32.xlu0 %v7132
      %v7134 = vpop.xlane.xlu0 %7133
      %v7135 = vsel %vm7110, %v7086, 0.0
      %7136 = vadd.xlane.f32.xlu0 %v7135
      %v7137 = vpop.xlane.xlu0 %7136
      %v7138 = vsel %vm7110, %v7087, 0.0
      %7139 = vadd.xlane.f32.xlu0 %v7138
      %v7140 = vpop.xlane.xlu0 %7139
      %v7141 = vsel %vm7110, %v7088, 0.0
      %7142 = vadd.xlane.f32.xlu0 %v7141
      %v7143 = vpop.xlane.xlu0 %7142
      %v7144 = vsel %vm7110, %v7089, 0.0
      %7145 = vadd.xlane.f32.xlu0 %v7144
      %v7146 = vpop.xlane.xlu0 %7145
      %v7147 = vsel %vm7110, %v7090, 0.0
      %7148 = vadd.xlane.f32.xlu0 %v7147
      %v7149 = vpop.xlane.xlu0 %7148
      %v7150 = vsel %vm7110, %v7091, 0.0
      %7151 = vadd.xlane.f32.xlu0 %v7150
      %v7152 = vpop.xlane.xlu0 %7151
      %v7153 = vsel %vm7110, %v7092, 0.0
      %7154 = vadd.xlane.f32.xlu0 %v7153
      %v7155 = vpop.xlane.xlu0 %7154
      %v7156 = vsel %vm7110, %v7093, 0.0
      %7157 = vadd.xlane.f32.xlu0 %v7156
      %v7158 = vpop.xlane.xlu0 %7157
      %7159 = vmatprep.subr.mxu0 0.0
      %7160 = vmatpush1.msra.mxu0 %v7113
      %7161 = vmatprep.subr.mxu0 0.0
      %7162 = vmatpush1.msra.mxu0 %v7116
      %7163 = vmatprep.subr.mxu0 0.0
      %7164 = vmatpush1.msra.mxu0 %v7119
      %7165 = vmatprep.subr.mxu0 0.0
      %7166 = vmatpush1.msra.mxu0 %v7122
      %7167 = vmatprep.subr.mxu0 0.0
      %7168 = vmatpush1.msra.mxu0 %v7125
      %7169 = vmatprep.subr.mxu0 0.0
      %7170 = vmatpush1.msra.mxu0 %v7128
      %7171 = vmatprep.subr.mxu0 0.0
      %7172 = vmatpush1.msra.mxu0 %v7131
      %7173 = vmatprep.subr.mxu0 0.0
      %7174 = vmatpush1.msra.mxu0 %v7134
      %7175 = vmatprep.subr.mxu0 0.0
      %7176 = vmatpush1.msra.mxu0 %v7137
      %7177 = vmatprep.subr.mxu0 0.0
      %7178 = vmatpush1.msra.mxu0 %v7140
      %7179 = vmatprep.subr.mxu0 0.0
      %7180 = vmatpush1.msra.mxu0 %v7143
      %7181 = vmatprep.subr.mxu0 0.0
      %7182 = vmatpush1.msra.mxu0 %v7146
      %7183 = vmatprep.subr.mxu0 0.0
      %7184 = vmatpush1.msra.mxu0 %v7149
      %7185 = vmatprep.subr.mxu0 0.0
      %7186 = vmatpush1.msra.mxu0 %v7152
      %7187 = vmatprep.subr.mxu0 0.0
      %7188 = vmatpush1.msra.mxu0 %v7155
      %7189 = vmatprep.subr.mxu0 0.0
      %7190 = vmatpush1.msra.mxu0 %v7158
      %7191 = vmatprep.subr.mxu0 0.0
      %7192 = vmatpush1.msra.mxu0 0.0
      %7193 = vmatprep.subr.mxu0 0.0
      %7194 = vmatpush1.msra.mxu0 0.0
      %7195 = vmatprep.subr.mxu0 0.0
      %7196 = vmatpush1.msra.mxu0 0.0
      %7197 = vmatprep.subr.mxu0 0.0
      %7198 = vmatpush1.msra.mxu0 0.0
      %7199 = vmatprep.subr.mxu0 0.0
      %7200 = vmatpush1.msra.mxu0 0.0
      %7201 = vmatprep.subr.mxu0 0.0
      %7202 = vmatpush1.msra.mxu0 0.0
      %7203 = vmatprep.subr.mxu0 0.0
      %7204 = vmatpush1.msra.mxu0 0.0
      %7205 = vmatprep.subr.mxu0 0.0
      %7206 = vmatpush1.msra.mxu0 0.0
      %7207 = vmatprep.subr.mxu0 0.0
      %7208 = vmatpush1.msra.mxu0 0.0
      %7209 = vmatprep.subr.mxu0 0.0
      %7210 = vmatpush1.msra.mxu0 0.0
      %7211 = vmatprep.subr.mxu0 0.0
      %7212 = vmatpush1.msra.mxu0 0.0
      %7213 = vmatprep.subr.mxu0 0.0
      %7214 = vmatpush1.msra.mxu0 0.0
      %7215 = vmatprep.subr.mxu0 0.0
      %7216 = vmatpush1.msra.mxu0 0.0
      %7217 = vmatprep.subr.mxu0 0.0
      %7218 = vmatpush1.msra.mxu0 0.0
      %7219 = vmatprep.subr.mxu0 0.0
      %7220 = vmatpush1.msra.mxu0 0.0
      %7221 = vmatprep.subr.mxu0 0.0
      %7222 = vmatpush1.msra.mxu0 0.0
      %7223 = vmatprep.mubr.f32.mxu0 0.0
      %7224 = vmatmul.mubr.f32.gmra.mrb[0].mxu0 %v7094
      %v7225 = vpop.f32.mrb[0].mxu0
      %v7226 = vadd.f32 0.0, %v7225
      %v7227 = vpop.f32.mrb[0].mxu0
      %7228 = vmatprep.mubr.f32.mxu0 0.0
      %7229 = vmatmul.mubr.f32.gmra.mrb[0].mxu0 %v7095
      %v7230 = vpop.f32.mrb[0].mxu0
      %v7231 = vadd.f32 0.0, %v7230
      %v7232 = vpop.f32.mrb[0].mxu0
      %7233 = vmatprep.mubr.f32.mxu0 0.0
      %7234 = vmatmul.mubr.f32.gmra.mrb[0].mxu0 %v7096
      %v7235 = vpop.f32.mrb[0].mxu0
      %v7236 = vadd.f32 0.0, %v7235
      %v7237 = vpop.f32.mrb[0].mxu0
      %7238 = vmatprep.mubr.f32.mxu0 0.0
      %7239 = vmatmul.mubr.f32.gmra.mrb[0].mxu0 %v7097
      %v7240 = vpop.f32.mrb[0].mxu0
      %v7241 = vadd.f32 0.0, %v7240
      %v7242 = vpop.f32.mrb[0].mxu0
      %7243 = vmatprep.mubr.f32.mxu0 0.0
      %7244 = vmatmul.mubr.f32.gmra.mrb[0].mxu0 %v7098
      %v7245 = vpop.f32.mrb[0].mxu0
      %v7246 = vadd.f32 0.0, %v7245
      %v7247 = vpop.f32.mrb[0].mxu0
      %7248 = vmatprep.mubr.f32.mxu0 0.0
      %7249 = vmatmul.mubr.f32.gmra.mrb[0].mxu0 %v7099
      %v7250 = vpop.f32.mrb[0].mxu0
      %v7251 = vadd.f32 0.0, %v7250
      %v7252 = vpop.f32.mrb[0].mxu0
      %7253 = vmatprep.mubr.f32.mxu0 0.0
      %7254 = vmatmul.mubr.f32.gmra.mrb[0].mxu0 %v7100
      %v7255 = vpop.f32.mrb[0].mxu0
      %v7256 = vadd.f32 0.0, %v7255
      %v7257 = vpop.f32.mrb[0].mxu0
      %7258 = vmatprep.mubr.f32.mxu0 0.0
      %7259 = vmatmul.mubr.f32.gmra.mrb[0].mxu0 %v7101
      %v7260 = vpop.f32.mrb[0].mxu0
      %v7261 = vadd.f32 0.0, %v7260
      %v7262 = vpop.f32.mrb[0].mxu0
      %7263 = vmatprep.mubr.f32.mxu0 0.0
      %7264 = vmatmul.mubr.f32.gmra.mrb[0].mxu0 %v7102
      %v7265 = vpop.f32.mrb[0].mxu0
      %v7266 = vadd.f32 0.0, %v7265
      %v7267 = vpop.f32.mrb[0].mxu0
      %7268 = vmatprep.mubr.f32.mxu0 0.0
      %7269 = vmatmul.mubr.f32.gmra.mrb[0].mxu0 %v7103
      %v7270 = vpop.f32.mrb[0].mxu0
      %v7271 = vadd.f32 0.0, %v7270
      %v7272 = vpop.f32.mrb[0].mxu0
      %7273 = vmatprep.mubr.f32.mxu0 0.0
      %7274 = vmatmul.mubr.f32.gmra.mrb[0].mxu0 %v7104
      %v7275 = vpop.f32.mrb[0].mxu0
      %v7276 = vadd.f32 0.0, %v7275
      %v7277 = vpop.f32.mrb[0].mxu0
      %7278 = vmatprep.mubr.f32.mxu0 0.0
      %7279 = vmatmul.mubr.f32.gmra.mrb[0].mxu0 %v7105
      %v7280 = vpop.f32.mrb[0].mxu0
      %v7281 = vadd.f32 0.0, %v7280
      %v7282 = vpop.f32.mrb[0].mxu0
      %7283 = vmatprep.mubr.f32.mxu0 0.0
      %7284 = vmatmul.mubr.f32.gmra.mrb[0].mxu0 %v7106
      %v7285 = vpop.f32.mrb[0].mxu0
      %v7286 = vadd.f32 0.0, %v7285
      %v7287 = vpop.f32.mrb[0].mxu0
      %7288 = vmatprep.mubr.f32.mxu0 0.0
      %7289 = vmatmul.mubr.f32.gmra.mrb[0].mxu0 %v7107
      %v7290 = vpop.f32.mrb[0].mxu0
      %v7291 = vadd.f32 0.0, %v7290
      %v7292 = vpop.f32.mrb[0].mxu0
      %7293 = vmatprep.mubr.f32.mxu0 0.0
      %7294 = vmatmul.mubr.f32.gmra.mrb[0].mxu0 %v7108
      %v7295 = vpop.f32.mrb[0].mxu0
      %v7296 = vadd.f32 0.0, %v7295
      %v7297 = vpop.f32.mrb[0].mxu0
      %7298 = vmatprep.mubr.f32.mxu0 0.0
      %7299 = vmatmul.mubr.f32.gmra.mrb[0].mxu0 %v7109
      %v7300 = vpop.f32.mrb[0].mxu0
      %v7301 = vadd.f32 0.0, %v7300
      %v7302 = vpop.f32.mrb[0].mxu0
      %7303 = vdwg.mxu0
      %7305 = vset.pattern.permute.xlu0 0
      %7306 = vperm.xlu0 %7305, %v7226
      %v7307 = vpop.permute.xlu0 %7306
      %7310 = vset.pattern.permute.xlu0 0
      %7311 = vperm.xlu0 %7310, %v7231
      %v7312 = vpop.permute.xlu0 %7311
      %7315 = vset.pattern.permute.xlu0 0
      %7316 = vperm.xlu0 %7315, %v7236
      %v7317 = vpop.permute.xlu0 %7316
      %7320 = vset.pattern.permute.xlu0 0
      %7321 = vperm.xlu0 %7320, %v7241
      %v7322 = vpop.permute.xlu0 %7321
      %7325 = vset.pattern.permute.xlu0 0
      %7326 = vperm.xlu0 %7325, %v7246
      %v7327 = vpop.permute.xlu0 %7326
      %7330 = vset.pattern.permute.xlu0 0
      %7331 = vperm.xlu0 %7330, %v7251
      %v7332 = vpop.permute.xlu0 %7331
      %7335 = vset.pattern.permute.xlu0 0
      %7336 = vperm.xlu0 %7335, %v7256
      %v7337 = vpop.permute.xlu0 %7336
      %7340 = vset.pattern.permute.xlu0 0
      %7341 = vperm.xlu0 %7340, %v7261
      %v7342 = vpop.permute.xlu0 %7341
      %7345 = vset.pattern.permute.xlu0 0
      %7346 = vperm.xlu0 %7345, %v7266
      %v7347 = vpop.permute.xlu0 %7346
      %7350 = vset.pattern.permute.xlu0 0
      %7351 = vperm.xlu0 %7350, %v7271
      %v7352 = vpop.permute.xlu0 %7351
      %7355 = vset.pattern.permute.xlu0 0
      %7356 = vperm.xlu0 %7355, %v7276
      %v7357 = vpop.permute.xlu0 %7356
      %7360 = vset.pattern.permute.xlu0 0
      %7361 = vperm.xlu0 %7360, %v7281
      %v7362 = vpop.permute.xlu0 %7361
      %7365 = vset.pattern.permute.xlu0 0
      %7366 = vperm.xlu0 %7365, %v7286
      %v7367 = vpop.permute.xlu0 %7366
      %7370 = vset.pattern.permute.xlu0 0
      %7371 = vperm.xlu0 %7370, %v7291
      %v7372 = vpop.permute.xlu0 %7371
      %7375 = vset.pattern.permute.xlu0 0
      %7376 = vperm.xlu0 %7375, %v7296
      %v7377 = vpop.permute.xlu0 %7376
      %7380 = vset.pattern.permute.xlu0 0
      %7381 = vperm.xlu0 %7380, %v7301
      %v7382 = vpop.permute.xlu0 %7381
      %v7384 = vsub.f32 %v7078, %v7307
      %v7385 = vsub.f32 %v7079, %v7312
      %v7386 = vsub.f32 %v7080, %v7317
      %v7387 = vsub.f32 %v7081, %v7322
      %v7388 = vsub.f32 %v7082, %v7327
      %v7389 = vsub.f32 %v7083, %v7332
      %v7390 = vsub.f32 %v7084, %v7337
      %v7391 = vsub.f32 %v7085, %v7342
      %v7392 = vsub.f32 %v7086, %v7347
      %v7393 = vsub.f32 %v7087, %v7352
      %v7394 = vsub.f32 %v7088, %v7357
      %v7395 = vsub.f32 %v7089, %v7362
      %v7396 = vsub.f32 %v7090, %v7367
      %v7397 = vsub.f32 %v7091, %v7372
      %v7398 = vsub.f32 %v7092, %v7377
      %v7399 = vsub.f32 %v7093, %v7382
      %v7400 = vmul.f32 %v7384, %v7384
      %v7401 = vmul.f32 %v7385, %v7385
      %v7402 = vmul.f32 %v7386, %v7386
      %v7403 = vmul.f32 %v7387, %v7387
      %v7404 = vmul.f32 %v7388, %v7388
      %v7405 = vmul.f32 %v7389, %v7389
      %v7406 = vmul.f32 %v7390, %v7390
      %v7407 = vmul.f32 %v7391, %v7391
      %v7408 = vmul.f32 %v7392, %v7392
      %v7409 = vmul.f32 %v7393, %v7393
      %v7410 = vmul.f32 %v7394, %v7394
      %v7411 = vmul.f32 %v7395, %v7395
      %v7412 = vmul.f32 %v7396, %v7396
      %v7413 = vmul.f32 %v7397, %v7397
      %v7414 = vmul.f32 %v7398, %v7398
      %v7415 = vmul.f32 %v7399, %v7399
      %v7416 = vsel %vm7110, %v7400, 0.0
      %7417 = vadd.xlane.f32.xlu0 %v7416
      %v7418 = vpop.xlane.xlu0 %7417
      %v7419 = vsel %vm7110, %v7401, 0.0
      %7420 = vadd.xlane.f32.xlu0 %v7419
      %v7421 = vpop.xlane.xlu0 %7420
      %v7422 = vsel %vm7110, %v7402, 0.0
      %7423 = vadd.xlane.f32.xlu0 %v7422
      %v7424 = vpop.xlane.xlu0 %7423
      %v7425 = vsel %vm7110, %v7403, 0.0
      %7426 = vadd.xlane.f32.xlu0 %v7425
      %v7427 = vpop.xlane.xlu0 %7426
      %v7428 = vsel %vm7110, %v7404, 0.0
      %7429 = vadd.xlane.f32.xlu0 %v7428
      %v7430 = vpop.xlane.xlu0 %7429
      %v7431 = vsel %vm7110, %v7405, 0.0
      %7432 = vadd.xlane.f32.xlu0 %v7431
      %v7433 = vpop.xlane.xlu0 %7432
      %v7434 = vsel %vm7110, %v7406, 0.0
      %7435 = vadd.xlane.f32.xlu0 %v7434
      %v7436 = vpop.xlane.xlu0 %7435
      %v7437 = vsel %vm7110, %v7407, 0.0
      %7438 = vadd.xlane.f32.xlu0 %v7437
      %v7439 = vpop.xlane.xlu0 %7438
      %v7440 = vsel %vm7110, %v7408, 0.0
      %7441 = vadd.xlane.f32.xlu0 %v7440
      %v7442 = vpop.xlane.xlu0 %7441
      %v7443 = vsel %vm7110, %v7409, 0.0
      %7444 = vadd.xlane.f32.xlu0 %v7443
      %v7445 = vpop.xlane.xlu0 %7444
      %v7446 = vsel %vm7110, %v7410, 0.0
      %7447 = vadd.xlane.f32.xlu0 %v7446
      %v7448 = vpop.xlane.xlu0 %7447
      %v7449 = vsel %vm7110, %v7411, 0.0
      %7450 = vadd.xlane.f32.xlu0 %v7449
      %v7451 = vpop.xlane.xlu0 %7450
      %v7452 = vsel %vm7110, %v7412, 0.0
      %7453 = vadd.xlane.f32.xlu0 %v7452
      %v7454 = vpop.xlane.xlu0 %7453
      %v7455 = vsel %vm7110, %v7413, 0.0
      %7456 = vadd.xlane.f32.xlu0 %v7455
      %v7457 = vpop.xlane.xlu0 %7456
      %v7458 = vsel %vm7110, %v7414, 0.0
      %7459 = vadd.xlane.f32.xlu0 %v7458
      %v7460 = vpop.xlane.xlu0 %7459
      %v7461 = vsel %vm7110, %v7415, 0.0
      %7462 = vadd.xlane.f32.xlu0 %v7461
      %v7463 = vpop.xlane.xlu0 %7462
      %7464 = vmatprep.subr.mxu0 0.0
      %7465 = vmatpush1.msra.mxu0 %v7418
      %7466 = vmatprep.subr.mxu0 0.0
      %7467 = vmatpush1.msra.mxu0 %v7421
      %7468 = vmatprep.subr.mxu0 0.0
      %7469 = vmatpush1.msra.mxu0 %v7424
      %7470 = vmatprep.subr.mxu0 0.0
      %7471 = vmatpush1.msra.mxu0 %v7427
      %7472 = vmatprep.subr.mxu0 0.0
      %7473 = vmatpush1.msra.mxu0 %v7430
      %7474 = vmatprep.subr.mxu0 0.0
      %7475 = vmatpush1.msra.mxu0 %v7433
      %7476 = vmatprep.subr.mxu0 0.0
      %7477 = vmatpush1.msra.mxu0 %v7436
      %7478 = vmatprep.subr.mxu0 0.0
      %7479 = vmatpush1.msra.mxu0 %v7439
      %7480 = vmatprep.subr.mxu0 0.0
      %7481 = vmatpush1.msra.mxu0 %v7442
      %7482 = vmatprep.subr.mxu0 0.0
      %7483 = vmatpush1.msra.mxu0 %v7445
      %7484 = vmatprep.subr.mxu0 0.0
      %7485 = vmatpush1.msra.mxu0 %v7448
      %7486 = vmatprep.subr.mxu0 0.0
      %7487 = vmatpush1.msra.mxu0 %v7451
      %7488 = vmatprep.subr.mxu0 0.0
      %7489 = vmatpush1.msra.mxu0 %v7454
      %7490 = vmatprep.subr.mxu0 0.0
      %7491 = vmatpush1.msra.mxu0 %v7457
      %7492 = vmatprep.subr.mxu0 0.0
      %7493 = vmatpush1.msra.mxu0 %v7460
      %7494 = vmatprep.subr.mxu0 0.0
      %7495 = vmatpush1.msra.mxu0 %v7463
      %7496 = vmatprep.subr.mxu0 0.0
      %7497 = vmatpush1.msra.mxu0 0.0
      %7498 = vmatprep.subr.mxu0 0.0
      %7499 = vmatpush1.msra.mxu0 0.0
      %7500 = vmatprep.subr.mxu0 0.0
      %7501 = vmatpush1.msra.mxu0 0.0
      %7502 = vmatprep.subr.mxu0 0.0
      %7503 = vmatpush1.msra.mxu0 0.0
      %7504 = vmatprep.subr.mxu0 0.0
      %7505 = vmatpush1.msra.mxu0 0.0
      %7506 = vmatprep.subr.mxu0 0.0
      %7507 = vmatpush1.msra.mxu0 0.0
      %7508 = vmatprep.subr.mxu0 0.0
      %7509 = vmatpush1.msra.mxu0 0.0
      %7510 = vmatprep.subr.mxu0 0.0
      %7511 = vmatpush1.msra.mxu0 0.0
      %7512 = vmatprep.subr.mxu0 0.0
      %7513 = vmatpush1.msra.mxu0 0.0
      %7514 = vmatprep.subr.mxu0 0.0
      %7515 = vmatpush1.msra.mxu0 0.0
      %7516 = vmatprep.subr.mxu0 0.0
      %7517 = vmatpush1.msra.mxu0 0.0
      %7518 = vmatprep.subr.mxu0 0.0
      %7519 = vmatpush1.msra.mxu0 0.0
      %7520 = vmatprep.subr.mxu0 0.0
      %7521 = vmatpush1.msra.mxu0 0.0
      %7522 = vmatprep.subr.mxu0 0.0
      %7523 = vmatpush1.msra.mxu0 0.0
      %7524 = vmatprep.subr.mxu0 0.0
      %7525 = vmatpush1.msra.mxu0 0.0
      %7526 = vmatprep.subr.mxu0 0.0
      %7527 = vmatpush1.msra.mxu0 0.0
      %7528 = vmatprep.mubr.f32.mxu0 0.0
      %7529 = vmatmul.mubr.f32.gmra.mrb[0].mxu0 %v7094
      %v7530 = vpop.f32.mrb[0].mxu0
      %v7531 = vadd.f32 1e-05, %v7530
      %v7532 = vpop.f32.mrb[0].mxu0
      %7533 = vmatprep.mubr.f32.mxu0 0.0
      %7534 = vmatmul.mubr.f32.gmra.mrb[0].mxu0 %v7095
      %v7535 = vpop.f32.mrb[0].mxu0
      %v7536 = vadd.f32 1e-05, %v7535
      %v7537 = vpop.f32.mrb[0].mxu0
      %7538 = vmatprep.mubr.f32.mxu0 0.0
      %7539 = vmatmul.mubr.f32.gmra.mrb[0].mxu0 %v7096
      %v7540 = vpop.f32.mrb[0].mxu0
      %v7541 = vadd.f32 1e-05, %v7540
      %v7542 = vpop.f32.mrb[0].mxu0
      %7543 = vmatprep.mubr.f32.mxu0 0.0
      %7544 = vmatmul.mubr.f32.gmra.mrb[0].mxu0 %v7097
      %v7545 = vpop.f32.mrb[0].mxu0
      %v7546 = vadd.f32 1e-05, %v7545
      %v7547 = vpop.f32.mrb[0].mxu0
      %7548 = vmatprep.mubr.f32.mxu0 0.0
      %7549 = vmatmul.mubr.f32.gmra.mrb[0].mxu0 %v7098
      %v7550 = vpop.f32.mrb[0].mxu0
      %v7551 = vadd.f32 1e-05, %v7550
      %v7552 = vpop.f32.mrb[0].mxu0
      %7553 = vmatprep.mubr.f32.mxu0 0.0
      %7554 = vmatmul.mubr.f32.gmra.mrb[0].mxu0 %v7099
      %v7555 = vpop.f32.mrb[0].mxu0
      %v7556 = vadd.f32 1e-05, %v7555
      %v7557 = vpop.f32.mrb[0].mxu0
      %7558 = vmatprep.mubr.f32.mxu0 0.0
      %7559 = vmatmul.mubr.f32.gmra.mrb[0].mxu0 %v7100
      %v7560 = vpop.f32.mrb[0].mxu0
      %v7561 = vadd.f32 1e-05, %v7560
      %v7562 = vpop.f32.mrb[0].mxu0
      %7563 = vmatprep.mubr.f32.mxu0 0.0
      %7564 = vmatmul.mubr.f32.gmra.mrb[0].mxu0 %v7101
      %v7565 = vpop.f32.mrb[0].mxu0
      %v7566 = vadd.f32 1e-05, %v7565
      %v7567 = vpop.f32.mrb[0].mxu0
      %7568 = vmatprep.mubr.f32.mxu0 0.0
      %7569 = vmatmul.mubr.f32.gmra.mrb[0].mxu0 %v7102
      %v7570 = vpop.f32.mrb[0].mxu0
      %v7571 = vadd.f32 1e-05, %v7570
      %v7572 = vpop.f32.mrb[0].mxu0
      %7573 = vmatprep.mubr.f32.mxu0 0.0
      %7574 = vmatmul.mubr.f32.gmra.mrb[0].mxu0 %v7103
      %v7575 = vpop.f32.mrb[0].mxu0
      %v7576 = vadd.f32 1e-05, %v7575
      %v7577 = vpop.f32.mrb[0].mxu0
      %7578 = vmatprep.mubr.f32.mxu0 0.0
      %7579 = vmatmul.mubr.f32.gmra.mrb[0].mxu0 %v7104
      %v7580 = vpop.f32.mrb[0].mxu0
      %v7581 = vadd.f32 1e-05, %v7580
      %v7582 = vpop.f32.mrb[0].mxu0
      %7583 = vmatprep.mubr.f32.mxu0 0.0
      %7584 = vmatmul.mubr.f32.gmra.mrb[0].mxu0 %v7105
      %v7585 = vpop.f32.mrb[0].mxu0
      %v7586 = vadd.f32 1e-05, %v7585
      %v7587 = vpop.f32.mrb[0].mxu0
      %7588 = vmatprep.mubr.f32.mxu0 0.0
      %7589 = vmatmul.mubr.f32.gmra.mrb[0].mxu0 %v7106
      %v7590 = vpop.f32.mrb[0].mxu0
      %v7591 = vadd.f32 1e-05, %v7590
      %v7592 = vpop.f32.mrb[0].mxu0
      %7593 = vmatprep.mubr.f32.mxu0 0.0
      %7594 = vmatmul.mubr.f32.gmra.mrb[0].mxu0 %v7107
      %v7595 = vpop.f32.mrb[0].mxu0
      %v7596 = vadd.f32 1e-05, %v7595
      %v7597 = vpop.f32.mrb[0].mxu0
      %7598 = vmatprep.mubr.f32.mxu0 0.0
      %7599 = vmatmul.mubr.f32.gmra.mrb[0].mxu0 %v7108
      %v7600 = vpop.f32.mrb[0].mxu0
      %v7601 = vadd.f32 1e-05, %v7600
      %v7602 = vpop.f32.mrb[0].mxu0
      %7603 = vmatprep.mubr.f32.mxu0 0.0
      %7604 = vmatmul.mubr.f32.gmra.mrb[0].mxu0 %v7109
      %v7605 = vpop.f32.mrb[0].mxu0
      %v7606 = vadd.f32 1e-05, %v7605
      %v7607 = vpop.f32.mrb[0].mxu0
      %7608 = vdwg.mxu0
      %v7609 = vrsqrt.pop %v7531
      %v7610 = vrsqrt.pop %v7536
      %v7611 = vrsqrt.pop %v7541
      %v7612 = vrsqrt.pop %v7546
      %v7613 = vrsqrt.pop %v7551
      %v7614 = vrsqrt.pop %v7556
      %v7615 = vrsqrt.pop %v7561
      %v7616 = vrsqrt.pop %v7566
      %v7617 = vrsqrt.pop %v7571
      %v7618 = vrsqrt.pop %v7576
      %v7619 = vrsqrt.pop %v7581
      %v7620 = vrsqrt.pop %v7586
      %v7621 = vrsqrt.pop %v7591
      %v7622 = vrsqrt.pop %v7596
      %v7623 = vrsqrt.pop %v7601
      %v7624 = vrsqrt.pop %v7606
      %7626 = vset.pattern.permute.xlu0 0
      %7627 = vperm.xlu0 %7626, %v7609
      %v7628 = vpop.permute.xlu0 %7627
      %7631 = vset.pattern.permute.xlu0 0
      %7632 = vperm.xlu0 %7631, %v7610
      %v7633 = vpop.permute.xlu0 %7632
      %7636 = vset.pattern.permute.xlu0 0
      %7637 = vperm.xlu0 %7636, %v7611
      %v7638 = vpop.permute.xlu0 %7637
      %7641 = vset.pattern.permute.xlu0 0
      %7642 = vperm.xlu0 %7641, %v7612
      %v7643 = vpop.permute.xlu0 %7642
      %7646 = vset.pattern.permute.xlu0 0
      %7647 = vperm.xlu0 %7646, %v7613
      %v7648 = vpop.permute.xlu0 %7647
      %7651 = vset.pattern.permute.xlu0 0
      %7652 = vperm.xlu0 %7651, %v7614
      %v7653 = vpop.permute.xlu0 %7652
      %7656 = vset.pattern.permute.xlu0 0
      %7657 = vperm.xlu0 %7656, %v7615
      %v7658 = vpop.permute.xlu0 %7657
      %7661 = vset.pattern.permute.xlu0 0
      %7662 = vperm.xlu0 %7661, %v7616
      %v7663 = vpop.permute.xlu0 %7662
      %7666 = vset.pattern.permute.xlu0 0
      %7667 = vperm.xlu0 %7666, %v7617
      %v7668 = vpop.permute.xlu0 %7667
      %7671 = vset.pattern.permute.xlu0 0
      %7672 = vperm.xlu0 %7671, %v7618
      %v7673 = vpop.permute.xlu0 %7672
      %7676 = vset.pattern.permute.xlu0 0
      %7677 = vperm.xlu0 %7676, %v7619
      %v7678 = vpop.permute.xlu0 %7677
      %7681 = vset.pattern.permute.xlu0 0
      %7682 = vperm.xlu0 %7681, %v7620
      %v7683 = vpop.permute.xlu0 %7682
      %7686 = vset.pattern.permute.xlu0 0
      %7687 = vperm.xlu0 %7686, %v7621
      %v7688 = vpop.permute.xlu0 %7687
      %7691 = vset.pattern.permute.xlu0 0
      %7692 = vperm.xlu0 %7691, %v7622
      %v7693 = vpop.permute.xlu0 %7692
      %7696 = vset.pattern.permute.xlu0 0
      %7697 = vperm.xlu0 %7696, %v7623
      %v7698 = vpop.permute.xlu0 %7697
      %7701 = vset.pattern.permute.xlu0 0
      %7702 = vperm.xlu0 %7701, %v7624
      %v7703 = vpop.permute.xlu0 %7702
      %v7705 = vmul.f32 %v7384, %v7628
      %v7706 = vmul.f32 %v7385, %v7633
      %v7707 = vmul.f32 %v7386, %v7638
      %v7708 = vmul.f32 %v7387, %v7643
      %v7709 = vmul.f32 %v7388, %v7648
      %v7710 = vmul.f32 %v7389, %v7653
      %v7711 = vmul.f32 %v7390, %v7658
      %v7712 = vmul.f32 %v7391, %v7663
      %v7713 = vmul.f32 %v7392, %v7668
      %v7714 = vmul.f32 %v7393, %v7673
      %v7715 = vmul.f32 %v7394, %v7678
      %v7716 = vmul.f32 %v7395, %v7683
      %v7717 = vmul.f32 %v7396, %v7688
      %v7718 = vmul.f32 %v7397, %v7693
      %v7719 = vmul.f32 %v7398, %v7698
      %v7720 = vmul.f32 %v7399, %v7703
      %vm7721 = vcmp.ge.f32.partialorder %v7705, 0.0
      %vm7722 = vcmp.ge.f32.partialorder %v7706, 0.0
      %vm7723 = vcmp.ge.f32.partialorder %v7707, 0.0
      %vm7724 = vcmp.ge.f32.partialorder %v7708, 0.0
      %vm7725 = vcmp.ge.f32.partialorder %v7709, 0.0
      %vm7726 = vcmp.ge.f32.partialorder %v7710, 0.0
      %vm7727 = vcmp.ge.f32.partialorder %v7711, 0.0
      %vm7728 = vcmp.ge.f32.partialorder %v7712, 0.0
      %vm7729 = vcmp.ge.f32.partialorder %v7713, 0.0
      %vm7730 = vcmp.ge.f32.partialorder %v7714, 0.0
      %vm7731 = vcmp.ge.f32.partialorder %v7715, 0.0
      %vm7732 = vcmp.ge.f32.partialorder %v7716, 0.0
      %vm7733 = vcmp.ge.f32.partialorder %v7717, 0.0
      %vm7734 = vcmp.ge.f32.partialorder %v7718, 0.0
      %vm7735 = vcmp.ge.f32.partialorder %v7719, 0.0
      %vm7736 = vcmp.ge.f32.partialorder %v7720, 0.0
      %v7737 = vmul.f32 %v7705, 0.2
      %v7738 = vmul.f32 %v7706, 0.2
      %v7739 = vmul.f32 %v7707, 0.2
      %v7740 = vmul.f32 %v7708, 0.2
      %v7741 = vmul.f32 %v7709, 0.2
      %v7742 = vmul.f32 %v7710, 0.2
      %v7743 = vmul.f32 %v7711, 0.2
      %v7744 = vmul.f32 %v7712, 0.2
      %v7745 = vmul.f32 %v7713, 0.2
      %v7746 = vmul.f32 %v7714, 0.2
      %v7747 = vmul.f32 %v7715, 0.2
      %v7748 = vmul.f32 %v7716, 0.2
      %v7749 = vmul.f32 %v7717, 0.2
      %v7750 = vmul.f32 %v7718, 0.2
      %v7751 = vmul.f32 %v7719, 0.2
      %v7752 = vmul.f32 %v7720, 0.2
      %v7753 = vsel %vm7721, %v7705, %v7737
      %v7754 = vsel %vm7722, %v7706, %v7738
      %v7755 = vsel %vm7723, %v7707, %v7739
      %v7756 = vsel %vm7724, %v7708, %v7740
      %v7757 = vsel %vm7725, %v7709, %v7741
      %v7758 = vsel %vm7726, %v7710, %v7742
      %v7759 = vsel %vm7727, %v7711, %v7743
      %v7760 = vsel %vm7728, %v7712, %v7744
      %v7761 = vsel %vm7729, %v7713, %v7745
      %v7762 = vsel %vm7730, %v7714, %v7746
      %v7763 = vsel %vm7731, %v7715, %v7747
      %v7764 = vsel %vm7732, %v7716, %v7748
      %v7765 = vsel %vm7733, %v7717, %v7749
      %v7766 = vsel %vm7734, %v7718, %v7750
      %v7767 = vsel %vm7735, %v7719, %v7751
      %v7768 = vsel %vm7736, %v7720, %v7752
      %v7769 = vpack.c.bf16 %v7754, %v7753
      %v7770 = vpack.c.bf16 %v7756, %v7755
      %v7771 = vpack.c.bf16 %v7758, %v7757
      %v7772 = vpack.c.bf16 %v7760, %v7759
      %v7773 = vpack.c.bf16 %v7762, %v7761
      %v7774 = vpack.c.bf16 %v7764, %v7763
      %v7775 = vpack.c.bf16 %v7766, %v7765
      %v7776 = vpack.c.bf16 %v7768, %v7767
      %v7777 = vld [vmem:[%s13] sm:$0x3]
      %v7779 = vsel %vm7110, %v7769, 0
      %v7782 = vsel %vm7110, %v7770, 0
      %v7785 = vsel %vm7110, %v7771, 0
      %v7788 = vsel %vm7110, %v7772, 0
      %v7791 = vsel %vm7110, %v7773, 0
      %v7794 = vsel %vm7110, %v7774, 0
      %v7797 = vsel %vm7110, %v7775, 0
      %v7800 = vsel %vm7110, %v7776, 0
      %vm7802 = vcmask 1041408
      %v7804 = vsel %vm7802, %v7777, 0
      %7806 = vmatprep.subr.bf16.mxu0 0
      %7807 = vmatpush1.bf16.msra.mxu0 %v7804
      %7808 = vmatprep.subr.bf16.mxu0 0
      %7809 = vmatpush1.bf16.msra.mxu0 0
      %7810 = vmatprep.subr.bf16.mxu0 0
      %7811 = vmatpush1.bf16.msra.mxu0 0
      %7812 = vmatprep.subr.bf16.mxu0 0
      %7813 = vmatpush1.bf16.msra.mxu0 0
      %7814 = vmatprep.subr.bf16.mxu0 0
      %7815 = vmatpush1.bf16.msra.mxu0 0
      %7816 = vmatprep.subr.bf16.mxu0 0
      %7817 = vmatpush1.bf16.msra.mxu0 0
      %7818 = vmatprep.subr.bf16.mxu0 0
      %7819 = vmatpush1.bf16.msra.mxu0 0
      %7820 = vmatprep.subr.bf16.mxu0 0
      %7821 = vmatpush1.bf16.msra.mxu0 0
      %7822 = vmatprep.subr.bf16.mxu0 0
      %7823 = vmatpush1.bf16.msra.mxu0 0
      %7824 = vmatprep.subr.bf16.mxu0 0
      %7825 = vmatpush1.bf16.msra.mxu0 0
      %7826 = vmatprep.subr.bf16.mxu0 0
      %7827 = vmatpush1.bf16.msra.mxu0 0
      %7828 = vmatprep.subr.bf16.mxu0 0
      %7829 = vmatpush1.bf16.msra.mxu0 0
      %7830 = vmatprep.subr.bf16.mxu0 0
      %7831 = vmatpush1.bf16.msra.mxu0 0
      %7832 = vmatprep.subr.bf16.mxu0 0
      %7833 = vmatpush1.bf16.msra.mxu0 0
      %7834 = vmatprep.subr.bf16.mxu0 0
      %7835 = vmatpush1.bf16.msra.mxu0 0
      %7836 = vmatprep.subr.bf16.mxu0 0
      %7837 = vmatpush1.bf16.msra.mxu0 0
      %7838 = vmatprep.mubr.bf16.mxu0 0
      %7839 = vmatmul.mubr.bf16.gmra.mrb[0].mxu0 %v7779
      %v7840 = vpop.f32.mrb[0].mxu0
      %v7841 = vadd.f32 0.0, %v7840
      %v7842 = vpop.f32.mrb[0].mxu0
      %v7843 = vpop.f32.mrb[0].mxu0
      %v7844 = vadd.f32 0.0, %v7843
      %v7845 = vpop.f32.mrb[0].mxu0
      %7846 = vmatprep.mubr.bf16.mxu0 0
      %7847 = vmatmul.mubr.bf16.gmra.mrb[0].mxu0 %v7782
      %v7848 = vpop.f32.mrb[0].mxu0
      %v7849 = vadd.f32 0.0, %v7848
      %v7850 = vpop.f32.mrb[0].mxu0
      %v7851 = vpop.f32.mrb[0].mxu0
      %v7852 = vadd.f32 0.0, %v7851
      %v7853 = vpop.f32.mrb[0].mxu0
      %7854 = vmatprep.mubr.bf16.mxu0 0
      %7855 = vmatmul.mubr.bf16.gmra.mrb[0].mxu0 %v7785
      %v7856 = vpop.f32.mrb[0].mxu0
      %v7857 = vadd.f32 0.0, %v7856
      %v7858 = vpop.f32.mrb[0].mxu0
      %v7859 = vpop.f32.mrb[0].mxu0
      %v7860 = vadd.f32 0.0, %v7859
      %v7861 = vpop.f32.mrb[0].mxu0
      %7862 = vmatprep.mubr.bf16.mxu0 0
      %7863 = vmatmul.mubr.bf16.gmra.mrb[0].mxu0 %v7788
      %v7864 = vpop.f32.mrb[0].mxu0
      %v7865 = vadd.f32 0.0, %v7864
      %v7866 = vpop.f32.mrb[0].mxu0
      %v7867 = vpop.f32.mrb[0].mxu0
      %v7868 = vadd.f32 0.0, %v7867
      %v7869 = vpop.f32.mrb[0].mxu0
      %7870 = vmatprep.mubr.bf16.mxu0 0
      %7871 = vmatmul.mubr.bf16.gmra.mrb[0].mxu0 %v7791
      %v7872 = vpop.f32.mrb[0].mxu0
      %v7873 = vadd.f32 0.0, %v7872
      %v7874 = vpop.f32.mrb[0].mxu0
      %v7875 = vpop.f32.mrb[0].mxu0
      %v7876 = vadd.f32 0.0, %v7875
      %v7877 = vpop.f32.mrb[0].mxu0
      %7878 = vmatprep.mubr.bf16.mxu0 0
      %7879 = vmatmul.mubr.bf16.gmra.mrb[0].mxu0 %v7794
      %v7880 = vpop.f32.mrb[0].mxu0
      %v7881 = vadd.f32 0.0, %v7880
      %v7882 = vpop.f32.mrb[0].mxu0
      %v7883 = vpop.f32.mrb[0].mxu0
      %v7884 = vadd.f32 0.0, %v7883
      %v7885 = vpop.f32.mrb[0].mxu0
      %7886 = vmatprep.mubr.bf16.mxu0 0
      %7887 = vmatmul.mubr.bf16.gmra.mrb[0].mxu0 %v7797
      %v7888 = vpop.f32.mrb[0].mxu0
      %v7889 = vadd.f32 0.0, %v7888
      %v7890 = vpop.f32.mrb[0].mxu0
      %v7891 = vpop.f32.mrb[0].mxu0
      %v7892 = vadd.f32 0.0, %v7891
      %v7893 = vpop.f32.mrb[0].mxu0
      %7894 = vmatprep.mubr.bf16.mxu0 0
      %7895 = vmatmul.mubr.bf16.gmra.mrb[0].mxu0 %v7800
      %v7896 = vpop.f32.mrb[0].mxu0
      %v7897 = vadd.f32 0.0, %v7896
      %v7898 = vpop.f32.mrb[0].mxu0
      %v7899 = vpop.f32.mrb[0].mxu0
      %v7900 = vadd.f32 0.0, %v7899
      %v7901 = vpop.f32.mrb[0].mxu0
      %7902 = vdwg.mxu0
      %v7903 = vpack.c.bf16 %v7844, %v7841
      %v7904 = vpack.c.bf16 %v7852, %v7849
      %v7905 = vpack.c.bf16 %v7860, %v7857
      %v7906 = vpack.c.bf16 %v7868, %v7865
      %v7907 = vpack.c.bf16 %v7876, %v7873
      %v7908 = vpack.c.bf16 %v7884, %v7881
      %v7909 = vpack.c.bf16 %v7892, %v7889
      %v7910 = vpack.c.bf16 %v7900, %v7897
      %v7911 = vld [vmem:[%s12] sm:$0x1]
      %s7912 = scalar_lea.vmem %s13, 2
      %v7913 = vld [vmem:[%s7912] sm:$0x3]
      %v7915 = vsel %vm7802, %v7913, 0
      %7917 = vmatprep.subr.bf16.mxu0 0
      %7918 = vmatpush1.bf16.msra.mxu0 %v7915
      %7919 = vmatprep.subr.bf16.mxu0 0
      %7920 = vmatpush1.bf16.msra.mxu0 0
      %7921 = vmatprep.subr.bf16.mxu0 0
      %7922 = vmatpush1.bf16.msra.mxu0 0
      %7923 = vmatprep.subr.bf16.mxu0 0
      %7924 = vmatpush1.bf16.msra.mxu0 0
      %7925 = vmatprep.subr.bf16.mxu0 0
      %7926 = vmatpush1.bf16.msra.mxu0 0
      %7927 = vmatprep.subr.bf16.mxu0 0
      %7928 = vmatpush1.bf16.msra.mxu0 0
      %7929 = vmatprep.subr.bf16.mxu0 0
      %7930 = vmatpush1.bf16.msra.mxu0 0
      %7931 = vmatprep.subr.bf16.mxu0 0
      %7932 = vmatpush1.bf16.msra.mxu0 0
      %7933 = vmatprep.subr.bf16.mxu0 0
      %7934 = vmatpush1.bf16.msra.mxu0 0
      %7935 = vmatprep.subr.bf16.mxu0 0
      %7936 = vmatpush1.bf16.msra.mxu0 0
      %7937 = vmatprep.subr.bf16.mxu0 0
      %7938 = vmatpush1.bf16.msra.mxu0 0
      %7939 = vmatprep.subr.bf16.mxu0 0
      %7940 = vmatpush1.bf16.msra.mxu0 0
      %7941 = vmatprep.subr.bf16.mxu0 0
      %7942 = vmatpush1.bf16.msra.mxu0 0
      %7943 = vmatprep.subr.bf16.mxu0 0
      %7944 = vmatpush1.bf16.msra.mxu0 0
      %7945 = vmatprep.subr.bf16.mxu0 0
      %7946 = vmatpush1.bf16.msra.mxu0 0
      %7947 = vmatprep.subr.bf16.mxu0 0
      %7948 = vmatpush1.bf16.msra.mxu0 0
      %7949 = vmatprep.mubr.bf16.mxu0 0
      %7950 = vmatmul.mubr.bf16.gmra.mrb[0].mxu0 %v7779
      %v7951 = vpop.f32.mrb[0].mxu0
      %v7952 = vadd.f32 0.0, %v7951
      %v7953 = vpop.f32.mrb[0].mxu0
      %v7954 = vpop.f32.mrb[0].mxu0
      %v7955 = vadd.f32 0.0, %v7954
      %v7956 = vpop.f32.mrb[0].mxu0
      %7957 = vmatprep.mubr.bf16.mxu0 0
      %7958 = vmatmul.mubr.bf16.gmra.mrb[0].mxu0 %v7782
      %v7959 = vpop.f32.mrb[0].mxu0
      %v7960 = vadd.f32 0.0, %v7959
      %v7961 = vpop.f32.mrb[0].mxu0
      %v7962 = vpop.f32.mrb[0].mxu0
      %v7963 = vadd.f32 0.0, %v7962
      %v7964 = vpop.f32.mrb[0].mxu0
      %7965 = vmatprep.mubr.bf16.mxu0 0
      %7966 = vmatmul.mubr.bf16.gmra.mrb[0].mxu0 %v7785
      %v7967 = vpop.f32.mrb[0].mxu0
      %v7968 = vadd.f32 0.0, %v7967
      %v7969 = vpop.f32.mrb[0].mxu0
      %v7970 = vpop.f32.mrb[0].mxu0
      %v7971 = vadd.f32 0.0, %v7970
      %v7972 = vpop.f32.mrb[0].mxu0
      %7973 = vmatprep.mubr.bf16.mxu0 0
      %7974 = vmatmul.mubr.bf16.gmra.mrb[0].mxu0 %v7788
      %v7975 = vpop.f32.mrb[0].mxu0
      %v7976 = vadd.f32 0.0, %v7975
      %v7977 = vpop.f32.mrb[0].mxu0
      %v7978 = vpop.f32.mrb[0].mxu0
      %v7979 = vadd.f32 0.0, %v7978
      %v7980 = vpop.f32.mrb[0].mxu0
      %7981 = vmatprep.mubr.bf16.mxu0 0
      %7982 = vmatmul.mubr.bf16.gmra.mrb[0].mxu0 %v7791
      %v7983 = vpop.f32.mrb[0].mxu0
      %v7984 = vadd.f32 0.0, %v7983
      %v7985 = vpop.f32.mrb[0].mxu0
      %v7986 = vpop.f32.mrb[0].mxu0
      %v7987 = vadd.f32 0.0, %v7986
      %v7988 = vpop.f32.mrb[0].mxu0
      %7989 = vmatprep.mubr.bf16.mxu0 0
      %7990 = vmatmul.mubr.bf16.gmra.mrb[0].mxu0 %v7794
      %v7991 = vpop.f32.mrb[0].mxu0
      %v7992 = vadd.f32 0.0, %v7991
      %v7993 = vpop.f32.mrb[0].mxu0
      %v7994 = vpop.f32.mrb[0].mxu0
      %v7995 = vadd.f32 0.0, %v7994
      %v7996 = vpop.f32.mrb[0].mxu0
      %7997 = vmatprep.mubr.bf16.mxu0 0
      %7998 = vmatmul.mubr.bf16.gmra.mrb[0].mxu0 %v7797
      %v7999 = vpop.f32.mrb[0].mxu0
      %v8000 = vadd.f32 0.0, %v7999
      %v8001 = vpop.f32.mrb[0].mxu0
      %v8002 = vpop.f32.mrb[0].mxu0
      %v8003 = vadd.f32 0.0, %v8002
      %v8004 = vpop.f32.mrb[0].mxu0
      %8005 = vmatprep.mubr.bf16.mxu0 0
      %8006 = vmatmul.mubr.bf16.gmra.mrb[0].mxu0 %v7800
      %v8007 = vpop.f32.mrb[0].mxu0
      %v8008 = vadd.f32 0.0, %v8007
      %v8009 = vpop.f32.mrb[0].mxu0
      %v8010 = vpop.f32.mrb[0].mxu0
      %v8011 = vadd.f32 0.0, %v8010
      %v8012 = vpop.f32.mrb[0].mxu0
      %8013 = vdwg.mxu0
      %v8014 = vpack.c.bf16 %v7955, %v7952
      %v8015 = vpack.c.bf16 %v7963, %v7960
      %v8016 = vpack.c.bf16 %v7971, %v7968
      %v8017 = vpack.c.bf16 %v7979, %v7976
      %v8018 = vpack.c.bf16 %v7987, %v7984
      %v8019 = vpack.c.bf16 %v7995, %v7992
      %v8020 = vpack.c.bf16 %v8003, %v8000
      %v8021 = vpack.c.bf16 %v8011, %v8008
      %s8022 = scalar_lea.vmem %s12, 1
      %v8023 = vld [vmem:[%s8022] sm:$0x1]
      %8024 = vmatprep.subr.bf16.mxu0 0
      %8025 = vmatpush1.bf16.msra.mxu0 %v8014
      %8026 = vmatprep.subr.bf16.mxu0 0
      %8027 = vmatpush1.bf16.msra.mxu0 %v8015
      %8028 = vmatprep.subr.bf16.mxu0 0
      %8029 = vmatpush1.bf16.msra.mxu0 %v8016
      %8030 = vmatprep.subr.bf16.mxu0 0
      %8031 = vmatpush1.bf16.msra.mxu0 %v8017
      %8032 = vmatprep.subr.bf16.mxu0 0
      %8033 = vmatpush1.bf16.msra.mxu0 %v8018
      %8034 = vmatprep.subr.bf16.mxu0 0
      %8035 = vmatpush1.bf16.msra.mxu0 %v8019
      %8036 = vmatprep.subr.bf16.mxu0 0
      %8037 = vmatpush1.bf16.msra.mxu0 %v8020
      %8038 = vmatprep.subr.bf16.mxu0 0
      %8039 = vmatpush1.bf16.msra.mxu0 %v8021
      %8040 = vmatprep.subr.bf16.mxu0 0
      %8041 = vmatpush1.bf16.msra.mxu0 0
      %8042 = vmatprep.subr.bf16.mxu0 0
      %8043 = vmatpush1.bf16.msra.mxu0 0
      %8044 = vmatprep.subr.bf16.mxu0 0
      %8045 = vmatpush1.bf16.msra.mxu0 0
      %8046 = vmatprep.subr.bf16.mxu0 0
      %8047 = vmatpush1.bf16.msra.mxu0 0
      %8048 = vmatprep.subr.bf16.mxu0 0
      %8049 = vmatpush1.bf16.msra.mxu0 0
      %8050 = vmatprep.subr.bf16.mxu0 0
      %8051 = vmatpush1.bf16.msra.mxu0 0
      %8052 = vmatprep.subr.bf16.mxu0 0
      %8053 = vmatpush1.bf16.msra.mxu0 0
      %8054 = vmatprep.subr.bf16.mxu0 0
      %8055 = vmatpush1.bf16.msra.mxu0 0
      %8056 = vmatprep.mubr.bf16.mxu0 0
      %8057 = vmatmul.mubr.bf16.gmra.mrb[0].mxu0 %v8023
      %v8058 = vpop.f32.mrb[0].mxu0
      %v8059 = vadd.f32 0.0, %v8058
      %v8060 = vpop.f32.mrb[0].mxu0
      %v8061 = vpop.f32.mrb[0].mxu0
      %v8062 = vpop.f32.mrb[0].mxu0
      %8063 = vdwg.mxu0
      %8064 = vmatprep.subr.bf16.mxu0 0
      %8065 = vmatpush1.bf16.msra.mxu0 %v7903
      %8066 = vmatprep.subr.bf16.mxu0 0
      %8067 = vmatpush1.bf16.msra.mxu0 %v7904
      %8068 = vmatprep.subr.bf16.mxu0 0
      %8069 = vmatpush1.bf16.msra.mxu0 %v7905
      %8070 = vmatprep.subr.bf16.mxu0 0
      %8071 = vmatpush1.bf16.msra.mxu0 %v7906
      %8072 = vmatprep.subr.bf16.mxu0 0
      %8073 = vmatpush1.bf16.msra.mxu0 %v7907
      %8074 = vmatprep.subr.bf16.mxu0 0
      %8075 = vmatpush1.bf16.msra.mxu0 %v7908
      %8076 = vmatprep.subr.bf16.mxu0 0
      %8077 = vmatpush1.bf16.msra.mxu0 %v7909
      %8078 = vmatprep.subr.bf16.mxu0 0
      %8079 = vmatpush1.bf16.msra.mxu0 %v7910
      %8080 = vmatprep.subr.bf16.mxu0 0
      %8081 = vmatpush1.bf16.msra.mxu0 0
      %8082 = vmatprep.subr.bf16.mxu0 0
      %8083 = vmatpush1.bf16.msra.mxu0 0
      %8084 = vmatprep.subr.bf16.mxu0 0
      %8085 = vmatpush1.bf16.msra.mxu0 0
      %8086 = vmatprep.subr.bf16.mxu0 0
      %8087 = vmatpush1.bf16.msra.mxu0 0
      %8088 = vmatprep.subr.bf16.mxu0 0
      %8089 = vmatpush1.bf16.msra.mxu0 0
      %8090 = vmatprep.subr.bf16.mxu0 0
      %8091 = vmatpush1.bf16.msra.mxu0 0
      %8092 = vmatprep.subr.bf16.mxu0 0
      %8093 = vmatpush1.bf16.msra.mxu0 0
      %8094 = vmatprep.subr.bf16.mxu0 0
      %8095 = vmatpush1.bf16.msra.mxu0 0
      %8096 = vmatprep.mubr.bf16.mxu0 0
      %8097 = vmatmul.mubr.bf16.gmra.mrb[0].mxu0 %v7911
      %v8098 = vpop.f32.mrb[0].mxu0
      %v8099 = vadd.f32 %v8059, %v8098
      %v8100 = vpop.f32.mrb[0].mxu0
      %v8101 = vpop.f32.mrb[0].mxu0
      %v8102 = vpop.f32.mrb[0].mxu0
      %8103 = vdwg.mxu0
      %s8104 = scalar_lea.vmem %s13, 4
      %v8105 = vld [vmem:[%s8104] sm:$0x3]
      %v8107 = vsel %vm7802, %v8105, 0
      %8109 = vmatprep.subr.bf16.mxu0 0
      %8110 = vmatpush1.bf16.msra.mxu0 %v8107
      %8111 = vmatprep.subr.bf16.mxu0 0
      %8112 = vmatpush1.bf16.msra.mxu0 0
      %8113 = vmatprep.subr.bf16.mxu0 0
      %8114 = vmatpush1.bf16.msra.mxu0 0
      %8115 = vmatprep.subr.bf16.mxu0 0
      %8116 = vmatpush1.bf16.msra.mxu0 0
      %8117 = vmatprep.subr.bf16.mxu0 0
      %8118 = vmatpush1.bf16.msra.mxu0 0
      %8119 = vmatprep.subr.bf16.mxu0 0
      %8120 = vmatpush1.bf16.msra.mxu0 0
      %8121 = vmatprep.subr.bf16.mxu0 0
      %8122 = vmatpush1.bf16.msra.mxu0 0
      %8123 = vmatprep.subr.bf16.mxu0 0
      %8124 = vmatpush1.bf16.msra.mxu0 0
      %8125 = vmatprep.subr.bf16.mxu0 0
      %8126 = vmatpush1.bf16.msra.mxu0 0
      %8127 = vmatprep.subr.bf16.mxu0 0
      %8128 = vmatpush1.bf16.msra.mxu0 0
      %8129 = vmatprep.subr.bf16.mxu0 0
      %8130 = vmatpush1.bf16.msra.mxu0 0
      %8131 = vmatprep.subr.bf16.mxu0 0
      %8132 = vmatpush1.bf16.msra.mxu0 0
      %8133 = vmatprep.subr.bf16.mxu0 0
      %8134 = vmatpush1.bf16.msra.mxu0 0
      %8135 = vmatprep.subr.bf16.mxu0 0
      %8136 = vmatpush1.bf16.msra.mxu0 0
      %8137 = vmatprep.subr.bf16.mxu0 0
      %8138 = vmatpush1.bf16.msra.mxu0 0
      %8139 = vmatprep.subr.bf16.mxu0 0
      %8140 = vmatpush1.bf16.msra.mxu0 0
      %8141 = vmatprep.mubr.bf16.mxu0 0
      %8142 = vmatmul.mubr.bf16.gmra.mrb[0].mxu0 %v7779
      %v8143 = vpop.f32.mrb[0].mxu0
      %v8144 = vadd.f32 0.0, %v8143
      %v8145 = vpop.f32.mrb[0].mxu0
      %v8146 = vpop.f32.mrb[0].mxu0
      %v8147 = vadd.f32 0.0, %v8146
      %v8148 = vpop.f32.mrb[0].mxu0
      %8149 = vmatprep.mubr.bf16.mxu0 0
      %8150 = vmatmul.mubr.bf16.gmra.mrb[0].mxu0 %v7782
      %v8151 = vpop.f32.mrb[0].mxu0
      %v8152 = vadd.f32 0.0, %v8151
      %v8153 = vpop.f32.mrb[0].mxu0
      %v8154 = vpop.f32.mrb[0].mxu0
      %v8155 = vadd.f32 0.0, %v8154
      %v8156 = vpop.f32.mrb[0].mxu0
      %8157 = vmatprep.mubr.bf16.mxu0 0
      %8158 = vmatmul.mubr.bf16.gmra.mrb[0].mxu0 %v7785
      %v8159 = vpop.f32.mrb[0].mxu0
      %v8160 = vadd.f32 0.0, %v8159
      %v8161 = vpop.f32.mrb[0].mxu0
      %v8162 = vpop.f32.mrb[0].mxu0
      %v8163 = vadd.f32 0.0, %v8162
      %v8164 = vpop.f32.mrb[0].mxu0
      %8165 = vmatprep.mubr.bf16.mxu0 0
      %8166 = vmatmul.mubr.bf16.gmra.mrb[0].mxu0 %v7788
      %v8167 = vpop.f32.mrb[0].mxu0
      %v8168 = vadd.f32 0.0, %v8167
      %v8169 = vpop.f32.mrb[0].mxu0
      %v8170 = vpop.f32.mrb[0].mxu0
      %v8171 = vadd.f32 0.0, %v8170
      %v8172 = vpop.f32.mrb[0].mxu0
      %8173 = vmatprep.mubr.bf16.mxu0 0
      %8174 = vmatmul.mubr.bf16.gmra.mrb[0].mxu0 %v7791
      %v8175 = vpop.f32.mrb[0].mxu0
      %v8176 = vadd.f32 0.0, %v8175
      %v8177 = vpop.f32.mrb[0].mxu0
      %v8178 = vpop.f32.mrb[0].mxu0
      %v8179 = vadd.f32 0.0, %v8178
      %v8180 = vpop.f32.mrb[0].mxu0
      %8181 = vmatprep.mubr.bf16.mxu0 0
      %8182 = vmatmul.mubr.bf16.gmra.mrb[0].mxu0 %v7794
      %v8183 = vpop.f32.mrb[0].mxu0
      %v8184 = vadd.f32 0.0, %v8183
      %v8185 = vpop.f32.mrb[0].mxu0
      %v8186 = vpop.f32.mrb[0].mxu0
      %v8187 = vadd.f32 0.0, %v8186
      %v8188 = vpop.f32.mrb[0].mxu0
      %8189 = vmatprep.mubr.bf16.mxu0 0
      %8190 = vmatmul.mubr.bf16.gmra.mrb[0].mxu0 %v7797
      %v8191 = vpop.f32.mrb[0].mxu0
      %v8192 = vadd.f32 0.0, %v8191
      %v8193 = vpop.f32.mrb[0].mxu0
      %v8194 = vpop.f32.mrb[0].mxu0
      %v8195 = vadd.f32 0.0, %v8194
      %v8196 = vpop.f32.mrb[0].mxu0
      %8197 = vmatprep.mubr.bf16.mxu0 0
      %8198 = vmatmul.mubr.bf16.gmra.mrb[0].mxu0 %v7800
      %v8199 = vpop.f32.mrb[0].mxu0
      %v8200 = vadd.f32 0.0, %v8199
      %v8201 = vpop.f32.mrb[0].mxu0
      %v8202 = vpop.f32.mrb[0].mxu0
      %v8203 = vadd.f32 0.0, %v8202
      %v8204 = vpop.f32.mrb[0].mxu0
      %8205 = vdwg.mxu0
      %v8206 = vpack.c.bf16 %v8147, %v8144
      %v8207 = vpack.c.bf16 %v8155, %v8152
      %v8208 = vpack.c.bf16 %v8163, %v8160
      %v8209 = vpack.c.bf16 %v8171, %v8168
      %v8210 = vpack.c.bf16 %v8179, %v8176
      %v8211 = vpack.c.bf16 %v8187, %v8184
      %v8212 = vpack.c.bf16 %v8195, %v8192
      %v8213 = vpack.c.bf16 %v8203, %v8200
      %s8214 = scalar_lea.vmem %s12, 2
      %v8215 = vld [vmem:[%s8214] sm:$0x1]
      %8216 = vmatprep.subr.bf16.mxu0 0
      %8217 = vmatpush1.bf16.msra.mxu0 %v8206
      %8218 = vmatprep.subr.bf16.mxu0 0
      %8219 = vmatpush1.bf16.msra.mxu0 %v8207
      %8220 = vmatprep.subr.bf16.mxu0 0
      %8221 = vmatpush1.bf16.msra.mxu0 %v8208
      %8222 = vmatprep.subr.bf16.mxu0 0
      %8223 = vmatpush1.bf16.msra.mxu0 %v8209
      %8224 = vmatprep.subr.bf16.mxu0 0
      %8225 = vmatpush1.bf16.msra.mxu0 %v8210
      %8226 = vmatprep.subr.bf16.mxu0 0
      %8227 = vmatpush1.bf16.msra.mxu0 %v8211
      %8228 = vmatprep.subr.bf16.mxu0 0
      %8229 = vmatpush1.bf16.msra.mxu0 %v8212
      %8230 = vmatprep.subr.bf16.mxu0 0
      %8231 = vmatpush1.bf16.msra.mxu0 %v8213
      %8232 = vmatprep.subr.bf16.mxu0 0
      %8233 = vmatpush1.bf16.msra.mxu0 0
      %8234 = vmatprep.subr.bf16.mxu0 0
      %8235 = vmatpush1.bf16.msra.mxu0 0
      %8236 = vmatprep.subr.bf16.mxu0 0
      %8237 = vmatpush1.bf16.msra.mxu0 0
      %8238 = vmatprep.subr.bf16.mxu0 0
      %8239 = vmatpush1.bf16.msra.mxu0 0
      %8240 = vmatprep.subr.bf16.mxu0 0
      %8241 = vmatpush1.bf16.msra.mxu0 0
      %8242 = vmatprep.subr.bf16.mxu0 0
      %8243 = vmatpush1.bf16.msra.mxu0 0
      %8244 = vmatprep.subr.bf16.mxu0 0
      %8245 = vmatpush1.bf16.msra.mxu0 0
      %8246 = vmatprep.subr.bf16.mxu0 0
      %8247 = vmatpush1.bf16.msra.mxu0 0
      %8248 = vmatprep.mubr.bf16.mxu0 0
      %8249 = vmatmul.mubr.bf16.gmra.mrb[0].mxu0 %v8215
      %v8250 = vpop.f32.mrb[0].mxu0
      %v8251 = vadd.f32 0.0, %v8250
      %v8252 = vpop.f32.mrb[0].mxu0
      %v8253 = vpop.f32.mrb[0].mxu0
      %v8254 = vpop.f32.mrb[0].mxu0
      %8255 = vdwg.mxu0
      %v8256 = vadd.f32 %v8099, %v8251
      %s8257 = scalar_lea.vmem %s13, 6
      %v8258 = vld [vmem:[%s8257] sm:$0x3]
      %v8260 = vsel %vm7802, %v8258, 0
      %8262 = vmatprep.subr.bf16.mxu0 0
      %8263 = vmatpush1.bf16.msra.mxu0 %v8260
      %8264 = vmatprep.subr.bf16.mxu0 0
      %8265 = vmatpush1.bf16.msra.mxu0 0
      %8266 = vmatprep.subr.bf16.mxu0 0
      %8267 = vmatpush1.bf16.msra.mxu0 0
      %8268 = vmatprep.subr.bf16.mxu0 0
      %8269 = vmatpush1.bf16.msra.mxu0 0
      %8270 = vmatprep.subr.bf16.mxu0 0
      %8271 = vmatpush1.bf16.msra.mxu0 0
      %8272 = vmatprep.subr.bf16.mxu0 0
      %8273 = vmatpush1.bf16.msra.mxu0 0
      %8274 = vmatprep.subr.bf16.mxu0 0
      %8275 = vmatpush1.bf16.msra.mxu0 0
      %8276 = vmatprep.subr.bf16.mxu0 0
      %8277 = vmatpush1.bf16.msra.mxu0 0
      %8278 = vmatprep.subr.bf16.mxu0 0
      %8279 = vmatpush1.bf16.msra.mxu0 0
      %8280 = vmatprep.subr.bf16.mxu0 0
      %8281 = vmatpush1.bf16.msra.mxu0 0
      %8282 = vmatprep.subr.bf16.mxu0 0
      %8283 = vmatpush1.bf16.msra.mxu0 0
      %8284 = vmatprep.subr.bf16.mxu0 0
      %8285 = vmatpush1.bf16.msra.mxu0 0
      %8286 = vmatprep.subr.bf16.mxu0 0
      %8287 = vmatpush1.bf16.msra.mxu0 0
      %8288 = vmatprep.subr.bf16.mxu0 0
      %8289 = vmatpush1.bf16.msra.mxu0 0
      %8290 = vmatprep.subr.bf16.mxu0 0
      %8291 = vmatpush1.bf16.msra.mxu0 0
      %8292 = vmatprep.subr.bf16.mxu0 0
      %8293 = vmatpush1.bf16.msra.mxu0 0
      %8294 = vmatprep.mubr.bf16.mxu0 0
      %8295 = vmatmul.mubr.bf16.gmra.mrb[0].mxu0 %v7779
      %v8296 = vpop.f32.mrb[0].mxu0
      %v8297 = vadd.f32 0.0, %v8296
      %v8298 = vpop.f32.mrb[0].mxu0
      %v8299 = vpop.f32.mrb[0].mxu0
      %v8300 = vadd.f32 0.0, %v8299
      %v8301 = vpop.f32.mrb[0].mxu0
      %8302 = vmatprep.mubr.bf16.mxu0 0
      %8303 = vmatmul.mubr.bf16.gmra.mrb[0].mxu0 %v7782
      %v8304 = vpop.f32.mrb[0].mxu0
      %v8305 = vadd.f32 0.0, %v8304
      %v8306 = vpop.f32.mrb[0].mxu0
      %v8307 = vpop.f32.mrb[0].mxu0
      %v8308 = vadd.f32 0.0, %v8307
      %v8309 = vpop.f32.mrb[0].mxu0
      %8310 = vmatprep.mubr.bf16.mxu0 0
      %8311 = vmatmul.mubr.bf16.gmra.mrb[0].mxu0 %v7785
      %v8312 = vpop.f32.mrb[0].mxu0
      %v8313 = vadd.f32 0.0, %v8312
      %v8314 = vpop.f32.mrb[0].mxu0
      %v8315 = vpop.f32.mrb[0].mxu0
      %v8316 = vadd.f32 0.0, %v8315
      %v8317 = vpop.f32.mrb[0].mxu0
      %8318 = vmatprep.mubr.bf16.mxu0 0
      %8319 = vmatmul.mubr.bf16.gmra.mrb[0].mxu0 %v7788
      %v8320 = vpop.f32.mrb[0].mxu0
      %v8321 = vadd.f32 0.0, %v8320
      %v8322 = vpop.f32.mrb[0].mxu0
      %v8323 = vpop.f32.mrb[0].mxu0
      %v8324 = vadd.f32 0.0, %v8323
      %v8325 = vpop.f32.mrb[0].mxu0
      %8326 = vmatprep.mubr.bf16.mxu0 0
      %8327 = vmatmul.mubr.bf16.gmra.mrb[0].mxu0 %v7791
      %v8328 = vpop.f32.mrb[0].mxu0
      %v8329 = vadd.f32 0.0, %v8328
      %v8330 = vpop.f32.mrb[0].mxu0
      %v8331 = vpop.f32.mrb[0].mxu0
      %v8332 = vadd.f32 0.0, %v8331
      %v8333 = vpop.f32.mrb[0].mxu0
      %8334 = vmatprep.mubr.bf16.mxu0 0
      %8335 = vmatmul.mubr.bf16.gmra.mrb[0].mxu0 %v7794
      %v8336 = vpop.f32.mrb[0].mxu0
      %v8337 = vadd.f32 0.0, %v8336
      %v8338 = vpop.f32.mrb[0].mxu0
      %v8339 = vpop.f32.mrb[0].mxu0
      %v8340 = vadd.f32 0.0, %v8339
      %v8341 = vpop.f32.mrb[0].mxu0
      %8342 = vmatprep.mubr.bf16.mxu0 0
      %8343 = vmatmul.mubr.bf16.gmra.mrb[0].mxu0 %v7797
      %v8344 = vpop.f32.mrb[0].mxu0
      %v8345 = vadd.f32 0.0, %v8344
      %v8346 = vpop.f32.mrb[0].mxu0
      %v8347 = vpop.f32.mrb[0].mxu0
      %v8348 = vadd.f32 0.0, %v8347
      %v8349 = vpop.f32.mrb[0].mxu0
      %8350 = vmatprep.mubr.bf16.mxu0 0
      %8351 = vmatmul.mubr.bf16.gmra.mrb[0].mxu0 %v7800
      %v8352 = vpop.f32.mrb[0].mxu0
      %v8353 = vadd.f32 0.0, %v8352
      %v8354 = vpop.f32.mrb[0].mxu0
      %v8355 = vpop.f32.mrb[0].mxu0
      %v8356 = vadd.f32 0.0, %v8355
      %v8357 = vpop.f32.mrb[0].mxu0
      %8358 = vdwg.mxu0
      %v8359 = vpack.c.bf16 %v8300, %v8297
      %v8360 = vpack.c.bf16 %v8308, %v8305
      %v8361 = vpack.c.bf16 %v8316, %v8313
      %v8362 = vpack.c.bf16 %v8324, %v8321
      %v8363 = vpack.c.bf16 %v8332, %v8329
      %v8364 = vpack.c.bf16 %v8340, %v8337
      %v8365 = vpack.c.bf16 %v8348, %v8345
      %v8366 = vpack.c.bf16 %v8356, %v8353
      %s8367 = scalar_lea.vmem %s12, 3
      %v8368 = vld [vmem:[%s8367] sm:$0x1]
      %8369 = vmatprep.subr.bf16.mxu0 0
      %8370 = vmatpush1.bf16.msra.mxu0 %v8359
      %8371 = vmatprep.subr.bf16.mxu0 0
      %8372 = vmatpush1.bf16.msra.mxu0 %v8360
      %8373 = vmatprep.subr.bf16.mxu0 0
      %8374 = vmatpush1.bf16.msra.mxu0 %v8361
      %8375 = vmatprep.subr.bf16.mxu0 0
      %8376 = vmatpush1.bf16.msra.mxu0 %v8362
      %8377 = vmatprep.subr.bf16.mxu0 0
      %8378 = vmatpush1.bf16.msra.mxu0 %v8363
      %8379 = vmatprep.subr.bf16.mxu0 0
      %8380 = vmatpush1.bf16.msra.mxu0 %v8364
      %8381 = vmatprep.subr.bf16.mxu0 0
      %8382 = vmatpush1.bf16.msra.mxu0 %v8365
      %8383 = vmatprep.subr.bf16.mxu0 0
      %8384 = vmatpush1.bf16.msra.mxu0 %v8366
      %8385 = vmatprep.subr.bf16.mxu0 0
      %8386 = vmatpush1.bf16.msra.mxu0 0
      %8387 = vmatprep.subr.bf16.mxu0 0
      %8388 = vmatpush1.bf16.msra.mxu0 0
      %8389 = vmatprep.subr.bf16.mxu0 0
      %8390 = vmatpush1.bf16.msra.mxu0 0
      %8391 = vmatprep.subr.bf16.mxu0 0
      %8392 = vmatpush1.bf16.msra.mxu0 0
      %8393 = vmatprep.subr.bf16.mxu0 0
      %8394 = vmatpush1.bf16.msra.mxu0 0
      %8395 = vmatprep.subr.bf16.mxu0 0
      %8396 = vmatpush1.bf16.msra.mxu0 0
      %8397 = vmatprep.subr.bf16.mxu0 0
      %8398 = vmatpush1.bf16.msra.mxu0 0
      %8399 = vmatprep.subr.bf16.mxu0 0
      %8400 = vmatpush1.bf16.msra.mxu0 0
      %8401 = vmatprep.mubr.bf16.mxu0 0
      %8402 = vmatmul.mubr.bf16.gmra.mrb[0].mxu0 %v8368
      %v8403 = vpop.f32.mrb[0].mxu0
      %v8404 = vadd.f32 0.0, %v8403
      %v8405 = vpop.f32.mrb[0].mxu0
      %v8406 = vpop.f32.mrb[0].mxu0
      %v8407 = vpop.f32.mrb[0].mxu0
      %8408 = vdwg.mxu0
      %v8409 = vadd.f32 %v8256, %v8404
      %s8410 = sld [smem:[#allocation2]]
      %v8411 = vstv %s8410
      %v8412 = vadd.f32 %v8409, %v8411
      %vm8413 = vcmask 0
      %8414 = vst.msk [vmem:[%s491] sm:$0x1] %vm8413, %v8412
      %p8415 = scmp.lt.s32.totalorder %s27, 1
      %s8416 = scalar_select %p8415, %s27, 1
      %s8417 = scalar_lea.vmem %s15, %s8416
      // Predicated region
      $region81: #{critic_forward.1} parent=79 // pred_check
        %p8418 = pneg %p365
      $region82: #{critic_forward.1} parent=79 // pred_check_branch
        %8420 = sbr.rel (%p8418) target = $region84
      $region83: #{critic_forward.1} parent=79 // pred_region
        _
      $region84: #{critic_forward.1} parent=79 // pred_fallthru
        _
    $region80: #{critic_forward.1} parent=5 // pred_fallthru
      _
    %p8421 = scmp.le.s32.totalorder 2, %s22
    // Predicated region
    $region85: #{critic_forward.1} parent=5 // pred_check
      %p8422 = pneg %p8421
    $region86: #{critic_forward.1} parent=5 // pred_check_branch
      %8424 = sbr.rel (%p8422) target = $region88
    $region87: #{critic_forward.1} parent=5 // pred_region
      %s8425 = ssub.s32 %s22, 2
      // Predicated region
      $region89: #{critic_forward.1} parent=87 // pred_check
        %p8426 = pneg %p371
      $region90: #{critic_forward.1} parent=87 // pred_check_branch
        %8428 = sbr.rel (%p8426) target = $region92
      $region91: #{critic_forward.1} parent=87 // pred_region
        %p8429 = scmp.lt.s32.totalorder %s28, 1
        %s8430 = scalar_select %p8429, %s28, 1
        %s8431 = scalar_lea.vmem %s15, %s8430
      $region92: #{critic_forward.1} parent=87 // pred_fallthru
        _
    $region88: #{critic_forward.1} parent=5 // pred_fallthru
      _
  $region6: #{critic_forward.1} parent=0 // loop_footer
    %s26 = sadd.s32 1, %s22
  $region7: #{critic_forward.1} parent=0 // loop_footer_branch
    %21 = sbr.rel target = $region3
  $region8: #{critic_forward.1} parent=0 // loop_exit
    _

</llo_original>
